<compile_context>
chip_gen: v5e
topology: v5e:2x2
jax: 0.10.0
libtpu: 0.0.40
codegen_flags: <defaults>
</compile_context>

<pallas_src>
import functools

import jax
import jax.numpy as jnp
from jax.experimental import pallas as pl
from jax.experimental.pallas import tpu as pltpu

EPS = 1e-5            # torch.nn.BatchNorm2d default
LANE = 128            # TPU lane width; channel padding target
VMEM_LIMIT = 32 * 1024 * 1024


# ---------------------------------------------------------------------------
# In-kernel helpers
# ---------------------------------------------------------------------------
def _conv3x3_taps(x_ref, w_ref, H, W, Cp):
    """3x3 'same' convolution of one spatially padded tile.

    x_ref: (1, H+2, W+2, Cp) ref (float) -- zero-halo padded input tile.
    w_ref: (9, Cp, Cp) bf16 ref          -- tap-major weights, tap = kh*3 + kw.
    Returns (H*W, Cp) float32 (bias not included).
    """
    acc = jnp.zeros((H * W, Cp), jnp.float32)
    for kh in range(3):
        for kw in range(3):
            tap = x_ref[0, kh:kh + H, kw:kw + W, :].astype(jnp.bfloat16)
            acc = acc + jnp.dot(tap.reshape(H * W, Cp),
                                w_ref[kh * 3 + kw],
                                preferred_element_type=jnp.float32)
    return acc


def _finalize_bn(st_ref, g_ref, be_ref, inv_count):
    """Reduce per-tile (sum, sumsq) partials -> per-channel scale/shift."""
    sums = jnp.sum(st_ref[...], axis=0)                    # (2, Cp)
    mean = sums[0:1, :] * inv_count                        # (1, Cp)
    var = jnp.maximum(sums[1:2, :] * inv_count - mean * mean, 0.0)
    scale = g_ref[...] * jax.lax.rsqrt(var + EPS)
    shift = be_ref[...] - mean * scale
    return scale, shift


# ---------------------------------------------------------------------------
# Pallas kernels
# ---------------------------------------------------------------------------
def _conv1_stats_kernel(x_ref, w_ref, b_ref, y_ref, st_ref):
    # x: (1, Hp, Wp, Cp) bf16 padded image tile; outputs conv1+bias (f32)
    # and single-pass partial BN statistics for this tile.
    _, H, W, Cp = y_ref.shape
    y = _conv3x3_taps(x_ref, w_ref, H, W, Cp) + b_ref[...]     # (H*W, Cp) f32
    st_ref[0, 0:1, :] = jnp.sum(y, axis=0, keepdims=True)
    st_ref[0, 1:2, :] = jnp.sum(y * y, axis=0, keepdims=True)
    y_ref[0] = y.reshape(H, W, Cp)


def _bn_relu_conv2_kernel(y1_ref, st1_ref, g_ref, be_ref, w_ref, b_ref,
                          y2_ref, st2_ref, apad_ref, *, inv_count):
    _, H, W, Cp = y1_ref.shape
    # Finalize BN1 statistics (global across all grid tiles).
    scale, shift = _finalize_bn(st1_ref, g_ref, be_ref, inv_count)
    # BN1 + ReLU on this tile (f32).
    a = jnp.maximum(y1_ref[0].reshape(H * W, Cp) * scale + shift, 0.0)
    # Stage the activation in a zero-halo padded VMEM tile (conv2 padding=1).
    apad_ref[...] = jnp.zeros_like(apad_ref)
    apad_ref[0, 1:H + 1, 1:W + 1, :] = a.reshape(H, W, Cp)
    # conv2 + bias, plus partial BN2 statistics.
    y2 = _conv3x3_taps(apad_ref, w_ref, H, W, Cp) + b_ref[...]
    st2_ref[0, 0:1, :] = jnp.sum(y2, axis=0, keepdims=True)
    st2_ref[0, 1:2, :] = jnp.sum(y2 * y2, axis=0, keepdims=True)
    y2_ref[0] = y2.reshape(H, W, Cp)


def _bn2_residual_kernel(y2_ref, st2_ref, g_ref, be_ref, res_ref, o_ref, *,
                         inv_count):
    _, H, W, Cp = y2_ref.shape
    scale, shift = _finalize_bn(st2_ref, g_ref, be_ref, inv_count)
    y2 = y2_ref[0].reshape(H * W, Cp)
    r = res_ref[0].reshape(H * W, Cp)
    o_ref[0] = (y2 * scale + shift + r).reshape(H, W, Cp)


# ---------------------------------------------------------------------------
# Wrapper (layout glue only: transpose / zero-padding / weight re-layout)
# ---------------------------------------------------------------------------
def _pad_lane(v, cp):
    v = jnp.asarray(v, jnp.float32).reshape(1, -1)
    return jnp.pad(v, ((0, 0), (0, cp - v.shape[1])))


def _weight_taps(w_oihw, cp):
    """torch (Cout, Cin, 3, 3) -> (9, Cp, Cp) bf16, tap-major (kh*3 + kw)."""
    cout, cin, _, _ = w_oihw.shape
    w = jnp.transpose(jnp.asarray(w_oihw, jnp.float32), (2, 3, 1, 0))  # kh,kw,ci,co
    w = w.reshape(9, cin, cout)
    w = jnp.pad(w, ((0, 0), (0, cp - cin), (0, cp - cout)))
    return w.astype(jnp.bfloat16)


def resnet_block(x_nchw, w1, b1, w2, b2, gamma, beta):
    N, C, H, W = x_nchw.shape
    Cp = ((C + LANE - 1) // LANE) * LANE
    Hp, Wp = H + 2, W + 2
    M = N * H * W
    inv_count = 1.0 / float(M)

    # ---- layout glue (pure data movement) ---------------------------------
    x_nhwc = jnp.transpose(x_nchw, (0, 2, 3, 1)).astype(jnp.float32)
    x_cp = jnp.pad(x_nhwc, ((0, 0), (0, 0), (0, 0), (0, Cp - C)))   # residual f32
    x_pad = jnp.pad(x_cp, ((0, 0), (1, 1), (1, 1), (0, 0))).astype(jnp.bfloat16)

    w1m, w2m = _weight_taps(w1, Cp), _weight_taps(w2, Cp)
    b1p, b2p = _pad_lane(b1, Cp), _pad_lane(b2, Cp)
    g, be = _pad_lane(gamma, Cp), _pad_lane(beta, Cp)

    cparams = pltpu.CompilerParams(dimension_semantics=("parallel",),
                                   vmem_limit_bytes=VMEM_LIMIT)
    vec_spec = pl.BlockSpec((1, Cp), lambda n: (0, 0))
    img_spec = pl.BlockSpec((1, H, W, Cp), lambda n: (n, 0, 0, 0))
    st_out_spec = pl.BlockSpec((1, 2, Cp), lambda n: (n, 0, 0))
    st_in_spec = pl.BlockSpec((N, 2, Cp), lambda n: (0, 0, 0))
    w_spec = pl.BlockSpec((9, Cp, Cp), lambda n: (0, 0, 0))

    # ---- stage 1: conv1 + bias, per-tile partial BN1 stats -----------------
    y1, st1 = pl.pallas_call(
        _conv1_stats_kernel,
        out_shape=(jax.ShapeDtypeStruct((N, H, W, Cp), jnp.float32),
                   jax.ShapeDtypeStruct((N, 2, Cp), jnp.float32)),
        grid=(N,),
        in_specs=[pl.BlockSpec((1, Hp, Wp, Cp), lambda n: (n, 0, 0, 0)),
                  w_spec, vec_spec],
        out_specs=(img_spec, st_out_spec),
        compiler_params=cparams,
    )(x_pad, w1m, b1p)

    # ---- stage 2: BN1 finalize + ReLU + conv2 + bias, partial BN2 stats ----
    y2, st2 = pl.pallas_call(
        functools.partial(_bn_relu_conv2_kernel, inv_count=inv_count),
        out_shape=(jax.ShapeDtypeStruct((N, H, W, Cp), jnp.float32),
                   jax.ShapeDtypeStruct((N, 2, Cp), jnp.float32)),
        grid=(N,),
        in_specs=[img_spec, st_in_spec, vec_spec, vec_spec, w_spec, vec_spec],
        out_specs=(img_spec, st_out_spec),
        scratch_shapes=[pltpu.VMEM((1, Hp, Wp, Cp), jnp.float32)],
        compiler_params=cparams,
    )(y1, st1, g, be, w2m, b2p)

    # ---- stage 3: BN2 finalize + residual add -------------------------------
    out = pl.pallas_call(
        functools.partial(_bn2_residual_kernel, inv_count=inv_count),
        out_shape=jax.ShapeDtypeStruct((N, H, W, Cp), jnp.float32),
        grid=(N,),
        in_specs=[img_spec, st_in_spec, vec_spec, vec_spec, img_spec],
        out_specs=img_spec,
        compiler_params=cparams,
    )(y2, st2, g, be, x_cp)

    return jnp.transpose(out[..., :C], (0, 3, 1, 2))   # back to NCHW


# ---------------------------------------------------------------------------
# Pure-JAX reference (mirrors the kernel's bf16 matmul operands, f32 accum)
# ---------------------------------------------------------------------------
def _reference(x, w1, b1, w2, b2, gamma, beta):
    def conv(z, w, b):
        y = jax.lax.conv_general_dilated(
            z.astype(jnp.bfloat16), w.astype(jnp.bfloat16),
            window_strides=(1, 1), padding=((1, 1), (1, 1)),
            dimension_numbers=("NCHW", "OIHW", "NCHW"),
            preferred_element_type=jnp.float32)
        return y + b.reshape(1, -1, 1, 1)

    def bn(y):
        mean = jnp.mean(y, axis=(0, 2, 3), keepdims=True)
        var = jnp.mean((y - mean) ** 2, axis=(0, 2, 3), keepdims=True)
        return ((y - mean) * jax.lax.rsqrt(var + EPS)
                * gamma.reshape(1, -1, 1, 1) + beta.reshape(1, -1, 1, 1))

    out = jnp.maximum(bn(conv(x, w1, b1)), 0.0)
    out = bn(conv(out, w2, b2))
    return out + x


# ---------------------------------------------------------------------------
if __name__ == "__main__":
    # num_filter=4 ResnetBlock, small deterministic inputs
    N, C, H, W = 2, 4, 16, 16
    key = jax.random.PRNGKey(0)
    k0, k1, k2, k3, k4 = jax.random.split(key, 5)

    x = jax.random.normal(k0, (N, C, H, W), jnp.float32)
    w1 = 0.1 * jax.random.normal(k1, (C, C, 3, 3), jnp.float32)
    b1 = 0.1 * jax.random.normal(k2, (C,), jnp.float32)
    w2 = 0.1 * jax.random.normal(k3, (C, C, 3, 3), jnp.float32)
    b2 = 0.1 * jax.random.normal(k4, (C,), jnp.float32)
    gamma = jnp.ones((C,), jnp.float32)   # BatchNorm2d default affine init,
    beta = jnp.zeros((C,), jnp.float32)   # shared by both bn applications.

    fwd = jax.jit(resnet_block)
    out = jax.block_until_ready(fwd(x, w1, b1, w2, b2, gamma, beta))
    ref = _reference(x, w1, b1, w2, b2, gamma, beta)

    assert out.shape == (N, C, H, W)
    # Tolerance accounts for bf16 MXU operands (mirrored in the reference) and
    # rare bf16 rounding-boundary divergence of the intermediate activation.
    if not jnp.allclose(out, ref, atol=5e-3, rtol=5e-3):
        max_err = jnp.max(jnp.abs(out - ref))
        raise AssertionError(f"Pallas output mismatch, max abs err = {max_err}")
    print("KERNEL_OK")
</pallas_src>

<mosaic_0001>
module attributes {stable_mosaic.version = 11 : i64} {
  func.func @_bn_relu_conv2_kernel(%arg0: i32, %arg1: memref<1x16x16x128xf32, #tpu.memory_space<vmem>>, %arg2: memref<2x2x128xf32, #tpu.memory_space<vmem>>, %arg3: memref<1x128xf32, #tpu.memory_space<vmem>>, %arg4: memref<1x128xf32, #tpu.memory_space<vmem>>, %arg5: memref<9x128x128xbf16, #tpu.memory_space<vmem>>, %arg6: memref<1x128xf32, #tpu.memory_space<vmem>>, %arg7: memref<1x16x16x128xf32, #tpu.memory_space<vmem>>, %arg8: memref<1x2x128xf32, #tpu.memory_space<vmem>>, %arg9: memref<1x18x18x128xf32, #tpu.memory_space<vmem>>) attributes {dimension_semantics = [#tpu.dimension_semantics<parallel>], iteration_bounds = array<i64: 2>, scalar_prefetch = 0 : i64, scratch_operands = 1 : i64, tpu.core_type = #tpu.core_type<tc>, window_params = [{transform_indices = @transform_0, window_bounds = array<i64: 1, 16, 16, 128>}, {pipeline_mode = #tpu.pipeline_mode<synchronous>, transform_indices = @transform_1, window_bounds = array<i64: 2, 2, 128>}, {pipeline_mode = #tpu.pipeline_mode<synchronous>, transform_indices = @transform_2, window_bounds = array<i64: 1, 128>}, {pipeline_mode = #tpu.pipeline_mode<synchronous>, transform_indices = @transform_3, window_bounds = array<i64: 1, 128>}, {pipeline_mode = #tpu.pipeline_mode<synchronous>, transform_indices = @transform_4, window_bounds = array<i64: 9, 128, 128>}, {pipeline_mode = #tpu.pipeline_mode<synchronous>, transform_indices = @transform_5, window_bounds = array<i64: 1, 128>}, {transform_indices = @transform_6, window_bounds = array<i64: 1, 16, 16, 128>}, {transform_indices = @transform_7, window_bounds = array<i64: 1, 2, 128>}]} {
    %c0 = arith.constant 0 : index
    %c0_0 = arith.constant 0 : index
    %c0_1 = arith.constant 0 : index
    %0 = vector.load %arg2[%c0, %c0_0, %c0_1] : memref<2x2x128xf32, #tpu.memory_space<vmem>>, vector<2x2x128xf32>
    %cst = arith.constant dense<0.000000e+00> : vector<2x128xf32>
    %1 = vector.multi_reduction <add>, %0, %cst [0] : vector<2x2x128xf32> to vector<2x128xf32>
    %2 = vector.extract_strided_slice %1 {offsets = [0, 0], sizes = [1, 128], strides = [1, 1]} : vector<2x128xf32> to vector<1x128xf32>
    %cst_2 = arith.constant 0.001953125 : f32
    %3 = vector.broadcast %cst_2 : f32 to vector<1x128xf32>
    %4 = arith.mulf %2, %3 : vector<1x128xf32>
    %5 = vector.extract_strided_slice %1 {offsets = [1, 0], sizes = [1, 128], strides = [1, 1]} : vector<2x128xf32> to vector<1x128xf32>
    %cst_3 = arith.constant 0.001953125 : f32
    %6 = vector.broadcast %cst_3 : f32 to vector<1x128xf32>
    %7 = arith.mulf %5, %6 : vector<1x128xf32>
    %8 = arith.mulf %4, %4 : vector<1x128xf32>
    %9 = arith.subf %7, %8 : vector<1x128xf32>
    %cst_4 = arith.constant 0.000000e+00 : f32
    %10 = vector.broadcast %cst_4 : f32 to vector<1x128xf32>
    %11 = arith.maximumf %9, %10 : vector<1x128xf32>
    %c0_5 = arith.constant 0 : index
    %c0_6 = arith.constant 0 : index
    %12 = vector.load %arg3[%c0_5, %c0_6] : memref<1x128xf32, #tpu.memory_space<vmem>>, vector<1x128xf32>
    %cst_7 = arith.constant 9.99999974E-6 : f32
    %13 = vector.broadcast %cst_7 : f32 to vector<1x128xf32>
    %14 = arith.addf %11, %13 : vector<1x128xf32>
    %15 = math.rsqrt %14 : vector<1x128xf32>
    %16 = arith.mulf %12, %15 : vector<1x128xf32>
    %c0_8 = arith.constant 0 : index
    %c0_9 = arith.constant 0 : index
    %17 = vector.load %arg4[%c0_8, %c0_9] : memref<1x128xf32, #tpu.memory_space<vmem>>, vector<1x128xf32>
    %18 = arith.mulf %4, %16 : vector<1x128xf32>
    %19 = arith.subf %17, %18 : vector<1x128xf32>
    %c0_10 = arith.constant 0 : index
    %c0_11 = arith.constant 0 : index
    %c0_12 = arith.constant 0 : index
    %c0_13 = arith.constant 0 : index
    %20 = vector.load %arg1[%c0_10, %c0_11, %c0_12, %c0_13] : memref<1x16x16x128xf32, #tpu.memory_space<vmem>>, vector<1x16x16x128xf32>
    %21 = vector.shape_cast %20 : vector<1x16x16x128xf32> to vector<16x16x128xf32>
    %22 = vector.shape_cast %21 : vector<16x16x128xf32> to vector<256x128xf32>
    %23 = vector.broadcast %16 : vector<1x128xf32> to vector<256x128xf32>
    %24 = arith.mulf %22, %23 : vector<256x128xf32>
    %25 = vector.broadcast %19 : vector<1x128xf32> to vector<256x128xf32>
    %26 = arith.addf %24, %25 : vector<256x128xf32>
    %cst_14 = arith.constant 0.000000e+00 : f32
    %27 = vector.broadcast %cst_14 : f32 to vector<256x128xf32>
    %28 = arith.maximumf %26, %27 : vector<256x128xf32>
    %cst_15 = arith.constant 0.000000e+00 : f32
    %29 = vector.broadcast %cst_15 : f32 to vector<1x18x18x128xf32>
    %c0_16 = arith.constant 0 : index
    %c0_17 = arith.constant 0 : index
    %c0_18 = arith.constant 0 : index
    %c0_19 = arith.constant 0 : index
    %30 = vector.load %arg9[%c0_16, %c0_17, %c0_18, %c0_19] : memref<1x18x18x128xf32, #tpu.memory_space<vmem>>, vector<1x18x18x128xf32>
    tpu.vector_store %arg9[%c0_16, %c0_17, %c0_18, %c0_19], %29 {strides = array<i32>} : memref<1x18x18x128xf32, #tpu.memory_space<vmem>>, vector<1x18x18x128xf32>,
    %31 = vector.shape_cast %28 : vector<256x128xf32> to vector<16x16x128xf32>
    %c0_20 = arith.constant 0 : index
    %c1 = arith.constant 1 : index
    %c1_21 = arith.constant 1 : index
    %c0_22 = arith.constant 0 : index
    %32 = vector.load %arg9[%c0_20, %c1, %c1_21, %c0_22] : memref<1x18x18x128xf32, #tpu.memory_space<vmem>>, vector<1x16x16x128xf32>
    %33 = vector.shape_cast %32 : vector<1x16x16x128xf32> to vector<16x16x128xf32>
    %34 = vector.shape_cast %31 : vector<16x16x128xf32> to vector<1x16x16x128xf32>
    tpu.vector_store %arg9[%c0_20, %c1, %c1_21, %c0_22], %34 {strides = array<i32>} : memref<1x18x18x128xf32, #tpu.memory_space<vmem>>, vector<1x16x16x128xf32>,
    %cst_23 = arith.constant 0.000000e+00 : f32
    %35 = vector.broadcast %cst_23 : f32 to vector<256x128xf32>
    %c0_24 = arith.constant 0 : index
    %c0_25 = arith.constant 0 : index
    %c0_26 = arith.constant 0 : index
    %c0_27 = arith.constant 0 : index
    %36 = vector.load %arg9[%c0_24, %c0_25, %c0_26, %c0_27] : memref<1x18x18x128xf32, #tpu.memory_space<vmem>>, vector<1x16x16x128xf32>
    %37 = vector.shape_cast %36 : vector<1x16x16x128xf32> to vector<16x16x128xf32>
    %38 = arith.truncf %37 : vector<16x16x128xf32> to vector<16x16x128xbf16>
    %39 = vector.shape_cast %38 : vector<16x16x128xbf16> to vector<256x128xbf16>
    %c0_28 = arith.constant 0 : index
    %c0_29 = arith.constant 0 : index
    %c0_30 = arith.constant 0 : index
    %40 = vector.load %arg5[%c0_28, %c0_29, %c0_30] : memref<9x128x128xbf16, #tpu.memory_space<vmem>>, vector<1x128x128xbf16>
    %41 = vector.shape_cast %40 : vector<1x128x128xbf16> to vector<128x128xbf16>
    %cst_31 = arith.constant dense<0.000000e+00> : vector<256x128xf32>
    %42 = tpu.matmul %39, %41, %cst_31 {dimension_numbers = #tpu.dot_dimension_numbers<[1], [0], [0], [1], [0, 0, 1, 1], [], []>} : vector<256x128xbf16>, vector<128x128xbf16>, vector<256x128xf32> -> vector<256x128xf32>
    %43 = arith.addf %35, %42 : vector<256x128xf32>
    %c0_32 = arith.constant 0 : index
    %c0_33 = arith.constant 0 : index
    %c1_34 = arith.constant 1 : index
    %c0_35 = arith.constant 0 : index
    %44 = vector.load %arg9[%c0_32, %c0_33, %c1_34, %c0_35] : memref<1x18x18x128xf32, #tpu.memory_space<vmem>>, vector<1x16x16x128xf32>
    %45 = vector.shape_cast %44 : vector<1x16x16x128xf32> to vector<16x16x128xf32>
    %46 = arith.truncf %45 : vector<16x16x128xf32> to vector<16x16x128xbf16>
    %47 = vector.shape_cast %46 : vector<16x16x128xbf16> to vector<256x128xbf16>
    %c1_36 = arith.constant 1 : index
    %c0_37 = arith.constant 0 : index
    %c0_38 = arith.constant 0 : index
    %48 = vector.load %arg5[%c1_36, %c0_37, %c0_38] : memref<9x128x128xbf16, #tpu.memory_space<vmem>>, vector<1x128x128xbf16>
    %49 = vector.shape_cast %48 : vector<1x128x128xbf16> to vector<128x128xbf16>
    %cst_39 = arith.constant dense<0.000000e+00> : vector<256x128xf32>
    %50 = tpu.matmul %47, %49, %cst_39 {dimension_numbers = #tpu.dot_dimension_numbers<[1], [0], [0], [1], [0, 0, 1, 1], [], []>} : vector<256x128xbf16>, vector<128x128xbf16>, vector<256x128xf32> -> vector<256x128xf32>
    %51 = arith.addf %43, %50 : vector<256x128xf32>
    %c0_40 = arith.constant 0 : index
    %c0_41 = arith.constant 0 : index
    %c2 = arith.constant 2 : index
    %c0_42 = arith.constant 0 : index
    %52 = vector.load %arg9[%c0_40, %c0_41, %c2, %c0_42] : memref<1x18x18x128xf32, #tpu.memory_space<vmem>>, vector<1x16x16x128xf32>
    %53 = vector.shape_cast %52 : vector<1x16x16x128xf32> to vector<16x16x128xf32>
    %54 = arith.truncf %53 : vector<16x16x128xf32> to vector<16x16x128xbf16>
    %55 = vector.shape_cast %54 : vector<16x16x128xbf16> to vector<256x128xbf16>
    %c2_43 = arith.constant 2 : index
    %c0_44 = arith.constant 0 : index
    %c0_45 = arith.constant 0 : index
    %56 = vector.load %arg5[%c2_43, %c0_44, %c0_45] : memref<9x128x128xbf16, #tpu.memory_space<vmem>>, vector<1x128x128xbf16>
    %57 = vector.shape_cast %56 : vector<1x128x128xbf16> to vector<128x128xbf16>
    %cst_46 = arith.constant dense<0.000000e+00> : vector<256x128xf32>
    %58 = tpu.matmul %55, %57, %cst_46 {dimension_numbers = #tpu.dot_dimension_numbers<[1], [0], [0], [1], [0, 0, 1, 1], [], []>} : vector<256x128xbf16>, vector<128x128xbf16>, vector<256x128xf32> -> vector<256x128xf32>
    %59 = arith.addf %51, %58 : vector<256x128xf32>
    %c0_47 = arith.constant 0 : index
    %c1_48 = arith.constant 1 : index
    %c0_49 = arith.constant 0 : index
    %c0_50 = arith.constant 0 : index
    %60 = vector.load %arg9[%c0_47, %c1_48, %c0_49, %c0_50] : memref<1x18x18x128xf32, #tpu.memory_space<vmem>>, vector<1x16x16x128xf32>
    %61 = vector.shape_cast %60 : vector<1x16x16x128xf32> to vector<16x16x128xf32>
    %62 = arith.truncf %61 : vector<16x16x128xf32> to vector<16x16x128xbf16>
    %63 = vector.shape_cast %62 : vector<16x16x128xbf16> to vector<256x128xbf16>
    %c3 = arith.constant 3 : index
    %c0_51 = arith.constant 0 : index
    %c0_52 = arith.constant 0 : index
    %64 = vector.load %arg5[%c3, %c0_51, %c0_52] : memref<9x128x128xbf16, #tpu.memory_space<vmem>>, vector<1x128x128xbf16>
    %65 = vector.shape_cast %64 : vector<1x128x128xbf16> to vector<128x128xbf16>
    %cst_53 = arith.constant dense<0.000000e+00> : vector<256x128xf32>
    %66 = tpu.matmul %63, %65, %cst_53 {dimension_numbers = #tpu.dot_dimension_numbers<[1], [0], [0], [1], [0, 0, 1, 1], [], []>} : vector<256x128xbf16>, vector<128x128xbf16>, vector<256x128xf32> -> vector<256x128xf32>
    %67 = arith.addf %59, %66 : vector<256x128xf32>
    %c0_54 = arith.constant 0 : index
    %c1_55 = arith.constant 1 : index
    %c1_56 = arith.constant 1 : index
    %c0_57 = arith.constant 0 : index
    %68 = vector.load %arg9[%c0_54, %c1_55, %c1_56, %c0_57] : memref<1x18x18x128xf32, #tpu.memory_space<vmem>>, vector<1x16x16x128xf32>
    %69 = vector.shape_cast %68 : vector<1x16x16x128xf32> to vector<16x16x128xf32>
    %70 = arith.truncf %69 : vector<16x16x128xf32> to vector<16x16x128xbf16>
    %71 = vector.shape_cast %70 : vector<16x16x128xbf16> to vector<256x128xbf16>
    %c4 = arith.constant 4 : index
    %c0_58 = arith.constant 0 : index
    %c0_59 = arith.constant 0 : index
    %72 = vector.load %arg5[%c4, %c0_58, %c0_59] : memref<9x128x128xbf16, #tpu.memory_space<vmem>>, vector<1x128x128xbf16>
    %73 = vector.shape_cast %72 : vector<1x128x128xbf16> to vector<128x128xbf16>
    %cst_60 = arith.constant dense<0.000000e+00> : vector<256x128xf32>
    %74 = tpu.matmul %71, %73, %cst_60 {dimension_numbers = #tpu.dot_dimension_numbers<[1], [0], [0], [1], [0, 0, 1, 1], [], []>} : vector<256x128xbf16>, vector<128x128xbf16>, vector<256x128xf32> -> vector<256x128xf32>
    %75 = arith.addf %67, %74 : vector<256x128xf32>
    %c0_61 = arith.constant 0 : index
    %c1_62 = arith.constant 1 : index
    %c2_63 = arith.constant 2 : index
    %c0_64 = arith.constant 0 : index
    %76 = vector.load %arg9[%c0_61, %c1_62, %c2_63, %c0_64] : memref<1x18x18x128xf32, #tpu.memory_space<vmem>>, vector<1x16x16x128xf32>
    %77 = vector.shape_cast %76 : vector<1x16x16x128xf32> to vector<16x16x128xf32>
    %78 = arith.truncf %77 : vector<16x16x128xf32> to vector<16x16x128xbf16>
    %79 = vector.shape_cast %78 : vector<16x16x128xbf16> to vector<256x128xbf16>
    %c5 = arith.constant 5 : index
    %c0_65 = arith.constant 0 : index
    %c0_66 = arith.constant 0 : index
    %80 = vector.load %arg5[%c5, %c0_65, %c0_66] : memref<9x128x128xbf16, #tpu.memory_space<vmem>>, vector<1x128x128xbf16>
    %81 = vector.shape_cast %80 : vector<1x128x128xbf16> to vector<128x128xbf16>
    %cst_67 = arith.constant dense<0.000000e+00> : vector<256x128xf32>
    %82 = tpu.matmul %79, %81, %cst_67 {dimension_numbers = #tpu.dot_dimension_numbers<[1], [0], [0], [1], [0, 0, 1, 1], [], []>} : vector<256x128xbf16>, vector<128x128xbf16>, vector<256x128xf32> -> vector<256x128xf32>
    %83 = arith.addf %75, %82 : vector<256x128xf32>
    %c0_68 = arith.constant 0 : index
    %c2_69 = arith.constant 2 : index
    %c0_70 = arith.constant 0 : index
    %c0_71 = arith.constant 0 : index
    %84 = vector.load %arg9[%c0_68, %c2_69, %c0_70, %c0_71] : memref<1x18x18x128xf32, #tpu.memory_space<vmem>>, vector<1x16x16x128xf32>
    %85 = vector.shape_cast %84 : vector<1x16x16x128xf32> to vector<16x16x128xf32>
    %86 = arith.truncf %85 : vector<16x16x128xf32> to vector<16x16x128xbf16>
    %87 = vector.shape_cast %86 : vector<16x16x128xbf16> to vector<256x128xbf16>
    %c6 = arith.constant 6 : index
    %c0_72 = arith.constant 0 : index
    %c0_73 = arith.constant 0 : index
    %88 = vector.load %arg5[%c6, %c0_72, %c0_73] : memref<9x128x128xbf16, #tpu.memory_space<vmem>>, vector<1x128x128xbf16>
    %89 = vector.shape_cast %88 : vector<1x128x128xbf16> to vector<128x128xbf16>
    %cst_74 = arith.constant dense<0.000000e+00> : vector<256x128xf32>
    %90 = tpu.matmul %87, %89, %cst_74 {dimension_numbers = #tpu.dot_dimension_numbers<[1], [0], [0], [1], [0, 0, 1, 1], [], []>} : vector<256x128xbf16>, vector<128x128xbf16>, vector<256x128xf32> -> vector<256x128xf32>
    %91 = arith.addf %83, %90 : vector<256x128xf32>
    %c0_75 = arith.constant 0 : index
    %c2_76 = arith.constant 2 : index
    %c1_77 = arith.constant 1 : index
    %c0_78 = arith.constant 0 : index
    %92 = vector.load %arg9[%c0_75, %c2_76, %c1_77, %c0_78] : memref<1x18x18x128xf32, #tpu.memory_space<vmem>>, vector<1x16x16x128xf32>
    %93 = vector.shape_cast %92 : vector<1x16x16x128xf32> to vector<16x16x128xf32>
    %94 = arith.truncf %93 : vector<16x16x128xf32> to vector<16x16x128xbf16>
    %95 = vector.shape_cast %94 : vector<16x16x128xbf16> to vector<256x128xbf16>
    %c7 = arith.constant 7 : index
    %c0_79 = arith.constant 0 : index
    %c0_80 = arith.constant 0 : index
    %96 = vector.load %arg5[%c7, %c0_79, %c0_80] : memref<9x128x128xbf16, #tpu.memory_space<vmem>>, vector<1x128x128xbf16>
    %97 = vector.shape_cast %96 : vector<1x128x128xbf16> to vector<128x128xbf16>
    %cst_81 = arith.constant dense<0.000000e+00> : vector<256x128xf32>
    %98 = tpu.matmul %95, %97, %cst_81 {dimension_numbers = #tpu.dot_dimension_numbers<[1], [0], [0], [1], [0, 0, 1, 1], [], []>} : vector<256x128xbf16>, vector<128x128xbf16>, vector<256x128xf32> -> vector<256x128xf32>
    %99 = arith.addf %91, %98 : vector<256x128xf32>
    %c0_82 = arith.constant 0 : index
    %c2_83 = arith.constant 2 : index
    %c2_84 = arith.constant 2 : index
    %c0_85 = arith.constant 0 : index
    %100 = vector.load %arg9[%c0_82, %c2_83, %c2_84, %c0_85] : memref<1x18x18x128xf32, #tpu.memory_space<vmem>>, vector<1x16x16x128xf32>
    %101 = vector.shape_cast %100 : vector<1x16x16x128xf32> to vector<16x16x128xf32>
    %102 = arith.truncf %101 : vector<16x16x128xf32> to vector<16x16x128xbf16>
    %103 = vector.shape_cast %102 : vector<16x16x128xbf16> to vector<256x128xbf16>
    %c8 = arith.constant 8 : index
    %c0_86 = arith.constant 0 : index
    %c0_87 = arith.constant 0 : index
    %104 = vector.load %arg5[%c8, %c0_86, %c0_87] : memref<9x128x128xbf16, #tpu.memory_space<vmem>>, vector<1x128x128xbf16>
    %105 = vector.shape_cast %104 : vector<1x128x128xbf16> to vector<128x128xbf16>
    %cst_88 = arith.constant dense<0.000000e+00> : vector<256x128xf32>
    %106 = tpu.matmul %103, %105, %cst_88 {dimension_numbers = #tpu.dot_dimension_numbers<[1], [0], [0], [1], [0, 0, 1, 1], [], []>} : vector<256x128xbf16>, vector<128x128xbf16>, vector<256x128xf32> -> vector<256x128xf32>
    %107 = arith.addf %99, %106 : vector<256x128xf32>
    %c0_89 = arith.constant 0 : index
    %c0_90 = arith.constant 0 : index
    %108 = vector.load %arg6[%c0_89, %c0_90] : memref<1x128xf32, #tpu.memory_space<vmem>>, vector<1x128xf32>
    %109 = vector.broadcast %108 : vector<1x128xf32> to vector<256x128xf32>
    %110 = arith.addf %107, %109 : vector<256x128xf32>
    %cst_91 = arith.constant dense<0.000000e+00> : vector<128xf32>
    %111 = vector.multi_reduction <add>, %110, %cst_91 [0] : vector<256x128xf32> to vector<128xf32>
    %112 = vector.shape_cast %111 : vector<128xf32> to vector<1x128xf32>
    %c0_92 = arith.constant 0 : index
    %c0_93 = arith.constant 0 : index
    %c0_94 = arith.constant 0 : index
    %113 = vector.load %arg8[%c0_92, %c0_93, %c0_94] : memref<1x2x128xf32, #tpu.memory_space<vmem>>, vector<1x1x128xf32>
    %114 = vector.shape_cast %113 : vector<1x1x128xf32> to vector<1x128xf32>
    %115 = vector.shape_cast %112 : vector<1x128xf32> to vector<1x1x128xf32>
    tpu.vector_store %arg8[%c0_92, %c0_93, %c0_94], %115 {strides = array<i32>} : memref<1x2x128xf32, #tpu.memory_space<vmem>>, vector<1x1x128xf32>,
    %116 = arith.mulf %110, %110 : vector<256x128xf32>
    %cst_95 = arith.constant dense<0.000000e+00> : vector<128xf32>
    %117 = vector.multi_reduction <add>, %116, %cst_95 [0] : vector<256x128xf32> to vector<128xf32>
    %118 = vector.shape_cast %117 : vector<128xf32> to vector<1x128xf32>
    %c0_96 = arith.constant 0 : index
    %c1_97 = arith.constant 1 : index
    %c0_98 = arith.constant 0 : index
    %119 = vector.load %arg8[%c0_96, %c1_97, %c0_98] : memref<1x2x128xf32, #tpu.memory_space<vmem>>, vector<1x1x128xf32>
    %120 = vector.shape_cast %119 : vector<1x1x128xf32> to vector<1x128xf32>
    %121 = vector.shape_cast %118 : vector<1x128xf32> to vector<1x1x128xf32>
    tpu.vector_store %arg8[%c0_96, %c1_97, %c0_98], %121 {strides = array<i32>} : memref<1x2x128xf32, #tpu.memory_space<vmem>>, vector<1x1x128xf32>,
    %122 = vector.shape_cast %110 : vector<256x128xf32> to vector<16x16x128xf32>
    %c0_99 = arith.constant 0 : index
    %c0_100 = arith.constant 0 : index
    %c0_101 = arith.constant 0 : index
    %c0_102 = arith.constant 0 : index
    %123 = vector.load %arg7[%c0_99, %c0_100, %c0_101, %c0_102] : memref<1x16x16x128xf32, #tpu.memory_space<vmem>>, vector<1x16x16x128xf32>
    %124 = vector.shape_cast %123 : vector<1x16x16x128xf32> to vector<16x16x128xf32>
    %125 = vector.shape_cast %122 : vector<16x16x128xf32> to vector<1x16x16x128xf32>
    tpu.vector_store %arg7[%c0_99, %c0_100, %c0_101, %c0_102], %125 {strides = array<i32>} : memref<1x16x16x128xf32, #tpu.memory_space<vmem>>, vector<1x16x16x128xf32>,
    return
  }
  func.func @transform_0(%arg0: i32) -> (i32, i32, i32, i32) {
    %c0_i32 = arith.constant 0 : i32
    %c0_i32_0 = arith.constant 0 : i32
    %c0_i32_1 = arith.constant 0 : i32
    %c0_i32_2 = arith.constant 0 : i32
    return %arg0, %c0_i32, %c0_i32_0, %c0_i32_1 : i32, i32, i32, i32
  }
  func.func @transform_1(%arg0: i32) -> (i32, i32, i32) {
    %c0_i32 = arith.constant 0 : i32
    %c0_i32_0 = arith.constant 0 : i32
    %c0_i32_1 = arith.constant 0 : i32
    %c0_i32_2 = arith.constant 0 : i32
    return %c0_i32, %c0_i32_0, %c0_i32_1 : i32, i32, i32
  }
  func.func @transform_2(%arg0: i32) -> (i32, i32) {
    %c0_i32 = arith.constant 0 : i32
    %c0_i32_0 = arith.constant 0 : i32
    %c0_i32_1 = arith.constant 0 : i32
    return %c0_i32, %c0_i32_0 : i32, i32
  }
  func.func @transform_3(%arg0: i32) -> (i32, i32) {
    %c0_i32 = arith.constant 0 : i32
    %c0_i32_0 = arith.constant 0 : i32
    %c0_i32_1 = arith.constant 0 : i32
    return %c0_i32, %c0_i32_0 : i32, i32
  }
  func.func @transform_4(%arg0: i32) -> (i32, i32, i32) {
    %c0_i32 = arith.constant 0 : i32
    %c0_i32_0 = arith.constant 0 : i32
    %c0_i32_1 = arith.constant 0 : i32
    %c0_i32_2 = arith.constant 0 : i32
    return %c0_i32, %c0_i32_0, %c0_i32_1 : i32, i32, i32
  }
  func.func @transform_5(%arg0: i32) -> (i32, i32) {
    %c0_i32 = arith.constant 0 : i32
    %c0_i32_0 = arith.constant 0 : i32
    %c0_i32_1 = arith.constant 0 : i32
    return %c0_i32, %c0_i32_0 : i32, i32
  }
  func.func @transform_6(%arg0: i32) -> (i32, i32, i32, i32) {
    %c0_i32 = arith.constant 0 : i32
    %c0_i32_0 = arith.constant 0 : i32
    %c0_i32_1 = arith.constant 0 : i32
    %c0_i32_2 = arith.constant 0 : i32
    return %arg0, %c0_i32, %c0_i32_0, %c0_i32_1 : i32, i32, i32, i32
  }
  func.func @transform_7(%arg0: i32) -> (i32, i32, i32) {
    %c0_i32 = arith.constant 0 : i32
    %c0_i32_0 = arith.constant 0 : i32
    %c0_i32_1 = arith.constant 0 : i32
    return %arg0, %c0_i32, %c0_i32_0 : i32, i32, i32
  }
}

module attributes {stable_mosaic.version = 11 : i64} {
  func.func @_conv1_stats_kernel(%arg0: i32, %arg1: memref<1x18x18x128xbf16, #tpu.memory_space<vmem>>, %arg2: memref<9x128x128xbf16, #tpu.memory_space<vmem>>, %arg3: memref<1x128xf32, #tpu.memory_space<vmem>>, %arg4: memref<1x16x16x128xf32, #tpu.memory_space<vmem>>, %arg5: memref<1x2x128xf32, #tpu.memory_space<vmem>>) attributes {dimension_semantics = [#tpu.dimension_semantics<parallel>], iteration_bounds = array<i64: 2>, scalar_prefetch = 0 : i64, scratch_operands = 0 : i64, tpu.core_type = #tpu.core_type<tc>, window_params = [{transform_indices = @transform_0, window_bounds = array<i64: 1, 18, 18, 128>}, {pipeline_mode = #tpu.pipeline_mode<synchronous>, transform_indices = @transform_1, window_bounds = array<i64: 9, 128, 128>}, {pipeline_mode = #tpu.pipeline_mode<synchronous>, transform_indices = @transform_2, window_bounds = array<i64: 1, 128>}, {transform_indices = @transform_3, window_bounds = array<i64: 1, 16, 16, 128>}, {transform_indices = @transform_4, window_bounds = array<i64: 1, 2, 128>}]} {
    %cst = arith.constant 0.000000e+00 : f32
    %0 = vector.broadcast %cst : f32 to vector<256x128xf32>
    %c0 = arith.constant 0 : index
    %c0_0 = arith.constant 0 : index
    %c0_1 = arith.constant 0 : index
    %c0_2 = arith.constant 0 : index
    %1 = vector.load %arg1[%c0, %c0_0, %c0_1, %c0_2] : memref<1x18x18x128xbf16, #tpu.memory_space<vmem>>, vector<1x16x16x128xbf16>
    %2 = vector.shape_cast %1 : vector<1x16x16x128xbf16> to vector<16x16x128xbf16>
    %3 = vector.shape_cast %2 : vector<16x16x128xbf16> to vector<256x128xbf16>
    %c0_3 = arith.constant 0 : index
    %c0_4 = arith.constant 0 : index
    %c0_5 = arith.constant 0 : index
    %4 = vector.load %arg2[%c0_3, %c0_4, %c0_5] : memref<9x128x128xbf16, #tpu.memory_space<vmem>>, vector<1x128x128xbf16>
    %5 = vector.shape_cast %4 : vector<1x128x128xbf16> to vector<128x128xbf16>
    %cst_6 = arith.constant dense<0.000000e+00> : vector<256x128xf32>
    %6 = tpu.matmul %3, %5, %cst_6 {dimension_numbers = #tpu.dot_dimension_numbers<[1], [0], [0], [1], [0, 0, 1, 1], [], []>} : vector<256x128xbf16>, vector<128x128xbf16>, vector<256x128xf32> -> vector<256x128xf32>
    %7 = arith.addf %0, %6 : vector<256x128xf32>
    %c0_7 = arith.constant 0 : index
    %c0_8 = arith.constant 0 : index
    %c1 = arith.constant 1 : index
    %c0_9 = arith.constant 0 : index
    %8 = vector.load %arg1[%c0_7, %c0_8, %c1, %c0_9] : memref<1x18x18x128xbf16, #tpu.memory_space<vmem>>, vector<1x16x16x128xbf16>
    %9 = vector.shape_cast %8 : vector<1x16x16x128xbf16> to vector<16x16x128xbf16>
    %10 = vector.shape_cast %9 : vector<16x16x128xbf16> to vector<256x128xbf16>
    %c1_10 = arith.constant 1 : index
    %c0_11 = arith.constant 0 : index
    %c0_12 = arith.constant 0 : index
    %11 = vector.load %arg2[%c1_10, %c0_11, %c0_12] : memref<9x128x128xbf16, #tpu.memory_space<vmem>>, vector<1x128x128xbf16>
    %12 = vector.shape_cast %11 : vector<1x128x128xbf16> to vector<128x128xbf16>
    %cst_13 = arith.constant dense<0.000000e+00> : vector<256x128xf32>
    %13 = tpu.matmul %10, %12, %cst_13 {dimension_numbers = #tpu.dot_dimension_numbers<[1], [0], [0], [1], [0, 0, 1, 1], [], []>} : vector<256x128xbf16>, vector<128x128xbf16>, vector<256x128xf32> -> vector<256x128xf32>
    %14 = arith.addf %7, %13 : vector<256x128xf32>
    %c0_14 = arith.constant 0 : index
    %c0_15 = arith.constant 0 : index
    %c2 = arith.constant 2 : index
    %c0_16 = arith.constant 0 : index
    %15 = vector.load %arg1[%c0_14, %c0_15, %c2, %c0_16] : memref<1x18x18x128xbf16, #tpu.memory_space<vmem>>, vector<1x16x16x128xbf16>
    %16 = vector.shape_cast %15 : vector<1x16x16x128xbf16> to vector<16x16x128xbf16>
    %17 = vector.shape_cast %16 : vector<16x16x128xbf16> to vector<256x128xbf16>
    %c2_17 = arith.constant 2 : index
    %c0_18 = arith.constant 0 : index
    %c0_19 = arith.constant 0 : index
    %18 = vector.load %arg2[%c2_17, %c0_18, %c0_19] : memref<9x128x128xbf16, #tpu.memory_space<vmem>>, vector<1x128x128xbf16>
    %19 = vector.shape_cast %18 : vector<1x128x128xbf16> to vector<128x128xbf16>
    %cst_20 = arith.constant dense<0.000000e+00> : vector<256x128xf32>
    %20 = tpu.matmul %17, %19, %cst_20 {dimension_numbers = #tpu.dot_dimension_numbers<[1], [0], [0], [1], [0, 0, 1, 1], [], []>} : vector<256x128xbf16>, vector<128x128xbf16>, vector<256x128xf32> -> vector<256x128xf32>
    %21 = arith.addf %14, %20 : vector<256x128xf32>
    %c0_21 = arith.constant 0 : index
    %c1_22 = arith.constant 1 : index
    %c0_23 = arith.constant 0 : index
    %c0_24 = arith.constant 0 : index
    %22 = vector.load %arg1[%c0_21, %c1_22, %c0_23, %c0_24] : memref<1x18x18x128xbf16, #tpu.memory_space<vmem>>, vector<1x16x16x128xbf16>
    %23 = vector.shape_cast %22 : vector<1x16x16x128xbf16> to vector<16x16x128xbf16>
    %24 = vector.shape_cast %23 : vector<16x16x128xbf16> to vector<256x128xbf16>
    %c3 = arith.constant 3 : index
    %c0_25 = arith.constant 0 : index
    %c0_26 = arith.constant 0 : index
    %25 = vector.load %arg2[%c3, %c0_25, %c0_26] : memref<9x128x128xbf16, #tpu.memory_space<vmem>>, vector<1x128x128xbf16>
    %26 = vector.shape_cast %25 : vector<1x128x128xbf16> to vector<128x128xbf16>
    %cst_27 = arith.constant dense<0.000000e+00> : vector<256x128xf32>
    %27 = tpu.matmul %24, %26, %cst_27 {dimension_numbers = #tpu.dot_dimension_numbers<[1], [0], [0], [1], [0, 0, 1, 1], [], []>} : vector<256x128xbf16>, vector<128x128xbf16>, vector<256x128xf32> -> vector<256x128xf32>
    %28 = arith.addf %21, %27 : vector<256x128xf32>
    %c0_28 = arith.constant 0 : index
    %c1_29 = arith.constant 1 : index
    %c1_30 = arith.constant 1 : index
    %c0_31 = arith.constant 0 : index
    %29 = vector.load %arg1[%c0_28, %c1_29, %c1_30, %c0_31] : memref<1x18x18x128xbf16, #tpu.memory_space<vmem>>, vector<1x16x16x128xbf16>
    %30 = vector.shape_cast %29 : vector<1x16x16x128xbf16> to vector<16x16x128xbf16>
    %31 = vector.shape_cast %30 : vector<16x16x128xbf16> to vector<256x128xbf16>
    %c4 = arith.constant 4 : index
    %c0_32 = arith.constant 0 : index
    %c0_33 = arith.constant 0 : index
    %32 = vector.load %arg2[%c4, %c0_32, %c0_33] : memref<9x128x128xbf16, #tpu.memory_space<vmem>>, vector<1x128x128xbf16>
    %33 = vector.shape_cast %32 : vector<1x128x128xbf16> to vector<128x128xbf16>
    %cst_34 = arith.constant dense<0.000000e+00> : vector<256x128xf32>
    %34 = tpu.matmul %31, %33, %cst_34 {dimension_numbers = #tpu.dot_dimension_numbers<[1], [0], [0], [1], [0, 0, 1, 1], [], []>} : vector<256x128xbf16>, vector<128x128xbf16>, vector<256x128xf32> -> vector<256x128xf32>
    %35 = arith.addf %28, %34 : vector<256x128xf32>
    %c0_35 = arith.constant 0 : index
    %c1_36 = arith.constant 1 : index
    %c2_37 = arith.constant 2 : index
    %c0_38 = arith.constant 0 : index
    %36 = vector.load %arg1[%c0_35, %c1_36, %c2_37, %c0_38] : memref<1x18x18x128xbf16, #tpu.memory_space<vmem>>, vector<1x16x16x128xbf16>
    %37 = vector.shape_cast %36 : vector<1x16x16x128xbf16> to vector<16x16x128xbf16>
    %38 = vector.shape_cast %37 : vector<16x16x128xbf16> to vector<256x128xbf16>
    %c5 = arith.constant 5 : index
    %c0_39 = arith.constant 0 : index
    %c0_40 = arith.constant 0 : index
    %39 = vector.load %arg2[%c5, %c0_39, %c0_40] : memref<9x128x128xbf16, #tpu.memory_space<vmem>>, vector<1x128x128xbf16>
    %40 = vector.shape_cast %39 : vector<1x128x128xbf16> to vector<128x128xbf16>
    %cst_41 = arith.constant dense<0.000000e+00> : vector<256x128xf32>
    %41 = tpu.matmul %38, %40, %cst_41 {dimension_numbers = #tpu.dot_dimension_numbers<[1], [0], [0], [1], [0, 0, 1, 1], [], []>} : vector<256x128xbf16>, vector<128x128xbf16>, vector<256x128xf32> -> vector<256x128xf32>
    %42 = arith.addf %35, %41 : vector<256x128xf32>
    %c0_42 = arith.constant 0 : index
    %c2_43 = arith.constant 2 : index
    %c0_44 = arith.constant 0 : index
    %c0_45 = arith.constant 0 : index
    %43 = vector.load %arg1[%c0_42, %c2_43, %c0_44, %c0_45] : memref<1x18x18x128xbf16, #tpu.memory_space<vmem>>, vector<1x16x16x128xbf16>
    %44 = vector.shape_cast %43 : vector<1x16x16x128xbf16> to vector<16x16x128xbf16>
    %45 = vector.shape_cast %44 : vector<16x16x128xbf16> to vector<256x128xbf16>
    %c6 = arith.constant 6 : index
    %c0_46 = arith.constant 0 : index
    %c0_47 = arith.constant 0 : index
    %46 = vector.load %arg2[%c6, %c0_46, %c0_47] : memref<9x128x128xbf16, #tpu.memory_space<vmem>>, vector<1x128x128xbf16>
    %47 = vector.shape_cast %46 : vector<1x128x128xbf16> to vector<128x128xbf16>
    %cst_48 = arith.constant dense<0.000000e+00> : vector<256x128xf32>
    %48 = tpu.matmul %45, %47, %cst_48 {dimension_numbers = #tpu.dot_dimension_numbers<[1], [0], [0], [1], [0, 0, 1, 1], [], []>} : vector<256x128xbf16>, vector<128x128xbf16>, vector<256x128xf32> -> vector<256x128xf32>
    %49 = arith.addf %42, %48 : vector<256x128xf32>
    %c0_49 = arith.constant 0 : index
    %c2_50 = arith.constant 2 : index
    %c1_51 = arith.constant 1 : index
    %c0_52 = arith.constant 0 : index
    %50 = vector.load %arg1[%c0_49, %c2_50, %c1_51, %c0_52] : memref<1x18x18x128xbf16, #tpu.memory_space<vmem>>, vector<1x16x16x128xbf16>
    %51 = vector.shape_cast %50 : vector<1x16x16x128xbf16> to vector<16x16x128xbf16>
    %52 = vector.shape_cast %51 : vector<16x16x128xbf16> to vector<256x128xbf16>
    %c7 = arith.constant 7 : index
    %c0_53 = arith.constant 0 : index
    %c0_54 = arith.constant 0 : index
    %53 = vector.load %arg2[%c7, %c0_53, %c0_54] : memref<9x128x128xbf16, #tpu.memory_space<vmem>>, vector<1x128x128xbf16>
    %54 = vector.shape_cast %53 : vector<1x128x128xbf16> to vector<128x128xbf16>
    %cst_55 = arith.constant dense<0.000000e+00> : vector<256x128xf32>
    %55 = tpu.matmul %52, %54, %cst_55 {dimension_numbers = #tpu.dot_dimension_numbers<[1], [0], [0], [1], [0, 0, 1, 1], [], []>} : vector<256x128xbf16>, vector<128x128xbf16>, vector<256x128xf32> -> vector<256x128xf32>
    %56 = arith.addf %49, %55 : vector<256x128xf32>
    %c0_56 = arith.constant 0 : index
    %c2_57 = arith.constant 2 : index
    %c2_58 = arith.constant 2 : index
    %c0_59 = arith.constant 0 : index
    %57 = vector.load %arg1[%c0_56, %c2_57, %c2_58, %c0_59] : memref<1x18x18x128xbf16, #tpu.memory_space<vmem>>, vector<1x16x16x128xbf16>
    %58 = vector.shape_cast %57 : vector<1x16x16x128xbf16> to vector<16x16x128xbf16>
    %59 = vector.shape_cast %58 : vector<16x16x128xbf16> to vector<256x128xbf16>
    %c8 = arith.constant 8 : index
    %c0_60 = arith.constant 0 : index
    %c0_61 = arith.constant 0 : index
    %60 = vector.load %arg2[%c8, %c0_60, %c0_61] : memref<9x128x128xbf16, #tpu.memory_space<vmem>>, vector<1x128x128xbf16>
    %61 = vector.shape_cast %60 : vector<1x128x128xbf16> to vector<128x128xbf16>
    %cst_62 = arith.constant dense<0.000000e+00> : vector<256x128xf32>
    %62 = tpu.matmul %59, %61, %cst_62 {dimension_numbers = #tpu.dot_dimension_numbers<[1], [0], [0], [1], [0, 0, 1, 1], [], []>} : vector<256x128xbf16>, vector<128x128xbf16>, vector<256x128xf32> -> vector<256x128xf32>
    %63 = arith.addf %56, %62 : vector<256x128xf32>
    %c0_63 = arith.constant 0 : index
    %c0_64 = arith.constant 0 : index
    %64 = vector.load %arg3[%c0_63, %c0_64] : memref<1x128xf32, #tpu.memory_space<vmem>>, vector<1x128xf32>
    %65 = vector.broadcast %64 : vector<1x128xf32> to vector<256x128xf32>
    %66 = arith.addf %63, %65 : vector<256x128xf32>
    %cst_65 = arith.constant dense<0.000000e+00> : vector<128xf32>
    %67 = vector.multi_reduction <add>, %66, %cst_65 [0] : vector<256x128xf32> to vector<128xf32>
    %68 = vector.shape_cast %67 : vector<128xf32> to vector<1x128xf32>
    %c0_66 = arith.constant 0 : index
    %c0_67 = arith.constant 0 : index
    %c0_68 = arith.constant 0 : index
    %69 = vector.load %arg5[%c0_66, %c0_67, %c0_68] : memref<1x2x128xf32, #tpu.memory_space<vmem>>, vector<1x1x128xf32>
    %70 = vector.shape_cast %69 : vector<1x1x128xf32> to vector<1x128xf32>
    %71 = vector.shape_cast %68 : vector<1x128xf32> to vector<1x1x128xf32>
    tpu.vector_store %arg5[%c0_66, %c0_67, %c0_68], %71 {strides = array<i32>} : memref<1x2x128xf32, #tpu.memory_space<vmem>>, vector<1x1x128xf32>,
    %72 = arith.mulf %66, %66 : vector<256x128xf32>
    %cst_69 = arith.constant dense<0.000000e+00> : vector<128xf32>
    %73 = vector.multi_reduction <add>, %72, %cst_69 [0] : vector<256x128xf32> to vector<128xf32>
    %74 = vector.shape_cast %73 : vector<128xf32> to vector<1x128xf32>
    %c0_70 = arith.constant 0 : index
    %c1_71 = arith.constant 1 : index
    %c0_72 = arith.constant 0 : index
    %75 = vector.load %arg5[%c0_70, %c1_71, %c0_72] : memref<1x2x128xf32, #tpu.memory_space<vmem>>, vector<1x1x128xf32>
    %76 = vector.shape_cast %75 : vector<1x1x128xf32> to vector<1x128xf32>
    %77 = vector.shape_cast %74 : vector<1x128xf32> to vector<1x1x128xf32>
    tpu.vector_store %arg5[%c0_70, %c1_71, %c0_72], %77 {strides = array<i32>} : memref<1x2x128xf32, #tpu.memory_space<vmem>>, vector<1x1x128xf32>,
    %78 = vector.shape_cast %66 : vector<256x128xf32> to vector<16x16x128xf32>
    %c0_73 = arith.constant 0 : index
    %c0_74 = arith.constant 0 : index
    %c0_75 = arith.constant 0 : index
    %c0_76 = arith.constant 0 : index
    %79 = vector.load %arg4[%c0_73, %c0_74, %c0_75, %c0_76] : memref<1x16x16x128xf32, #tpu.memory_space<vmem>>, vector<1x16x16x128xf32>
    %80 = vector.shape_cast %79 : vector<1x16x16x128xf32> to vector<16x16x128xf32>
    %81 = vector.shape_cast %78 : vector<16x16x128xf32> to vector<1x16x16x128xf32>
    tpu.vector_store %arg4[%c0_73, %c0_74, %c0_75, %c0_76], %81 {strides = array<i32>} : memref<1x16x16x128xf32, #tpu.memory_space<vmem>>, vector<1x16x16x128xf32>,
    return
  }
  func.func @transform_0(%arg0: i32) -> (i32, i32, i32, i32) {
    %c0_i32 = arith.constant 0 : i32
    %c0_i32_0 = arith.constant 0 : i32
    %c0_i32_1 = arith.constant 0 : i32
    %c0_i32_2 = arith.constant 0 : i32
    return %arg0, %c0_i32, %c0_i32_0, %c0_i32_1 : i32, i32, i32, i32
  }
  func.func @transform_1(%arg0: i32) -> (i32, i32, i32) {
    %c0_i32 = arith.constant 0 : i32
    %c0_i32_0 = arith.constant 0 : i32
    %c0_i32_1 = arith.constant 0 : i32
    %c0_i32_2 = arith.constant 0 : i32
    return %c0_i32, %c0_i32_0, %c0_i32_1 : i32, i32, i32
  }
  func.func @transform_2(%arg0: i32) -> (i32, i32) {
    %c0_i32 = arith.constant 0 : i32
    %c0_i32_0 = arith.constant 0 : i32
    %c0_i32_1 = arith.constant 0 : i32
    return %c0_i32, %c0_i32_0 : i32, i32
  }
  func.func @transform_3(%arg0: i32) -> (i32, i32, i32, i32) {
    %c0_i32 = arith.constant 0 : i32
    %c0_i32_0 = arith.constant 0 : i32
    %c0_i32_1 = arith.constant 0 : i32
    %c0_i32_2 = arith.constant 0 : i32
    return %arg0, %c0_i32, %c0_i32_0, %c0_i32_1 : i32, i32, i32, i32
  }
  func.func @transform_4(%arg0: i32) -> (i32, i32, i32) {
    %c0_i32 = arith.constant 0 : i32
    %c0_i32_0 = arith.constant 0 : i32
    %c0_i32_1 = arith.constant 0 : i32
    return %arg0, %c0_i32, %c0_i32_0 : i32, i32, i32
  }
}

module attributes {stable_mosaic.version = 11 : i64} {
  func.func @_bn2_residual_kernel(%arg0: i32, %arg1: memref<1x16x16x128xf32, #tpu.memory_space<vmem>>, %arg2: memref<2x2x128xf32, #tpu.memory_space<vmem>>, %arg3: memref<1x128xf32, #tpu.memory_space<vmem>>, %arg4: memref<1x128xf32, #tpu.memory_space<vmem>>, %arg5: memref<1x16x16x128xf32, #tpu.memory_space<vmem>>, %arg6: memref<1x16x16x128xf32, #tpu.memory_space<vmem>>) attributes {dimension_semantics = [#tpu.dimension_semantics<parallel>], iteration_bounds = array<i64: 2>, scalar_prefetch = 0 : i64, scratch_operands = 0 : i64, tpu.core_type = #tpu.core_type<tc>, window_params = [{transform_indices = @transform_0, window_bounds = array<i64: 1, 16, 16, 128>}, {pipeline_mode = #tpu.pipeline_mode<synchronous>, transform_indices = @transform_1, window_bounds = array<i64: 2, 2, 128>}, {pipeline_mode = #tpu.pipeline_mode<synchronous>, transform_indices = @transform_2, window_bounds = array<i64: 1, 128>}, {pipeline_mode = #tpu.pipeline_mode<synchronous>, transform_indices = @transform_3, window_bounds = array<i64: 1, 128>}, {transform_indices = @transform_4, window_bounds = array<i64: 1, 16, 16, 128>}, {transform_indices = @transform_5, window_bounds = array<i64: 1, 16, 16, 128>}]} {
    %c0 = arith.constant 0 : index
    %c0_0 = arith.constant 0 : index
    %c0_1 = arith.constant 0 : index
    %0 = vector.load %arg2[%c0, %c0_0, %c0_1] : memref<2x2x128xf32, #tpu.memory_space<vmem>>, vector<2x2x128xf32>
    %cst = arith.constant dense<0.000000e+00> : vector<2x128xf32>
    %1 = vector.multi_reduction <add>, %0, %cst [0] : vector<2x2x128xf32> to vector<2x128xf32>
    %2 = vector.extract_strided_slice %1 {offsets = [0, 0], sizes = [1, 128], strides = [1, 1]} : vector<2x128xf32> to vector<1x128xf32>
    %cst_2 = arith.constant 0.001953125 : f32
    %3 = vector.broadcast %cst_2 : f32 to vector<1x128xf32>
    %4 = arith.mulf %2, %3 : vector<1x128xf32>
    %5 = vector.extract_strided_slice %1 {offsets = [1, 0], sizes = [1, 128], strides = [1, 1]} : vector<2x128xf32> to vector<1x128xf32>
    %cst_3 = arith.constant 0.001953125 : f32
    %6 = vector.broadcast %cst_3 : f32 to vector<1x128xf32>
    %7 = arith.mulf %5, %6 : vector<1x128xf32>
    %8 = arith.mulf %4, %4 : vector<1x128xf32>
    %9 = arith.subf %7, %8 : vector<1x128xf32>
    %cst_4 = arith.constant 0.000000e+00 : f32
    %10 = vector.broadcast %cst_4 : f32 to vector<1x128xf32>
    %11 = arith.maximumf %9, %10 : vector<1x128xf32>
    %c0_5 = arith.constant 0 : index
    %c0_6 = arith.constant 0 : index
    %12 = vector.load %arg3[%c0_5, %c0_6] : memref<1x128xf32, #tpu.memory_space<vmem>>, vector<1x128xf32>
    %cst_7 = arith.constant 9.99999974E-6 : f32
    %13 = vector.broadcast %cst_7 : f32 to vector<1x128xf32>
    %14 = arith.addf %11, %13 : vector<1x128xf32>
    %15 = math.rsqrt %14 : vector<1x128xf32>
    %16 = arith.mulf %12, %15 : vector<1x128xf32>
    %c0_8 = arith.constant 0 : index
    %c0_9 = arith.constant 0 : index
    %17 = vector.load %arg4[%c0_8, %c0_9] : memref<1x128xf32, #tpu.memory_space<vmem>>, vector<1x128xf32>
    %18 = arith.mulf %4, %16 : vector<1x128xf32>
    %19 = arith.subf %17, %18 : vector<1x128xf32>
    %c0_10 = arith.constant 0 : index
    %c0_11 = arith.constant 0 : index
    %c0_12 = arith.constant 0 : index
    %c0_13 = arith.constant 0 : index
    %20 = vector.load %arg1[%c0_10, %c0_11, %c0_12, %c0_13] : memref<1x16x16x128xf32, #tpu.memory_space<vmem>>, vector<1x16x16x128xf32>
    %21 = vector.shape_cast %20 : vector<1x16x16x128xf32> to vector<16x16x128xf32>
    %22 = vector.shape_cast %21 : vector<16x16x128xf32> to vector<256x128xf32>
    %c0_14 = arith.constant 0 : index
    %c0_15 = arith.constant 0 : index
    %c0_16 = arith.constant 0 : index
    %c0_17 = arith.constant 0 : index
    %23 = vector.load %arg5[%c0_14, %c0_15, %c0_16, %c0_17] : memref<1x16x16x128xf32, #tpu.memory_space<vmem>>, vector<1x16x16x128xf32>
    %24 = vector.shape_cast %23 : vector<1x16x16x128xf32> to vector<16x16x128xf32>
    %25 = vector.shape_cast %24 : vector<16x16x128xf32> to vector<256x128xf32>
    %26 = vector.broadcast %16 : vector<1x128xf32> to vector<256x128xf32>
    %27 = arith.mulf %22, %26 : vector<256x128xf32>
    %28 = vector.broadcast %19 : vector<1x128xf32> to vector<256x128xf32>
    %29 = arith.addf %27, %28 : vector<256x128xf32>
    %30 = arith.addf %29, %25 : vector<256x128xf32>
    %31 = vector.shape_cast %30 : vector<256x128xf32> to vector<16x16x128xf32>
    %c0_18 = arith.constant 0 : index
    %c0_19 = arith.constant 0 : index
    %c0_20 = arith.constant 0 : index
    %c0_21 = arith.constant 0 : index
    %32 = vector.load %arg6[%c0_18, %c0_19, %c0_20, %c0_21] : memref<1x16x16x128xf32, #tpu.memory_space<vmem>>, vector<1x16x16x128xf32>
    %33 = vector.shape_cast %32 : vector<1x16x16x128xf32> to vector<16x16x128xf32>
    %34 = vector.shape_cast %31 : vector<16x16x128xf32> to vector<1x16x16x128xf32>
    tpu.vector_store %arg6[%c0_18, %c0_19, %c0_20, %c0_21], %34 {strides = array<i32>} : memref<1x16x16x128xf32, #tpu.memory_space<vmem>>, vector<1x16x16x128xf32>,
    return
  }
  func.func @transform_0(%arg0: i32) -> (i32, i32, i32, i32) {
    %c0_i32 = arith.constant 0 : i32
    %c0_i32_0 = arith.constant 0 : i32
    %c0_i32_1 = arith.constant 0 : i32
    %c0_i32_2 = arith.constant 0 : i32
    return %arg0, %c0_i32, %c0_i32_0, %c0_i32_1 : i32, i32, i32, i32
  }
  func.func @transform_1(%arg0: i32) -> (i32, i32, i32) {
    %c0_i32 = arith.constant 0 : i32
    %c0_i32_0 = arith.constant 0 : i32
    %c0_i32_1 = arith.constant 0 : i32
    %c0_i32_2 = arith.constant 0 : i32
    return %c0_i32, %c0_i32_0, %c0_i32_1 : i32, i32, i32
  }
  func.func @transform_2(%arg0: i32) -> (i32, i32) {
    %c0_i32 = arith.constant 0 : i32
    %c0_i32_0 = arith.constant 0 : i32
    %c0_i32_1 = arith.constant 0 : i32
    return %c0_i32, %c0_i32_0 : i32, i32
  }
  func.func @transform_3(%arg0: i32) -> (i32, i32) {
    %c0_i32 = arith.constant 0 : i32
    %c0_i32_0 = arith.constant 0 : i32
    %c0_i32_1 = arith.constant 0 : i32
    return %c0_i32, %c0_i32_0 : i32, i32
  }
  func.func @transform_4(%arg0: i32) -> (i32, i32, i32, i32) {
    %c0_i32 = arith.constant 0 : i32
    %c0_i32_0 = arith.constant 0 : i32
    %c0_i32_1 = arith.constant 0 : i32
    %c0_i32_2 = arith.constant 0 : i32
    return %arg0, %c0_i32, %c0_i32_0, %c0_i32_1 : i32, i32, i32, i32
  }
  func.func @transform_5(%arg0: i32) -> (i32, i32, i32, i32) {
    %c0_i32 = arith.constant 0 : i32
    %c0_i32_0 = arith.constant 0 : i32
    %c0_i32_1 = arith.constant 0 : i32
    %c0_i32_2 = arith.constant 0 : i32
    return %arg0, %c0_i32, %c0_i32_0, %c0_i32_1 : i32, i32, i32, i32
  }
}

</mosaic_0001>

<llo_original>
// kernel: resnet_block.5
$region0: #{resnet_block.5}
  #allocation0 [shape = 'u32[]', space=smem, size = 0x4, offset = 0x4, fixed_abs, tag = 'smem constant byte address 0x4 - core index']
  #allocation1 [shape = 'u32[72,128]{1,0:T(1,128)}', space=vmem, size = 0x9000, scoped, tag = 'internal scratch']
  %s0 = inlined_call_operand.vmem [shape: f32[2,16,16,128], index: 0, kind: input, shape index: {}]
  %s1 = inlined_call_operand.vmem [shape: f32[2,2,128], index: 1, kind: input, shape index: {}]
  %s2 = inlined_call_operand.vmem [shape: f32[1,128], index: 2, kind: input, shape index: {}]
  %s3 = inlined_call_operand.vmem [shape: f32[1,128], index: 3, kind: input, shape index: {}]
  %s4 = inlined_call_operand.vmem [shape: f32[2,16,16,128], index: 4, kind: input, shape index: {}]
  %s5 = inlined_call_operand.vmem [shape: f32[2,16,16,128], index: 5, kind: output, shape index: {}]
  %s6 = sld [smem:[#allocation0]]
  $region53: #{resnet_block.5} parent=0
    _
  %s8 = ssub.s32 1, %s6
  %s9 = scalar_select 0, %s8, %s6
  loop: start=0, step=1, limit=4
  $region2: #{resnet_block.5} parent=0 // loop_pre_header
    _
  $region3: #{resnet_block.5} parent=0 // loop_header
    %s11 = sphi 0, %s15
    %p12 = scmp.ge.s32.totalorder %s11, 4
    %s21 = sphi 0, %s23
    %s24 = sphi 0, %s21
    %s25 = sphi 0, %s24
    %s41 = sphi 0, %s25
    %s45 = sphi 0, %s45
    %s47 = sphi 0, %s45
    %s48 = sphi 0, %s47
    %s62 = sphi 0, %s48
    %s66 = sphi 0, %s66
    %s68 = sphi 0, %s66
    %s69 = sphi 0, %s68
    %s83 = sphi 0, %s69
    %s87 = sphi 0, %s87
    %s89 = sphi 0, %s87
    %s90 = sphi 0, %s89
    %s104 = sphi 0, %s90
    %s110 = sphi 0, %s112
    %s113 = sphi 0, %s110
    %s114 = sphi 0, %s113
    %s130 = sphi 0, %s114
    %s136 = sphi 0, %s138
    %s139 = sphi 0, %s136
    %s140 = sphi 0, %s139
    %s156 = sphi 0, %s140
  $region4: #{resnet_block.5} parent=0 // loop_header_branch
    %14 = sbr.rel (%p12) target = $region8
  $region5: #{resnet_block.5} parent=0 // loop_body
    %s16 = ssub.s32 %s11, 1
    %s17 = ssub.s32 %s11, 2
    %s18 = sadd.s32 %s11, 1
    %s19 = ssub.s32 %s11, %s18
    %p20 = scmp.eq.s32.totalorder %s19, 0
    %s22 = sadd.s32 %s21, 1
    %s23 = scalar_select %p20, %s21, %s22
    %p26 = pneg %p20
    %p27 = scmp.eq.s32.totalorder %s11, 1
    %p28 = por %p26, %p27
    %p29 = scmp.ne.s32.totalorder %s21, %s24
    %p30 = scmp.eq.s32.totalorder %s11, 0
    %p31 = por %p29, %p30
    %p32 = scmp.ne.s32.totalorder %s21, %s24
    %p33 = scmp.eq.s32.totalorder %s16, 1
    %p34 = por %p32, %p33
    %p35 = scmp.ne.s32.totalorder %s24, %s25
    %p36 = scmp.eq.s32.totalorder %s16, 0
    %p37 = por %p35, %p36
    %p38 = scmp.ne.s32.totalorder %s24, %s25
    %p39 = scmp.eq.s32.totalorder %s17, 1
    %p40 = por %p38, %p39
    %p42 = scmp.ne.s32.totalorder %s25, %s41
    %p43 = scmp.eq.s32.totalorder %s17, 0
    %p44 = por %p42, %p43
    %s46 = sadd.s32 %s45, 1
    %p49 = scmp.eq.s32.totalorder %s11, 1
    %p50 = scmp.ne.s32.totalorder %s45, %s47
    %p51 = scmp.eq.s32.totalorder %s11, 0
    %p52 = por %p50, %p51
    %p53 = scmp.ne.s32.totalorder %s45, %s47
    %p54 = scmp.eq.s32.totalorder %s16, 1
    %p55 = por %p53, %p54
    %p56 = scmp.ne.s32.totalorder %s47, %s48
    %p57 = scmp.eq.s32.totalorder %s16, 0
    %p58 = por %p56, %p57
    %p59 = scmp.ne.s32.totalorder %s47, %s48
    %p60 = scmp.eq.s32.totalorder %s17, 1
    %p61 = por %p59, %p60
    %p63 = scmp.ne.s32.totalorder %s48, %s62
    %p64 = scmp.eq.s32.totalorder %s17, 0
    %p65 = por %p63, %p64
    %s67 = sadd.s32 %s66, 1
    %p70 = scmp.eq.s32.totalorder %s11, 1
    %p71 = scmp.ne.s32.totalorder %s66, %s68
    %p72 = scmp.eq.s32.totalorder %s11, 0
    %p73 = por %p71, %p72
    %p74 = scmp.ne.s32.totalorder %s66, %s68
    %p75 = scmp.eq.s32.totalorder %s16, 1
    %p76 = por %p74, %p75
    %p77 = scmp.ne.s32.totalorder %s68, %s69
    %p78 = scmp.eq.s32.totalorder %s16, 0
    %p79 = por %p77, %p78
    %p80 = scmp.ne.s32.totalorder %s68, %s69
    %p81 = scmp.eq.s32.totalorder %s17, 1
    %p82 = por %p80, %p81
    %p84 = scmp.ne.s32.totalorder %s69, %s83
    %p85 = scmp.eq.s32.totalorder %s17, 0
    %p86 = por %p84, %p85
    %s88 = sadd.s32 %s87, 1
    %p91 = scmp.eq.s32.totalorder %s11, 1
    %p92 = scmp.ne.s32.totalorder %s87, %s89
    %p93 = scmp.eq.s32.totalorder %s11, 0
    %p94 = por %p92, %p93
    %p95 = scmp.ne.s32.totalorder %s87, %s89
    %p96 = scmp.eq.s32.totalorder %s16, 1
    %p97 = por %p95, %p96
    %p98 = scmp.ne.s32.totalorder %s89, %s90
    %p99 = scmp.eq.s32.totalorder %s16, 0
    %p100 = por %p98, %p99
    %p101 = scmp.ne.s32.totalorder %s89, %s90
    %p102 = scmp.eq.s32.totalorder %s17, 1
    %p103 = por %p101, %p102
    %p105 = scmp.ne.s32.totalorder %s90, %s104
    %p106 = scmp.eq.s32.totalorder %s17, 0
    %p107 = por %p105, %p106
    %s108 = ssub.s32 %s11, %s18
    %p109 = scmp.eq.s32.totalorder %s108, 0
    %s111 = sadd.s32 %s110, 1
    %s112 = scalar_select %p109, %s110, %s111
    %p115 = pneg %p109
    %p116 = scmp.eq.s32.totalorder %s11, 1
    %p117 = por %p115, %p116
    %p118 = scmp.ne.s32.totalorder %s110, %s113
    %p119 = scmp.eq.s32.totalorder %s11, 0
    %p120 = por %p118, %p119
    %p121 = scmp.ne.s32.totalorder %s110, %s113
    %p122 = scmp.eq.s32.totalorder %s16, 1
    %p123 = por %p121, %p122
    %p124 = scmp.ne.s32.totalorder %s113, %s114
    %p125 = scmp.eq.s32.totalorder %s16, 0
    %p126 = por %p124, %p125
    %p127 = scmp.ne.s32.totalorder %s113, %s114
    %p128 = scmp.eq.s32.totalorder %s17, 1
    %p129 = por %p127, %p128
    %p131 = scmp.ne.s32.totalorder %s114, %s130
    %p132 = scmp.eq.s32.totalorder %s17, 0
    %p133 = por %p131, %p132
    %s134 = ssub.s32 %s11, %s18
    %p135 = scmp.eq.s32.totalorder %s134, 0
    %s137 = sadd.s32 %s136, 1
    %s138 = scalar_select %p135, %s136, %s137
    %p141 = pneg %p135
    %p142 = scmp.eq.s32.totalorder %s11, 1
    %p143 = por %p141, %p142
    %p144 = scmp.ne.s32.totalorder %s136, %s139
    %p145 = scmp.eq.s32.totalorder %s11, 0
    %p146 = por %p144, %p145
    %p147 = scmp.ne.s32.totalorder %s136, %s139
    %p148 = scmp.eq.s32.totalorder %s16, 1
    %p149 = por %p147, %p148
    %p150 = scmp.ne.s32.totalorder %s139, %s140
    %p151 = scmp.eq.s32.totalorder %s16, 0
    %p152 = por %p150, %p151
    %p153 = scmp.ne.s32.totalorder %s139, %s140
    %p154 = scmp.eq.s32.totalorder %s17, 1
    %p155 = por %p153, %p154
    %p157 = scmp.ne.s32.totalorder %s140, %s156
    %p158 = scmp.eq.s32.totalorder %s17, 0
    %p159 = por %p157, %p158
    %p160 = scmp.le.s32.totalorder 1, %s11
    %p161 = scmp.lt.s32.totalorder %s11, 3
    %p162 = pnand %p160, %p161
    %p163 = pneg %p162
    // Predicated region
    $region9: #{resnet_block.5} parent=5 // pred_check
      _
    $region10: #{resnet_block.5} parent=5 // pred_check_branch
      %165 = sbr.rel (%p162) target = $region12
    $region11: #{resnet_block.5} parent=5 // pred_region
      %s166 = ssub.s32 %s11, 1
      // Predicated region
      $region13: #{resnet_block.5} parent=11 // pred_check
        %p167 = pneg %p58
      $region14: #{resnet_block.5} parent=11 // pred_check_branch
        %169 = sbr.rel (%p167) target = $region16
      $region15: #{resnet_block.5} parent=11 // pred_region
        _
      $region16: #{resnet_block.5} parent=11 // pred_fallthru
        _
      // Predicated region
      $region17: #{resnet_block.5} parent=11 // pred_check
        %p170 = pneg %p79
      $region18: #{resnet_block.5} parent=11 // pred_check_branch
        %172 = sbr.rel (%p170) target = $region20
      $region19: #{resnet_block.5} parent=11 // pred_region
        _
      $region20: #{resnet_block.5} parent=11 // pred_fallthru
        _
      // Predicated region
      $region21: #{resnet_block.5} parent=11 // pred_check
        %p173 = pneg %p100
      $region22: #{resnet_block.5} parent=11 // pred_check_branch
        %175 = sbr.rel (%p173) target = $region24
      $region23: #{resnet_block.5} parent=11 // pred_region
        _
      $region24: #{resnet_block.5} parent=11 // pred_fallthru
        _
    $region12: #{resnet_block.5} parent=5 // pred_fallthru
      _
    %p176 = scmp.lt.s32.totalorder %s11, 2
    // Predicated region
    $region25: #{resnet_block.5} parent=5 // pred_check
      %p177 = pneg %p176
    $region26: #{resnet_block.5} parent=5 // pred_check_branch
      %179 = sbr.rel (%p177) target = $region28
    $region27: #{resnet_block.5} parent=5 // pred_region
      // Predicated region
      $region29: #{resnet_block.5} parent=27 // pred_check
        %p180 = pneg %p31
      $region30: #{resnet_block.5} parent=27 // pred_check_branch
        %182 = sbr.rel (%p180) target = $region32
      $region31: #{resnet_block.5} parent=27 // pred_region
        %p183 = scmp.lt.s32.totalorder %s11, 1
        %s184 = scalar_select %p183, %s11, 1
        %s185 = smul.addr %s184, 32
        %s186 = smul.addr %s185, 8
        %s187 = scalar_lea.vmem %s0, %s186
      $region32: #{resnet_block.5} parent=27 // pred_fallthru
        _
      // Predicated region
      $region33: #{resnet_block.5} parent=27 // pred_check
        %p188 = pneg %p120
      $region34: #{resnet_block.5} parent=27 // pred_check_branch
        %190 = sbr.rel (%p188) target = $region36
      $region35: #{resnet_block.5} parent=27 // pred_region
        %p191 = scmp.lt.s32.totalorder %s11, 1
        %s192 = scalar_select %p191, %s11, 1
        %s193 = smul.addr %s192, 32
        %s194 = smul.addr %s193, 8
        %s195 = scalar_lea.vmem %s4, %s194
      $region36: #{resnet_block.5} parent=27 // pred_fallthru
        _
    $region28: #{resnet_block.5} parent=5 // pred_fallthru
      _
    %p196 = scmp.le.s32.totalorder 1, %s11
    %p197 = scmp.lt.s32.totalorder %s11, 3
    %p198 = pnand %p196, %p197
    %p199 = pneg %p198
    // Predicated region
    $region37: #{resnet_block.5} parent=5 // pred_check
      _
    $region38: #{resnet_block.5} parent=5 // pred_check_branch
      %201 = sbr.rel (%p198) target = $region40
    $region39: #{resnet_block.5} parent=5 // pred_region
      %s202 = ssub.s32 %s11, 1
      %p203 = scmp.lt.s32.totalorder %s16, 1
      %s204 = scalar_select %p203, %s16, 1
      %s205 = smul.addr %s204, 32
      %s206 = smul.addr %s205, 8
      %s207 = scalar_lea.vmem %s0, %s206
      %p208 = pneg %p37
      %p209 = pneg %p34
      %p210 = pneg %p58
      %p211 = pneg %p55
      %p212 = pneg %p79
      %p213 = pneg %p76
      %p214 = pneg %p100
      %p215 = pneg %p97
      %p216 = scmp.lt.s32.totalorder %s16, 1
      %s217 = scalar_select %p216, %s16, 1
      %s218 = smul.addr %s217, 32
      %s219 = smul.addr %s218, 8
      %s220 = scalar_lea.vmem %s4, %s219
      %p221 = pneg %p126
      %p222 = pneg %p123
      %p223 = pneg %p152
      %p224 = pneg %p149
      %p225 = scmp.lt.s32.totalorder %s16, 1
      %s226 = scalar_select %p225, %s16, 1
      %s227 = smul.addr %s226, 32
      %s228 = smul.addr %s227, 8
      %s229 = scalar_lea.vmem %s5, %s228
      %p230 = scmp.lt.s32.totalorder %s16, 1
      %s231 = scalar_select %p230, %s16, 1
      %s232 = smul.addr %s231, 32
      %s233 = smul.addr %s232, 8
      %s234 = scalar_lea.vmem %s0, %s233
      %p235 = scmp.lt.s32.totalorder %s16, 1
      %s236 = scalar_select %p235, %s16, 1
      %s237 = smul.addr %s236, 32
      %s238 = smul.addr %s237, 8
      %s239 = scalar_lea.vmem %s4, %s238
      %p240 = scmp.lt.s32.totalorder %s16, 1
      %s241 = scalar_select %p240, %s16, 1
      %s242 = smul.addr %s241, 32
      %s243 = smul.addr %s242, 8
      %s244 = scalar_lea.vmem %s5, %s243
      %v245 = vld [vmem:[%s1] sm:$0x3]
      %v246 = vld [vmem:[%s1 + $0x2] sm:$0x3]
      %vm247 = vcmask 1041408
      %v248 = vsel %vm247, %v245, 0.0
      %v249 = vsel %vm247, %v246, 0.0
      %v250 = vadd.f32 %v248, %v249
      %v251 = vmul.f32 %v250, 0.001953125
      %v252 = vmul.f32 %v251, %v251
      %v254 = vrot.slane %v252, 7
      %v256 = vsub.f32 %v251, %v254
      %v257 = vmax.f32 %v256, 0.0
      %v258 = vld [vmem:[%s2] sm:$0x1]
      %v259 = vadd.f32 %v257, 1e-05
      %v260 = vrsqrt.pop %v259
      %v261 = vmul.f32 %v260, %v259
      %v262 = vmul.f32 %v261, %v260
      %v263 = vmul.f32 0.5, %v262
      %v264 = vsub.f32 1.5, %v263
      %v265 = vmul.f32 %v260, %v264
      %vm266 = vweird.f32 %v259
      %vm267 = vweird.f32 %v260
      %vm268 = vmor %vm266, %vm267
      %v269 = vsel %vm268, %v260, %v265
      %271 = vst [vmem:[#allocation1] sm:$0xff] %v269
      %s272 = scalar_lea.vmem [#allocation1], 1
      %v273 = vld [vmem:[%s272] ss:$9 sm:$0xff]
      %v275 = vmul.f32 %v258, %v273
      %v276 = vld [vmem:[%s3] sm:$0x1]
      %v277 = vmul.f32 %v251, %v275
      %v278 = vsub.f32 %v276, %v277
      %v279 = vld [vmem:[%s234] sm:$0xff]
      %v280 = vld [vmem:[%s234 + $0x8] sm:$0xff]
      %v281 = vld [vmem:[%s234 + $0x10] sm:$0xff]
      %v282 = vld [vmem:[%s234 + $0x18] sm:$0xff]
      %v283 = vld [vmem:[%s234 + $0x20] sm:$0xff]
      %v284 = vld [vmem:[%s234 + $0x28] sm:$0xff]
      %v285 = vld [vmem:[%s234 + $0x30] sm:$0xff]
      %v286 = vld [vmem:[%s234 + $0x38] sm:$0xff]
      %v287 = vld [vmem:[%s234 + $0x40] sm:$0xff]
      %v288 = vld [vmem:[%s234 + $0x48] sm:$0xff]
      %v289 = vld [vmem:[%s234 + $0x50] sm:$0xff]
      %v290 = vld [vmem:[%s234 + $0x58] sm:$0xff]
      %v291 = vld [vmem:[%s234 + $0x60] sm:$0xff]
      %v292 = vld [vmem:[%s234 + $0x68] sm:$0xff]
      %v293 = vld [vmem:[%s234 + $0x70] sm:$0xff]
      %v294 = vld [vmem:[%s234 + $0x78] sm:$0xff]
      %v295 = vld [vmem:[%s234 + $0x80] sm:$0xff]
      %v296 = vld [vmem:[%s234 + $0x88] sm:$0xff]
      %v297 = vld [vmem:[%s234 + $0x90] sm:$0xff]
      %v298 = vld [vmem:[%s234 + $0x98] sm:$0xff]
      %v299 = vld [vmem:[%s234 + $0xa0] sm:$0xff]
      %v300 = vld [vmem:[%s234 + $0xa8] sm:$0xff]
      %v301 = vld [vmem:[%s234 + $0xb0] sm:$0xff]
      %v302 = vld [vmem:[%s234 + $0xb8] sm:$0xff]
      %v303 = vld [vmem:[%s234 + $0xc0] sm:$0xff]
      %v304 = vld [vmem:[%s234 + $0xc8] sm:$0xff]
      %v305 = vld [vmem:[%s234 + $0xd0] sm:$0xff]
      %v306 = vld [vmem:[%s234 + $0xd8] sm:$0xff]
      %v307 = vld [vmem:[%s234 + $0xe0] sm:$0xff]
      %v308 = vld [vmem:[%s234 + $0xe8] sm:$0xff]
      %v309 = vld [vmem:[%s234 + $0xf0] sm:$0xff]
      %v310 = vld [vmem:[%s234 + $0xf8] sm:$0xff]
      %v311 = vld [vmem:[%s239] sm:$0xff]
      %v312 = vld [vmem:[%s239 + $0x8] sm:$0xff]
      %v313 = vld [vmem:[%s239 + $0x10] sm:$0xff]
      %v314 = vld [vmem:[%s239 + $0x18] sm:$0xff]
      %v315 = vld [vmem:[%s239 + $0x20] sm:$0xff]
      %v316 = vld [vmem:[%s239 + $0x28] sm:$0xff]
      %v317 = vld [vmem:[%s239 + $0x30] sm:$0xff]
      %v318 = vld [vmem:[%s239 + $0x38] sm:$0xff]
      %v319 = vld [vmem:[%s239 + $0x40] sm:$0xff]
      %v320 = vld [vmem:[%s239 + $0x48] sm:$0xff]
      %v321 = vld [vmem:[%s239 + $0x50] sm:$0xff]
      %v322 = vld [vmem:[%s239 + $0x58] sm:$0xff]
      %v323 = vld [vmem:[%s239 + $0x60] sm:$0xff]
      %v324 = vld [vmem:[%s239 + $0x68] sm:$0xff]
      %v325 = vld [vmem:[%s239 + $0x70] sm:$0xff]
      %v326 = vld [vmem:[%s239 + $0x78] sm:$0xff]
      %v327 = vld [vmem:[%s239 + $0x80] sm:$0xff]
      %v328 = vld [vmem:[%s239 + $0x88] sm:$0xff]
      %v329 = vld [vmem:[%s239 + $0x90] sm:$0xff]
      %v330 = vld [vmem:[%s239 + $0x98] sm:$0xff]
      %v331 = vld [vmem:[%s239 + $0xa0] sm:$0xff]
      %v332 = vld [vmem:[%s239 + $0xa8] sm:$0xff]
      %v333 = vld [vmem:[%s239 + $0xb0] sm:$0xff]
      %v334 = vld [vmem:[%s239 + $0xb8] sm:$0xff]
      %v335 = vld [vmem:[%s239 + $0xc0] sm:$0xff]
      %v336 = vld [vmem:[%s239 + $0xc8] sm:$0xff]
      %v337 = vld [vmem:[%s239 + $0xd0] sm:$0xff]
      %v338 = vld [vmem:[%s239 + $0xd8] sm:$0xff]
      %v339 = vld [vmem:[%s239 + $0xe0] sm:$0xff]
      %v340 = vld [vmem:[%s239 + $0xe8] sm:$0xff]
      %v341 = vld [vmem:[%s239 + $0xf0] sm:$0xff]
      %v342 = vld [vmem:[%s239 + $0xf8] sm:$0xff]
      %v344 = vperm.slane %v275, 0
      %v346 = vmul.f32 %v279, %v344
      %v347 = vmul.f32 %v280, %v344
      %v348 = vmul.f32 %v281, %v344
      %v349 = vmul.f32 %v282, %v344
      %v350 = vmul.f32 %v283, %v344
      %v351 = vmul.f32 %v284, %v344
      %v352 = vmul.f32 %v285, %v344
      %v353 = vmul.f32 %v286, %v344
      %v354 = vmul.f32 %v287, %v344
      %v355 = vmul.f32 %v288, %v344
      %v356 = vmul.f32 %v289, %v344
      %v357 = vmul.f32 %v290, %v344
      %v358 = vmul.f32 %v291, %v344
      %v359 = vmul.f32 %v292, %v344
      %v360 = vmul.f32 %v293, %v344
      %v361 = vmul.f32 %v294, %v344
      %v362 = vmul.f32 %v295, %v344
      %v363 = vmul.f32 %v296, %v344
      %v364 = vmul.f32 %v297, %v344
      %v365 = vmul.f32 %v298, %v344
      %v366 = vmul.f32 %v299, %v344
      %v367 = vmul.f32 %v300, %v344
      %v368 = vmul.f32 %v301, %v344
      %v369 = vmul.f32 %v302, %v344
      %v370 = vmul.f32 %v303, %v344
      %v371 = vmul.f32 %v304, %v344
      %v372 = vmul.f32 %v305, %v344
      %v373 = vmul.f32 %v306, %v344
      %v374 = vmul.f32 %v307, %v344
      %v375 = vmul.f32 %v308, %v344
      %v376 = vmul.f32 %v309, %v344
      %v377 = vmul.f32 %v310, %v344
      %v379 = vperm.slane %v278, 0
      %v381 = vadd.f32 %v346, %v379
      %v382 = vadd.f32 %v347, %v379
      %v383 = vadd.f32 %v348, %v379
      %v384 = vadd.f32 %v349, %v379
      %v385 = vadd.f32 %v350, %v379
      %v386 = vadd.f32 %v351, %v379
      %v387 = vadd.f32 %v352, %v379
      %v388 = vadd.f32 %v353, %v379
      %v389 = vadd.f32 %v354, %v379
      %v390 = vadd.f32 %v355, %v379
      %v391 = vadd.f32 %v356, %v379
      %v392 = vadd.f32 %v357, %v379
      %v393 = vadd.f32 %v358, %v379
      %v394 = vadd.f32 %v359, %v379
      %v395 = vadd.f32 %v360, %v379
      %v396 = vadd.f32 %v361, %v379
      %v397 = vadd.f32 %v362, %v379
      %v398 = vadd.f32 %v363, %v379
      %v399 = vadd.f32 %v364, %v379
      %v400 = vadd.f32 %v365, %v379
      %v401 = vadd.f32 %v366, %v379
      %v402 = vadd.f32 %v367, %v379
      %v403 = vadd.f32 %v368, %v379
      %v404 = vadd.f32 %v369, %v379
      %v405 = vadd.f32 %v370, %v379
      %v406 = vadd.f32 %v371, %v379
      %v407 = vadd.f32 %v372, %v379
      %v408 = vadd.f32 %v373, %v379
      %v409 = vadd.f32 %v374, %v379
      %v410 = vadd.f32 %v375, %v379
      %v411 = vadd.f32 %v376, %v379
      %v412 = vadd.f32 %v377, %v379
      %v413 = vadd.f32 %v381, %v311
      %v414 = vadd.f32 %v382, %v312
      %v415 = vadd.f32 %v383, %v313
      %v416 = vadd.f32 %v384, %v314
      %v417 = vadd.f32 %v385, %v315
      %v418 = vadd.f32 %v386, %v316
      %v419 = vadd.f32 %v387, %v317
      %v420 = vadd.f32 %v388, %v318
      %v421 = vadd.f32 %v389, %v319
      %v422 = vadd.f32 %v390, %v320
      %v423 = vadd.f32 %v391, %v321
      %v424 = vadd.f32 %v392, %v322
      %v425 = vadd.f32 %v393, %v323
      %v426 = vadd.f32 %v394, %v324
      %v427 = vadd.f32 %v395, %v325
      %v428 = vadd.f32 %v396, %v326
      %v429 = vadd.f32 %v397, %v327
      %v430 = vadd.f32 %v398, %v328
      %v431 = vadd.f32 %v399, %v329
      %v432 = vadd.f32 %v400, %v330
      %v433 = vadd.f32 %v401, %v331
      %v434 = vadd.f32 %v402, %v332
      %v435 = vadd.f32 %v403, %v333
      %v436 = vadd.f32 %v404, %v334
      %v437 = vadd.f32 %v405, %v335
      %v438 = vadd.f32 %v406, %v336
      %v439 = vadd.f32 %v407, %v337
      %v440 = vadd.f32 %v408, %v338
      %v441 = vadd.f32 %v409, %v339
      %v442 = vadd.f32 %v410, %v340
      %v443 = vadd.f32 %v411, %v341
      %v444 = vadd.f32 %v412, %v342
      %445 = vst [vmem:[%s244] sm:$0xff] %v413
      %446 = vst [vmem:[%s244 + $0x8] sm:$0xff] %v414
      %447 = vst [vmem:[%s244 + $0x10] sm:$0xff] %v415
      %448 = vst [vmem:[%s244 + $0x18] sm:$0xff] %v416
      %449 = vst [vmem:[%s244 + $0x20] sm:$0xff] %v417
      %450 = vst [vmem:[%s244 + $0x28] sm:$0xff] %v418
      %451 = vst [vmem:[%s244 + $0x30] sm:$0xff] %v419
      %452 = vst [vmem:[%s244 + $0x38] sm:$0xff] %v420
      %453 = vst [vmem:[%s244 + $0x40] sm:$0xff] %v421
      %454 = vst [vmem:[%s244 + $0x48] sm:$0xff] %v422
      %455 = vst [vmem:[%s244 + $0x50] sm:$0xff] %v423
      %456 = vst [vmem:[%s244 + $0x58] sm:$0xff] %v424
      %457 = vst [vmem:[%s244 + $0x60] sm:$0xff] %v425
      %458 = vst [vmem:[%s244 + $0x68] sm:$0xff] %v426
      %459 = vst [vmem:[%s244 + $0x70] sm:$0xff] %v427
      %460 = vst [vmem:[%s244 + $0x78] sm:$0xff] %v428
      %461 = vst [vmem:[%s244 + $0x80] sm:$0xff] %v429
      %462 = vst [vmem:[%s244 + $0x88] sm:$0xff] %v430
      %463 = vst [vmem:[%s244 + $0x90] sm:$0xff] %v431
      %464 = vst [vmem:[%s244 + $0x98] sm:$0xff] %v432
      %465 = vst [vmem:[%s244 + $0xa0] sm:$0xff] %v433
      %466 = vst [vmem:[%s244 + $0xa8] sm:$0xff] %v434
      %467 = vst [vmem:[%s244 + $0xb0] sm:$0xff] %v435
      %468 = vst [vmem:[%s244 + $0xb8] sm:$0xff] %v436
      %469 = vst [vmem:[%s244 + $0xc0] sm:$0xff] %v437
      %470 = vst [vmem:[%s244 + $0xc8] sm:$0xff] %v438
      %471 = vst [vmem:[%s244 + $0xd0] sm:$0xff] %v439
      %472 = vst [vmem:[%s244 + $0xd8] sm:$0xff] %v440
      %473 = vst [vmem:[%s244 + $0xe0] sm:$0xff] %v441
      %474 = vst [vmem:[%s244 + $0xe8] sm:$0xff] %v442
      %475 = vst [vmem:[%s244 + $0xf0] sm:$0xff] %v443
      %476 = vst [vmem:[%s244 + $0xf8] sm:$0xff] %v444
      %p477 = scmp.lt.s32.totalorder %s16, 1
      %s478 = scalar_select %p477, %s16, 1
      %s479 = smul.addr %s478, 32
      %s480 = smul.addr %s479, 8
      %s481 = scalar_lea.vmem %s5, %s480
      // Predicated region
      $region41: #{resnet_block.5} parent=39 // pred_check
        %p482 = pneg %p149
      $region42: #{resnet_block.5} parent=39 // pred_check_branch
        %484 = sbr.rel (%p482) target = $region44
      $region43: #{resnet_block.5} parent=39 // pred_region
        _
      $region44: #{resnet_block.5} parent=39 // pred_fallthru
        _
    $region40: #{resnet_block.5} parent=5 // pred_fallthru
      _
    %p485 = scmp.le.s32.totalorder 2, %s11
    // Predicated region
    $region45: #{resnet_block.5} parent=5 // pred_check
      %p486 = pneg %p485
    $region46: #{resnet_block.5} parent=5 // pred_check_branch
      %488 = sbr.rel (%p486) target = $region48
    $region47: #{resnet_block.5} parent=5 // pred_region
      %s489 = ssub.s32 %s11, 2
      // Predicated region
      $region49: #{resnet_block.5} parent=47 // pred_check
        %p490 = pneg %p155
      $region50: #{resnet_block.5} parent=47 // pred_check_branch
        %492 = sbr.rel (%p490) target = $region52
      $region51: #{resnet_block.5} parent=47 // pred_region
        %p493 = scmp.lt.s32.totalorder %s17, 1
        %s494 = scalar_select %p493, %s17, 1
        %s495 = smul.addr %s494, 32
        %s496 = smul.addr %s495, 8
        %s497 = scalar_lea.vmem %s5, %s496
      $region52: #{resnet_block.5} parent=47 // pred_fallthru
        _
    $region48: #{resnet_block.5} parent=5 // pred_fallthru
      _
  $region6: #{resnet_block.5} parent=0 // loop_footer
    %s15 = sadd.s32 1, %s11
  $region7: #{resnet_block.5} parent=0 // loop_footer_branch
    %10 = sbr.rel target = $region3
  $region8: #{resnet_block.5} parent=0 // loop_exit
    _

// kernel: resnet_block.4
$region0: #{resnet_block.4}
  #allocation0 [shape = 'u32[]', space=smem, size = 0x4, offset = 0x4, fixed_abs, tag = 'smem constant byte address 0x4 - core index']
  #allocation1 [shape = 'u32[72,128]{1,0:T(1,128)}', space=vmem, size = 0x9000, scoped, tag = 'internal scratch']
  #allocation2 [shape = 'f32[1,18,18,128]{3,2,1,0:T(8,128)}', space=vmem, size = 0x36000, scoped, tag = 'scratch operand']
  %s0 = inlined_call_operand.vmem [shape: f32[2,16,16,128], index: 0, kind: input, shape index: {}]
  %s1 = inlined_call_operand.vmem [shape: f32[2,2,128], index: 1, kind: input, shape index: {}]
  %s2 = inlined_call_operand.vmem [shape: f32[1,128], index: 2, kind: input, shape index: {}]
  %s3 = inlined_call_operand.vmem [shape: f32[1,128], index: 3, kind: input, shape index: {}]
  %s4 = inlined_call_operand.vmem [shape: bf16[9,128,128], index: 4, kind: input, shape index: {}]
  %s5 = inlined_call_operand.vmem [shape: f32[1,128], index: 5, kind: input, shape index: {}]
  %s6 = inlined_call_operand.vmem [shape: f32[2,16,16,128], index: 6, kind: output, shape index: {0}]
  %s7 = inlined_call_operand.vmem [shape: f32[2,2,128], index: 7, kind: output, shape index: {1}]
  %8 = xla_tuple %s6, %s7
  %s9 = sld [smem:[#allocation0]]
  $region65: #{resnet_block.4} parent=0
    _
  %s11 = ssub.s32 1, %s9
  %s12 = scalar_select 0, %s11, %s9
  loop: start=0, step=1, limit=4
  $region2: #{resnet_block.4} parent=0 // loop_pre_header
    _
  $region3: #{resnet_block.4} parent=0 // loop_header
    %s14 = sphi 0, %s18
    %p15 = scmp.ge.s32.totalorder %s14, 4
    %s24 = sphi 0, %s26
    %s27 = sphi 0, %s24
    %s28 = sphi 0, %s27
    %s44 = sphi 0, %s28
    %s48 = sphi 0, %s48
    %s50 = sphi 0, %s48
    %s51 = sphi 0, %s50
    %s65 = sphi 0, %s51
    %s69 = sphi 0, %s69
    %s71 = sphi 0, %s69
    %s72 = sphi 0, %s71
    %s86 = sphi 0, %s72
    %s90 = sphi 0, %s90
    %s92 = sphi 0, %s90
    %s93 = sphi 0, %s92
    %s107 = sphi 0, %s93
    %s111 = sphi 0, %s111
    %s113 = sphi 0, %s111
    %s114 = sphi 0, %s113
    %s128 = sphi 0, %s114
    %s132 = sphi 0, %s132
    %s134 = sphi 0, %s132
    %s135 = sphi 0, %s134
    %s149 = sphi 0, %s135
    %s155 = sphi 0, %s157
    %s158 = sphi 0, %s155
    %s159 = sphi 0, %s158
    %s175 = sphi 0, %s159
    %s181 = sphi 0, %s183
    %s184 = sphi 0, %s181
    %s185 = sphi 0, %s184
    %s201 = sphi 0, %s185
  $region4: #{resnet_block.4} parent=0 // loop_header_branch
    %17 = sbr.rel (%p15) target = $region8
  $region5: #{resnet_block.4} parent=0 // loop_body
    %s19 = ssub.s32 %s14, 1
    %s20 = ssub.s32 %s14, 2
    %s21 = sadd.s32 %s14, 1
    %s22 = ssub.s32 %s14, %s21
    %p23 = scmp.eq.s32.totalorder %s22, 0
    %s25 = sadd.s32 %s24, 1
    %s26 = scalar_select %p23, %s24, %s25
    %p29 = pneg %p23
    %p30 = scmp.eq.s32.totalorder %s14, 1
    %p31 = por %p29, %p30
    %p32 = scmp.ne.s32.totalorder %s24, %s27
    %p33 = scmp.eq.s32.totalorder %s14, 0
    %p34 = por %p32, %p33
    %p35 = scmp.ne.s32.totalorder %s24, %s27
    %p36 = scmp.eq.s32.totalorder %s19, 1
    %p37 = por %p35, %p36
    %p38 = scmp.ne.s32.totalorder %s27, %s28
    %p39 = scmp.eq.s32.totalorder %s19, 0
    %p40 = por %p38, %p39
    %p41 = scmp.ne.s32.totalorder %s27, %s28
    %p42 = scmp.eq.s32.totalorder %s20, 1
    %p43 = por %p41, %p42
    %p45 = scmp.ne.s32.totalorder %s28, %s44
    %p46 = scmp.eq.s32.totalorder %s20, 0
    %p47 = por %p45, %p46
    %s49 = sadd.s32 %s48, 1
    %p52 = scmp.eq.s32.totalorder %s14, 1
    %p53 = scmp.ne.s32.totalorder %s48, %s50
    %p54 = scmp.eq.s32.totalorder %s14, 0
    %p55 = por %p53, %p54
    %p56 = scmp.ne.s32.totalorder %s48, %s50
    %p57 = scmp.eq.s32.totalorder %s19, 1
    %p58 = por %p56, %p57
    %p59 = scmp.ne.s32.totalorder %s50, %s51
    %p60 = scmp.eq.s32.totalorder %s19, 0
    %p61 = por %p59, %p60
    %p62 = scmp.ne.s32.totalorder %s50, %s51
    %p63 = scmp.eq.s32.totalorder %s20, 1
    %p64 = por %p62, %p63
    %p66 = scmp.ne.s32.totalorder %s51, %s65
    %p67 = scmp.eq.s32.totalorder %s20, 0
    %p68 = por %p66, %p67
    %s70 = sadd.s32 %s69, 1
    %p73 = scmp.eq.s32.totalorder %s14, 1
    %p74 = scmp.ne.s32.totalorder %s69, %s71
    %p75 = scmp.eq.s32.totalorder %s14, 0
    %p76 = por %p74, %p75
    %p77 = scmp.ne.s32.totalorder %s69, %s71
    %p78 = scmp.eq.s32.totalorder %s19, 1
    %p79 = por %p77, %p78
    %p80 = scmp.ne.s32.totalorder %s71, %s72
    %p81 = scmp.eq.s32.totalorder %s19, 0
    %p82 = por %p80, %p81
    %p83 = scmp.ne.s32.totalorder %s71, %s72
    %p84 = scmp.eq.s32.totalorder %s20, 1
    %p85 = por %p83, %p84
    %p87 = scmp.ne.s32.totalorder %s72, %s86
    %p88 = scmp.eq.s32.totalorder %s20, 0
    %p89 = por %p87, %p88
    %s91 = sadd.s32 %s90, 1
    %p94 = scmp.eq.s32.totalorder %s14, 1
    %p95 = scmp.ne.s32.totalorder %s90, %s92
    %p96 = scmp.eq.s32.totalorder %s14, 0
    %p97 = por %p95, %p96
    %p98 = scmp.ne.s32.totalorder %s90, %s92
    %p99 = scmp.eq.s32.totalorder %s19, 1
    %p100 = por %p98, %p99
    %p101 = scmp.ne.s32.totalorder %s92, %s93
    %p102 = scmp.eq.s32.totalorder %s19, 0
    %p103 = por %p101, %p102
    %p104 = scmp.ne.s32.totalorder %s92, %s93
    %p105 = scmp.eq.s32.totalorder %s20, 1
    %p106 = por %p104, %p105
    %p108 = scmp.ne.s32.totalorder %s93, %s107
    %p109 = scmp.eq.s32.totalorder %s20, 0
    %p110 = por %p108, %p109
    %s112 = sadd.s32 %s111, 1
    %p115 = scmp.eq.s32.totalorder %s14, 1
    %p116 = scmp.ne.s32.totalorder %s111, %s113
    %p117 = scmp.eq.s32.totalorder %s14, 0
    %p118 = por %p116, %p117
    %p119 = scmp.ne.s32.totalorder %s111, %s113
    %p120 = scmp.eq.s32.totalorder %s19, 1
    %p121 = por %p119, %p120
    %p122 = scmp.ne.s32.totalorder %s113, %s114
    %p123 = scmp.eq.s32.totalorder %s19, 0
    %p124 = por %p122, %p123
    %p125 = scmp.ne.s32.totalorder %s113, %s114
    %p126 = scmp.eq.s32.totalorder %s20, 1
    %p127 = por %p125, %p126
    %p129 = scmp.ne.s32.totalorder %s114, %s128
    %p130 = scmp.eq.s32.totalorder %s20, 0
    %p131 = por %p129, %p130
    %s133 = sadd.s32 %s132, 1
    %p136 = scmp.eq.s32.totalorder %s14, 1
    %p137 = scmp.ne.s32.totalorder %s132, %s134
    %p138 = scmp.eq.s32.totalorder %s14, 0
    %p139 = por %p137, %p138
    %p140 = scmp.ne.s32.totalorder %s132, %s134
    %p141 = scmp.eq.s32.totalorder %s19, 1
    %p142 = por %p140, %p141
    %p143 = scmp.ne.s32.totalorder %s134, %s135
    %p144 = scmp.eq.s32.totalorder %s19, 0
    %p145 = por %p143, %p144
    %p146 = scmp.ne.s32.totalorder %s134, %s135
    %p147 = scmp.eq.s32.totalorder %s20, 1
    %p148 = por %p146, %p147
    %p150 = scmp.ne.s32.totalorder %s135, %s149
    %p151 = scmp.eq.s32.totalorder %s20, 0
    %p152 = por %p150, %p151
    %s153 = ssub.s32 %s14, %s21
    %p154 = scmp.eq.s32.totalorder %s153, 0
    %s156 = sadd.s32 %s155, 1
    %s157 = scalar_select %p154, %s155, %s156
    %p160 = pneg %p154
    %p161 = scmp.eq.s32.totalorder %s14, 1
    %p162 = por %p160, %p161
    %p163 = scmp.ne.s32.totalorder %s155, %s158
    %p164 = scmp.eq.s32.totalorder %s14, 0
    %p165 = por %p163, %p164
    %p166 = scmp.ne.s32.totalorder %s155, %s158
    %p167 = scmp.eq.s32.totalorder %s19, 1
    %p168 = por %p166, %p167
    %p169 = scmp.ne.s32.totalorder %s158, %s159
    %p170 = scmp.eq.s32.totalorder %s19, 0
    %p171 = por %p169, %p170
    %p172 = scmp.ne.s32.totalorder %s158, %s159
    %p173 = scmp.eq.s32.totalorder %s20, 1
    %p174 = por %p172, %p173
    %p176 = scmp.ne.s32.totalorder %s159, %s175
    %p177 = scmp.eq.s32.totalorder %s20, 0
    %p178 = por %p176, %p177
    %s179 = ssub.s32 %s14, %s21
    %p180 = scmp.eq.s32.totalorder %s179, 0
    %s182 = sadd.s32 %s181, 1
    %s183 = scalar_select %p180, %s181, %s182
    %p186 = pneg %p180
    %p187 = scmp.eq.s32.totalorder %s14, 1
    %p188 = por %p186, %p187
    %p189 = scmp.ne.s32.totalorder %s181, %s184
    %p190 = scmp.eq.s32.totalorder %s14, 0
    %p191 = por %p189, %p190
    %p192 = scmp.ne.s32.totalorder %s181, %s184
    %p193 = scmp.eq.s32.totalorder %s19, 1
    %p194 = por %p192, %p193
    %p195 = scmp.ne.s32.totalorder %s184, %s185
    %p196 = scmp.eq.s32.totalorder %s19, 0
    %p197 = por %p195, %p196
    %p198 = scmp.ne.s32.totalorder %s184, %s185
    %p199 = scmp.eq.s32.totalorder %s20, 1
    %p200 = por %p198, %p199
    %p202 = scmp.ne.s32.totalorder %s185, %s201
    %p203 = scmp.eq.s32.totalorder %s20, 0
    %p204 = por %p202, %p203
    %p205 = scmp.le.s32.totalorder 1, %s14
    %p206 = scmp.lt.s32.totalorder %s14, 3
    %p207 = pnand %p205, %p206
    %p208 = pneg %p207
    // Predicated region
    $region9: #{resnet_block.4} parent=5 // pred_check
      _
    $region10: #{resnet_block.4} parent=5 // pred_check_branch
      %210 = sbr.rel (%p207) target = $region12
    $region11: #{resnet_block.4} parent=5 // pred_region
      %s211 = ssub.s32 %s14, 1
      // Predicated region
      $region13: #{resnet_block.4} parent=11 // pred_check
        %p212 = pneg %p61
      $region14: #{resnet_block.4} parent=11 // pred_check_branch
        %214 = sbr.rel (%p212) target = $region16
      $region15: #{resnet_block.4} parent=11 // pred_region
        _
      $region16: #{resnet_block.4} parent=11 // pred_fallthru
        _
      // Predicated region
      $region17: #{resnet_block.4} parent=11 // pred_check
        %p215 = pneg %p82
      $region18: #{resnet_block.4} parent=11 // pred_check_branch
        %217 = sbr.rel (%p215) target = $region20
      $region19: #{resnet_block.4} parent=11 // pred_region
        _
      $region20: #{resnet_block.4} parent=11 // pred_fallthru
        _
      // Predicated region
      $region21: #{resnet_block.4} parent=11 // pred_check
        %p218 = pneg %p103
      $region22: #{resnet_block.4} parent=11 // pred_check_branch
        %220 = sbr.rel (%p218) target = $region24
      $region23: #{resnet_block.4} parent=11 // pred_region
        _
      $region24: #{resnet_block.4} parent=11 // pred_fallthru
        _
      // Predicated region
      $region25: #{resnet_block.4} parent=11 // pred_check
        %p221 = pneg %p124
      $region26: #{resnet_block.4} parent=11 // pred_check_branch
        %223 = sbr.rel (%p221) target = $region28
      $region27: #{resnet_block.4} parent=11 // pred_region
        _
      $region28: #{resnet_block.4} parent=11 // pred_fallthru
        _
      // Predicated region
      $region29: #{resnet_block.4} parent=11 // pred_check
        %p224 = pneg %p145
      $region30: #{resnet_block.4} parent=11 // pred_check_branch
        %226 = sbr.rel (%p224) target = $region32
      $region31: #{resnet_block.4} parent=11 // pred_region
        _
      $region32: #{resnet_block.4} parent=11 // pred_fallthru
        _
    $region12: #{resnet_block.4} parent=5 // pred_fallthru
      _
    %p227 = scmp.lt.s32.totalorder %s14, 2
    // Predicated region
    $region33: #{resnet_block.4} parent=5 // pred_check
      %p228 = pneg %p227
    $region34: #{resnet_block.4} parent=5 // pred_check_branch
      %230 = sbr.rel (%p228) target = $region36
    $region35: #{resnet_block.4} parent=5 // pred_region
      // Predicated region
      $region37: #{resnet_block.4} parent=35 // pred_check
        %p231 = pneg %p34
      $region38: #{resnet_block.4} parent=35 // pred_check_branch
        %233 = sbr.rel (%p231) target = $region40
      $region39: #{resnet_block.4} parent=35 // pred_region
        %p234 = scmp.lt.s32.totalorder %s14, 1
        %s235 = scalar_select %p234, %s14, 1
        %s236 = smul.addr %s235, 32
        %s237 = smul.addr %s236, 8
        %s238 = scalar_lea.vmem %s0, %s237
      $region40: #{resnet_block.4} parent=35 // pred_fallthru
        _
    $region36: #{resnet_block.4} parent=5 // pred_fallthru
      _
    %p239 = scmp.le.s32.totalorder 1, %s14
    %p240 = scmp.lt.s32.totalorder %s14, 3
    %p241 = pnand %p239, %p240
    %p242 = pneg %p241
    // Predicated region
    $region41: #{resnet_block.4} parent=5 // pred_check
      _
    $region42: #{resnet_block.4} parent=5 // pred_check_branch
      %244 = sbr.rel (%p241) target = $region44
    $region43: #{resnet_block.4} parent=5 // pred_region
      %s245 = ssub.s32 %s14, 1
      %p246 = scmp.lt.s32.totalorder %s19, 1
      %s247 = scalar_select %p246, %s19, 1
      %s248 = smul.addr %s247, 32
      %s249 = smul.addr %s248, 8
      %s250 = scalar_lea.vmem %s0, %s249
      %p251 = pneg %p40
      %p252 = pneg %p37
      %p253 = pneg %p61
      %p254 = pneg %p58
      %p255 = pneg %p82
      %p256 = pneg %p79
      %p257 = pneg %p103
      %p258 = pneg %p100
      %p259 = pneg %p124
      %p260 = pneg %p121
      %p261 = pneg %p145
      %p262 = pneg %p142
      %p263 = pneg %p171
      %p264 = pneg %p168
      %p265 = scmp.lt.s32.totalorder %s19, 1
      %s266 = scalar_select %p265, %s19, 1
      %s267 = smul.addr %s266, 32
      %s268 = smul.addr %s267, 8
      %s269 = scalar_lea.vmem %s6, %s268
      %p270 = pneg %p197
      %p271 = pneg %p194
      %p272 = scmp.lt.s32.totalorder %s19, 1
      %s273 = scalar_select %p272, %s19, 1
      %s274 = smul.addr %s273, 2
      %s275 = scalar_lea.vmem %s7, %s274
      %p276 = scmp.lt.s32.totalorder %s19, 1
      %s277 = scalar_select %p276, %s19, 1
      %s278 = smul.addr %s277, 32
      %s279 = smul.addr %s278, 8
      %s280 = scalar_lea.vmem %s0, %s279
      %p281 = scmp.lt.s32.totalorder %s19, 1
      %s282 = scalar_select %p281, %s19, 1
      %s283 = smul.addr %s282, 32
      %s284 = smul.addr %s283, 8
      %s285 = scalar_lea.vmem %s6, %s284
      %p286 = scmp.lt.s32.totalorder %s19, 1
      %s287 = scalar_select %p286, %s19, 1
      %s288 = smul.addr %s287, 2
      %s289 = scalar_lea.vmem %s7, %s288
      %v290 = vld [vmem:[%s1] sm:$0x3]
      %v291 = vld [vmem:[%s1 + $0x2] sm:$0x3]
      %vm292 = vcmask 1041408
      %v293 = vsel %vm292, %v290, 0.0
      %v294 = vsel %vm292, %v291, 0.0
      %v295 = vadd.f32 %v293, %v294
      %v296 = vmul.f32 %v295, 0.001953125
      %v297 = vmul.f32 %v296, %v296
      %v299 = vrot.slane %v297, 7
      %v301 = vsub.f32 %v296, %v299
      %v302 = vmax.f32 %v301, 0.0
      %v303 = vld [vmem:[%s2] sm:$0x1]
      %v304 = vadd.f32 %v302, 1e-05
      %v305 = vrsqrt.pop %v304
      %v306 = vmul.f32 %v305, %v304
      %v307 = vmul.f32 %v306, %v305
      %v308 = vmul.f32 0.5, %v307
      %v309 = vsub.f32 1.5, %v308
      %v310 = vmul.f32 %v305, %v309
      %vm311 = vweird.f32 %v304
      %vm312 = vweird.f32 %v305
      %vm313 = vmor %vm311, %vm312
      %v314 = vsel %vm313, %v305, %v310
      %316 = vst [vmem:[#allocation1] sm:$0xff] %v314
      %s317 = scalar_lea.vmem [#allocation1], 1
      %v318 = vld [vmem:[%s317] ss:$9 sm:$0xff]
      %v320 = vmul.f32 %v303, %v318
      %v321 = vld [vmem:[%s3] sm:$0x1]
      %v322 = vmul.f32 %v296, %v320
      %v323 = vsub.f32 %v321, %v322
      %v324 = vld [vmem:[%s280] sm:$0xff]
      %v325 = vld [vmem:[%s280 + $0x8] sm:$0xff]
      %v326 = vld [vmem:[%s280 + $0x10] sm:$0xff]
      %v327 = vld [vmem:[%s280 + $0x18] sm:$0xff]
      %v328 = vld [vmem:[%s280 + $0x20] sm:$0xff]
      %v329 = vld [vmem:[%s280 + $0x28] sm:$0xff]
      %v330 = vld [vmem:[%s280 + $0x30] sm:$0xff]
      %v331 = vld [vmem:[%s280 + $0x38] sm:$0xff]
      %v332 = vld [vmem:[%s280 + $0x40] sm:$0xff]
      %v333 = vld [vmem:[%s280 + $0x48] sm:$0xff]
      %v334 = vld [vmem:[%s280 + $0x50] sm:$0xff]
      %v335 = vld [vmem:[%s280 + $0x58] sm:$0xff]
      %v336 = vld [vmem:[%s280 + $0x60] sm:$0xff]
      %v337 = vld [vmem:[%s280 + $0x68] sm:$0xff]
      %v338 = vld [vmem:[%s280 + $0x70] sm:$0xff]
      %v339 = vld [vmem:[%s280 + $0x78] sm:$0xff]
      %v340 = vld [vmem:[%s280 + $0x80] sm:$0xff]
      %v341 = vld [vmem:[%s280 + $0x88] sm:$0xff]
      %v342 = vld [vmem:[%s280 + $0x90] sm:$0xff]
      %v343 = vld [vmem:[%s280 + $0x98] sm:$0xff]
      %v344 = vld [vmem:[%s280 + $0xa0] sm:$0xff]
      %v345 = vld [vmem:[%s280 + $0xa8] sm:$0xff]
      %v346 = vld [vmem:[%s280 + $0xb0] sm:$0xff]
      %v347 = vld [vmem:[%s280 + $0xb8] sm:$0xff]
      %v348 = vld [vmem:[%s280 + $0xc0] sm:$0xff]
      %v349 = vld [vmem:[%s280 + $0xc8] sm:$0xff]
      %v350 = vld [vmem:[%s280 + $0xd0] sm:$0xff]
      %v351 = vld [vmem:[%s280 + $0xd8] sm:$0xff]
      %v352 = vld [vmem:[%s280 + $0xe0] sm:$0xff]
      %v353 = vld [vmem:[%s280 + $0xe8] sm:$0xff]
      %v354 = vld [vmem:[%s280 + $0xf0] sm:$0xff]
      %v355 = vld [vmem:[%s280 + $0xf8] sm:$0xff]
      %v357 = vperm.slane %v320, 0
      %v359 = vmul.f32 %v324, %v357
      %v360 = vmul.f32 %v325, %v357
      %v361 = vmul.f32 %v326, %v357
      %v362 = vmul.f32 %v327, %v357
      %v363 = vmul.f32 %v328, %v357
      %v364 = vmul.f32 %v329, %v357
      %v365 = vmul.f32 %v330, %v357
      %v366 = vmul.f32 %v331, %v357
      %v367 = vmul.f32 %v332, %v357
      %v368 = vmul.f32 %v333, %v357
      %v369 = vmul.f32 %v334, %v357
      %v370 = vmul.f32 %v335, %v357
      %v371 = vmul.f32 %v336, %v357
      %v372 = vmul.f32 %v337, %v357
      %v373 = vmul.f32 %v338, %v357
      %v374 = vmul.f32 %v339, %v357
      %v375 = vmul.f32 %v340, %v357
      %v376 = vmul.f32 %v341, %v357
      %v377 = vmul.f32 %v342, %v357
      %v378 = vmul.f32 %v343, %v357
      %v379 = vmul.f32 %v344, %v357
      %v380 = vmul.f32 %v345, %v357
      %v381 = vmul.f32 %v346, %v357
      %v382 = vmul.f32 %v347, %v357
      %v383 = vmul.f32 %v348, %v357
      %v384 = vmul.f32 %v349, %v357
      %v385 = vmul.f32 %v350, %v357
      %v386 = vmul.f32 %v351, %v357
      %v387 = vmul.f32 %v352, %v357
      %v388 = vmul.f32 %v353, %v357
      %v389 = vmul.f32 %v354, %v357
      %v390 = vmul.f32 %v355, %v357
      %v392 = vperm.slane %v323, 0
      %v394 = vadd.f32 %v359, %v392
      %v395 = vadd.f32 %v360, %v392
      %v396 = vadd.f32 %v361, %v392
      %v397 = vadd.f32 %v362, %v392
      %v398 = vadd.f32 %v363, %v392
      %v399 = vadd.f32 %v364, %v392
      %v400 = vadd.f32 %v365, %v392
      %v401 = vadd.f32 %v366, %v392
      %v402 = vadd.f32 %v367, %v392
      %v403 = vadd.f32 %v368, %v392
      %v404 = vadd.f32 %v369, %v392
      %v405 = vadd.f32 %v370, %v392
      %v406 = vadd.f32 %v371, %v392
      %v407 = vadd.f32 %v372, %v392
      %v408 = vadd.f32 %v373, %v392
      %v409 = vadd.f32 %v374, %v392
      %v410 = vadd.f32 %v375, %v392
      %v411 = vadd.f32 %v376, %v392
      %v412 = vadd.f32 %v377, %v392
      %v413 = vadd.f32 %v378, %v392
      %v414 = vadd.f32 %v379, %v392
      %v415 = vadd.f32 %v380, %v392
      %v416 = vadd.f32 %v381, %v392
      %v417 = vadd.f32 %v382, %v392
      %v418 = vadd.f32 %v383, %v392
      %v419 = vadd.f32 %v384, %v392
      %v420 = vadd.f32 %v385, %v392
      %v421 = vadd.f32 %v386, %v392
      %v422 = vadd.f32 %v387, %v392
      %v423 = vadd.f32 %v388, %v392
      %v424 = vadd.f32 %v389, %v392
      %v425 = vadd.f32 %v390, %v392
      %v426 = vmax.f32 %v394, 0.0
      %v427 = vmax.f32 %v395, 0.0
      %v428 = vmax.f32 %v396, 0.0
      %v429 = vmax.f32 %v397, 0.0
      %v430 = vmax.f32 %v398, 0.0
      %v431 = vmax.f32 %v399, 0.0
      %v432 = vmax.f32 %v400, 0.0
      %v433 = vmax.f32 %v401, 0.0
      %v434 = vmax.f32 %v402, 0.0
      %v435 = vmax.f32 %v403, 0.0
      %v436 = vmax.f32 %v404, 0.0
      %v437 = vmax.f32 %v405, 0.0
      %v438 = vmax.f32 %v406, 0.0
      %v439 = vmax.f32 %v407, 0.0
      %v440 = vmax.f32 %v408, 0.0
      %v441 = vmax.f32 %v409, 0.0
      %v442 = vmax.f32 %v410, 0.0
      %v443 = vmax.f32 %v411, 0.0
      %v444 = vmax.f32 %v412, 0.0
      %v445 = vmax.f32 %v413, 0.0
      %v446 = vmax.f32 %v414, 0.0
      %v447 = vmax.f32 %v415, 0.0
      %v448 = vmax.f32 %v416, 0.0
      %v449 = vmax.f32 %v417, 0.0
      %v450 = vmax.f32 %v418, 0.0
      %v451 = vmax.f32 %v419, 0.0
      %v452 = vmax.f32 %v420, 0.0
      %v453 = vmax.f32 %v421, 0.0
      %v454 = vmax.f32 %v422, 0.0
      %v455 = vmax.f32 %v423, 0.0
      %v456 = vmax.f32 %v424, 0.0
      %v457 = vmax.f32 %v425, 0.0
      %458 = vst [vmem:[#allocation2] sm:$0xff] 0.0
      %459 = vst [vmem:[#allocation2 + $0x8] sm:$0xff] 0.0
      %460 = vst [vmem:[#allocation2 + $0x10] sm:$0x3] 0.0
      %461 = vst [vmem:[#allocation2 + $0x18] sm:$0xff] 0.0
      %462 = vst [vmem:[#allocation2 + $0x20] sm:$0xff] 0.0
      %463 = vst [vmem:[#allocation2 + $0x28] sm:$0x3] 0.0
      %464 = vst [vmem:[#allocation2 + $0x30] sm:$0xff] 0.0
      %465 = vst [vmem:[#allocation2 + $0x38] sm:$0xff] 0.0
      %466 = vst [vmem:[#allocation2 + $0x40] sm:$0x3] 0.0
      %467 = vst [vmem:[#allocation2 + $0x48] sm:$0xff] 0.0
      %468 = vst [vmem:[#allocation2 + $0x50] sm:$0xff] 0.0
      %469 = vst [vmem:[#allocation2 + $0x58] sm:$0x3] 0.0
      %470 = vst [vmem:[#allocation2 + $0x60] sm:$0xff] 0.0
      %471 = vst [vmem:[#allocation2 + $0x68] sm:$0xff] 0.0
      %472 = vst [vmem:[#allocation2 + $0x70] sm:$0x3] 0.0
      %473 = vst [vmem:[#allocation2 + $0x78] sm:$0xff] 0.0
      %474 = vst [vmem:[#allocation2 + $0x80] sm:$0xff] 0.0
      %475 = vst [vmem:[#allocation2 + $0x88] sm:$0x3] 0.0
      %476 = vst [vmem:[#allocation2 + $0x90] sm:$0xff] 0.0
      %477 = vst [vmem:[#allocation2 + $0x98] sm:$0xff] 0.0
      %478 = vst [vmem:[#allocation2 + $0xa0] sm:$0x3] 0.0
      %479 = vst [vmem:[#allocation2 + $0xa8] sm:$0xff] 0.0
      %480 = vst [vmem:[#allocation2 + $0xb0] sm:$0xff] 0.0
      %481 = vst [vmem:[#allocation2 + $0xb8] sm:$0x3] 0.0
      %482 = vst [vmem:[#allocation2 + $0xc0] sm:$0xff] 0.0
      %483 = vst [vmem:[#allocation2 + $0xc8] sm:$0xff] 0.0
      %484 = vst [vmem:[#allocation2 + $0xd0] sm:$0x3] 0.0
      %485 = vst [vmem:[#allocation2 + $0xd8] sm:$0xff] 0.0
      %486 = vst [vmem:[#allocation2 + $0xe0] sm:$0xff] 0.0
      %487 = vst [vmem:[#allocation2 + $0xe8] sm:$0x3] 0.0
      %488 = vst [vmem:[#allocation2 + $0xf0] sm:$0xff] 0.0
      %489 = vst [vmem:[#allocation2 + $0xf8] sm:$0xff] 0.0
      %490 = vst [vmem:[#allocation2 + $0x100] sm:$0x3] 0.0
      %491 = vst [vmem:[#allocation2 + $0x108] sm:$0xff] 0.0
      %492 = vst [vmem:[#allocation2 + $0x110] sm:$0xff] 0.0
      %493 = vst [vmem:[#allocation2 + $0x118] sm:$0x3] 0.0
      %494 = vst [vmem:[#allocation2 + $0x120] sm:$0xff] 0.0
      %495 = vst [vmem:[#allocation2 + $0x128] sm:$0xff] 0.0
      %496 = vst [vmem:[#allocation2 + $0x130] sm:$0x3] 0.0
      %497 = vst [vmem:[#allocation2 + $0x138] sm:$0xff] 0.0
      %498 = vst [vmem:[#allocation2 + $0x140] sm:$0xff] 0.0
      %499 = vst [vmem:[#allocation2 + $0x148] sm:$0x3] 0.0
      %500 = vst [vmem:[#allocation2 + $0x150] sm:$0xff] 0.0
      %501 = vst [vmem:[#allocation2 + $0x158] sm:$0xff] 0.0
      %502 = vst [vmem:[#allocation2 + $0x160] sm:$0x3] 0.0
      %503 = vst [vmem:[#allocation2 + $0x168] sm:$0xff] 0.0
      %504 = vst [vmem:[#allocation2 + $0x170] sm:$0xff] 0.0
      %505 = vst [vmem:[#allocation2 + $0x178] sm:$0x3] 0.0
      %506 = vst [vmem:[#allocation2 + $0x180] sm:$0xff] 0.0
      %507 = vst [vmem:[#allocation2 + $0x188] sm:$0xff] 0.0
      %508 = vst [vmem:[#allocation2 + $0x190] sm:$0x3] 0.0
      %509 = vst [vmem:[#allocation2 + $0x198] sm:$0xff] 0.0
      %510 = vst [vmem:[#allocation2 + $0x1a0] sm:$0xff] 0.0
      %511 = vst [vmem:[#allocation2 + $0x1a8] sm:$0x3] 0.0
      %s512 = scalar_lea.vmem [#allocation2], 24
      %513 = vst [vmem:[%s512 + $0x1] sm:$0xff] %v426
      %514 = vst [vmem:[%s512 + $0x9] sm:$0xff] %v427
      %515 = vst [vmem:[%s512 + $0x19] sm:$0xff] %v428
      %516 = vst [vmem:[%s512 + $0x21] sm:$0xff] %v429
      %517 = vst [vmem:[%s512 + $0x31] sm:$0xff] %v430
      %518 = vst [vmem:[%s512 + $0x39] sm:$0xff] %v431
      %519 = vst [vmem:[%s512 + $0x49] sm:$0xff] %v432
      %520 = vst [vmem:[%s512 + $0x51] sm:$0xff] %v433
      %521 = vst [vmem:[%s512 + $0x61] sm:$0xff] %v434
      %522 = vst [vmem:[%s512 + $0x69] sm:$0xff] %v435
      %523 = vst [vmem:[%s512 + $0x79] sm:$0xff] %v436
      %524 = vst [vmem:[%s512 + $0x81] sm:$0xff] %v437
      %525 = vst [vmem:[%s512 + $0x91] sm:$0xff] %v438
      %526 = vst [vmem:[%s512 + $0x99] sm:$0xff] %v439
      %527 = vst [vmem:[%s512 + $0xa9] sm:$0xff] %v440
      %528 = vst [vmem:[%s512 + $0xb1] sm:$0xff] %v441
      %529 = vst [vmem:[%s512 + $0xc1] sm:$0xff] %v442
      %530 = vst [vmem:[%s512 + $0xc9] sm:$0xff] %v443
      %531 = vst [vmem:[%s512 + $0xd9] sm:$0xff] %v444
      %532 = vst [vmem:[%s512 + $0xe1] sm:$0xff] %v445
      %533 = vst [vmem:[%s512 + $0xf1] sm:$0xff] %v446
      %534 = vst [vmem:[%s512 + $0xf9] sm:$0xff] %v447
      %535 = vst [vmem:[%s512 + $0x109] sm:$0xff] %v448
      %536 = vst [vmem:[%s512 + $0x111] sm:$0xff] %v449
      %537 = vst [vmem:[%s512 + $0x121] sm:$0xff] %v450
      %538 = vst [vmem:[%s512 + $0x129] sm:$0xff] %v451
      %539 = vst [vmem:[%s512 + $0x139] sm:$0xff] %v452
      %540 = vst [vmem:[%s512 + $0x141] sm:$0xff] %v453
      %541 = vst [vmem:[%s512 + $0x151] sm:$0xff] %v454
      %542 = vst [vmem:[%s512 + $0x159] sm:$0xff] %v455
      %543 = vst [vmem:[%s512 + $0x169] sm:$0xff] %v456
      %544 = vst [vmem:[%s512 + $0x171] sm:$0xff] %v457
      %v545 = vld [vmem:[#allocation2] sm:$0xff]
      %v546 = vld [vmem:[#allocation2 + $0x8] sm:$0xff]
      %v547 = vld [vmem:[#allocation2 + $0x18] sm:$0xff]
      %v548 = vld [vmem:[#allocation2 + $0x20] sm:$0xff]
      %v549 = vld [vmem:[#allocation2 + $0x30] sm:$0xff]
      %v550 = vld [vmem:[#allocation2 + $0x38] sm:$0xff]
      %v551 = vld [vmem:[#allocation2 + $0x48] sm:$0xff]
      %v552 = vld [vmem:[#allocation2 + $0x50] sm:$0xff]
      %v553 = vld [vmem:[#allocation2 + $0x60] sm:$0xff]
      %v554 = vld [vmem:[#allocation2 + $0x68] sm:$0xff]
      %v555 = vld [vmem:[#allocation2 + $0x78] sm:$0xff]
      %v556 = vld [vmem:[#allocation2 + $0x80] sm:$0xff]
      %v557 = vld [vmem:[#allocation2 + $0x90] sm:$0xff]
      %v558 = vld [vmem:[#allocation2 + $0x98] sm:$0xff]
      %v559 = vld [vmem:[#allocation2 + $0xa8] sm:$0xff]
      %v560 = vld [vmem:[#allocation2 + $0xb0] sm:$0xff]
      %v561 = vld [vmem:[#allocation2 + $0xc0] sm:$0xff]
      %v562 = vld [vmem:[#allocation2 + $0xc8] sm:$0xff]
      %v563 = vld [vmem:[#allocation2 + $0xd8] sm:$0xff]
      %v564 = vld [vmem:[#allocation2 + $0xe0] sm:$0xff]
      %v565 = vld [vmem:[#allocation2 + $0xf0] sm:$0xff]
      %v566 = vld [vmem:[#allocation2 + $0xf8] sm:$0xff]
      %v567 = vld [vmem:[#allocation2 + $0x108] sm:$0xff]
      %v568 = vld [vmem:[#allocation2 + $0x110] sm:$0xff]
      %v569 = vld [vmem:[#allocation2 + $0x120] sm:$0xff]
      %v570 = vld [vmem:[#allocation2 + $0x128] sm:$0xff]
      %v571 = vld [vmem:[#allocation2 + $0x138] sm:$0xff]
      %v572 = vld [vmem:[#allocation2 + $0x140] sm:$0xff]
      %v573 = vld [vmem:[#allocation2 + $0x150] sm:$0xff]
      %v574 = vld [vmem:[#allocation2 + $0x158] sm:$0xff]
      %v575 = vld [vmem:[#allocation2 + $0x168] sm:$0xff]
      %v576 = vld [vmem:[#allocation2 + $0x170] sm:$0xff]
      %v577 = vpack.c.bf16 %v545, %v545
      %v578 = vpack.c.bf16 %v546, %v546
      %v579 = vpack.c.bf16 %v547, %v547
      %v580 = vpack.c.bf16 %v548, %v548
      %v581 = vpack.c.bf16 %v549, %v549
      %v582 = vpack.c.bf16 %v550, %v550
      %v583 = vpack.c.bf16 %v551, %v551
      %v584 = vpack.c.bf16 %v552, %v552
      %v585 = vpack.c.bf16 %v553, %v553
      %v586 = vpack.c.bf16 %v554, %v554
      %v587 = vpack.c.bf16 %v555, %v555
      %v588 = vpack.c.bf16 %v556, %v556
      %v589 = vpack.c.bf16 %v557, %v557
      %v590 = vpack.c.bf16 %v558, %v558
      %v591 = vpack.c.bf16 %v559, %v559
      %v592 = vpack.c.bf16 %v560, %v560
      %v593 = vpack.c.bf16 %v561, %v561
      %v594 = vpack.c.bf16 %v562, %v562
      %v595 = vpack.c.bf16 %v563, %v563
      %v596 = vpack.c.bf16 %v564, %v564
      %v597 = vpack.c.bf16 %v565, %v565
      %v598 = vpack.c.bf16 %v566, %v566
      %v599 = vpack.c.bf16 %v567, %v567
      %v600 = vpack.c.bf16 %v568, %v568
      %v601 = vpack.c.bf16 %v569, %v569
      %v602 = vpack.c.bf16 %v570, %v570
      %v603 = vpack.c.bf16 %v571, %v571
      %v604 = vpack.c.bf16 %v572, %v572
      %v605 = vpack.c.bf16 %v573, %v573
      %v606 = vpack.c.bf16 %v574, %v574
      %v607 = vpack.c.bf16 %v575, %v575
      %v608 = vpack.c.bf16 %v576, %v576
      %v609 = vld [vmem:[%s4] sm:$0xf]
      %v610 = vld [vmem:[%s4 + $0x4] sm:$0xf]
      %v611 = vld [vmem:[%s4 + $0x8] sm:$0xf]
      %v612 = vld [vmem:[%s4 + $0xc] sm:$0xf]
      %v613 = vld [vmem:[%s4 + $0x10] sm:$0xf]
      %v614 = vld [vmem:[%s4 + $0x14] sm:$0xf]
      %v615 = vld [vmem:[%s4 + $0x18] sm:$0xf]
      %v616 = vld [vmem:[%s4 + $0x1c] sm:$0xf]
      %v617 = vld [vmem:[%s4 + $0x20] sm:$0xf]
      %v618 = vld [vmem:[%s4 + $0x24] sm:$0xf]
      %v619 = vld [vmem:[%s4 + $0x28] sm:$0xf]
      %v620 = vld [vmem:[%s4 + $0x2c] sm:$0xf]
      %v621 = vld [vmem:[%s4 + $0x30] sm:$0xf]
      %v622 = vld [vmem:[%s4 + $0x34] sm:$0xf]
      %v623 = vld [vmem:[%s4 + $0x38] sm:$0xf]
      %v624 = vld [vmem:[%s4 + $0x3c] sm:$0xf]
      %v625 = vld [vmem:[#allocation2 + $0x1] sm:$0xff]
      %v626 = vld [vmem:[#allocation2 + $0x9] sm:$0xff]
      %v627 = vld [vmem:[#allocation2 + $0x19] sm:$0xff]
      %v628 = vld [vmem:[#allocation2 + $0x21] sm:$0xff]
      %v629 = vld [vmem:[#allocation2 + $0x31] sm:$0xff]
      %v630 = vld [vmem:[#allocation2 + $0x39] sm:$0xff]
      %v631 = vld [vmem:[#allocation2 + $0x49] sm:$0xff]
      %v632 = vld [vmem:[#allocation2 + $0x51] sm:$0xff]
      %v633 = vld [vmem:[#allocation2 + $0x61] sm:$0xff]
      %v634 = vld [vmem:[#allocation2 + $0x69] sm:$0xff]
      %v635 = vld [vmem:[#allocation2 + $0x79] sm:$0xff]
      %v636 = vld [vmem:[#allocation2 + $0x81] sm:$0xff]
      %v637 = vld [vmem:[#allocation2 + $0x91] sm:$0xff]
      %v638 = vld [vmem:[#allocation2 + $0x99] sm:$0xff]
      %v639 = vld [vmem:[#allocation2 + $0xa9] sm:$0xff]
      %v640 = vld [vmem:[#allocation2 + $0xb1] sm:$0xff]
      %v641 = vld [vmem:[#allocation2 + $0xc1] sm:$0xff]
      %v642 = vld [vmem:[#allocation2 + $0xc9] sm:$0xff]
      %v643 = vld [vmem:[#allocation2 + $0xd9] sm:$0xff]
      %v644 = vld [vmem:[#allocation2 + $0xe1] sm:$0xff]
      %v645 = vld [vmem:[#allocation2 + $0xf1] sm:$0xff]
      %v646 = vld [vmem:[#allocation2 + $0xf9] sm:$0xff]
      %v647 = vld [vmem:[#allocation2 + $0x109] sm:$0xff]
      %v648 = vld [vmem:[#allocation2 + $0x111] sm:$0xff]
      %v649 = vld [vmem:[#allocation2 + $0x121] sm:$0xff]
      %v650 = vld [vmem:[#allocation2 + $0x129] sm:$0xff]
      %v651 = vld [vmem:[#allocation2 + $0x139] sm:$0xff]
      %v652 = vld [vmem:[#allocation2 + $0x141] sm:$0xff]
      %v653 = vld [vmem:[#allocation2 + $0x151] sm:$0xff]
      %v654 = vld [vmem:[#allocation2 + $0x159] sm:$0xff]
      %v655 = vld [vmem:[#allocation2 + $0x169] sm:$0xff]
      %v656 = vld [vmem:[#allocation2 + $0x171] sm:$0xff]
      %v657 = vpack.c.bf16 %v625, %v625
      %v658 = vpack.c.bf16 %v626, %v626
      %v659 = vpack.c.bf16 %v627, %v627
      %v660 = vpack.c.bf16 %v628, %v628
      %v661 = vpack.c.bf16 %v629, %v629
      %v662 = vpack.c.bf16 %v630, %v630
      %v663 = vpack.c.bf16 %v631, %v631
      %v664 = vpack.c.bf16 %v632, %v632
      %v665 = vpack.c.bf16 %v633, %v633
      %v666 = vpack.c.bf16 %v634, %v634
      %v667 = vpack.c.bf16 %v635, %v635
      %v668 = vpack.c.bf16 %v636, %v636
      %v669 = vpack.c.bf16 %v637, %v637
      %v670 = vpack.c.bf16 %v638, %v638
      %v671 = vpack.c.bf16 %v639, %v639
      %v672 = vpack.c.bf16 %v640, %v640
      %v673 = vpack.c.bf16 %v641, %v641
      %v674 = vpack.c.bf16 %v642, %v642
      %v675 = vpack.c.bf16 %v643, %v643
      %v676 = vpack.c.bf16 %v644, %v644
      %v677 = vpack.c.bf16 %v645, %v645
      %v678 = vpack.c.bf16 %v646, %v646
      %v679 = vpack.c.bf16 %v647, %v647
      %v680 = vpack.c.bf16 %v648, %v648
      %v681 = vpack.c.bf16 %v649, %v649
      %v682 = vpack.c.bf16 %v650, %v650
      %v683 = vpack.c.bf16 %v651, %v651
      %v684 = vpack.c.bf16 %v652, %v652
      %v685 = vpack.c.bf16 %v653, %v653
      %v686 = vpack.c.bf16 %v654, %v654
      %v687 = vpack.c.bf16 %v655, %v655
      %v688 = vpack.c.bf16 %v656, %v656
      %s689 = scalar_lea.vmem %s4, 64
      %v690 = vld [vmem:[%s689] sm:$0xf]
      %v691 = vld [vmem:[%s689 + $0x4] sm:$0xf]
      %v692 = vld [vmem:[%s689 + $0x8] sm:$0xf]
      %v693 = vld [vmem:[%s689 + $0xc] sm:$0xf]
      %v694 = vld [vmem:[%s689 + $0x10] sm:$0xf]
      %v695 = vld [vmem:[%s689 + $0x14] sm:$0xf]
      %v696 = vld [vmem:[%s689 + $0x18] sm:$0xf]
      %v697 = vld [vmem:[%s689 + $0x1c] sm:$0xf]
      %v698 = vld [vmem:[%s689 + $0x20] sm:$0xf]
      %v699 = vld [vmem:[%s689 + $0x24] sm:$0xf]
      %v700 = vld [vmem:[%s689 + $0x28] sm:$0xf]
      %v701 = vld [vmem:[%s689 + $0x2c] sm:$0xf]
      %v702 = vld [vmem:[%s689 + $0x30] sm:$0xf]
      %v703 = vld [vmem:[%s689 + $0x34] sm:$0xf]
      %v704 = vld [vmem:[%s689 + $0x38] sm:$0xf]
      %v705 = vld [vmem:[%s689 + $0x3c] sm:$0xf]
      %v738 = vunpack.c.l.b16 %v657
      %v739 = vunpack.c.l.b16 %v658
      %v740 = vunpack.c.l.b16 %v659
      %v741 = vunpack.c.l.b16 %v660
      %v742 = vunpack.c.l.b16 %v661
      %v743 = vunpack.c.l.b16 %v662
      %v744 = vunpack.c.l.b16 %v663
      %v745 = vunpack.c.l.b16 %v664
      %v746 = vunpack.c.l.b16 %v665
      %v747 = vunpack.c.l.b16 %v666
      %v748 = vunpack.c.l.b16 %v667
      %v749 = vunpack.c.l.b16 %v668
      %v750 = vunpack.c.l.b16 %v669
      %v751 = vunpack.c.l.b16 %v670
      %v752 = vunpack.c.l.b16 %v671
      %v753 = vunpack.c.l.b16 %v672
      %v754 = vunpack.c.l.b16 %v673
      %v755 = vunpack.c.l.b16 %v674
      %v756 = vunpack.c.l.b16 %v675
      %v757 = vunpack.c.l.b16 %v676
      %v758 = vunpack.c.l.b16 %v677
      %v759 = vunpack.c.l.b16 %v678
      %v760 = vunpack.c.l.b16 %v679
      %v761 = vunpack.c.l.b16 %v680
      %v762 = vunpack.c.l.b16 %v681
      %v763 = vunpack.c.l.b16 %v682
      %v764 = vunpack.c.l.b16 %v683
      %v765 = vunpack.c.l.b16 %v684
      %v766 = vunpack.c.l.b16 %v685
      %v767 = vunpack.c.l.b16 %v686
      %v768 = vunpack.c.l.b16 %v687
      %v769 = vunpack.c.l.b16 %v688
      %v770 = vpack.c.b16 %v739, %v738
      %v771 = vpack.c.b16 %v741, %v740
      %v772 = vpack.c.b16 %v743, %v742
      %v773 = vpack.c.b16 %v745, %v744
      %v774 = vpack.c.b16 %v747, %v746
      %v775 = vpack.c.b16 %v749, %v748
      %v776 = vpack.c.b16 %v751, %v750
      %v777 = vpack.c.b16 %v753, %v752
      %v778 = vpack.c.b16 %v755, %v754
      %v779 = vpack.c.b16 %v757, %v756
      %v780 = vpack.c.b16 %v759, %v758
      %v781 = vpack.c.b16 %v761, %v760
      %v782 = vpack.c.b16 %v763, %v762
      %v783 = vpack.c.b16 %v765, %v764
      %v784 = vpack.c.b16 %v767, %v766
      %v785 = vpack.c.b16 %v769, %v768
      %v818 = vunpack.c.l.b16 %v690
      %v819 = vunpack.c.l.b16 %v691
      %v820 = vunpack.c.l.b16 %v692
      %v821 = vunpack.c.l.b16 %v693
      %v822 = vunpack.c.l.b16 %v694
      %v823 = vunpack.c.l.b16 %v695
      %v824 = vunpack.c.l.b16 %v696
      %v825 = vunpack.c.l.b16 %v697
      %v826 = vunpack.c.l.b16 %v698
      %v827 = vunpack.c.l.b16 %v699
      %v828 = vunpack.c.l.b16 %v700
      %v829 = vunpack.c.l.b16 %v701
      %v830 = vunpack.c.l.b16 %v702
      %v831 = vunpack.c.l.b16 %v703
      %v832 = vunpack.c.l.b16 %v704
      %v833 = vunpack.c.l.b16 %v705
      %v834 = vpack.c.b16 %v819, %v818
      %v835 = vpack.c.b16 %v821, %v820
      %v836 = vpack.c.b16 %v823, %v822
      %v837 = vpack.c.b16 %v825, %v824
      %v838 = vpack.c.b16 %v827, %v826
      %v839 = vpack.c.b16 %v829, %v828
      %v840 = vpack.c.b16 %v831, %v830
      %v841 = vpack.c.b16 %v833, %v832
      %850 = vmatpush.bf16.msra.mxu0 %v841
      %851 = vmatpush.bf16.msra.mxu0 %v840
      %852 = vmatpush.bf16.msra.mxu0 %v839
      %853 = vmatpush.bf16.msra.mxu0 %v838
      %854 = vmatpush.bf16.msra.mxu0 %v837
      %855 = vmatpush.bf16.msra.mxu0 %v836
      %856 = vmatpush.bf16.msra.mxu0 %v835
      %857 = vmatpush.bf16.msra.mxu0 %v834
      %858 = vmatmul.bf16.gmra.mxu0 %v770
      %v859 = vpop.f32.mrf.mxu0
      %v860 = vadd.f32 0.0, %v859
      %v861 = vpop.f32.mrf.mxu0
      %v862 = vadd.f32 0.0, %v861
      %863 = vmatmul.bf16.gmra.mxu0 %v771
      %v864 = vpop.f32.mrf.mxu0
      %v865 = vadd.f32 0.0, %v864
      %v866 = vpop.f32.mrf.mxu0
      %v867 = vadd.f32 0.0, %v866
      %868 = vmatmul.bf16.gmra.mxu0 %v772
      %v869 = vpop.f32.mrf.mxu0
      %v870 = vadd.f32 0.0, %v869
      %v871 = vpop.f32.mrf.mxu0
      %v872 = vadd.f32 0.0, %v871
      %873 = vmatmul.bf16.gmra.mxu0 %v773
      %v874 = vpop.f32.mrf.mxu0
      %v875 = vadd.f32 0.0, %v874
      %v876 = vpop.f32.mrf.mxu0
      %v877 = vadd.f32 0.0, %v876
      %878 = vmatmul.bf16.gmra.mxu0 %v774
      %v879 = vpop.f32.mrf.mxu0
      %v880 = vadd.f32 0.0, %v879
      %v881 = vpop.f32.mrf.mxu0
      %v882 = vadd.f32 0.0, %v881
      %883 = vmatmul.bf16.gmra.mxu0 %v775
      %v884 = vpop.f32.mrf.mxu0
      %v885 = vadd.f32 0.0, %v884
      %v886 = vpop.f32.mrf.mxu0
      %v887 = vadd.f32 0.0, %v886
      %888 = vmatmul.bf16.gmra.mxu0 %v776
      %v889 = vpop.f32.mrf.mxu0
      %v890 = vadd.f32 0.0, %v889
      %v891 = vpop.f32.mrf.mxu0
      %v892 = vadd.f32 0.0, %v891
      %893 = vmatmul.bf16.gmra.mxu0 %v777
      %v894 = vpop.f32.mrf.mxu0
      %v895 = vadd.f32 0.0, %v894
      %v896 = vpop.f32.mrf.mxu0
      %v897 = vadd.f32 0.0, %v896
      %898 = vmatmul.bf16.gmra.mxu0 %v778
      %v899 = vpop.f32.mrf.mxu0
      %v900 = vadd.f32 0.0, %v899
      %v901 = vpop.f32.mrf.mxu0
      %v902 = vadd.f32 0.0, %v901
      %903 = vmatmul.bf16.gmra.mxu0 %v779
      %v904 = vpop.f32.mrf.mxu0
      %v905 = vadd.f32 0.0, %v904
      %v906 = vpop.f32.mrf.mxu0
      %v907 = vadd.f32 0.0, %v906
      %908 = vmatmul.bf16.gmra.mxu0 %v780
      %v909 = vpop.f32.mrf.mxu0
      %v910 = vadd.f32 0.0, %v909
      %v911 = vpop.f32.mrf.mxu0
      %v912 = vadd.f32 0.0, %v911
      %913 = vmatmul.bf16.gmra.mxu0 %v781
      %v914 = vpop.f32.mrf.mxu0
      %v915 = vadd.f32 0.0, %v914
      %v916 = vpop.f32.mrf.mxu0
      %v917 = vadd.f32 0.0, %v916
      %918 = vmatmul.bf16.gmra.mxu0 %v782
      %v919 = vpop.f32.mrf.mxu0
      %v920 = vadd.f32 0.0, %v919
      %v921 = vpop.f32.mrf.mxu0
      %v922 = vadd.f32 0.0, %v921
      %923 = vmatmul.bf16.gmra.mxu0 %v783
      %v924 = vpop.f32.mrf.mxu0
      %v925 = vadd.f32 0.0, %v924
      %v926 = vpop.f32.mrf.mxu0
      %v927 = vadd.f32 0.0, %v926
      %928 = vmatmul.bf16.gmra.mxu0 %v784
      %v929 = vpop.f32.mrf.mxu0
      %v930 = vadd.f32 0.0, %v929
      %v931 = vpop.f32.mrf.mxu0
      %v932 = vadd.f32 0.0, %v931
      %933 = vmatmul.bf16.gmra.mxu0 %v785
      %v934 = vpop.f32.mrf.mxu0
      %v935 = vadd.f32 0.0, %v934
      %v936 = vpop.f32.mrf.mxu0
      %v937 = vadd.f32 0.0, %v936
      %938 = vdwg.mxu0
      %v971 = vunpack.c.l.b16 %v577
      %v972 = vunpack.c.l.b16 %v578
      %v973 = vunpack.c.l.b16 %v579
      %v974 = vunpack.c.l.b16 %v580
      %v975 = vunpack.c.l.b16 %v581
      %v976 = vunpack.c.l.b16 %v582
      %v977 = vunpack.c.l.b16 %v583
      %v978 = vunpack.c.l.b16 %v584
      %v979 = vunpack.c.l.b16 %v585
      %v980 = vunpack.c.l.b16 %v586
      %v981 = vunpack.c.l.b16 %v587
      %v982 = vunpack.c.l.b16 %v588
      %v983 = vunpack.c.l.b16 %v589
      %v984 = vunpack.c.l.b16 %v590
      %v985 = vunpack.c.l.b16 %v591
      %v986 = vunpack.c.l.b16 %v592
      %v987 = vunpack.c.l.b16 %v593
      %v988 = vunpack.c.l.b16 %v594
      %v989 = vunpack.c.l.b16 %v595
      %v990 = vunpack.c.l.b16 %v596
      %v991 = vunpack.c.l.b16 %v597
      %v992 = vunpack.c.l.b16 %v598
      %v993 = vunpack.c.l.b16 %v599
      %v994 = vunpack.c.l.b16 %v600
      %v995 = vunpack.c.l.b16 %v601
      %v996 = vunpack.c.l.b16 %v602
      %v997 = vunpack.c.l.b16 %v603
      %v998 = vunpack.c.l.b16 %v604
      %v999 = vunpack.c.l.b16 %v605
      %v1000 = vunpack.c.l.b16 %v606
      %v1001 = vunpack.c.l.b16 %v607
      %v1002 = vunpack.c.l.b16 %v608
      %v1003 = vpack.c.b16 %v972, %v971
      %v1004 = vpack.c.b16 %v974, %v973
      %v1005 = vpack.c.b16 %v976, %v975
      %v1006 = vpack.c.b16 %v978, %v977
      %v1007 = vpack.c.b16 %v980, %v979
      %v1008 = vpack.c.b16 %v982, %v981
      %v1009 = vpack.c.b16 %v984, %v983
      %v1010 = vpack.c.b16 %v986, %v985
      %v1011 = vpack.c.b16 %v988, %v987
      %v1012 = vpack.c.b16 %v990, %v989
      %v1013 = vpack.c.b16 %v992, %v991
      %v1014 = vpack.c.b16 %v994, %v993
      %v1015 = vpack.c.b16 %v996, %v995
      %v1016 = vpack.c.b16 %v998, %v997
      %v1017 = vpack.c.b16 %v1000, %v999
      %v1018 = vpack.c.b16 %v1002, %v1001
      %v1051 = vunpack.c.l.b16 %v609
      %v1052 = vunpack.c.l.b16 %v610
      %v1053 = vunpack.c.l.b16 %v611
      %v1054 = vunpack.c.l.b16 %v612
      %v1055 = vunpack.c.l.b16 %v613
      %v1056 = vunpack.c.l.b16 %v614
      %v1057 = vunpack.c.l.b16 %v615
      %v1058 = vunpack.c.l.b16 %v616
      %v1059 = vunpack.c.l.b16 %v617
      %v1060 = vunpack.c.l.b16 %v618
      %v1061 = vunpack.c.l.b16 %v619
      %v1062 = vunpack.c.l.b16 %v620
      %v1063 = vunpack.c.l.b16 %v621
      %v1064 = vunpack.c.l.b16 %v622
      %v1065 = vunpack.c.l.b16 %v623
      %v1066 = vunpack.c.l.b16 %v624
      %v1067 = vpack.c.b16 %v1052, %v1051
      %v1068 = vpack.c.b16 %v1054, %v1053
      %v1069 = vpack.c.b16 %v1056, %v1055
      %v1070 = vpack.c.b16 %v1058, %v1057
      %v1071 = vpack.c.b16 %v1060, %v1059
      %v1072 = vpack.c.b16 %v1062, %v1061
      %v1073 = vpack.c.b16 %v1064, %v1063
      %v1074 = vpack.c.b16 %v1066, %v1065
      %1083 = vmatpush.bf16.msra.mxu0 %v1074
      %1084 = vmatpush.bf16.msra.mxu0 %v1073
      %1085 = vmatpush.bf16.msra.mxu0 %v1072
      %1086 = vmatpush.bf16.msra.mxu0 %v1071
      %1087 = vmatpush.bf16.msra.mxu0 %v1070
      %1088 = vmatpush.bf16.msra.mxu0 %v1069
      %1089 = vmatpush.bf16.msra.mxu0 %v1068
      %1090 = vmatpush.bf16.msra.mxu0 %v1067
      %1091 = vmatmul.bf16.gmra.mxu0 %v1003
      %v1092 = vpop.f32.mrf.mxu0
      %v1093 = vadd.f32 %v860, %v1092
      %v1094 = vpop.f32.mrf.mxu0
      %v1095 = vadd.f32 %v862, %v1094
      %1096 = vmatmul.bf16.gmra.mxu0 %v1004
      %v1097 = vpop.f32.mrf.mxu0
      %v1098 = vadd.f32 %v865, %v1097
      %v1099 = vpop.f32.mrf.mxu0
      %v1100 = vadd.f32 %v867, %v1099
      %1101 = vmatmul.bf16.gmra.mxu0 %v1005
      %v1102 = vpop.f32.mrf.mxu0
      %v1103 = vadd.f32 %v870, %v1102
      %v1104 = vpop.f32.mrf.mxu0
      %v1105 = vadd.f32 %v872, %v1104
      %1106 = vmatmul.bf16.gmra.mxu0 %v1006
      %v1107 = vpop.f32.mrf.mxu0
      %v1108 = vadd.f32 %v875, %v1107
      %v1109 = vpop.f32.mrf.mxu0
      %v1110 = vadd.f32 %v877, %v1109
      %1111 = vmatmul.bf16.gmra.mxu0 %v1007
      %v1112 = vpop.f32.mrf.mxu0
      %v1113 = vadd.f32 %v880, %v1112
      %v1114 = vpop.f32.mrf.mxu0
      %v1115 = vadd.f32 %v882, %v1114
      %1116 = vmatmul.bf16.gmra.mxu0 %v1008
      %v1117 = vpop.f32.mrf.mxu0
      %v1118 = vadd.f32 %v885, %v1117
      %v1119 = vpop.f32.mrf.mxu0
      %v1120 = vadd.f32 %v887, %v1119
      %1121 = vmatmul.bf16.gmra.mxu0 %v1009
      %v1122 = vpop.f32.mrf.mxu0
      %v1123 = vadd.f32 %v890, %v1122
      %v1124 = vpop.f32.mrf.mxu0
      %v1125 = vadd.f32 %v892, %v1124
      %1126 = vmatmul.bf16.gmra.mxu0 %v1010
      %v1127 = vpop.f32.mrf.mxu0
      %v1128 = vadd.f32 %v895, %v1127
      %v1129 = vpop.f32.mrf.mxu0
      %v1130 = vadd.f32 %v897, %v1129
      %1131 = vmatmul.bf16.gmra.mxu0 %v1011
      %v1132 = vpop.f32.mrf.mxu0
      %v1133 = vadd.f32 %v900, %v1132
      %v1134 = vpop.f32.mrf.mxu0
      %v1135 = vadd.f32 %v902, %v1134
      %1136 = vmatmul.bf16.gmra.mxu0 %v1012
      %v1137 = vpop.f32.mrf.mxu0
      %v1138 = vadd.f32 %v905, %v1137
      %v1139 = vpop.f32.mrf.mxu0
      %v1140 = vadd.f32 %v907, %v1139
      %1141 = vmatmul.bf16.gmra.mxu0 %v1013
      %v1142 = vpop.f32.mrf.mxu0
      %v1143 = vadd.f32 %v910, %v1142
      %v1144 = vpop.f32.mrf.mxu0
      %v1145 = vadd.f32 %v912, %v1144
      %1146 = vmatmul.bf16.gmra.mxu0 %v1014
      %v1147 = vpop.f32.mrf.mxu0
      %v1148 = vadd.f32 %v915, %v1147
      %v1149 = vpop.f32.mrf.mxu0
      %v1150 = vadd.f32 %v917, %v1149
      %1151 = vmatmul.bf16.gmra.mxu0 %v1015
      %v1152 = vpop.f32.mrf.mxu0
      %v1153 = vadd.f32 %v920, %v1152
      %v1154 = vpop.f32.mrf.mxu0
      %v1155 = vadd.f32 %v922, %v1154
      %1156 = vmatmul.bf16.gmra.mxu0 %v1016
      %v1157 = vpop.f32.mrf.mxu0
      %v1158 = vadd.f32 %v925, %v1157
      %v1159 = vpop.f32.mrf.mxu0
      %v1160 = vadd.f32 %v927, %v1159
      %1161 = vmatmul.bf16.gmra.mxu0 %v1017
      %v1162 = vpop.f32.mrf.mxu0
      %v1163 = vadd.f32 %v930, %v1162
      %v1164 = vpop.f32.mrf.mxu0
      %v1165 = vadd.f32 %v932, %v1164
      %1166 = vmatmul.bf16.gmra.mxu0 %v1018
      %v1167 = vpop.f32.mrf.mxu0
      %v1168 = vadd.f32 %v935, %v1167
      %v1169 = vpop.f32.mrf.mxu0
      %v1170 = vadd.f32 %v937, %v1169
      %1171 = vdwg.mxu0
      %v1172 = vld [vmem:[#allocation2 + $0x2] sm:$0xff]
      %v1173 = vld [vmem:[#allocation2 + $0xa] sm:$0xff]
      %v1174 = vld [vmem:[#allocation2 + $0x1a] sm:$0xff]
      %v1175 = vld [vmem:[#allocation2 + $0x22] sm:$0xff]
      %v1176 = vld [vmem:[#allocation2 + $0x32] sm:$0xff]
      %v1177 = vld [vmem:[#allocation2 + $0x3a] sm:$0xff]
      %v1178 = vld [vmem:[#allocation2 + $0x4a] sm:$0xff]
      %v1179 = vld [vmem:[#allocation2 + $0x52] sm:$0xff]
      %v1180 = vld [vmem:[#allocation2 + $0x62] sm:$0xff]
      %v1181 = vld [vmem:[#allocation2 + $0x6a] sm:$0xff]
      %v1182 = vld [vmem:[#allocation2 + $0x7a] sm:$0xff]
      %v1183 = vld [vmem:[#allocation2 + $0x82] sm:$0xff]
      %v1184 = vld [vmem:[#allocation2 + $0x92] sm:$0xff]
      %v1185 = vld [vmem:[#allocation2 + $0x9a] sm:$0xff]
      %v1186 = vld [vmem:[#allocation2 + $0xaa] sm:$0xff]
      %v1187 = vld [vmem:[#allocation2 + $0xb2] sm:$0xff]
      %v1188 = vld [vmem:[#allocation2 + $0xc2] sm:$0xff]
      %v1189 = vld [vmem:[#allocation2 + $0xca] sm:$0xff]
      %v1190 = vld [vmem:[#allocation2 + $0xda] sm:$0xff]
      %v1191 = vld [vmem:[#allocation2 + $0xe2] sm:$0xff]
      %v1192 = vld [vmem:[#allocation2 + $0xf2] sm:$0xff]
      %v1193 = vld [vmem:[#allocation2 + $0xfa] sm:$0xff]
      %v1194 = vld [vmem:[#allocation2 + $0x10a] sm:$0xff]
      %v1195 = vld [vmem:[#allocation2 + $0x112] sm:$0xff]
      %v1196 = vld [vmem:[#allocation2 + $0x122] sm:$0xff]
      %v1197 = vld [vmem:[#allocation2 + $0x12a] sm:$0xff]
      %v1198 = vld [vmem:[#allocation2 + $0x13a] sm:$0xff]
      %v1199 = vld [vmem:[#allocation2 + $0x142] sm:$0xff]
      %v1200 = vld [vmem:[#allocation2 + $0x152] sm:$0xff]
      %v1201 = vld [vmem:[#allocation2 + $0x15a] sm:$0xff]
      %v1202 = vld [vmem:[#allocation2 + $0x16a] sm:$0xff]
      %v1203 = vld [vmem:[#allocation2 + $0x172] sm:$0xff]
      %v1204 = vpack.c.bf16 %v1172, %v1172
      %v1205 = vpack.c.bf16 %v1173, %v1173
      %v1206 = vpack.c.bf16 %v1174, %v1174
      %v1207 = vpack.c.bf16 %v1175, %v1175
      %v1208 = vpack.c.bf16 %v1176, %v1176
      %v1209 = vpack.c.bf16 %v1177, %v1177
      %v1210 = vpack.c.bf16 %v1178, %v1178
      %v1211 = vpack.c.bf16 %v1179, %v1179
      %v1212 = vpack.c.bf16 %v1180, %v1180
      %v1213 = vpack.c.bf16 %v1181, %v1181
      %v1214 = vpack.c.bf16 %v1182, %v1182
      %v1215 = vpack.c.bf16 %v1183, %v1183
      %v1216 = vpack.c.bf16 %v1184, %v1184
      %v1217 = vpack.c.bf16 %v1185, %v1185
      %v1218 = vpack.c.bf16 %v1186, %v1186
      %v1219 = vpack.c.bf16 %v1187, %v1187
      %v1220 = vpack.c.bf16 %v1188, %v1188
      %v1221 = vpack.c.bf16 %v1189, %v1189
      %v1222 = vpack.c.bf16 %v1190, %v1190
      %v1223 = vpack.c.bf16 %v1191, %v1191
      %v1224 = vpack.c.bf16 %v1192, %v1192
      %v1225 = vpack.c.bf16 %v1193, %v1193
      %v1226 = vpack.c.bf16 %v1194, %v1194
      %v1227 = vpack.c.bf16 %v1195, %v1195
      %v1228 = vpack.c.bf16 %v1196, %v1196
      %v1229 = vpack.c.bf16 %v1197, %v1197
      %v1230 = vpack.c.bf16 %v1198, %v1198
      %v1231 = vpack.c.bf16 %v1199, %v1199
      %v1232 = vpack.c.bf16 %v1200, %v1200
      %v1233 = vpack.c.bf16 %v1201, %v1201
      %v1234 = vpack.c.bf16 %v1202, %v1202
      %v1235 = vpack.c.bf16 %v1203, %v1203
      %s1236 = scalar_lea.vmem %s4, 128
      %v1237 = vld [vmem:[%s1236] sm:$0xf]
      %v1238 = vld [vmem:[%s1236 + $0x4] sm:$0xf]
      %v1239 = vld [vmem:[%s1236 + $0x8] sm:$0xf]
      %v1240 = vld [vmem:[%s1236 + $0xc] sm:$0xf]
      %v1241 = vld [vmem:[%s1236 + $0x10] sm:$0xf]
      %v1242 = vld [vmem:[%s1236 + $0x14] sm:$0xf]
      %v1243 = vld [vmem:[%s1236 + $0x18] sm:$0xf]
      %v1244 = vld [vmem:[%s1236 + $0x1c] sm:$0xf]
      %v1245 = vld [vmem:[%s1236 + $0x20] sm:$0xf]
      %v1246 = vld [vmem:[%s1236 + $0x24] sm:$0xf]
      %v1247 = vld [vmem:[%s1236 + $0x28] sm:$0xf]
      %v1248 = vld [vmem:[%s1236 + $0x2c] sm:$0xf]
      %v1249 = vld [vmem:[%s1236 + $0x30] sm:$0xf]
      %v1250 = vld [vmem:[%s1236 + $0x34] sm:$0xf]
      %v1251 = vld [vmem:[%s1236 + $0x38] sm:$0xf]
      %v1252 = vld [vmem:[%s1236 + $0x3c] sm:$0xf]
      %v1285 = vunpack.c.l.b16 %v1204
      %v1286 = vunpack.c.l.b16 %v1205
      %v1287 = vunpack.c.l.b16 %v1206
      %v1288 = vunpack.c.l.b16 %v1207
      %v1289 = vunpack.c.l.b16 %v1208
      %v1290 = vunpack.c.l.b16 %v1209
      %v1291 = vunpack.c.l.b16 %v1210
      %v1292 = vunpack.c.l.b16 %v1211
      %v1293 = vunpack.c.l.b16 %v1212
      %v1294 = vunpack.c.l.b16 %v1213
      %v1295 = vunpack.c.l.b16 %v1214
      %v1296 = vunpack.c.l.b16 %v1215
      %v1297 = vunpack.c.l.b16 %v1216
      %v1298 = vunpack.c.l.b16 %v1217
      %v1299 = vunpack.c.l.b16 %v1218
      %v1300 = vunpack.c.l.b16 %v1219
      %v1301 = vunpack.c.l.b16 %v1220
      %v1302 = vunpack.c.l.b16 %v1221
      %v1303 = vunpack.c.l.b16 %v1222
      %v1304 = vunpack.c.l.b16 %v1223
      %v1305 = vunpack.c.l.b16 %v1224
      %v1306 = vunpack.c.l.b16 %v1225
      %v1307 = vunpack.c.l.b16 %v1226
      %v1308 = vunpack.c.l.b16 %v1227
      %v1309 = vunpack.c.l.b16 %v1228
      %v1310 = vunpack.c.l.b16 %v1229
      %v1311 = vunpack.c.l.b16 %v1230
      %v1312 = vunpack.c.l.b16 %v1231
      %v1313 = vunpack.c.l.b16 %v1232
      %v1314 = vunpack.c.l.b16 %v1233
      %v1315 = vunpack.c.l.b16 %v1234
      %v1316 = vunpack.c.l.b16 %v1235
      %v1317 = vpack.c.b16 %v1286, %v1285
      %v1318 = vpack.c.b16 %v1288, %v1287
      %v1319 = vpack.c.b16 %v1290, %v1289
      %v1320 = vpack.c.b16 %v1292, %v1291
      %v1321 = vpack.c.b16 %v1294, %v1293
      %v1322 = vpack.c.b16 %v1296, %v1295
      %v1323 = vpack.c.b16 %v1298, %v1297
      %v1324 = vpack.c.b16 %v1300, %v1299
      %v1325 = vpack.c.b16 %v1302, %v1301
      %v1326 = vpack.c.b16 %v1304, %v1303
      %v1327 = vpack.c.b16 %v1306, %v1305
      %v1328 = vpack.c.b16 %v1308, %v1307
      %v1329 = vpack.c.b16 %v1310, %v1309
      %v1330 = vpack.c.b16 %v1312, %v1311
      %v1331 = vpack.c.b16 %v1314, %v1313
      %v1332 = vpack.c.b16 %v1316, %v1315
      %v1365 = vunpack.c.l.b16 %v1237
      %v1366 = vunpack.c.l.b16 %v1238
      %v1367 = vunpack.c.l.b16 %v1239
      %v1368 = vunpack.c.l.b16 %v1240
      %v1369 = vunpack.c.l.b16 %v1241
      %v1370 = vunpack.c.l.b16 %v1242
      %v1371 = vunpack.c.l.b16 %v1243
      %v1372 = vunpack.c.l.b16 %v1244
      %v1373 = vunpack.c.l.b16 %v1245
      %v1374 = vunpack.c.l.b16 %v1246
      %v1375 = vunpack.c.l.b16 %v1247
      %v1376 = vunpack.c.l.b16 %v1248
      %v1377 = vunpack.c.l.b16 %v1249
      %v1378 = vunpack.c.l.b16 %v1250
      %v1379 = vunpack.c.l.b16 %v1251
      %v1380 = vunpack.c.l.b16 %v1252
      %v1381 = vpack.c.b16 %v1366, %v1365
      %v1382 = vpack.c.b16 %v1368, %v1367
      %v1383 = vpack.c.b16 %v1370, %v1369
      %v1384 = vpack.c.b16 %v1372, %v1371
      %v1385 = vpack.c.b16 %v1374, %v1373
      %v1386 = vpack.c.b16 %v1376, %v1375
      %v1387 = vpack.c.b16 %v1378, %v1377
      %v1388 = vpack.c.b16 %v1380, %v1379
      %1397 = vmatpush.bf16.msra.mxu0 %v1388
      %1398 = vmatpush.bf16.msra.mxu0 %v1387
      %1399 = vmatpush.bf16.msra.mxu0 %v1386
      %1400 = vmatpush.bf16.msra.mxu0 %v1385
      %1401 = vmatpush.bf16.msra.mxu0 %v1384
      %1402 = vmatpush.bf16.msra.mxu0 %v1383
      %1403 = vmatpush.bf16.msra.mxu0 %v1382
      %1404 = vmatpush.bf16.msra.mxu0 %v1381
      %1405 = vmatmul.bf16.gmra.mxu0 %v1317
      %v1406 = vpop.f32.mrf.mxu0
      %v1407 = vadd.f32 0.0, %v1406
      %v1408 = vpop.f32.mrf.mxu0
      %v1409 = vadd.f32 0.0, %v1408
      %1410 = vmatmul.bf16.gmra.mxu0 %v1318
      %v1411 = vpop.f32.mrf.mxu0
      %v1412 = vadd.f32 0.0, %v1411
      %v1413 = vpop.f32.mrf.mxu0
      %v1414 = vadd.f32 0.0, %v1413
      %1415 = vmatmul.bf16.gmra.mxu0 %v1319
      %v1416 = vpop.f32.mrf.mxu0
      %v1417 = vadd.f32 0.0, %v1416
      %v1418 = vpop.f32.mrf.mxu0
      %v1419 = vadd.f32 0.0, %v1418
      %1420 = vmatmul.bf16.gmra.mxu0 %v1320
      %v1421 = vpop.f32.mrf.mxu0
      %v1422 = vadd.f32 0.0, %v1421
      %v1423 = vpop.f32.mrf.mxu0
      %v1424 = vadd.f32 0.0, %v1423
      %1425 = vmatmul.bf16.gmra.mxu0 %v1321
      %v1426 = vpop.f32.mrf.mxu0
      %v1427 = vadd.f32 0.0, %v1426
      %v1428 = vpop.f32.mrf.mxu0
      %v1429 = vadd.f32 0.0, %v1428
      %1430 = vmatmul.bf16.gmra.mxu0 %v1322
      %v1431 = vpop.f32.mrf.mxu0
      %v1432 = vadd.f32 0.0, %v1431
      %v1433 = vpop.f32.mrf.mxu0
      %v1434 = vadd.f32 0.0, %v1433
      %1435 = vmatmul.bf16.gmra.mxu0 %v1323
      %v1436 = vpop.f32.mrf.mxu0
      %v1437 = vadd.f32 0.0, %v1436
      %v1438 = vpop.f32.mrf.mxu0
      %v1439 = vadd.f32 0.0, %v1438
      %1440 = vmatmul.bf16.gmra.mxu0 %v1324
      %v1441 = vpop.f32.mrf.mxu0
      %v1442 = vadd.f32 0.0, %v1441
      %v1443 = vpop.f32.mrf.mxu0
      %v1444 = vadd.f32 0.0, %v1443
      %1445 = vmatmul.bf16.gmra.mxu0 %v1325
      %v1446 = vpop.f32.mrf.mxu0
      %v1447 = vadd.f32 0.0, %v1446
      %v1448 = vpop.f32.mrf.mxu0
      %v1449 = vadd.f32 0.0, %v1448
      %1450 = vmatmul.bf16.gmra.mxu0 %v1326
      %v1451 = vpop.f32.mrf.mxu0
      %v1452 = vadd.f32 0.0, %v1451
      %v1453 = vpop.f32.mrf.mxu0
      %v1454 = vadd.f32 0.0, %v1453
      %1455 = vmatmul.bf16.gmra.mxu0 %v1327
      %v1456 = vpop.f32.mrf.mxu0
      %v1457 = vadd.f32 0.0, %v1456
      %v1458 = vpop.f32.mrf.mxu0
      %v1459 = vadd.f32 0.0, %v1458
      %1460 = vmatmul.bf16.gmra.mxu0 %v1328
      %v1461 = vpop.f32.mrf.mxu0
      %v1462 = vadd.f32 0.0, %v1461
      %v1463 = vpop.f32.mrf.mxu0
      %v1464 = vadd.f32 0.0, %v1463
      %1465 = vmatmul.bf16.gmra.mxu0 %v1329
      %v1466 = vpop.f32.mrf.mxu0
      %v1467 = vadd.f32 0.0, %v1466
      %v1468 = vpop.f32.mrf.mxu0
      %v1469 = vadd.f32 0.0, %v1468
      %1470 = vmatmul.bf16.gmra.mxu0 %v1330
      %v1471 = vpop.f32.mrf.mxu0
      %v1472 = vadd.f32 0.0, %v1471
      %v1473 = vpop.f32.mrf.mxu0
      %v1474 = vadd.f32 0.0, %v1473
      %1475 = vmatmul.bf16.gmra.mxu0 %v1331
      %v1476 = vpop.f32.mrf.mxu0
      %v1477 = vadd.f32 0.0, %v1476
      %v1478 = vpop.f32.mrf.mxu0
      %v1479 = vadd.f32 0.0, %v1478
      %1480 = vmatmul.bf16.gmra.mxu0 %v1332
      %v1481 = vpop.f32.mrf.mxu0
      %v1482 = vadd.f32 0.0, %v1481
      %v1483 = vpop.f32.mrf.mxu0
      %v1484 = vadd.f32 0.0, %v1483
      %1485 = vdwg.mxu0
      %v1486 = vadd.f32 %v1093, %v1407
      %v1487 = vadd.f32 %v1095, %v1409
      %v1488 = vadd.f32 %v1098, %v1412
      %v1489 = vadd.f32 %v1100, %v1414
      %v1490 = vadd.f32 %v1103, %v1417
      %v1491 = vadd.f32 %v1105, %v1419
      %v1492 = vadd.f32 %v1108, %v1422
      %v1493 = vadd.f32 %v1110, %v1424
      %v1494 = vadd.f32 %v1113, %v1427
      %v1495 = vadd.f32 %v1115, %v1429
      %v1496 = vadd.f32 %v1118, %v1432
      %v1497 = vadd.f32 %v1120, %v1434
      %v1498 = vadd.f32 %v1123, %v1437
      %v1499 = vadd.f32 %v1125, %v1439
      %v1500 = vadd.f32 %v1128, %v1442
      %v1501 = vadd.f32 %v1130, %v1444
      %v1502 = vadd.f32 %v1133, %v1447
      %v1503 = vadd.f32 %v1135, %v1449
      %v1504 = vadd.f32 %v1138, %v1452
      %v1505 = vadd.f32 %v1140, %v1454
      %v1506 = vadd.f32 %v1143, %v1457
      %v1507 = vadd.f32 %v1145, %v1459
      %v1508 = vadd.f32 %v1148, %v1462
      %v1509 = vadd.f32 %v1150, %v1464
      %v1510 = vadd.f32 %v1153, %v1467
      %v1511 = vadd.f32 %v1155, %v1469
      %v1512 = vadd.f32 %v1158, %v1472
      %v1513 = vadd.f32 %v1160, %v1474
      %v1514 = vadd.f32 %v1163, %v1477
      %v1515 = vadd.f32 %v1165, %v1479
      %v1516 = vadd.f32 %v1168, %v1482
      %v1517 = vadd.f32 %v1170, %v1484
      %v1518 = vld [vmem:[%s512] sm:$0xff]
      %v1519 = vld [vmem:[%s512 + $0x8] sm:$0xff]
      %v1520 = vld [vmem:[%s512 + $0x18] sm:$0xff]
      %v1521 = vld [vmem:[%s512 + $0x20] sm:$0xff]
      %v1522 = vld [vmem:[%s512 + $0x30] sm:$0xff]
      %v1523 = vld [vmem:[%s512 + $0x38] sm:$0xff]
      %v1524 = vld [vmem:[%s512 + $0x48] sm:$0xff]
      %v1525 = vld [vmem:[%s512 + $0x50] sm:$0xff]
      %v1526 = vld [vmem:[%s512 + $0x60] sm:$0xff]
      %v1527 = vld [vmem:[%s512 + $0x68] sm:$0xff]
      %v1528 = vld [vmem:[%s512 + $0x78] sm:$0xff]
      %v1529 = vld [vmem:[%s512 + $0x80] sm:$0xff]
      %v1530 = vld [vmem:[%s512 + $0x90] sm:$0xff]
      %v1531 = vld [vmem:[%s512 + $0x98] sm:$0xff]
      %v1532 = vld [vmem:[%s512 + $0xa8] sm:$0xff]
      %v1533 = vld [vmem:[%s512 + $0xb0] sm:$0xff]
      %v1534 = vld [vmem:[%s512 + $0xc0] sm:$0xff]
      %v1535 = vld [vmem:[%s512 + $0xc8] sm:$0xff]
      %v1536 = vld [vmem:[%s512 + $0xd8] sm:$0xff]
      %v1537 = vld [vmem:[%s512 + $0xe0] sm:$0xff]
      %v1538 = vld [vmem:[%s512 + $0xf0] sm:$0xff]
      %v1539 = vld [vmem:[%s512 + $0xf8] sm:$0xff]
      %v1540 = vld [vmem:[%s512 + $0x108] sm:$0xff]
      %v1541 = vld [vmem:[%s512 + $0x110] sm:$0xff]
      %v1542 = vld [vmem:[%s512 + $0x120] sm:$0xff]
      %v1543 = vld [vmem:[%s512 + $0x128] sm:$0xff]
      %v1544 = vld [vmem:[%s512 + $0x138] sm:$0xff]
      %v1545 = vld [vmem:[%s512 + $0x140] sm:$0xff]
      %v1546 = vld [vmem:[%s512 + $0x150] sm:$0xff]
      %v1547 = vld [vmem:[%s512 + $0x158] sm:$0xff]
      %v1548 = vld [vmem:[%s512 + $0x168] sm:$0xff]
      %v1549 = vld [vmem:[%s512 + $0x170] sm:$0xff]
      %v1550 = vpack.c.bf16 %v1518, %v1518
      %v1551 = vpack.c.bf16 %v1519, %v1519
      %v1552 = vpack.c.bf16 %v1520, %v1520
      %v1553 = vpack.c.bf16 %v1521, %v1521
      %v1554 = vpack.c.bf16 %v1522, %v1522
      %v1555 = vpack.c.bf16 %v1523, %v1523
      %v1556 = vpack.c.bf16 %v1524, %v1524
      %v1557 = vpack.c.bf16 %v1525, %v1525
      %v1558 = vpack.c.bf16 %v1526, %v1526
      %v1559 = vpack.c.bf16 %v1527, %v1527
      %v1560 = vpack.c.bf16 %v1528, %v1528
      %v1561 = vpack.c.bf16 %v1529, %v1529
      %v1562 = vpack.c.bf16 %v1530, %v1530
      %v1563 = vpack.c.bf16 %v1531, %v1531
      %v1564 = vpack.c.bf16 %v1532, %v1532
      %v1565 = vpack.c.bf16 %v1533, %v1533
      %v1566 = vpack.c.bf16 %v1534, %v1534
      %v1567 = vpack.c.bf16 %v1535, %v1535
      %v1568 = vpack.c.bf16 %v1536, %v1536
      %v1569 = vpack.c.bf16 %v1537, %v1537
      %v1570 = vpack.c.bf16 %v1538, %v1538
      %v1571 = vpack.c.bf16 %v1539, %v1539
      %v1572 = vpack.c.bf16 %v1540, %v1540
      %v1573 = vpack.c.bf16 %v1541, %v1541
      %v1574 = vpack.c.bf16 %v1542, %v1542
      %v1575 = vpack.c.bf16 %v1543, %v1543
      %v1576 = vpack.c.bf16 %v1544, %v1544
      %v1577 = vpack.c.bf16 %v1545, %v1545
      %v1578 = vpack.c.bf16 %v1546, %v1546
      %v1579 = vpack.c.bf16 %v1547, %v1547
      %v1580 = vpack.c.bf16 %v1548, %v1548
      %v1581 = vpack.c.bf16 %v1549, %v1549
      %s1582 = scalar_lea.vmem %s4, 192
      %v1583 = vld [vmem:[%s1582] sm:$0xf]
      %v1584 = vld [vmem:[%s1582 + $0x4] sm:$0xf]
      %v1585 = vld [vmem:[%s1582 + $0x8] sm:$0xf]
      %v1586 = vld [vmem:[%s1582 + $0xc] sm:$0xf]
      %v1587 = vld [vmem:[%s1582 + $0x10] sm:$0xf]
      %v1588 = vld [vmem:[%s1582 + $0x14] sm:$0xf]
      %v1589 = vld [vmem:[%s1582 + $0x18] sm:$0xf]
      %v1590 = vld [vmem:[%s1582 + $0x1c] sm:$0xf]
      %v1591 = vld [vmem:[%s1582 + $0x20] sm:$0xf]
      %v1592 = vld [vmem:[%s1582 + $0x24] sm:$0xf]
      %v1593 = vld [vmem:[%s1582 + $0x28] sm:$0xf]
      %v1594 = vld [vmem:[%s1582 + $0x2c] sm:$0xf]
      %v1595 = vld [vmem:[%s1582 + $0x30] sm:$0xf]
      %v1596 = vld [vmem:[%s1582 + $0x34] sm:$0xf]
      %v1597 = vld [vmem:[%s1582 + $0x38] sm:$0xf]
      %v1598 = vld [vmem:[%s1582 + $0x3c] sm:$0xf]
      %v1631 = vunpack.c.l.b16 %v1550
      %v1632 = vunpack.c.l.b16 %v1551
      %v1633 = vunpack.c.l.b16 %v1552
      %v1634 = vunpack.c.l.b16 %v1553
      %v1635 = vunpack.c.l.b16 %v1554
      %v1636 = vunpack.c.l.b16 %v1555
      %v1637 = vunpack.c.l.b16 %v1556
      %v1638 = vunpack.c.l.b16 %v1557
      %v1639 = vunpack.c.l.b16 %v1558
      %v1640 = vunpack.c.l.b16 %v1559
      %v1641 = vunpack.c.l.b16 %v1560
      %v1642 = vunpack.c.l.b16 %v1561
      %v1643 = vunpack.c.l.b16 %v1562
      %v1644 = vunpack.c.l.b16 %v1563
      %v1645 = vunpack.c.l.b16 %v1564
      %v1646 = vunpack.c.l.b16 %v1565
      %v1647 = vunpack.c.l.b16 %v1566
      %v1648 = vunpack.c.l.b16 %v1567
      %v1649 = vunpack.c.l.b16 %v1568
      %v1650 = vunpack.c.l.b16 %v1569
      %v1651 = vunpack.c.l.b16 %v1570
      %v1652 = vunpack.c.l.b16 %v1571
      %v1653 = vunpack.c.l.b16 %v1572
      %v1654 = vunpack.c.l.b16 %v1573
      %v1655 = vunpack.c.l.b16 %v1574
      %v1656 = vunpack.c.l.b16 %v1575
      %v1657 = vunpack.c.l.b16 %v1576
      %v1658 = vunpack.c.l.b16 %v1577
      %v1659 = vunpack.c.l.b16 %v1578
      %v1660 = vunpack.c.l.b16 %v1579
      %v1661 = vunpack.c.l.b16 %v1580
      %v1662 = vunpack.c.l.b16 %v1581
      %v1663 = vpack.c.b16 %v1632, %v1631
      %v1664 = vpack.c.b16 %v1634, %v1633
      %v1665 = vpack.c.b16 %v1636, %v1635
      %v1666 = vpack.c.b16 %v1638, %v1637
      %v1667 = vpack.c.b16 %v1640, %v1639
      %v1668 = vpack.c.b16 %v1642, %v1641
      %v1669 = vpack.c.b16 %v1644, %v1643
      %v1670 = vpack.c.b16 %v1646, %v1645
      %v1671 = vpack.c.b16 %v1648, %v1647
      %v1672 = vpack.c.b16 %v1650, %v1649
      %v1673 = vpack.c.b16 %v1652, %v1651
      %v1674 = vpack.c.b16 %v1654, %v1653
      %v1675 = vpack.c.b16 %v1656, %v1655
      %v1676 = vpack.c.b16 %v1658, %v1657
      %v1677 = vpack.c.b16 %v1660, %v1659
      %v1678 = vpack.c.b16 %v1662, %v1661
      %v1711 = vunpack.c.l.b16 %v1583
      %v1712 = vunpack.c.l.b16 %v1584
      %v1713 = vunpack.c.l.b16 %v1585
      %v1714 = vunpack.c.l.b16 %v1586
      %v1715 = vunpack.c.l.b16 %v1587
      %v1716 = vunpack.c.l.b16 %v1588
      %v1717 = vunpack.c.l.b16 %v1589
      %v1718 = vunpack.c.l.b16 %v1590
      %v1719 = vunpack.c.l.b16 %v1591
      %v1720 = vunpack.c.l.b16 %v1592
      %v1721 = vunpack.c.l.b16 %v1593
      %v1722 = vunpack.c.l.b16 %v1594
      %v1723 = vunpack.c.l.b16 %v1595
      %v1724 = vunpack.c.l.b16 %v1596
      %v1725 = vunpack.c.l.b16 %v1597
      %v1726 = vunpack.c.l.b16 %v1598
      %v1727 = vpack.c.b16 %v1712, %v1711
      %v1728 = vpack.c.b16 %v1714, %v1713
      %v1729 = vpack.c.b16 %v1716, %v1715
      %v1730 = vpack.c.b16 %v1718, %v1717
      %v1731 = vpack.c.b16 %v1720, %v1719
      %v1732 = vpack.c.b16 %v1722, %v1721
      %v1733 = vpack.c.b16 %v1724, %v1723
      %v1734 = vpack.c.b16 %v1726, %v1725
      %1743 = vmatpush.bf16.msra.mxu0 %v1734
      %1744 = vmatpush.bf16.msra.mxu0 %v1733
      %1745 = vmatpush.bf16.msra.mxu0 %v1732
      %1746 = vmatpush.bf16.msra.mxu0 %v1731
      %1747 = vmatpush.bf16.msra.mxu0 %v1730
      %1748 = vmatpush.bf16.msra.mxu0 %v1729
      %1749 = vmatpush.bf16.msra.mxu0 %v1728
      %1750 = vmatpush.bf16.msra.mxu0 %v1727
      %1751 = vmatmul.bf16.gmra.mxu0 %v1663
      %v1752 = vpop.f32.mrf.mxu0
      %v1753 = vadd.f32 0.0, %v1752
      %v1754 = vpop.f32.mrf.mxu0
      %v1755 = vadd.f32 0.0, %v1754
      %1756 = vmatmul.bf16.gmra.mxu0 %v1664
      %v1757 = vpop.f32.mrf.mxu0
      %v1758 = vadd.f32 0.0, %v1757
      %v1759 = vpop.f32.mrf.mxu0
      %v1760 = vadd.f32 0.0, %v1759
      %1761 = vmatmul.bf16.gmra.mxu0 %v1665
      %v1762 = vpop.f32.mrf.mxu0
      %v1763 = vadd.f32 0.0, %v1762
      %v1764 = vpop.f32.mrf.mxu0
      %v1765 = vadd.f32 0.0, %v1764
      %1766 = vmatmul.bf16.gmra.mxu0 %v1666
      %v1767 = vpop.f32.mrf.mxu0
      %v1768 = vadd.f32 0.0, %v1767
      %v1769 = vpop.f32.mrf.mxu0
      %v1770 = vadd.f32 0.0, %v1769
      %1771 = vmatmul.bf16.gmra.mxu0 %v1667
      %v1772 = vpop.f32.mrf.mxu0
      %v1773 = vadd.f32 0.0, %v1772
      %v1774 = vpop.f32.mrf.mxu0
      %v1775 = vadd.f32 0.0, %v1774
      %1776 = vmatmul.bf16.gmra.mxu0 %v1668
      %v1777 = vpop.f32.mrf.mxu0
      %v1778 = vadd.f32 0.0, %v1777
      %v1779 = vpop.f32.mrf.mxu0
      %v1780 = vadd.f32 0.0, %v1779
      %1781 = vmatmul.bf16.gmra.mxu0 %v1669
      %v1782 = vpop.f32.mrf.mxu0
      %v1783 = vadd.f32 0.0, %v1782
      %v1784 = vpop.f32.mrf.mxu0
      %v1785 = vadd.f32 0.0, %v1784
      %1786 = vmatmul.bf16.gmra.mxu0 %v1670
      %v1787 = vpop.f32.mrf.mxu0
      %v1788 = vadd.f32 0.0, %v1787
      %v1789 = vpop.f32.mrf.mxu0
      %v1790 = vadd.f32 0.0, %v1789
      %1791 = vmatmul.bf16.gmra.mxu0 %v1671
      %v1792 = vpop.f32.mrf.mxu0
      %v1793 = vadd.f32 0.0, %v1792
      %v1794 = vpop.f32.mrf.mxu0
      %v1795 = vadd.f32 0.0, %v1794
      %1796 = vmatmul.bf16.gmra.mxu0 %v1672
      %v1797 = vpop.f32.mrf.mxu0
      %v1798 = vadd.f32 0.0, %v1797
      %v1799 = vpop.f32.mrf.mxu0
      %v1800 = vadd.f32 0.0, %v1799
      %1801 = vmatmul.bf16.gmra.mxu0 %v1673
      %v1802 = vpop.f32.mrf.mxu0
      %v1803 = vadd.f32 0.0, %v1802
      %v1804 = vpop.f32.mrf.mxu0
      %v1805 = vadd.f32 0.0, %v1804
      %1806 = vmatmul.bf16.gmra.mxu0 %v1674
      %v1807 = vpop.f32.mrf.mxu0
      %v1808 = vadd.f32 0.0, %v1807
      %v1809 = vpop.f32.mrf.mxu0
      %v1810 = vadd.f32 0.0, %v1809
      %1811 = vmatmul.bf16.gmra.mxu0 %v1675
      %v1812 = vpop.f32.mrf.mxu0
      %v1813 = vadd.f32 0.0, %v1812
      %v1814 = vpop.f32.mrf.mxu0
      %v1815 = vadd.f32 0.0, %v1814
      %1816 = vmatmul.bf16.gmra.mxu0 %v1676
      %v1817 = vpop.f32.mrf.mxu0
      %v1818 = vadd.f32 0.0, %v1817
      %v1819 = vpop.f32.mrf.mxu0
      %v1820 = vadd.f32 0.0, %v1819
      %1821 = vmatmul.bf16.gmra.mxu0 %v1677
      %v1822 = vpop.f32.mrf.mxu0
      %v1823 = vadd.f32 0.0, %v1822
      %v1824 = vpop.f32.mrf.mxu0
      %v1825 = vadd.f32 0.0, %v1824
      %1826 = vmatmul.bf16.gmra.mxu0 %v1678
      %v1827 = vpop.f32.mrf.mxu0
      %v1828 = vadd.f32 0.0, %v1827
      %v1829 = vpop.f32.mrf.mxu0
      %v1830 = vadd.f32 0.0, %v1829
      %1831 = vdwg.mxu0
      %v1832 = vadd.f32 %v1486, %v1753
      %v1833 = vadd.f32 %v1487, %v1755
      %v1834 = vadd.f32 %v1488, %v1758
      %v1835 = vadd.f32 %v1489, %v1760
      %v1836 = vadd.f32 %v1490, %v1763
      %v1837 = vadd.f32 %v1491, %v1765
      %v1838 = vadd.f32 %v1492, %v1768
      %v1839 = vadd.f32 %v1493, %v1770
      %v1840 = vadd.f32 %v1494, %v1773
      %v1841 = vadd.f32 %v1495, %v1775
      %v1842 = vadd.f32 %v1496, %v1778
      %v1843 = vadd.f32 %v1497, %v1780
      %v1844 = vadd.f32 %v1498, %v1783
      %v1845 = vadd.f32 %v1499, %v1785
      %v1846 = vadd.f32 %v1500, %v1788
      %v1847 = vadd.f32 %v1501, %v1790
      %v1848 = vadd.f32 %v1502, %v1793
      %v1849 = vadd.f32 %v1503, %v1795
      %v1850 = vadd.f32 %v1504, %v1798
      %v1851 = vadd.f32 %v1505, %v1800
      %v1852 = vadd.f32 %v1506, %v1803
      %v1853 = vadd.f32 %v1507, %v1805
      %v1854 = vadd.f32 %v1508, %v1808
      %v1855 = vadd.f32 %v1509, %v1810
      %v1856 = vadd.f32 %v1510, %v1813
      %v1857 = vadd.f32 %v1511, %v1815
      %v1858 = vadd.f32 %v1512, %v1818
      %v1859 = vadd.f32 %v1513, %v1820
      %v1860 = vadd.f32 %v1514, %v1823
      %v1861 = vadd.f32 %v1515, %v1825
      %v1862 = vadd.f32 %v1516, %v1828
      %v1863 = vadd.f32 %v1517, %v1830
      %v1864 = vld [vmem:[%s512 + $0x1] sm:$0xff]
      %v1865 = vld [vmem:[%s512 + $0x9] sm:$0xff]
      %v1866 = vld [vmem:[%s512 + $0x19] sm:$0xff]
      %v1867 = vld [vmem:[%s512 + $0x21] sm:$0xff]
      %v1868 = vld [vmem:[%s512 + $0x31] sm:$0xff]
      %v1869 = vld [vmem:[%s512 + $0x39] sm:$0xff]
      %v1870 = vld [vmem:[%s512 + $0x49] sm:$0xff]
      %v1871 = vld [vmem:[%s512 + $0x51] sm:$0xff]
      %v1872 = vld [vmem:[%s512 + $0x61] sm:$0xff]
      %v1873 = vld [vmem:[%s512 + $0x69] sm:$0xff]
      %v1874 = vld [vmem:[%s512 + $0x79] sm:$0xff]
      %v1875 = vld [vmem:[%s512 + $0x81] sm:$0xff]
      %v1876 = vld [vmem:[%s512 + $0x91] sm:$0xff]
      %v1877 = vld [vmem:[%s512 + $0x99] sm:$0xff]
      %v1878 = vld [vmem:[%s512 + $0xa9] sm:$0xff]
      %v1879 = vld [vmem:[%s512 + $0xb1] sm:$0xff]
      %v1880 = vld [vmem:[%s512 + $0xc1] sm:$0xff]
      %v1881 = vld [vmem:[%s512 + $0xc9] sm:$0xff]
      %v1882 = vld [vmem:[%s512 + $0xd9] sm:$0xff]
      %v1883 = vld [vmem:[%s512 + $0xe1] sm:$0xff]
      %v1884 = vld [vmem:[%s512 + $0xf1] sm:$0xff]
      %v1885 = vld [vmem:[%s512 + $0xf9] sm:$0xff]
      %v1886 = vld [vmem:[%s512 + $0x109] sm:$0xff]
      %v1887 = vld [vmem:[%s512 + $0x111] sm:$0xff]
      %v1888 = vld [vmem:[%s512 + $0x121] sm:$0xff]
      %v1889 = vld [vmem:[%s512 + $0x129] sm:$0xff]
      %v1890 = vld [vmem:[%s512 + $0x139] sm:$0xff]
      %v1891 = vld [vmem:[%s512 + $0x141] sm:$0xff]
      %v1892 = vld [vmem:[%s512 + $0x151] sm:$0xff]
      %v1893 = vld [vmem:[%s512 + $0x159] sm:$0xff]
      %v1894 = vld [vmem:[%s512 + $0x169] sm:$0xff]
      %v1895 = vld [vmem:[%s512 + $0x171] sm:$0xff]
      %v1896 = vpack.c.bf16 %v1864, %v1864
      %v1897 = vpack.c.bf16 %v1865, %v1865
      %v1898 = vpack.c.bf16 %v1866, %v1866
      %v1899 = vpack.c.bf16 %v1867, %v1867
      %v1900 = vpack.c.bf16 %v1868, %v1868
      %v1901 = vpack.c.bf16 %v1869, %v1869
      %v1902 = vpack.c.bf16 %v1870, %v1870
      %v1903 = vpack.c.bf16 %v1871, %v1871
      %v1904 = vpack.c.bf16 %v1872, %v1872
      %v1905 = vpack.c.bf16 %v1873, %v1873
      %v1906 = vpack.c.bf16 %v1874, %v1874
      %v1907 = vpack.c.bf16 %v1875, %v1875
      %v1908 = vpack.c.bf16 %v1876, %v1876
      %v1909 = vpack.c.bf16 %v1877, %v1877
      %v1910 = vpack.c.bf16 %v1878, %v1878
      %v1911 = vpack.c.bf16 %v1879, %v1879
      %v1912 = vpack.c.bf16 %v1880, %v1880
      %v1913 = vpack.c.bf16 %v1881, %v1881
      %v1914 = vpack.c.bf16 %v1882, %v1882
      %v1915 = vpack.c.bf16 %v1883, %v1883
      %v1916 = vpack.c.bf16 %v1884, %v1884
      %v1917 = vpack.c.bf16 %v1885, %v1885
      %v1918 = vpack.c.bf16 %v1886, %v1886
      %v1919 = vpack.c.bf16 %v1887, %v1887
      %v1920 = vpack.c.bf16 %v1888, %v1888
      %v1921 = vpack.c.bf16 %v1889, %v1889
      %v1922 = vpack.c.bf16 %v1890, %v1890
      %v1923 = vpack.c.bf16 %v1891, %v1891
      %v1924 = vpack.c.bf16 %v1892, %v1892
      %v1925 = vpack.c.bf16 %v1893, %v1893
      %v1926 = vpack.c.bf16 %v1894, %v1894
      %v1927 = vpack.c.bf16 %v1895, %v1895
      %s1928 = scalar_lea.vmem %s4, 256
      %v1929 = vld [vmem:[%s1928] sm:$0xf]
      %v1930 = vld [vmem:[%s1928 + $0x4] sm:$0xf]
      %v1931 = vld [vmem:[%s1928 + $0x8] sm:$0xf]
      %v1932 = vld [vmem:[%s1928 + $0xc] sm:$0xf]
      %v1933 = vld [vmem:[%s1928 + $0x10] sm:$0xf]
      %v1934 = vld [vmem:[%s1928 + $0x14] sm:$0xf]
      %v1935 = vld [vmem:[%s1928 + $0x18] sm:$0xf]
      %v1936 = vld [vmem:[%s1928 + $0x1c] sm:$0xf]
      %v1937 = vld [vmem:[%s1928 + $0x20] sm:$0xf]
      %v1938 = vld [vmem:[%s1928 + $0x24] sm:$0xf]
      %v1939 = vld [vmem:[%s1928 + $0x28] sm:$0xf]
      %v1940 = vld [vmem:[%s1928 + $0x2c] sm:$0xf]
      %v1941 = vld [vmem:[%s1928 + $0x30] sm:$0xf]
      %v1942 = vld [vmem:[%s1928 + $0x34] sm:$0xf]
      %v1943 = vld [vmem:[%s1928 + $0x38] sm:$0xf]
      %v1944 = vld [vmem:[%s1928 + $0x3c] sm:$0xf]
      %v1977 = vunpack.c.l.b16 %v1896
      %v1978 = vunpack.c.l.b16 %v1897
      %v1979 = vunpack.c.l.b16 %v1898
      %v1980 = vunpack.c.l.b16 %v1899
      %v1981 = vunpack.c.l.b16 %v1900
      %v1982 = vunpack.c.l.b16 %v1901
      %v1983 = vunpack.c.l.b16 %v1902
      %v1984 = vunpack.c.l.b16 %v1903
      %v1985 = vunpack.c.l.b16 %v1904
      %v1986 = vunpack.c.l.b16 %v1905
      %v1987 = vunpack.c.l.b16 %v1906
      %v1988 = vunpack.c.l.b16 %v1907
      %v1989 = vunpack.c.l.b16 %v1908
      %v1990 = vunpack.c.l.b16 %v1909
      %v1991 = vunpack.c.l.b16 %v1910
      %v1992 = vunpack.c.l.b16 %v1911
      %v1993 = vunpack.c.l.b16 %v1912
      %v1994 = vunpack.c.l.b16 %v1913
      %v1995 = vunpack.c.l.b16 %v1914
      %v1996 = vunpack.c.l.b16 %v1915
      %v1997 = vunpack.c.l.b16 %v1916
      %v1998 = vunpack.c.l.b16 %v1917
      %v1999 = vunpack.c.l.b16 %v1918
      %v2000 = vunpack.c.l.b16 %v1919
      %v2001 = vunpack.c.l.b16 %v1920
      %v2002 = vunpack.c.l.b16 %v1921
      %v2003 = vunpack.c.l.b16 %v1922
      %v2004 = vunpack.c.l.b16 %v1923
      %v2005 = vunpack.c.l.b16 %v1924
      %v2006 = vunpack.c.l.b16 %v1925
      %v2007 = vunpack.c.l.b16 %v1926
      %v2008 = vunpack.c.l.b16 %v1927
      %v2009 = vpack.c.b16 %v1978, %v1977
      %v2010 = vpack.c.b16 %v1980, %v1979
      %v2011 = vpack.c.b16 %v1982, %v1981
      %v2012 = vpack.c.b16 %v1984, %v1983
      %v2013 = vpack.c.b16 %v1986, %v1985
      %v2014 = vpack.c.b16 %v1988, %v1987
      %v2015 = vpack.c.b16 %v1990, %v1989
      %v2016 = vpack.c.b16 %v1992, %v1991
      %v2017 = vpack.c.b16 %v1994, %v1993
      %v2018 = vpack.c.b16 %v1996, %v1995
      %v2019 = vpack.c.b16 %v1998, %v1997
      %v2020 = vpack.c.b16 %v2000, %v1999
      %v2021 = vpack.c.b16 %v2002, %v2001
      %v2022 = vpack.c.b16 %v2004, %v2003
      %v2023 = vpack.c.b16 %v2006, %v2005
      %v2024 = vpack.c.b16 %v2008, %v2007
      %v2057 = vunpack.c.l.b16 %v1929
      %v2058 = vunpack.c.l.b16 %v1930
      %v2059 = vunpack.c.l.b16 %v1931
      %v2060 = vunpack.c.l.b16 %v1932
      %v2061 = vunpack.c.l.b16 %v1933
      %v2062 = vunpack.c.l.b16 %v1934
      %v2063 = vunpack.c.l.b16 %v1935
      %v2064 = vunpack.c.l.b16 %v1936
      %v2065 = vunpack.c.l.b16 %v1937
      %v2066 = vunpack.c.l.b16 %v1938
      %v2067 = vunpack.c.l.b16 %v1939
      %v2068 = vunpack.c.l.b16 %v1940
      %v2069 = vunpack.c.l.b16 %v1941
      %v2070 = vunpack.c.l.b16 %v1942
      %v2071 = vunpack.c.l.b16 %v1943
      %v2072 = vunpack.c.l.b16 %v1944
      %v2073 = vpack.c.b16 %v2058, %v2057
      %v2074 = vpack.c.b16 %v2060, %v2059
      %v2075 = vpack.c.b16 %v2062, %v2061
      %v2076 = vpack.c.b16 %v2064, %v2063
      %v2077 = vpack.c.b16 %v2066, %v2065
      %v2078 = vpack.c.b16 %v2068, %v2067
      %v2079 = vpack.c.b16 %v2070, %v2069
      %v2080 = vpack.c.b16 %v2072, %v2071
      %2089 = vmatpush.bf16.msra.mxu0 %v2080
      %2090 = vmatpush.bf16.msra.mxu0 %v2079
      %2091 = vmatpush.bf16.msra.mxu0 %v2078
      %2092 = vmatpush.bf16.msra.mxu0 %v2077
      %2093 = vmatpush.bf16.msra.mxu0 %v2076
      %2094 = vmatpush.bf16.msra.mxu0 %v2075
      %2095 = vmatpush.bf16.msra.mxu0 %v2074
      %2096 = vmatpush.bf16.msra.mxu0 %v2073
      %2097 = vmatmul.bf16.gmra.mxu0 %v2009
      %v2098 = vpop.f32.mrf.mxu0
      %v2099 = vadd.f32 0.0, %v2098
      %v2100 = vpop.f32.mrf.mxu0
      %v2101 = vadd.f32 0.0, %v2100
      %2102 = vmatmul.bf16.gmra.mxu0 %v2010
      %v2103 = vpop.f32.mrf.mxu0
      %v2104 = vadd.f32 0.0, %v2103
      %v2105 = vpop.f32.mrf.mxu0
      %v2106 = vadd.f32 0.0, %v2105
      %2107 = vmatmul.bf16.gmra.mxu0 %v2011
      %v2108 = vpop.f32.mrf.mxu0
      %v2109 = vadd.f32 0.0, %v2108
      %v2110 = vpop.f32.mrf.mxu0
      %v2111 = vadd.f32 0.0, %v2110
      %2112 = vmatmul.bf16.gmra.mxu0 %v2012
      %v2113 = vpop.f32.mrf.mxu0
      %v2114 = vadd.f32 0.0, %v2113
      %v2115 = vpop.f32.mrf.mxu0
      %v2116 = vadd.f32 0.0, %v2115
      %2117 = vmatmul.bf16.gmra.mxu0 %v2013
      %v2118 = vpop.f32.mrf.mxu0
      %v2119 = vadd.f32 0.0, %v2118
      %v2120 = vpop.f32.mrf.mxu0
      %v2121 = vadd.f32 0.0, %v2120
      %2122 = vmatmul.bf16.gmra.mxu0 %v2014
      %v2123 = vpop.f32.mrf.mxu0
      %v2124 = vadd.f32 0.0, %v2123
      %v2125 = vpop.f32.mrf.mxu0
      %v2126 = vadd.f32 0.0, %v2125
      %2127 = vmatmul.bf16.gmra.mxu0 %v2015
      %v2128 = vpop.f32.mrf.mxu0
      %v2129 = vadd.f32 0.0, %v2128
      %v2130 = vpop.f32.mrf.mxu0
      %v2131 = vadd.f32 0.0, %v2130
      %2132 = vmatmul.bf16.gmra.mxu0 %v2016
      %v2133 = vpop.f32.mrf.mxu0
      %v2134 = vadd.f32 0.0, %v2133
      %v2135 = vpop.f32.mrf.mxu0
      %v2136 = vadd.f32 0.0, %v2135
      %2137 = vmatmul.bf16.gmra.mxu0 %v2017
      %v2138 = vpop.f32.mrf.mxu0
      %v2139 = vadd.f32 0.0, %v2138
      %v2140 = vpop.f32.mrf.mxu0
      %v2141 = vadd.f32 0.0, %v2140
      %2142 = vmatmul.bf16.gmra.mxu0 %v2018
      %v2143 = vpop.f32.mrf.mxu0
      %v2144 = vadd.f32 0.0, %v2143
      %v2145 = vpop.f32.mrf.mxu0
      %v2146 = vadd.f32 0.0, %v2145
      %2147 = vmatmul.bf16.gmra.mxu0 %v2019
      %v2148 = vpop.f32.mrf.mxu0
      %v2149 = vadd.f32 0.0, %v2148
      %v2150 = vpop.f32.mrf.mxu0
      %v2151 = vadd.f32 0.0, %v2150
      %2152 = vmatmul.bf16.gmra.mxu0 %v2020
      %v2153 = vpop.f32.mrf.mxu0
      %v2154 = vadd.f32 0.0, %v2153
      %v2155 = vpop.f32.mrf.mxu0
      %v2156 = vadd.f32 0.0, %v2155
      %2157 = vmatmul.bf16.gmra.mxu0 %v2021
      %v2158 = vpop.f32.mrf.mxu0
      %v2159 = vadd.f32 0.0, %v2158
      %v2160 = vpop.f32.mrf.mxu0
      %v2161 = vadd.f32 0.0, %v2160
      %2162 = vmatmul.bf16.gmra.mxu0 %v2022
      %v2163 = vpop.f32.mrf.mxu0
      %v2164 = vadd.f32 0.0, %v2163
      %v2165 = vpop.f32.mrf.mxu0
      %v2166 = vadd.f32 0.0, %v2165
      %2167 = vmatmul.bf16.gmra.mxu0 %v2023
      %v2168 = vpop.f32.mrf.mxu0
      %v2169 = vadd.f32 0.0, %v2168
      %v2170 = vpop.f32.mrf.mxu0
      %v2171 = vadd.f32 0.0, %v2170
      %2172 = vmatmul.bf16.gmra.mxu0 %v2024
      %v2173 = vpop.f32.mrf.mxu0
      %v2174 = vadd.f32 0.0, %v2173
      %v2175 = vpop.f32.mrf.mxu0
      %v2176 = vadd.f32 0.0, %v2175
      %2177 = vdwg.mxu0
      %v2178 = vadd.f32 %v1832, %v2099
      %v2179 = vadd.f32 %v1833, %v2101
      %v2180 = vadd.f32 %v1834, %v2104
      %v2181 = vadd.f32 %v1835, %v2106
      %v2182 = vadd.f32 %v1836, %v2109
      %v2183 = vadd.f32 %v1837, %v2111
      %v2184 = vadd.f32 %v1838, %v2114
      %v2185 = vadd.f32 %v1839, %v2116
      %v2186 = vadd.f32 %v1840, %v2119
      %v2187 = vadd.f32 %v1841, %v2121
      %v2188 = vadd.f32 %v1842, %v2124
      %v2189 = vadd.f32 %v1843, %v2126
      %v2190 = vadd.f32 %v1844, %v2129
      %v2191 = vadd.f32 %v1845, %v2131
      %v2192 = vadd.f32 %v1846, %v2134
      %v2193 = vadd.f32 %v1847, %v2136
      %v2194 = vadd.f32 %v1848, %v2139
      %v2195 = vadd.f32 %v1849, %v2141
      %v2196 = vadd.f32 %v1850, %v2144
      %v2197 = vadd.f32 %v1851, %v2146
      %v2198 = vadd.f32 %v1852, %v2149
      %v2199 = vadd.f32 %v1853, %v2151
      %v2200 = vadd.f32 %v1854, %v2154
      %v2201 = vadd.f32 %v1855, %v2156
      %v2202 = vadd.f32 %v1856, %v2159
      %v2203 = vadd.f32 %v1857, %v2161
      %v2204 = vadd.f32 %v1858, %v2164
      %v2205 = vadd.f32 %v1859, %v2166
      %v2206 = vadd.f32 %v1860, %v2169
      %v2207 = vadd.f32 %v1861, %v2171
      %v2208 = vadd.f32 %v1862, %v2174
      %v2209 = vadd.f32 %v1863, %v2176
      %v2210 = vld [vmem:[%s512 + $0x2] sm:$0xff]
      %v2211 = vld [vmem:[%s512 + $0xa] sm:$0xff]
      %v2212 = vld [vmem:[%s512 + $0x1a] sm:$0xff]
      %v2213 = vld [vmem:[%s512 + $0x22] sm:$0xff]
      %v2214 = vld [vmem:[%s512 + $0x32] sm:$0xff]
      %v2215 = vld [vmem:[%s512 + $0x3a] sm:$0xff]
      %v2216 = vld [vmem:[%s512 + $0x4a] sm:$0xff]
      %v2217 = vld [vmem:[%s512 + $0x52] sm:$0xff]
      %v2218 = vld [vmem:[%s512 + $0x62] sm:$0xff]
      %v2219 = vld [vmem:[%s512 + $0x6a] sm:$0xff]
      %v2220 = vld [vmem:[%s512 + $0x7a] sm:$0xff]
      %v2221 = vld [vmem:[%s512 + $0x82] sm:$0xff]
      %v2222 = vld [vmem:[%s512 + $0x92] sm:$0xff]
      %v2223 = vld [vmem:[%s512 + $0x9a] sm:$0xff]
      %v2224 = vld [vmem:[%s512 + $0xaa] sm:$0xff]
      %v2225 = vld [vmem:[%s512 + $0xb2] sm:$0xff]
      %v2226 = vld [vmem:[%s512 + $0xc2] sm:$0xff]
      %v2227 = vld [vmem:[%s512 + $0xca] sm:$0xff]
      %v2228 = vld [vmem:[%s512 + $0xda] sm:$0xff]
      %v2229 = vld [vmem:[%s512 + $0xe2] sm:$0xff]
      %v2230 = vld [vmem:[%s512 + $0xf2] sm:$0xff]
      %v2231 = vld [vmem:[%s512 + $0xfa] sm:$0xff]
      %v2232 = vld [vmem:[%s512 + $0x10a] sm:$0xff]
      %v2233 = vld [vmem:[%s512 + $0x112] sm:$0xff]
      %v2234 = vld [vmem:[%s512 + $0x122] sm:$0xff]
      %v2235 = vld [vmem:[%s512 + $0x12a] sm:$0xff]
      %v2236 = vld [vmem:[%s512 + $0x13a] sm:$0xff]
      %v2237 = vld [vmem:[%s512 + $0x142] sm:$0xff]
      %v2238 = vld [vmem:[%s512 + $0x152] sm:$0xff]
      %v2239 = vld [vmem:[%s512 + $0x15a] sm:$0xff]
      %v2240 = vld [vmem:[%s512 + $0x16a] sm:$0xff]
      %v2241 = vld [vmem:[%s512 + $0x172] sm:$0xff]
      %v2242 = vpack.c.bf16 %v2210, %v2210
      %v2243 = vpack.c.bf16 %v2211, %v2211
      %v2244 = vpack.c.bf16 %v2212, %v2212
      %v2245 = vpack.c.bf16 %v2213, %v2213
      %v2246 = vpack.c.bf16 %v2214, %v2214
      %v2247 = vpack.c.bf16 %v2215, %v2215
      %v2248 = vpack.c.bf16 %v2216, %v2216
      %v2249 = vpack.c.bf16 %v2217, %v2217
      %v2250 = vpack.c.bf16 %v2218, %v2218
      %v2251 = vpack.c.bf16 %v2219, %v2219
      %v2252 = vpack.c.bf16 %v2220, %v2220
      %v2253 = vpack.c.bf16 %v2221, %v2221
      %v2254 = vpack.c.bf16 %v2222, %v2222
      %v2255 = vpack.c.bf16 %v2223, %v2223
      %v2256 = vpack.c.bf16 %v2224, %v2224
      %v2257 = vpack.c.bf16 %v2225, %v2225
      %v2258 = vpack.c.bf16 %v2226, %v2226
      %v2259 = vpack.c.bf16 %v2227, %v2227
      %v2260 = vpack.c.bf16 %v2228, %v2228
      %v2261 = vpack.c.bf16 %v2229, %v2229
      %v2262 = vpack.c.bf16 %v2230, %v2230
      %v2263 = vpack.c.bf16 %v2231, %v2231
      %v2264 = vpack.c.bf16 %v2232, %v2232
      %v2265 = vpack.c.bf16 %v2233, %v2233
      %v2266 = vpack.c.bf16 %v2234, %v2234
      %v2267 = vpack.c.bf16 %v2235, %v2235
      %v2268 = vpack.c.bf16 %v2236, %v2236
      %v2269 = vpack.c.bf16 %v2237, %v2237
      %v2270 = vpack.c.bf16 %v2238, %v2238
      %v2271 = vpack.c.bf16 %v2239, %v2239
      %v2272 = vpack.c.bf16 %v2240, %v2240
      %v2273 = vpack.c.bf16 %v2241, %v2241
      %s2274 = scalar_lea.vmem %s4, 320
      %v2275 = vld [vmem:[%s2274] sm:$0xf]
      %v2276 = vld [vmem:[%s2274 + $0x4] sm:$0xf]
      %v2277 = vld [vmem:[%s2274 + $0x8] sm:$0xf]
      %v2278 = vld [vmem:[%s2274 + $0xc] sm:$0xf]
      %v2279 = vld [vmem:[%s2274 + $0x10] sm:$0xf]
      %v2280 = vld [vmem:[%s2274 + $0x14] sm:$0xf]
      %v2281 = vld [vmem:[%s2274 + $0x18] sm:$0xf]
      %v2282 = vld [vmem:[%s2274 + $0x1c] sm:$0xf]
      %v2283 = vld [vmem:[%s2274 + $0x20] sm:$0xf]
      %v2284 = vld [vmem:[%s2274 + $0x24] sm:$0xf]
      %v2285 = vld [vmem:[%s2274 + $0x28] sm:$0xf]
      %v2286 = vld [vmem:[%s2274 + $0x2c] sm:$0xf]
      %v2287 = vld [vmem:[%s2274 + $0x30] sm:$0xf]
      %v2288 = vld [vmem:[%s2274 + $0x34] sm:$0xf]
      %v2289 = vld [vmem:[%s2274 + $0x38] sm:$0xf]
      %v2290 = vld [vmem:[%s2274 + $0x3c] sm:$0xf]
      %v2323 = vunpack.c.l.b16 %v2242
      %v2324 = vunpack.c.l.b16 %v2243
      %v2325 = vunpack.c.l.b16 %v2244
      %v2326 = vunpack.c.l.b16 %v2245
      %v2327 = vunpack.c.l.b16 %v2246
      %v2328 = vunpack.c.l.b16 %v2247
      %v2329 = vunpack.c.l.b16 %v2248
      %v2330 = vunpack.c.l.b16 %v2249
      %v2331 = vunpack.c.l.b16 %v2250
      %v2332 = vunpack.c.l.b16 %v2251
      %v2333 = vunpack.c.l.b16 %v2252
      %v2334 = vunpack.c.l.b16 %v2253
      %v2335 = vunpack.c.l.b16 %v2254
      %v2336 = vunpack.c.l.b16 %v2255
      %v2337 = vunpack.c.l.b16 %v2256
      %v2338 = vunpack.c.l.b16 %v2257
      %v2339 = vunpack.c.l.b16 %v2258
      %v2340 = vunpack.c.l.b16 %v2259
      %v2341 = vunpack.c.l.b16 %v2260
      %v2342 = vunpack.c.l.b16 %v2261
      %v2343 = vunpack.c.l.b16 %v2262
      %v2344 = vunpack.c.l.b16 %v2263
      %v2345 = vunpack.c.l.b16 %v2264
      %v2346 = vunpack.c.l.b16 %v2265
      %v2347 = vunpack.c.l.b16 %v2266
      %v2348 = vunpack.c.l.b16 %v2267
      %v2349 = vunpack.c.l.b16 %v2268
      %v2350 = vunpack.c.l.b16 %v2269
      %v2351 = vunpack.c.l.b16 %v2270
      %v2352 = vunpack.c.l.b16 %v2271
      %v2353 = vunpack.c.l.b16 %v2272
      %v2354 = vunpack.c.l.b16 %v2273
      %v2355 = vpack.c.b16 %v2324, %v2323
      %v2356 = vpack.c.b16 %v2326, %v2325
      %v2357 = vpack.c.b16 %v2328, %v2327
      %v2358 = vpack.c.b16 %v2330, %v2329
      %v2359 = vpack.c.b16 %v2332, %v2331
      %v2360 = vpack.c.b16 %v2334, %v2333
      %v2361 = vpack.c.b16 %v2336, %v2335
      %v2362 = vpack.c.b16 %v2338, %v2337
      %v2363 = vpack.c.b16 %v2340, %v2339
      %v2364 = vpack.c.b16 %v2342, %v2341
      %v2365 = vpack.c.b16 %v2344, %v2343
      %v2366 = vpack.c.b16 %v2346, %v2345
      %v2367 = vpack.c.b16 %v2348, %v2347
      %v2368 = vpack.c.b16 %v2350, %v2349
      %v2369 = vpack.c.b16 %v2352, %v2351
      %v2370 = vpack.c.b16 %v2354, %v2353
      %v2403 = vunpack.c.l.b16 %v2275
      %v2404 = vunpack.c.l.b16 %v2276
      %v2405 = vunpack.c.l.b16 %v2277
      %v2406 = vunpack.c.l.b16 %v2278
      %v2407 = vunpack.c.l.b16 %v2279
      %v2408 = vunpack.c.l.b16 %v2280
      %v2409 = vunpack.c.l.b16 %v2281
      %v2410 = vunpack.c.l.b16 %v2282
      %v2411 = vunpack.c.l.b16 %v2283
      %v2412 = vunpack.c.l.b16 %v2284
      %v2413 = vunpack.c.l.b16 %v2285
      %v2414 = vunpack.c.l.b16 %v2286
      %v2415 = vunpack.c.l.b16 %v2287
      %v2416 = vunpack.c.l.b16 %v2288
      %v2417 = vunpack.c.l.b16 %v2289
      %v2418 = vunpack.c.l.b16 %v2290
      %v2419 = vpack.c.b16 %v2404, %v2403
      %v2420 = vpack.c.b16 %v2406, %v2405
      %v2421 = vpack.c.b16 %v2408, %v2407
      %v2422 = vpack.c.b16 %v2410, %v2409
      %v2423 = vpack.c.b16 %v2412, %v2411
      %v2424 = vpack.c.b16 %v2414, %v2413
      %v2425 = vpack.c.b16 %v2416, %v2415
      %v2426 = vpack.c.b16 %v2418, %v2417
      %2435 = vmatpush.bf16.msra.mxu0 %v2426
      %2436 = vmatpush.bf16.msra.mxu0 %v2425
      %2437 = vmatpush.bf16.msra.mxu0 %v2424
      %2438 = vmatpush.bf16.msra.mxu0 %v2423
      %2439 = vmatpush.bf16.msra.mxu0 %v2422
      %2440 = vmatpush.bf16.msra.mxu0 %v2421
      %2441 = vmatpush.bf16.msra.mxu0 %v2420
      %2442 = vmatpush.bf16.msra.mxu0 %v2419
      %2443 = vmatmul.bf16.gmra.mxu0 %v2355
      %v2444 = vpop.f32.mrf.mxu0
      %v2445 = vadd.f32 0.0, %v2444
      %v2446 = vpop.f32.mrf.mxu0
      %v2447 = vadd.f32 0.0, %v2446
      %2448 = vmatmul.bf16.gmra.mxu0 %v2356
      %v2449 = vpop.f32.mrf.mxu0
      %v2450 = vadd.f32 0.0, %v2449
      %v2451 = vpop.f32.mrf.mxu0
      %v2452 = vadd.f32 0.0, %v2451
      %2453 = vmatmul.bf16.gmra.mxu0 %v2357
      %v2454 = vpop.f32.mrf.mxu0
      %v2455 = vadd.f32 0.0, %v2454
      %v2456 = vpop.f32.mrf.mxu0
      %v2457 = vadd.f32 0.0, %v2456
      %2458 = vmatmul.bf16.gmra.mxu0 %v2358
      %v2459 = vpop.f32.mrf.mxu0
      %v2460 = vadd.f32 0.0, %v2459
      %v2461 = vpop.f32.mrf.mxu0
      %v2462 = vadd.f32 0.0, %v2461
      %2463 = vmatmul.bf16.gmra.mxu0 %v2359
      %v2464 = vpop.f32.mrf.mxu0
      %v2465 = vadd.f32 0.0, %v2464
      %v2466 = vpop.f32.mrf.mxu0
      %v2467 = vadd.f32 0.0, %v2466
      %2468 = vmatmul.bf16.gmra.mxu0 %v2360
      %v2469 = vpop.f32.mrf.mxu0
      %v2470 = vadd.f32 0.0, %v2469
      %v2471 = vpop.f32.mrf.mxu0
      %v2472 = vadd.f32 0.0, %v2471
      %2473 = vmatmul.bf16.gmra.mxu0 %v2361
      %v2474 = vpop.f32.mrf.mxu0
      %v2475 = vadd.f32 0.0, %v2474
      %v2476 = vpop.f32.mrf.mxu0
      %v2477 = vadd.f32 0.0, %v2476
      %2478 = vmatmul.bf16.gmra.mxu0 %v2362
      %v2479 = vpop.f32.mrf.mxu0
      %v2480 = vadd.f32 0.0, %v2479
      %v2481 = vpop.f32.mrf.mxu0
      %v2482 = vadd.f32 0.0, %v2481
      %2483 = vmatmul.bf16.gmra.mxu0 %v2363
      %v2484 = vpop.f32.mrf.mxu0
      %v2485 = vadd.f32 0.0, %v2484
      %v2486 = vpop.f32.mrf.mxu0
      %v2487 = vadd.f32 0.0, %v2486
      %2488 = vmatmul.bf16.gmra.mxu0 %v2364
      %v2489 = vpop.f32.mrf.mxu0
      %v2490 = vadd.f32 0.0, %v2489
      %v2491 = vpop.f32.mrf.mxu0
      %v2492 = vadd.f32 0.0, %v2491
      %2493 = vmatmul.bf16.gmra.mxu0 %v2365
      %v2494 = vpop.f32.mrf.mxu0
      %v2495 = vadd.f32 0.0, %v2494
      %v2496 = vpop.f32.mrf.mxu0
      %v2497 = vadd.f32 0.0, %v2496
      %2498 = vmatmul.bf16.gmra.mxu0 %v2366
      %v2499 = vpop.f32.mrf.mxu0
      %v2500 = vadd.f32 0.0, %v2499
      %v2501 = vpop.f32.mrf.mxu0
      %v2502 = vadd.f32 0.0, %v2501
      %2503 = vmatmul.bf16.gmra.mxu0 %v2367
      %v2504 = vpop.f32.mrf.mxu0
      %v2505 = vadd.f32 0.0, %v2504
      %v2506 = vpop.f32.mrf.mxu0
      %v2507 = vadd.f32 0.0, %v2506
      %2508 = vmatmul.bf16.gmra.mxu0 %v2368
      %v2509 = vpop.f32.mrf.mxu0
      %v2510 = vadd.f32 0.0, %v2509
      %v2511 = vpop.f32.mrf.mxu0
      %v2512 = vadd.f32 0.0, %v2511
      %2513 = vmatmul.bf16.gmra.mxu0 %v2369
      %v2514 = vpop.f32.mrf.mxu0
      %v2515 = vadd.f32 0.0, %v2514
      %v2516 = vpop.f32.mrf.mxu0
      %v2517 = vadd.f32 0.0, %v2516
      %2518 = vmatmul.bf16.gmra.mxu0 %v2370
      %v2519 = vpop.f32.mrf.mxu0
      %v2520 = vadd.f32 0.0, %v2519
      %v2521 = vpop.f32.mrf.mxu0
      %v2522 = vadd.f32 0.0, %v2521
      %2523 = vdwg.mxu0
      %v2524 = vadd.f32 %v2178, %v2445
      %v2525 = vadd.f32 %v2179, %v2447
      %v2526 = vadd.f32 %v2180, %v2450
      %v2527 = vadd.f32 %v2181, %v2452
      %v2528 = vadd.f32 %v2182, %v2455
      %v2529 = vadd.f32 %v2183, %v2457
      %v2530 = vadd.f32 %v2184, %v2460
      %v2531 = vadd.f32 %v2185, %v2462
      %v2532 = vadd.f32 %v2186, %v2465
      %v2533 = vadd.f32 %v2187, %v2467
      %v2534 = vadd.f32 %v2188, %v2470
      %v2535 = vadd.f32 %v2189, %v2472
      %v2536 = vadd.f32 %v2190, %v2475
      %v2537 = vadd.f32 %v2191, %v2477
      %v2538 = vadd.f32 %v2192, %v2480
      %v2539 = vadd.f32 %v2193, %v2482
      %v2540 = vadd.f32 %v2194, %v2485
      %v2541 = vadd.f32 %v2195, %v2487
      %v2542 = vadd.f32 %v2196, %v2490
      %v2543 = vadd.f32 %v2197, %v2492
      %v2544 = vadd.f32 %v2198, %v2495
      %v2545 = vadd.f32 %v2199, %v2497
      %v2546 = vadd.f32 %v2200, %v2500
      %v2547 = vadd.f32 %v2201, %v2502
      %v2548 = vadd.f32 %v2202, %v2505
      %v2549 = vadd.f32 %v2203, %v2507
      %v2550 = vadd.f32 %v2204, %v2510
      %v2551 = vadd.f32 %v2205, %v2512
      %v2552 = vadd.f32 %v2206, %v2515
      %v2553 = vadd.f32 %v2207, %v2517
      %v2554 = vadd.f32 %v2208, %v2520
      %v2555 = vadd.f32 %v2209, %v2522
      %s2556 = scalar_lea.vmem [#allocation2], 48
      %v2557 = vld [vmem:[%s2556] sm:$0xff]
      %v2558 = vld [vmem:[%s2556 + $0x8] sm:$0xff]
      %v2559 = vld [vmem:[%s2556 + $0x18] sm:$0xff]
      %v2560 = vld [vmem:[%s2556 + $0x20] sm:$0xff]
      %v2561 = vld [vmem:[%s2556 + $0x30] sm:$0xff]
      %v2562 = vld [vmem:[%s2556 + $0x38] sm:$0xff]
      %v2563 = vld [vmem:[%s2556 + $0x48] sm:$0xff]
      %v2564 = vld [vmem:[%s2556 + $0x50] sm:$0xff]
      %v2565 = vld [vmem:[%s2556 + $0x60] sm:$0xff]
      %v2566 = vld [vmem:[%s2556 + $0x68] sm:$0xff]
      %v2567 = vld [vmem:[%s2556 + $0x78] sm:$0xff]
      %v2568 = vld [vmem:[%s2556 + $0x80] sm:$0xff]
      %v2569 = vld [vmem:[%s2556 + $0x90] sm:$0xff]
      %v2570 = vld [vmem:[%s2556 + $0x98] sm:$0xff]
      %v2571 = vld [vmem:[%s2556 + $0xa8] sm:$0xff]
      %v2572 = vld [vmem:[%s2556 + $0xb0] sm:$0xff]
      %v2573 = vld [vmem:[%s2556 + $0xc0] sm:$0xff]
      %v2574 = vld [vmem:[%s2556 + $0xc8] sm:$0xff]
      %v2575 = vld [vmem:[%s2556 + $0xd8] sm:$0xff]
      %v2576 = vld [vmem:[%s2556 + $0xe0] sm:$0xff]
      %v2577 = vld [vmem:[%s2556 + $0xf0] sm:$0xff]
      %v2578 = vld [vmem:[%s2556 + $0xf8] sm:$0xff]
      %v2579 = vld [vmem:[%s2556 + $0x108] sm:$0xff]
      %v2580 = vld [vmem:[%s2556 + $0x110] sm:$0xff]
      %v2581 = vld [vmem:[%s2556 + $0x120] sm:$0xff]
      %v2582 = vld [vmem:[%s2556 + $0x128] sm:$0xff]
      %v2583 = vld [vmem:[%s2556 + $0x138] sm:$0xff]
      %v2584 = vld [vmem:[%s2556 + $0x140] sm:$0xff]
      %v2585 = vld [vmem:[%s2556 + $0x150] sm:$0xff]
      %v2586 = vld [vmem:[%s2556 + $0x158] sm:$0xff]
      %v2587 = vld [vmem:[%s2556 + $0x168] sm:$0xff]
      %v2588 = vld [vmem:[%s2556 + $0x170] sm:$0xff]
      %v2589 = vpack.c.bf16 %v2557, %v2557
      %v2590 = vpack.c.bf16 %v2558, %v2558
      %v2591 = vpack.c.bf16 %v2559, %v2559
      %v2592 = vpack.c.bf16 %v2560, %v2560
      %v2593 = vpack.c.bf16 %v2561, %v2561
      %v2594 = vpack.c.bf16 %v2562, %v2562
      %v2595 = vpack.c.bf16 %v2563, %v2563
      %v2596 = vpack.c.bf16 %v2564, %v2564
      %v2597 = vpack.c.bf16 %v2565, %v2565
      %v2598 = vpack.c.bf16 %v2566, %v2566
      %v2599 = vpack.c.bf16 %v2567, %v2567
      %v2600 = vpack.c.bf16 %v2568, %v2568
      %v2601 = vpack.c.bf16 %v2569, %v2569
      %v2602 = vpack.c.bf16 %v2570, %v2570
      %v2603 = vpack.c.bf16 %v2571, %v2571
      %v2604 = vpack.c.bf16 %v2572, %v2572
      %v2605 = vpack.c.bf16 %v2573, %v2573
      %v2606 = vpack.c.bf16 %v2574, %v2574
      %v2607 = vpack.c.bf16 %v2575, %v2575
      %v2608 = vpack.c.bf16 %v2576, %v2576
      %v2609 = vpack.c.bf16 %v2577, %v2577
      %v2610 = vpack.c.bf16 %v2578, %v2578
      %v2611 = vpack.c.bf16 %v2579, %v2579
      %v2612 = vpack.c.bf16 %v2580, %v2580
      %v2613 = vpack.c.bf16 %v2581, %v2581
      %v2614 = vpack.c.bf16 %v2582, %v2582
      %v2615 = vpack.c.bf16 %v2583, %v2583
      %v2616 = vpack.c.bf16 %v2584, %v2584
      %v2617 = vpack.c.bf16 %v2585, %v2585
      %v2618 = vpack.c.bf16 %v2586, %v2586
      %v2619 = vpack.c.bf16 %v2587, %v2587
      %v2620 = vpack.c.bf16 %v2588, %v2588
      %s2621 = scalar_lea.vmem %s4, 384
      %v2622 = vld [vmem:[%s2621] sm:$0xf]
      %v2623 = vld [vmem:[%s2621 + $0x4] sm:$0xf]
      %v2624 = vld [vmem:[%s2621 + $0x8] sm:$0xf]
      %v2625 = vld [vmem:[%s2621 + $0xc] sm:$0xf]
      %v2626 = vld [vmem:[%s2621 + $0x10] sm:$0xf]
      %v2627 = vld [vmem:[%s2621 + $0x14] sm:$0xf]
      %v2628 = vld [vmem:[%s2621 + $0x18] sm:$0xf]
      %v2629 = vld [vmem:[%s2621 + $0x1c] sm:$0xf]
      %v2630 = vld [vmem:[%s2621 + $0x20] sm:$0xf]
      %v2631 = vld [vmem:[%s2621 + $0x24] sm:$0xf]
      %v2632 = vld [vmem:[%s2621 + $0x28] sm:$0xf]
      %v2633 = vld [vmem:[%s2621 + $0x2c] sm:$0xf]
      %v2634 = vld [vmem:[%s2621 + $0x30] sm:$0xf]
      %v2635 = vld [vmem:[%s2621 + $0x34] sm:$0xf]
      %v2636 = vld [vmem:[%s2621 + $0x38] sm:$0xf]
      %v2637 = vld [vmem:[%s2621 + $0x3c] sm:$0xf]
      %v2670 = vunpack.c.l.b16 %v2589
      %v2671 = vunpack.c.l.b16 %v2590
      %v2672 = vunpack.c.l.b16 %v2591
      %v2673 = vunpack.c.l.b16 %v2592
      %v2674 = vunpack.c.l.b16 %v2593
      %v2675 = vunpack.c.l.b16 %v2594
      %v2676 = vunpack.c.l.b16 %v2595
      %v2677 = vunpack.c.l.b16 %v2596
      %v2678 = vunpack.c.l.b16 %v2597
      %v2679 = vunpack.c.l.b16 %v2598
      %v2680 = vunpack.c.l.b16 %v2599
      %v2681 = vunpack.c.l.b16 %v2600
      %v2682 = vunpack.c.l.b16 %v2601
      %v2683 = vunpack.c.l.b16 %v2602
      %v2684 = vunpack.c.l.b16 %v2603
      %v2685 = vunpack.c.l.b16 %v2604
      %v2686 = vunpack.c.l.b16 %v2605
      %v2687 = vunpack.c.l.b16 %v2606
      %v2688 = vunpack.c.l.b16 %v2607
      %v2689 = vunpack.c.l.b16 %v2608
      %v2690 = vunpack.c.l.b16 %v2609
      %v2691 = vunpack.c.l.b16 %v2610
      %v2692 = vunpack.c.l.b16 %v2611
      %v2693 = vunpack.c.l.b16 %v2612
      %v2694 = vunpack.c.l.b16 %v2613
      %v2695 = vunpack.c.l.b16 %v2614
      %v2696 = vunpack.c.l.b16 %v2615
      %v2697 = vunpack.c.l.b16 %v2616
      %v2698 = vunpack.c.l.b16 %v2617
      %v2699 = vunpack.c.l.b16 %v2618
      %v2700 = vunpack.c.l.b16 %v2619
      %v2701 = vunpack.c.l.b16 %v2620
      %v2702 = vpack.c.b16 %v2671, %v2670
      %v2703 = vpack.c.b16 %v2673, %v2672
      %v2704 = vpack.c.b16 %v2675, %v2674
      %v2705 = vpack.c.b16 %v2677, %v2676
      %v2706 = vpack.c.b16 %v2679, %v2678
      %v2707 = vpack.c.b16 %v2681, %v2680
      %v2708 = vpack.c.b16 %v2683, %v2682
      %v2709 = vpack.c.b16 %v2685, %v2684
      %v2710 = vpack.c.b16 %v2687, %v2686
      %v2711 = vpack.c.b16 %v2689, %v2688
      %v2712 = vpack.c.b16 %v2691, %v2690
      %v2713 = vpack.c.b16 %v2693, %v2692
      %v2714 = vpack.c.b16 %v2695, %v2694
      %v2715 = vpack.c.b16 %v2697, %v2696
      %v2716 = vpack.c.b16 %v2699, %v2698
      %v2717 = vpack.c.b16 %v2701, %v2700
      %v2750 = vunpack.c.l.b16 %v2622
      %v2751 = vunpack.c.l.b16 %v2623
      %v2752 = vunpack.c.l.b16 %v2624
      %v2753 = vunpack.c.l.b16 %v2625
      %v2754 = vunpack.c.l.b16 %v2626
      %v2755 = vunpack.c.l.b16 %v2627
      %v2756 = vunpack.c.l.b16 %v2628
      %v2757 = vunpack.c.l.b16 %v2629
      %v2758 = vunpack.c.l.b16 %v2630
      %v2759 = vunpack.c.l.b16 %v2631
      %v2760 = vunpack.c.l.b16 %v2632
      %v2761 = vunpack.c.l.b16 %v2633
      %v2762 = vunpack.c.l.b16 %v2634
      %v2763 = vunpack.c.l.b16 %v2635
      %v2764 = vunpack.c.l.b16 %v2636
      %v2765 = vunpack.c.l.b16 %v2637
      %v2766 = vpack.c.b16 %v2751, %v2750
      %v2767 = vpack.c.b16 %v2753, %v2752
      %v2768 = vpack.c.b16 %v2755, %v2754
      %v2769 = vpack.c.b16 %v2757, %v2756
      %v2770 = vpack.c.b16 %v2759, %v2758
      %v2771 = vpack.c.b16 %v2761, %v2760
      %v2772 = vpack.c.b16 %v2763, %v2762
      %v2773 = vpack.c.b16 %v2765, %v2764
      %2782 = vmatpush.bf16.msra.mxu0 %v2773
      %2783 = vmatpush.bf16.msra.mxu0 %v2772
      %2784 = vmatpush.bf16.msra.mxu0 %v2771
      %2785 = vmatpush.bf16.msra.mxu0 %v2770
      %2786 = vmatpush.bf16.msra.mxu0 %v2769
      %2787 = vmatpush.bf16.msra.mxu0 %v2768
      %2788 = vmatpush.bf16.msra.mxu0 %v2767
      %2789 = vmatpush.bf16.msra.mxu0 %v2766
      %2790 = vmatmul.bf16.gmra.mxu0 %v2702
      %v2791 = vpop.f32.mrf.mxu0
      %v2792 = vadd.f32 0.0, %v2791
      %v2793 = vpop.f32.mrf.mxu0
      %v2794 = vadd.f32 0.0, %v2793
      %2795 = vmatmul.bf16.gmra.mxu0 %v2703
      %v2796 = vpop.f32.mrf.mxu0
      %v2797 = vadd.f32 0.0, %v2796
      %v2798 = vpop.f32.mrf.mxu0
      %v2799 = vadd.f32 0.0, %v2798
      %2800 = vmatmul.bf16.gmra.mxu0 %v2704
      %v2801 = vpop.f32.mrf.mxu0
      %v2802 = vadd.f32 0.0, %v2801
      %v2803 = vpop.f32.mrf.mxu0
      %v2804 = vadd.f32 0.0, %v2803
      %2805 = vmatmul.bf16.gmra.mxu0 %v2705
      %v2806 = vpop.f32.mrf.mxu0
      %v2807 = vadd.f32 0.0, %v2806
      %v2808 = vpop.f32.mrf.mxu0
      %v2809 = vadd.f32 0.0, %v2808
      %2810 = vmatmul.bf16.gmra.mxu0 %v2706
      %v2811 = vpop.f32.mrf.mxu0
      %v2812 = vadd.f32 0.0, %v2811
      %v2813 = vpop.f32.mrf.mxu0
      %v2814 = vadd.f32 0.0, %v2813
      %2815 = vmatmul.bf16.gmra.mxu0 %v2707
      %v2816 = vpop.f32.mrf.mxu0
      %v2817 = vadd.f32 0.0, %v2816
      %v2818 = vpop.f32.mrf.mxu0
      %v2819 = vadd.f32 0.0, %v2818
      %2820 = vmatmul.bf16.gmra.mxu0 %v2708
      %v2821 = vpop.f32.mrf.mxu0
      %v2822 = vadd.f32 0.0, %v2821
      %v2823 = vpop.f32.mrf.mxu0
      %v2824 = vadd.f32 0.0, %v2823
      %2825 = vmatmul.bf16.gmra.mxu0 %v2709
      %v2826 = vpop.f32.mrf.mxu0
      %v2827 = vadd.f32 0.0, %v2826
      %v2828 = vpop.f32.mrf.mxu0
      %v2829 = vadd.f32 0.0, %v2828
      %2830 = vmatmul.bf16.gmra.mxu0 %v2710
      %v2831 = vpop.f32.mrf.mxu0
      %v2832 = vadd.f32 0.0, %v2831
      %v2833 = vpop.f32.mrf.mxu0
      %v2834 = vadd.f32 0.0, %v2833
      %2835 = vmatmul.bf16.gmra.mxu0 %v2711
      %v2836 = vpop.f32.mrf.mxu0
      %v2837 = vadd.f32 0.0, %v2836
      %v2838 = vpop.f32.mrf.mxu0
      %v2839 = vadd.f32 0.0, %v2838
      %2840 = vmatmul.bf16.gmra.mxu0 %v2712
      %v2841 = vpop.f32.mrf.mxu0
      %v2842 = vadd.f32 0.0, %v2841
      %v2843 = vpop.f32.mrf.mxu0
      %v2844 = vadd.f32 0.0, %v2843
      %2845 = vmatmul.bf16.gmra.mxu0 %v2713
      %v2846 = vpop.f32.mrf.mxu0
      %v2847 = vadd.f32 0.0, %v2846
      %v2848 = vpop.f32.mrf.mxu0
      %v2849 = vadd.f32 0.0, %v2848
      %2850 = vmatmul.bf16.gmra.mxu0 %v2714
      %v2851 = vpop.f32.mrf.mxu0
      %v2852 = vadd.f32 0.0, %v2851
      %v2853 = vpop.f32.mrf.mxu0
      %v2854 = vadd.f32 0.0, %v2853
      %2855 = vmatmul.bf16.gmra.mxu0 %v2715
      %v2856 = vpop.f32.mrf.mxu0
      %v2857 = vadd.f32 0.0, %v2856
      %v2858 = vpop.f32.mrf.mxu0
      %v2859 = vadd.f32 0.0, %v2858
      %2860 = vmatmul.bf16.gmra.mxu0 %v2716
      %v2861 = vpop.f32.mrf.mxu0
      %v2862 = vadd.f32 0.0, %v2861
      %v2863 = vpop.f32.mrf.mxu0
      %v2864 = vadd.f32 0.0, %v2863
      %2865 = vmatmul.bf16.gmra.mxu0 %v2717
      %v2866 = vpop.f32.mrf.mxu0
      %v2867 = vadd.f32 0.0, %v2866
      %v2868 = vpop.f32.mrf.mxu0
      %v2869 = vadd.f32 0.0, %v2868
      %2870 = vdwg.mxu0
      %v2871 = vadd.f32 %v2524, %v2792
      %v2872 = vadd.f32 %v2525, %v2794
      %v2873 = vadd.f32 %v2526, %v2797
      %v2874 = vadd.f32 %v2527, %v2799
      %v2875 = vadd.f32 %v2528, %v2802
      %v2876 = vadd.f32 %v2529, %v2804
      %v2877 = vadd.f32 %v2530, %v2807
      %v2878 = vadd.f32 %v2531, %v2809
      %v2879 = vadd.f32 %v2532, %v2812
      %v2880 = vadd.f32 %v2533, %v2814
      %v2881 = vadd.f32 %v2534, %v2817
      %v2882 = vadd.f32 %v2535, %v2819
      %v2883 = vadd.f32 %v2536, %v2822
      %v2884 = vadd.f32 %v2537, %v2824
      %v2885 = vadd.f32 %v2538, %v2827
      %v2886 = vadd.f32 %v2539, %v2829
      %v2887 = vadd.f32 %v2540, %v2832
      %v2888 = vadd.f32 %v2541, %v2834
      %v2889 = vadd.f32 %v2542, %v2837
      %v2890 = vadd.f32 %v2543, %v2839
      %v2891 = vadd.f32 %v2544, %v2842
      %v2892 = vadd.f32 %v2545, %v2844
      %v2893 = vadd.f32 %v2546, %v2847
      %v2894 = vadd.f32 %v2547, %v2849
      %v2895 = vadd.f32 %v2548, %v2852
      %v2896 = vadd.f32 %v2549, %v2854
      %v2897 = vadd.f32 %v2550, %v2857
      %v2898 = vadd.f32 %v2551, %v2859
      %v2899 = vadd.f32 %v2552, %v2862
      %v2900 = vadd.f32 %v2553, %v2864
      %v2901 = vadd.f32 %v2554, %v2867
      %v2902 = vadd.f32 %v2555, %v2869
      %v2903 = vld [vmem:[%s2556 + $0x1] sm:$0xff]
      %v2904 = vld [vmem:[%s2556 + $0x9] sm:$0xff]
      %v2905 = vld [vmem:[%s2556 + $0x19] sm:$0xff]
      %v2906 = vld [vmem:[%s2556 + $0x21] sm:$0xff]
      %v2907 = vld [vmem:[%s2556 + $0x31] sm:$0xff]
      %v2908 = vld [vmem:[%s2556 + $0x39] sm:$0xff]
      %v2909 = vld [vmem:[%s2556 + $0x49] sm:$0xff]
      %v2910 = vld [vmem:[%s2556 + $0x51] sm:$0xff]
      %v2911 = vld [vmem:[%s2556 + $0x61] sm:$0xff]
      %v2912 = vld [vmem:[%s2556 + $0x69] sm:$0xff]
      %v2913 = vld [vmem:[%s2556 + $0x79] sm:$0xff]
      %v2914 = vld [vmem:[%s2556 + $0x81] sm:$0xff]
      %v2915 = vld [vmem:[%s2556 + $0x91] sm:$0xff]
      %v2916 = vld [vmem:[%s2556 + $0x99] sm:$0xff]
      %v2917 = vld [vmem:[%s2556 + $0xa9] sm:$0xff]
      %v2918 = vld [vmem:[%s2556 + $0xb1] sm:$0xff]
      %v2919 = vld [vmem:[%s2556 + $0xc1] sm:$0xff]
      %v2920 = vld [vmem:[%s2556 + $0xc9] sm:$0xff]
      %v2921 = vld [vmem:[%s2556 + $0xd9] sm:$0xff]
      %v2922 = vld [vmem:[%s2556 + $0xe1] sm:$0xff]
      %v2923 = vld [vmem:[%s2556 + $0xf1] sm:$0xff]
      %v2924 = vld [vmem:[%s2556 + $0xf9] sm:$0xff]
      %v2925 = vld [vmem:[%s2556 + $0x109] sm:$0xff]
      %v2926 = vld [vmem:[%s2556 + $0x111] sm:$0xff]
      %v2927 = vld [vmem:[%s2556 + $0x121] sm:$0xff]
      %v2928 = vld [vmem:[%s2556 + $0x129] sm:$0xff]
      %v2929 = vld [vmem:[%s2556 + $0x139] sm:$0xff]
      %v2930 = vld [vmem:[%s2556 + $0x141] sm:$0xff]
      %v2931 = vld [vmem:[%s2556 + $0x151] sm:$0xff]
      %v2932 = vld [vmem:[%s2556 + $0x159] sm:$0xff]
      %v2933 = vld [vmem:[%s2556 + $0x169] sm:$0xff]
      %v2934 = vld [vmem:[%s2556 + $0x171] sm:$0xff]
      %v2935 = vpack.c.bf16 %v2903, %v2903
      %v2936 = vpack.c.bf16 %v2904, %v2904
      %v2937 = vpack.c.bf16 %v2905, %v2905
      %v2938 = vpack.c.bf16 %v2906, %v2906
      %v2939 = vpack.c.bf16 %v2907, %v2907
      %v2940 = vpack.c.bf16 %v2908, %v2908
      %v2941 = vpack.c.bf16 %v2909, %v2909
      %v2942 = vpack.c.bf16 %v2910, %v2910
      %v2943 = vpack.c.bf16 %v2911, %v2911
      %v2944 = vpack.c.bf16 %v2912, %v2912
      %v2945 = vpack.c.bf16 %v2913, %v2913
      %v2946 = vpack.c.bf16 %v2914, %v2914
      %v2947 = vpack.c.bf16 %v2915, %v2915
      %v2948 = vpack.c.bf16 %v2916, %v2916
      %v2949 = vpack.c.bf16 %v2917, %v2917
      %v2950 = vpack.c.bf16 %v2918, %v2918
      %v2951 = vpack.c.bf16 %v2919, %v2919
      %v2952 = vpack.c.bf16 %v2920, %v2920
      %v2953 = vpack.c.bf16 %v2921, %v2921
      %v2954 = vpack.c.bf16 %v2922, %v2922
      %v2955 = vpack.c.bf16 %v2923, %v2923
      %v2956 = vpack.c.bf16 %v2924, %v2924
      %v2957 = vpack.c.bf16 %v2925, %v2925
      %v2958 = vpack.c.bf16 %v2926, %v2926
      %v2959 = vpack.c.bf16 %v2927, %v2927
      %v2960 = vpack.c.bf16 %v2928, %v2928
      %v2961 = vpack.c.bf16 %v2929, %v2929
      %v2962 = vpack.c.bf16 %v2930, %v2930
      %v2963 = vpack.c.bf16 %v2931, %v2931
      %v2964 = vpack.c.bf16 %v2932, %v2932
      %v2965 = vpack.c.bf16 %v2933, %v2933
      %v2966 = vpack.c.bf16 %v2934, %v2934
      %s2967 = scalar_lea.vmem %s4, 448
      %v2968 = vld [vmem:[%s2967] sm:$0xf]
      %v2969 = vld [vmem:[%s2967 + $0x4] sm:$0xf]
      %v2970 = vld [vmem:[%s2967 + $0x8] sm:$0xf]
      %v2971 = vld [vmem:[%s2967 + $0xc] sm:$0xf]
      %v2972 = vld [vmem:[%s2967 + $0x10] sm:$0xf]
      %v2973 = vld [vmem:[%s2967 + $0x14] sm:$0xf]
      %v2974 = vld [vmem:[%s2967 + $0x18] sm:$0xf]
      %v2975 = vld [vmem:[%s2967 + $0x1c] sm:$0xf]
      %v2976 = vld [vmem:[%s2967 + $0x20] sm:$0xf]
      %v2977 = vld [vmem:[%s2967 + $0x24] sm:$0xf]
      %v2978 = vld [vmem:[%s2967 + $0x28] sm:$0xf]
      %v2979 = vld [vmem:[%s2967 + $0x2c] sm:$0xf]
      %v2980 = vld [vmem:[%s2967 + $0x30] sm:$0xf]
      %v2981 = vld [vmem:[%s2967 + $0x34] sm:$0xf]
      %v2982 = vld [vmem:[%s2967 + $0x38] sm:$0xf]
      %v2983 = vld [vmem:[%s2967 + $0x3c] sm:$0xf]
      %v3016 = vunpack.c.l.b16 %v2935
      %v3017 = vunpack.c.l.b16 %v2936
      %v3018 = vunpack.c.l.b16 %v2937
      %v3019 = vunpack.c.l.b16 %v2938
      %v3020 = vunpack.c.l.b16 %v2939
      %v3021 = vunpack.c.l.b16 %v2940
      %v3022 = vunpack.c.l.b16 %v2941
      %v3023 = vunpack.c.l.b16 %v2942
      %v3024 = vunpack.c.l.b16 %v2943
      %v3025 = vunpack.c.l.b16 %v2944
      %v3026 = vunpack.c.l.b16 %v2945
      %v3027 = vunpack.c.l.b16 %v2946
      %v3028 = vunpack.c.l.b16 %v2947
      %v3029 = vunpack.c.l.b16 %v2948
      %v3030 = vunpack.c.l.b16 %v2949
      %v3031 = vunpack.c.l.b16 %v2950
      %v3032 = vunpack.c.l.b16 %v2951
      %v3033 = vunpack.c.l.b16 %v2952
      %v3034 = vunpack.c.l.b16 %v2953
      %v3035 = vunpack.c.l.b16 %v2954
      %v3036 = vunpack.c.l.b16 %v2955
      %v3037 = vunpack.c.l.b16 %v2956
      %v3038 = vunpack.c.l.b16 %v2957
      %v3039 = vunpack.c.l.b16 %v2958
      %v3040 = vunpack.c.l.b16 %v2959
      %v3041 = vunpack.c.l.b16 %v2960
      %v3042 = vunpack.c.l.b16 %v2961
      %v3043 = vunpack.c.l.b16 %v2962
      %v3044 = vunpack.c.l.b16 %v2963
      %v3045 = vunpack.c.l.b16 %v2964
      %v3046 = vunpack.c.l.b16 %v2965
      %v3047 = vunpack.c.l.b16 %v2966
      %v3048 = vpack.c.b16 %v3017, %v3016
      %v3049 = vpack.c.b16 %v3019, %v3018
      %v3050 = vpack.c.b16 %v3021, %v3020
      %v3051 = vpack.c.b16 %v3023, %v3022
      %v3052 = vpack.c.b16 %v3025, %v3024
      %v3053 = vpack.c.b16 %v3027, %v3026
      %v3054 = vpack.c.b16 %v3029, %v3028
      %v3055 = vpack.c.b16 %v3031, %v3030
      %v3056 = vpack.c.b16 %v3033, %v3032
      %v3057 = vpack.c.b16 %v3035, %v3034
      %v3058 = vpack.c.b16 %v3037, %v3036
      %v3059 = vpack.c.b16 %v3039, %v3038
      %v3060 = vpack.c.b16 %v3041, %v3040
      %v3061 = vpack.c.b16 %v3043, %v3042
      %v3062 = vpack.c.b16 %v3045, %v3044
      %v3063 = vpack.c.b16 %v3047, %v3046
      %v3096 = vunpack.c.l.b16 %v2968
      %v3097 = vunpack.c.l.b16 %v2969
      %v3098 = vunpack.c.l.b16 %v2970
      %v3099 = vunpack.c.l.b16 %v2971
      %v3100 = vunpack.c.l.b16 %v2972
      %v3101 = vunpack.c.l.b16 %v2973
      %v3102 = vunpack.c.l.b16 %v2974
      %v3103 = vunpack.c.l.b16 %v2975
      %v3104 = vunpack.c.l.b16 %v2976
      %v3105 = vunpack.c.l.b16 %v2977
      %v3106 = vunpack.c.l.b16 %v2978
      %v3107 = vunpack.c.l.b16 %v2979
      %v3108 = vunpack.c.l.b16 %v2980
      %v3109 = vunpack.c.l.b16 %v2981
      %v3110 = vunpack.c.l.b16 %v2982
      %v3111 = vunpack.c.l.b16 %v2983
      %v3112 = vpack.c.b16 %v3097, %v3096
      %v3113 = vpack.c.b16 %v3099, %v3098
      %v3114 = vpack.c.b16 %v3101, %v3100
      %v3115 = vpack.c.b16 %v3103, %v3102
      %v3116 = vpack.c.b16 %v3105, %v3104
      %v3117 = vpack.c.b16 %v3107, %v3106
      %v3118 = vpack.c.b16 %v3109, %v3108
      %v3119 = vpack.c.b16 %v3111, %v3110
      %3128 = vmatpush.bf16.msra.mxu0 %v3119
      %3129 = vmatpush.bf16.msra.mxu0 %v3118
      %3130 = vmatpush.bf16.msra.mxu0 %v3117
      %3131 = vmatpush.bf16.msra.mxu0 %v3116
      %3132 = vmatpush.bf16.msra.mxu0 %v3115
      %3133 = vmatpush.bf16.msra.mxu0 %v3114
      %3134 = vmatpush.bf16.msra.mxu0 %v3113
      %3135 = vmatpush.bf16.msra.mxu0 %v3112
      %3136 = vmatmul.bf16.gmra.mxu0 %v3048
      %v3137 = vpop.f32.mrf.mxu0
      %v3138 = vadd.f32 0.0, %v3137
      %v3139 = vpop.f32.mrf.mxu0
      %v3140 = vadd.f32 0.0, %v3139
      %3141 = vmatmul.bf16.gmra.mxu0 %v3049
      %v3142 = vpop.f32.mrf.mxu0
      %v3143 = vadd.f32 0.0, %v3142
      %v3144 = vpop.f32.mrf.mxu0
      %v3145 = vadd.f32 0.0, %v3144
      %3146 = vmatmul.bf16.gmra.mxu0 %v3050
      %v3147 = vpop.f32.mrf.mxu0
      %v3148 = vadd.f32 0.0, %v3147
      %v3149 = vpop.f32.mrf.mxu0
      %v3150 = vadd.f32 0.0, %v3149
      %3151 = vmatmul.bf16.gmra.mxu0 %v3051
      %v3152 = vpop.f32.mrf.mxu0
      %v3153 = vadd.f32 0.0, %v3152
      %v3154 = vpop.f32.mrf.mxu0
      %v3155 = vadd.f32 0.0, %v3154
      %3156 = vmatmul.bf16.gmra.mxu0 %v3052
      %v3157 = vpop.f32.mrf.mxu0
      %v3158 = vadd.f32 0.0, %v3157
      %v3159 = vpop.f32.mrf.mxu0
      %v3160 = vadd.f32 0.0, %v3159
      %3161 = vmatmul.bf16.gmra.mxu0 %v3053
      %v3162 = vpop.f32.mrf.mxu0
      %v3163 = vadd.f32 0.0, %v3162
      %v3164 = vpop.f32.mrf.mxu0
      %v3165 = vadd.f32 0.0, %v3164
      %3166 = vmatmul.bf16.gmra.mxu0 %v3054
      %v3167 = vpop.f32.mrf.mxu0
      %v3168 = vadd.f32 0.0, %v3167
      %v3169 = vpop.f32.mrf.mxu0
      %v3170 = vadd.f32 0.0, %v3169
      %3171 = vmatmul.bf16.gmra.mxu0 %v3055
      %v3172 = vpop.f32.mrf.mxu0
      %v3173 = vadd.f32 0.0, %v3172
      %v3174 = vpop.f32.mrf.mxu0
      %v3175 = vadd.f32 0.0, %v3174
      %3176 = vmatmul.bf16.gmra.mxu0 %v3056
      %v3177 = vpop.f32.mrf.mxu0
      %v3178 = vadd.f32 0.0, %v3177
      %v3179 = vpop.f32.mrf.mxu0
      %v3180 = vadd.f32 0.0, %v3179
      %3181 = vmatmul.bf16.gmra.mxu0 %v3057
      %v3182 = vpop.f32.mrf.mxu0
      %v3183 = vadd.f32 0.0, %v3182
      %v3184 = vpop.f32.mrf.mxu0
      %v3185 = vadd.f32 0.0, %v3184
      %3186 = vmatmul.bf16.gmra.mxu0 %v3058
      %v3187 = vpop.f32.mrf.mxu0
      %v3188 = vadd.f32 0.0, %v3187
      %v3189 = vpop.f32.mrf.mxu0
      %v3190 = vadd.f32 0.0, %v3189
      %3191 = vmatmul.bf16.gmra.mxu0 %v3059
      %v3192 = vpop.f32.mrf.mxu0
      %v3193 = vadd.f32 0.0, %v3192
      %v3194 = vpop.f32.mrf.mxu0
      %v3195 = vadd.f32 0.0, %v3194
      %3196 = vmatmul.bf16.gmra.mxu0 %v3060
      %v3197 = vpop.f32.mrf.mxu0
      %v3198 = vadd.f32 0.0, %v3197
      %v3199 = vpop.f32.mrf.mxu0
      %v3200 = vadd.f32 0.0, %v3199
      %3201 = vmatmul.bf16.gmra.mxu0 %v3061
      %v3202 = vpop.f32.mrf.mxu0
      %v3203 = vadd.f32 0.0, %v3202
      %v3204 = vpop.f32.mrf.mxu0
      %v3205 = vadd.f32 0.0, %v3204
      %3206 = vmatmul.bf16.gmra.mxu0 %v3062
      %v3207 = vpop.f32.mrf.mxu0
      %v3208 = vadd.f32 0.0, %v3207
      %v3209 = vpop.f32.mrf.mxu0
      %v3210 = vadd.f32 0.0, %v3209
      %3211 = vmatmul.bf16.gmra.mxu0 %v3063
      %v3212 = vpop.f32.mrf.mxu0
      %v3213 = vadd.f32 0.0, %v3212
      %v3214 = vpop.f32.mrf.mxu0
      %v3215 = vadd.f32 0.0, %v3214
      %3216 = vdwg.mxu0
      %v3217 = vadd.f32 %v2871, %v3138
      %v3218 = vadd.f32 %v2872, %v3140
      %v3219 = vadd.f32 %v2873, %v3143
      %v3220 = vadd.f32 %v2874, %v3145
      %v3221 = vadd.f32 %v2875, %v3148
      %v3222 = vadd.f32 %v2876, %v3150
      %v3223 = vadd.f32 %v2877, %v3153
      %v3224 = vadd.f32 %v2878, %v3155
      %v3225 = vadd.f32 %v2879, %v3158
      %v3226 = vadd.f32 %v2880, %v3160
      %v3227 = vadd.f32 %v2881, %v3163
      %v3228 = vadd.f32 %v2882, %v3165
      %v3229 = vadd.f32 %v2883, %v3168
      %v3230 = vadd.f32 %v2884, %v3170
      %v3231 = vadd.f32 %v2885, %v3173
      %v3232 = vadd.f32 %v2886, %v3175
      %v3233 = vadd.f32 %v2887, %v3178
      %v3234 = vadd.f32 %v2888, %v3180
      %v3235 = vadd.f32 %v2889, %v3183
      %v3236 = vadd.f32 %v2890, %v3185
      %v3237 = vadd.f32 %v2891, %v3188
      %v3238 = vadd.f32 %v2892, %v3190
      %v3239 = vadd.f32 %v2893, %v3193
      %v3240 = vadd.f32 %v2894, %v3195
      %v3241 = vadd.f32 %v2895, %v3198
      %v3242 = vadd.f32 %v2896, %v3200
      %v3243 = vadd.f32 %v2897, %v3203
      %v3244 = vadd.f32 %v2898, %v3205
      %v3245 = vadd.f32 %v2899, %v3208
      %v3246 = vadd.f32 %v2900, %v3210
      %v3247 = vadd.f32 %v2901, %v3213
      %v3248 = vadd.f32 %v2902, %v3215
      %v3249 = vld [vmem:[%s2556 + $0x2] sm:$0xff]
      %v3250 = vld [vmem:[%s2556 + $0xa] sm:$0xff]
      %v3251 = vld [vmem:[%s2556 + $0x1a] sm:$0xff]
      %v3252 = vld [vmem:[%s2556 + $0x22] sm:$0xff]
      %v3253 = vld [vmem:[%s2556 + $0x32] sm:$0xff]
      %v3254 = vld [vmem:[%s2556 + $0x3a] sm:$0xff]
      %v3255 = vld [vmem:[%s2556 + $0x4a] sm:$0xff]
      %v3256 = vld [vmem:[%s2556 + $0x52] sm:$0xff]
      %v3257 = vld [vmem:[%s2556 + $0x62] sm:$0xff]
      %v3258 = vld [vmem:[%s2556 + $0x6a] sm:$0xff]
      %v3259 = vld [vmem:[%s2556 + $0x7a] sm:$0xff]
      %v3260 = vld [vmem:[%s2556 + $0x82] sm:$0xff]
      %v3261 = vld [vmem:[%s2556 + $0x92] sm:$0xff]
      %v3262 = vld [vmem:[%s2556 + $0x9a] sm:$0xff]
      %v3263 = vld [vmem:[%s2556 + $0xaa] sm:$0xff]
      %v3264 = vld [vmem:[%s2556 + $0xb2] sm:$0xff]
      %v3265 = vld [vmem:[%s2556 + $0xc2] sm:$0xff]
      %v3266 = vld [vmem:[%s2556 + $0xca] sm:$0xff]
      %v3267 = vld [vmem:[%s2556 + $0xda] sm:$0xff]
      %v3268 = vld [vmem:[%s2556 + $0xe2] sm:$0xff]
      %v3269 = vld [vmem:[%s2556 + $0xf2] sm:$0xff]
      %v3270 = vld [vmem:[%s2556 + $0xfa] sm:$0xff]
      %v3271 = vld [vmem:[%s2556 + $0x10a] sm:$0xff]
      %v3272 = vld [vmem:[%s2556 + $0x112] sm:$0xff]
      %v3273 = vld [vmem:[%s2556 + $0x122] sm:$0xff]
      %v3274 = vld [vmem:[%s2556 + $0x12a] sm:$0xff]
      %v3275 = vld [vmem:[%s2556 + $0x13a] sm:$0xff]
      %v3276 = vld [vmem:[%s2556 + $0x142] sm:$0xff]
      %v3277 = vld [vmem:[%s2556 + $0x152] sm:$0xff]
      %v3278 = vld [vmem:[%s2556 + $0x15a] sm:$0xff]
      %v3279 = vld [vmem:[%s2556 + $0x16a] sm:$0xff]
      %v3280 = vld [vmem:[%s2556 + $0x172] sm:$0xff]
      %v3281 = vpack.c.bf16 %v3249, %v3249
      %v3282 = vpack.c.bf16 %v3250, %v3250
      %v3283 = vpack.c.bf16 %v3251, %v3251
      %v3284 = vpack.c.bf16 %v3252, %v3252
      %v3285 = vpack.c.bf16 %v3253, %v3253
      %v3286 = vpack.c.bf16 %v3254, %v3254
      %v3287 = vpack.c.bf16 %v3255, %v3255
      %v3288 = vpack.c.bf16 %v3256, %v3256
      %v3289 = vpack.c.bf16 %v3257, %v3257
      %v3290 = vpack.c.bf16 %v3258, %v3258
      %v3291 = vpack.c.bf16 %v3259, %v3259
      %v3292 = vpack.c.bf16 %v3260, %v3260
      %v3293 = vpack.c.bf16 %v3261, %v3261
      %v3294 = vpack.c.bf16 %v3262, %v3262
      %v3295 = vpack.c.bf16 %v3263, %v3263
      %v3296 = vpack.c.bf16 %v3264, %v3264
      %v3297 = vpack.c.bf16 %v3265, %v3265
      %v3298 = vpack.c.bf16 %v3266, %v3266
      %v3299 = vpack.c.bf16 %v3267, %v3267
      %v3300 = vpack.c.bf16 %v3268, %v3268
      %v3301 = vpack.c.bf16 %v3269, %v3269
      %v3302 = vpack.c.bf16 %v3270, %v3270
      %v3303 = vpack.c.bf16 %v3271, %v3271
      %v3304 = vpack.c.bf16 %v3272, %v3272
      %v3305 = vpack.c.bf16 %v3273, %v3273
      %v3306 = vpack.c.bf16 %v3274, %v3274
      %v3307 = vpack.c.bf16 %v3275, %v3275
      %v3308 = vpack.c.bf16 %v3276, %v3276
      %v3309 = vpack.c.bf16 %v3277, %v3277
      %v3310 = vpack.c.bf16 %v3278, %v3278
      %v3311 = vpack.c.bf16 %v3279, %v3279
      %v3312 = vpack.c.bf16 %v3280, %v3280
      %s3313 = scalar_lea.vmem %s4, 512
      %v3314 = vld [vmem:[%s3313] sm:$0xf]
      %v3315 = vld [vmem:[%s3313 + $0x4] sm:$0xf]
      %v3316 = vld [vmem:[%s3313 + $0x8] sm:$0xf]
      %v3317 = vld [vmem:[%s3313 + $0xc] sm:$0xf]
      %v3318 = vld [vmem:[%s3313 + $0x10] sm:$0xf]
      %v3319 = vld [vmem:[%s3313 + $0x14] sm:$0xf]
      %v3320 = vld [vmem:[%s3313 + $0x18] sm:$0xf]
      %v3321 = vld [vmem:[%s3313 + $0x1c] sm:$0xf]
      %v3322 = vld [vmem:[%s3313 + $0x20] sm:$0xf]
      %v3323 = vld [vmem:[%s3313 + $0x24] sm:$0xf]
      %v3324 = vld [vmem:[%s3313 + $0x28] sm:$0xf]
      %v3325 = vld [vmem:[%s3313 + $0x2c] sm:$0xf]
      %v3326 = vld [vmem:[%s3313 + $0x30] sm:$0xf]
      %v3327 = vld [vmem:[%s3313 + $0x34] sm:$0xf]
      %v3328 = vld [vmem:[%s3313 + $0x38] sm:$0xf]
      %v3329 = vld [vmem:[%s3313 + $0x3c] sm:$0xf]
      %v3362 = vunpack.c.l.b16 %v3281
      %v3363 = vunpack.c.l.b16 %v3282
      %v3364 = vunpack.c.l.b16 %v3283
      %v3365 = vunpack.c.l.b16 %v3284
      %v3366 = vunpack.c.l.b16 %v3285
      %v3367 = vunpack.c.l.b16 %v3286
      %v3368 = vunpack.c.l.b16 %v3287
      %v3369 = vunpack.c.l.b16 %v3288
      %v3370 = vunpack.c.l.b16 %v3289
      %v3371 = vunpack.c.l.b16 %v3290
      %v3372 = vunpack.c.l.b16 %v3291
      %v3373 = vunpack.c.l.b16 %v3292
      %v3374 = vunpack.c.l.b16 %v3293
      %v3375 = vunpack.c.l.b16 %v3294
      %v3376 = vunpack.c.l.b16 %v3295
      %v3377 = vunpack.c.l.b16 %v3296
      %v3378 = vunpack.c.l.b16 %v3297
      %v3379 = vunpack.c.l.b16 %v3298
      %v3380 = vunpack.c.l.b16 %v3299
      %v3381 = vunpack.c.l.b16 %v3300
      %v3382 = vunpack.c.l.b16 %v3301
      %v3383 = vunpack.c.l.b16 %v3302
      %v3384 = vunpack.c.l.b16 %v3303
      %v3385 = vunpack.c.l.b16 %v3304
      %v3386 = vunpack.c.l.b16 %v3305
      %v3387 = vunpack.c.l.b16 %v3306
      %v3388 = vunpack.c.l.b16 %v3307
      %v3389 = vunpack.c.l.b16 %v3308
      %v3390 = vunpack.c.l.b16 %v3309
      %v3391 = vunpack.c.l.b16 %v3310
      %v3392 = vunpack.c.l.b16 %v3311
      %v3393 = vunpack.c.l.b16 %v3312
      %v3394 = vpack.c.b16 %v3363, %v3362
      %v3395 = vpack.c.b16 %v3365, %v3364
      %v3396 = vpack.c.b16 %v3367, %v3366
      %v3397 = vpack.c.b16 %v3369, %v3368
      %v3398 = vpack.c.b16 %v3371, %v3370
      %v3399 = vpack.c.b16 %v3373, %v3372
      %v3400 = vpack.c.b16 %v3375, %v3374
      %v3401 = vpack.c.b16 %v3377, %v3376
      %v3402 = vpack.c.b16 %v3379, %v3378
      %v3403 = vpack.c.b16 %v3381, %v3380
      %v3404 = vpack.c.b16 %v3383, %v3382
      %v3405 = vpack.c.b16 %v3385, %v3384
      %v3406 = vpack.c.b16 %v3387, %v3386
      %v3407 = vpack.c.b16 %v3389, %v3388
      %v3408 = vpack.c.b16 %v3391, %v3390
      %v3409 = vpack.c.b16 %v3393, %v3392
      %v3442 = vunpack.c.l.b16 %v3314
      %v3443 = vunpack.c.l.b16 %v3315
      %v3444 = vunpack.c.l.b16 %v3316
      %v3445 = vunpack.c.l.b16 %v3317
      %v3446 = vunpack.c.l.b16 %v3318
      %v3447 = vunpack.c.l.b16 %v3319
      %v3448 = vunpack.c.l.b16 %v3320
      %v3449 = vunpack.c.l.b16 %v3321
      %v3450 = vunpack.c.l.b16 %v3322
      %v3451 = vunpack.c.l.b16 %v3323
      %v3452 = vunpack.c.l.b16 %v3324
      %v3453 = vunpack.c.l.b16 %v3325
      %v3454 = vunpack.c.l.b16 %v3326
      %v3455 = vunpack.c.l.b16 %v3327
      %v3456 = vunpack.c.l.b16 %v3328
      %v3457 = vunpack.c.l.b16 %v3329
      %v3458 = vpack.c.b16 %v3443, %v3442
      %v3459 = vpack.c.b16 %v3445, %v3444
      %v3460 = vpack.c.b16 %v3447, %v3446
      %v3461 = vpack.c.b16 %v3449, %v3448
      %v3462 = vpack.c.b16 %v3451, %v3450
      %v3463 = vpack.c.b16 %v3453, %v3452
      %v3464 = vpack.c.b16 %v3455, %v3454
      %v3465 = vpack.c.b16 %v3457, %v3456
      %3474 = vmatpush.bf16.msra.mxu0 %v3465
      %3475 = vmatpush.bf16.msra.mxu0 %v3464
      %3476 = vmatpush.bf16.msra.mxu0 %v3463
      %3477 = vmatpush.bf16.msra.mxu0 %v3462
      %3478 = vmatpush.bf16.msra.mxu0 %v3461
      %3479 = vmatpush.bf16.msra.mxu0 %v3460
      %3480 = vmatpush.bf16.msra.mxu0 %v3459
      %3481 = vmatpush.bf16.msra.mxu0 %v3458
      %3482 = vmatmul.bf16.gmra.mxu0 %v3394
      %v3483 = vpop.f32.mrf.mxu0
      %v3484 = vadd.f32 0.0, %v3483
      %v3485 = vpop.f32.mrf.mxu0
      %v3486 = vadd.f32 0.0, %v3485
      %3487 = vmatmul.bf16.gmra.mxu0 %v3395
      %v3488 = vpop.f32.mrf.mxu0
      %v3489 = vadd.f32 0.0, %v3488
      %v3490 = vpop.f32.mrf.mxu0
      %v3491 = vadd.f32 0.0, %v3490
      %3492 = vmatmul.bf16.gmra.mxu0 %v3396
      %v3493 = vpop.f32.mrf.mxu0
      %v3494 = vadd.f32 0.0, %v3493
      %v3495 = vpop.f32.mrf.mxu0
      %v3496 = vadd.f32 0.0, %v3495
      %3497 = vmatmul.bf16.gmra.mxu0 %v3397
      %v3498 = vpop.f32.mrf.mxu0
      %v3499 = vadd.f32 0.0, %v3498
      %v3500 = vpop.f32.mrf.mxu0
      %v3501 = vadd.f32 0.0, %v3500
      %3502 = vmatmul.bf16.gmra.mxu0 %v3398
      %v3503 = vpop.f32.mrf.mxu0
      %v3504 = vadd.f32 0.0, %v3503
      %v3505 = vpop.f32.mrf.mxu0
      %v3506 = vadd.f32 0.0, %v3505
      %3507 = vmatmul.bf16.gmra.mxu0 %v3399
      %v3508 = vpop.f32.mrf.mxu0
      %v3509 = vadd.f32 0.0, %v3508
      %v3510 = vpop.f32.mrf.mxu0
      %v3511 = vadd.f32 0.0, %v3510
      %3512 = vmatmul.bf16.gmra.mxu0 %v3400
      %v3513 = vpop.f32.mrf.mxu0
      %v3514 = vadd.f32 0.0, %v3513
      %v3515 = vpop.f32.mrf.mxu0
      %v3516 = vadd.f32 0.0, %v3515
      %3517 = vmatmul.bf16.gmra.mxu0 %v3401
      %v3518 = vpop.f32.mrf.mxu0
      %v3519 = vadd.f32 0.0, %v3518
      %v3520 = vpop.f32.mrf.mxu0
      %v3521 = vadd.f32 0.0, %v3520
      %3522 = vmatmul.bf16.gmra.mxu0 %v3402
      %v3523 = vpop.f32.mrf.mxu0
      %v3524 = vadd.f32 0.0, %v3523
      %v3525 = vpop.f32.mrf.mxu0
      %v3526 = vadd.f32 0.0, %v3525
      %3527 = vmatmul.bf16.gmra.mxu0 %v3403
      %v3528 = vpop.f32.mrf.mxu0
      %v3529 = vadd.f32 0.0, %v3528
      %v3530 = vpop.f32.mrf.mxu0
      %v3531 = vadd.f32 0.0, %v3530
      %3532 = vmatmul.bf16.gmra.mxu0 %v3404
      %v3533 = vpop.f32.mrf.mxu0
      %v3534 = vadd.f32 0.0, %v3533
      %v3535 = vpop.f32.mrf.mxu0
      %v3536 = vadd.f32 0.0, %v3535
      %3537 = vmatmul.bf16.gmra.mxu0 %v3405
      %v3538 = vpop.f32.mrf.mxu0
      %v3539 = vadd.f32 0.0, %v3538
      %v3540 = vpop.f32.mrf.mxu0
      %v3541 = vadd.f32 0.0, %v3540
      %3542 = vmatmul.bf16.gmra.mxu0 %v3406
      %v3543 = vpop.f32.mrf.mxu0
      %v3544 = vadd.f32 0.0, %v3543
      %v3545 = vpop.f32.mrf.mxu0
      %v3546 = vadd.f32 0.0, %v3545
      %3547 = vmatmul.bf16.gmra.mxu0 %v3407
      %v3548 = vpop.f32.mrf.mxu0
      %v3549 = vadd.f32 0.0, %v3548
      %v3550 = vpop.f32.mrf.mxu0
      %v3551 = vadd.f32 0.0, %v3550
      %3552 = vmatmul.bf16.gmra.mxu0 %v3408
      %v3553 = vpop.f32.mrf.mxu0
      %v3554 = vadd.f32 0.0, %v3553
      %v3555 = vpop.f32.mrf.mxu0
      %v3556 = vadd.f32 0.0, %v3555
      %3557 = vmatmul.bf16.gmra.mxu0 %v3409
      %v3558 = vpop.f32.mrf.mxu0
      %v3559 = vadd.f32 0.0, %v3558
      %v3560 = vpop.f32.mrf.mxu0
      %v3561 = vadd.f32 0.0, %v3560
      %3562 = vdwg.mxu0
      %v3563 = vadd.f32 %v3217, %v3484
      %v3564 = vadd.f32 %v3218, %v3486
      %v3565 = vadd.f32 %v3219, %v3489
      %v3566 = vadd.f32 %v3220, %v3491
      %v3567 = vadd.f32 %v3221, %v3494
      %v3568 = vadd.f32 %v3222, %v3496
      %v3569 = vadd.f32 %v3223, %v3499
      %v3570 = vadd.f32 %v3224, %v3501
      %v3571 = vadd.f32 %v3225, %v3504
      %v3572 = vadd.f32 %v3226, %v3506
      %v3573 = vadd.f32 %v3227, %v3509
      %v3574 = vadd.f32 %v3228, %v3511
      %v3575 = vadd.f32 %v3229, %v3514
      %v3576 = vadd.f32 %v3230, %v3516
      %v3577 = vadd.f32 %v3231, %v3519
      %v3578 = vadd.f32 %v3232, %v3521
      %v3579 = vadd.f32 %v3233, %v3524
      %v3580 = vadd.f32 %v3234, %v3526
      %v3581 = vadd.f32 %v3235, %v3529
      %v3582 = vadd.f32 %v3236, %v3531
      %v3583 = vadd.f32 %v3237, %v3534
      %v3584 = vadd.f32 %v3238, %v3536
      %v3585 = vadd.f32 %v3239, %v3539
      %v3586 = vadd.f32 %v3240, %v3541
      %v3587 = vadd.f32 %v3241, %v3544
      %v3588 = vadd.f32 %v3242, %v3546
      %v3589 = vadd.f32 %v3243, %v3549
      %v3590 = vadd.f32 %v3244, %v3551
      %v3591 = vadd.f32 %v3245, %v3554
      %v3592 = vadd.f32 %v3246, %v3556
      %v3593 = vadd.f32 %v3247, %v3559
      %v3594 = vadd.f32 %v3248, %v3561
      %v3595 = vld [vmem:[%s5] sm:$0x1]
      %v3597 = vperm.slane %v3595, 0
      %v3599 = vadd.f32 %v3563, %v3597
      %v3600 = vadd.f32 %v3564, %v3597
      %v3601 = vadd.f32 %v3565, %v3597
      %v3602 = vadd.f32 %v3566, %v3597
      %v3603 = vadd.f32 %v3567, %v3597
      %v3604 = vadd.f32 %v3568, %v3597
      %v3605 = vadd.f32 %v3569, %v3597
      %v3606 = vadd.f32 %v3570, %v3597
      %v3607 = vadd.f32 %v3571, %v3597
      %v3608 = vadd.f32 %v3572, %v3597
      %v3609 = vadd.f32 %v3573, %v3597
      %v3610 = vadd.f32 %v3574, %v3597
      %v3611 = vadd.f32 %v3575, %v3597
      %v3612 = vadd.f32 %v3576, %v3597
      %v3613 = vadd.f32 %v3577, %v3597
      %v3614 = vadd.f32 %v3578, %v3597
      %v3615 = vadd.f32 %v3579, %v3597
      %v3616 = vadd.f32 %v3580, %v3597
      %v3617 = vadd.f32 %v3581, %v3597
      %v3618 = vadd.f32 %v3582, %v3597
      %v3619 = vadd.f32 %v3583, %v3597
      %v3620 = vadd.f32 %v3584, %v3597
      %v3621 = vadd.f32 %v3585, %v3597
      %v3622 = vadd.f32 %v3586, %v3597
      %v3623 = vadd.f32 %v3587, %v3597
      %v3624 = vadd.f32 %v3588, %v3597
      %v3625 = vadd.f32 %v3589, %v3597
      %v3626 = vadd.f32 %v3590, %v3597
      %v3627 = vadd.f32 %v3591, %v3597
      %v3628 = vadd.f32 %v3592, %v3597
      %v3629 = vadd.f32 %v3593, %v3597
      %v3630 = vadd.f32 %v3594, %v3597
      %v3631 = vadd.f32 %v3599, %v3600
      %v3632 = vadd.f32 %v3631, %v3601
      %v3633 = vadd.f32 %v3632, %v3602
      %v3634 = vadd.f32 %v3633, %v3603
      %v3635 = vadd.f32 %v3634, %v3604
      %v3636 = vadd.f32 %v3635, %v3605
      %v3637 = vadd.f32 %v3636, %v3606
      %v3638 = vadd.f32 %v3637, %v3607
      %v3639 = vadd.f32 %v3638, %v3608
      %v3640 = vadd.f32 %v3639, %v3609
      %v3641 = vadd.f32 %v3640, %v3610
      %v3642 = vadd.f32 %v3641, %v3611
      %v3643 = vadd.f32 %v3642, %v3612
      %v3644 = vadd.f32 %v3643, %v3613
      %v3645 = vadd.f32 %v3644, %v3614
      %v3646 = vadd.f32 %v3645, %v3615
      %v3647 = vadd.f32 %v3646, %v3616
      %v3648 = vadd.f32 %v3647, %v3617
      %v3649 = vadd.f32 %v3648, %v3618
      %v3650 = vadd.f32 %v3649, %v3619
      %v3651 = vadd.f32 %v3650, %v3620
      %v3652 = vadd.f32 %v3651, %v3621
      %v3653 = vadd.f32 %v3652, %v3622
      %v3654 = vadd.f32 %v3653, %v3623
      %v3655 = vadd.f32 %v3654, %v3624
      %v3656 = vadd.f32 %v3655, %v3625
      %v3657 = vadd.f32 %v3656, %v3626
      %v3658 = vadd.f32 %v3657, %v3627
      %v3659 = vadd.f32 %v3658, %v3628
      %v3660 = vadd.f32 %v3659, %v3629
      %v3661 = vadd.f32 %v3660, %v3630
      %v3662 = vrot.slane %v3661, 4
      %v3663 = vadd.f32 %v3661, %v3662
      %v3664 = vrot.slane %v3663, 2
      %v3665 = vadd.f32 %v3663, %v3664
      %v3666 = vrot.slane %v3665, 1
      %v3667 = vadd.f32 %v3665, %v3666
      %3668 = vst [vmem:[%s289] sm:$0x1] %v3667
      %v3669 = vmul.f32 %v3599, %v3599
      %v3670 = vmul.f32 %v3600, %v3600
      %v3671 = vmul.f32 %v3601, %v3601
      %v3672 = vmul.f32 %v3602, %v3602
      %v3673 = vmul.f32 %v3603, %v3603
      %v3674 = vmul.f32 %v3604, %v3604
      %v3675 = vmul.f32 %v3605, %v3605
      %v3676 = vmul.f32 %v3606, %v3606
      %v3677 = vmul.f32 %v3607, %v3607
      %v3678 = vmul.f32 %v3608, %v3608
      %v3679 = vmul.f32 %v3609, %v3609
      %v3680 = vmul.f32 %v3610, %v3610
      %v3681 = vmul.f32 %v3611, %v3611
      %v3682 = vmul.f32 %v3612, %v3612
      %v3683 = vmul.f32 %v3613, %v3613
      %v3684 = vmul.f32 %v3614, %v3614
      %v3685 = vmul.f32 %v3615, %v3615
      %v3686 = vmul.f32 %v3616, %v3616
      %v3687 = vmul.f32 %v3617, %v3617
      %v3688 = vmul.f32 %v3618, %v3618
      %v3689 = vmul.f32 %v3619, %v3619
      %v3690 = vmul.f32 %v3620, %v3620
      %v3691 = vmul.f32 %v3621, %v3621
      %v3692 = vmul.f32 %v3622, %v3622
      %v3693 = vmul.f32 %v3623, %v3623
      %v3694 = vmul.f32 %v3624, %v3624
      %v3695 = vmul.f32 %v3625, %v3625
      %v3696 = vmul.f32 %v3626, %v3626
      %v3697 = vmul.f32 %v3627, %v3627
      %v3698 = vmul.f32 %v3628, %v3628
      %v3699 = vmul.f32 %v3629, %v3629
      %v3700 = vmul.f32 %v3630, %v3630
      %v3701 = vadd.f32 %v3669, %v3670
      %v3702 = vadd.f32 %v3701, %v3671
      %v3703 = vadd.f32 %v3702, %v3672
      %v3704 = vadd.f32 %v3703, %v3673
      %v3705 = vadd.f32 %v3704, %v3674
      %v3706 = vadd.f32 %v3705, %v3675
      %v3707 = vadd.f32 %v3706, %v3676
      %v3708 = vadd.f32 %v3707, %v3677
      %v3709 = vadd.f32 %v3708, %v3678
      %v3710 = vadd.f32 %v3709, %v3679
      %v3711 = vadd.f32 %v3710, %v3680
      %v3712 = vadd.f32 %v3711, %v3681
      %v3713 = vadd.f32 %v3712, %v3682
      %v3714 = vadd.f32 %v3713, %v3683
      %v3715 = vadd.f32 %v3714, %v3684
      %v3716 = vadd.f32 %v3715, %v3685
      %v3717 = vadd.f32 %v3716, %v3686
      %v3718 = vadd.f32 %v3717, %v3687
      %v3719 = vadd.f32 %v3718, %v3688
      %v3720 = vadd.f32 %v3719, %v3689
      %v3721 = vadd.f32 %v3720, %v3690
      %v3722 = vadd.f32 %v3721, %v3691
      %v3723 = vadd.f32 %v3722, %v3692
      %v3724 = vadd.f32 %v3723, %v3693
      %v3725 = vadd.f32 %v3724, %v3694
      %v3726 = vadd.f32 %v3725, %v3695
      %v3727 = vadd.f32 %v3726, %v3696
      %v3728 = vadd.f32 %v3727, %v3697
      %v3729 = vadd.f32 %v3728, %v3698
      %v3730 = vadd.f32 %v3729, %v3699
      %v3731 = vadd.f32 %v3730, %v3700
      %v3732 = vrot.slane %v3731, 4
      %v3733 = vadd.f32 %v3731, %v3732
      %v3734 = vrot.slane %v3733, 2
      %v3735 = vadd.f32 %v3733, %v3734
      %v3736 = vrot.slane %v3735, 1
      %v3737 = vadd.f32 %v3735, %v3736
      %3738 = vst [vmem:[%s289 + $0x1] sm:$0x1] %v3737
      %3739 = vst [vmem:[%s285] sm:$0xff] %v3599
      %3740 = vst [vmem:[%s285 + $0x8] sm:$0xff] %v3600
      %3741 = vst [vmem:[%s285 + $0x10] sm:$0xff] %v3601
      %3742 = vst [vmem:[%s285 + $0x18] sm:$0xff] %v3602
      %3743 = vst [vmem:[%s285 + $0x20] sm:$0xff] %v3603
      %3744 = vst [vmem:[%s285 + $0x28] sm:$0xff] %v3604
      %3745 = vst [vmem:[%s285 + $0x30] sm:$0xff] %v3605
      %3746 = vst [vmem:[%s285 + $0x38] sm:$0xff] %v3606
      %3747 = vst [vmem:[%s285 + $0x40] sm:$0xff] %v3607
      %3748 = vst [vmem:[%s285 + $0x48] sm:$0xff] %v3608
      %3749 = vst [vmem:[%s285 + $0x50] sm:$0xff] %v3609
      %3750 = vst [vmem:[%s285 + $0x58] sm:$0xff] %v3610
      %3751 = vst [vmem:[%s285 + $0x60] sm:$0xff] %v3611
      %3752 = vst [vmem:[%s285 + $0x68] sm:$0xff] %v3612
      %3753 = vst [vmem:[%s285 + $0x70] sm:$0xff] %v3613
      %3754 = vst [vmem:[%s285 + $0x78] sm:$0xff] %v3614
      %3755 = vst [vmem:[%s285 + $0x80] sm:$0xff] %v3615
      %3756 = vst [vmem:[%s285 + $0x88] sm:$0xff] %v3616
      %3757 = vst [vmem:[%s285 + $0x90] sm:$0xff] %v3617
      %3758 = vst [vmem:[%s285 + $0x98] sm:$0xff] %v3618
      %3759 = vst [vmem:[%s285 + $0xa0] sm:$0xff] %v3619
      %3760 = vst [vmem:[%s285 + $0xa8] sm:$0xff] %v3620
      %3761 = vst [vmem:[%s285 + $0xb0] sm:$0xff] %v3621
      %3762 = vst [vmem:[%s285 + $0xb8] sm:$0xff] %v3622
      %3763 = vst [vmem:[%s285 + $0xc0] sm:$0xff] %v3623
      %3764 = vst [vmem:[%s285 + $0xc8] sm:$0xff] %v3624
      %3765 = vst [vmem:[%s285 + $0xd0] sm:$0xff] %v3625
      %3766 = vst [vmem:[%s285 + $0xd8] sm:$0xff] %v3626
      %3767 = vst [vmem:[%s285 + $0xe0] sm:$0xff] %v3627
      %3768 = vst [vmem:[%s285 + $0xe8] sm:$0xff] %v3628
      %3769 = vst [vmem:[%s285 + $0xf0] sm:$0xff] %v3629
      %3770 = vst [vmem:[%s285 + $0xf8] sm:$0xff] %v3630
      %p3771 = scmp.lt.s32.totalorder %s19, 1
      %s3772 = scalar_select %p3771, %s19, 1
      %s3773 = smul.addr %s3772, 32
      %s3774 = smul.addr %s3773, 8
      %s3775 = scalar_lea.vmem %s6, %s3774
      %p3776 = scmp.lt.s32.totalorder %s19, 1
      %s3777 = scalar_select %p3776, %s19, 1
      %s3778 = smul.addr %s3777, 2
      %s3779 = scalar_lea.vmem %s7, %s3778
      // Predicated region
      $region45: #{resnet_block.4} parent=43 // pred_check
        %p3780 = pneg %p168
      $region46: #{resnet_block.4} parent=43 // pred_check_branch
        %3782 = sbr.rel (%p3780) target = $region48
      $region47: #{resnet_block.4} parent=43 // pred_region
        _
      $region48: #{resnet_block.4} parent=43 // pred_fallthru
        _
      // Predicated region
      $region49: #{resnet_block.4} parent=43 // pred_check
        %p3783 = pneg %p194
      $region50: #{resnet_block.4} parent=43 // pred_check_branch
        %3785 = sbr.rel (%p3783) target = $region52
      $region51: #{resnet_block.4} parent=43 // pred_region
        _
      $region52: #{resnet_block.4} parent=43 // pred_fallthru
        _
    $region44: #{resnet_block.4} parent=5 // pred_fallthru
      _
    %p3786 = scmp.le.s32.totalorder 2, %s14
    // Predicated region
    $region53: #{resnet_block.4} parent=5 // pred_check
      %p3787 = pneg %p3786
    $region54: #{resnet_block.4} parent=5 // pred_check_branch
      %3789 = sbr.rel (%p3787) target = $region56
    $region55: #{resnet_block.4} parent=5 // pred_region
      %s3790 = ssub.s32 %s14, 2
      // Predicated region
      $region57: #{resnet_block.4} parent=55 // pred_check
        %p3791 = pneg %p174
      $region58: #{resnet_block.4} parent=55 // pred_check_branch
        %3793 = sbr.rel (%p3791) target = $region60
      $region59: #{resnet_block.4} parent=55 // pred_region
        %p3794 = scmp.lt.s32.totalorder %s20, 1
        %s3795 = scalar_select %p3794, %s20, 1
        %s3796 = smul.addr %s3795, 32
        %s3797 = smul.addr %s3796, 8
        %s3798 = scalar_lea.vmem %s6, %s3797
      $region60: #{resnet_block.4} parent=55 // pred_fallthru
        _
      // Predicated region
      $region61: #{resnet_block.4} parent=55 // pred_check
        %p3799 = pneg %p200
      $region62: #{resnet_block.4} parent=55 // pred_check_branch
        %3801 = sbr.rel (%p3799) target = $region64
      $region63: #{resnet_block.4} parent=55 // pred_region
        %p3802 = scmp.lt.s32.totalorder %s20, 1
        %s3803 = scalar_select %p3802, %s20, 1
        %s3804 = smul.addr %s3803, 2
        %s3805 = scalar_lea.vmem %s7, %s3804
      $region64: #{resnet_block.4} parent=55 // pred_fallthru
        _
    $region56: #{resnet_block.4} parent=5 // pred_fallthru
      _
  $region6: #{resnet_block.4} parent=0 // loop_footer
    %s18 = sadd.s32 1, %s14
  $region7: #{resnet_block.4} parent=0 // loop_footer_branch
    %13 = sbr.rel target = $region3
  $region8: #{resnet_block.4} parent=0 // loop_exit
    _

// kernel: resnet_block.3
$region0: #{resnet_block.3}
  #allocation0 [shape = 'u32[]', space=smem, size = 0x4, offset = 0x4, fixed_abs, tag = 'smem constant byte address 0x4 - core index']
  #allocation1 [shape = 'u32[72,128]{1,0:T(1,128)}', space=vmem, size = 0x9000, scoped, tag = 'internal scratch']
  %s0 = inlined_call_operand.vmem [shape: bf16[2,18,18,128], index: 0, kind: input, shape index: {}]
  %s1 = inlined_call_operand.vmem [shape: bf16[9,128,128], index: 1, kind: input, shape index: {}]
  %s2 = inlined_call_operand.vmem [shape: f32[1,128], index: 2, kind: input, shape index: {}]
  %s3 = inlined_call_operand.vmem [shape: f32[2,16,16,128], index: 3, kind: output, shape index: {0}]
  %s4 = inlined_call_operand.vmem [shape: f32[2,2,128], index: 4, kind: output, shape index: {1}]
  %5 = xla_tuple %s3, %s4
  %s6 = sld [smem:[#allocation0]]
  $region53: #{resnet_block.3} parent=0
    _
  %s8 = ssub.s32 1, %s6
  %s9 = scalar_select 0, %s8, %s6
  loop: start=0, step=1, limit=4
  $region2: #{resnet_block.3} parent=0 // loop_pre_header
    _
  $region3: #{resnet_block.3} parent=0 // loop_header
    %s11 = sphi 0, %s15
    %p12 = scmp.ge.s32.totalorder %s11, 4
    %s21 = sphi 0, %s23
    %s24 = sphi 0, %s21
    %s25 = sphi 0, %s24
    %s41 = sphi 0, %s25
    %s45 = sphi 0, %s45
    %s47 = sphi 0, %s45
    %s48 = sphi 0, %s47
    %s62 = sphi 0, %s48
    %s66 = sphi 0, %s66
    %s68 = sphi 0, %s66
    %s69 = sphi 0, %s68
    %s83 = sphi 0, %s69
    %s89 = sphi 0, %s91
    %s92 = sphi 0, %s89
    %s93 = sphi 0, %s92
    %s109 = sphi 0, %s93
    %s115 = sphi 0, %s117
    %s118 = sphi 0, %s115
    %s119 = sphi 0, %s118
    %s135 = sphi 0, %s119
  $region4: #{resnet_block.3} parent=0 // loop_header_branch
    %14 = sbr.rel (%p12) target = $region8
  $region5: #{resnet_block.3} parent=0 // loop_body
    %s16 = ssub.s32 %s11, 1
    %s17 = ssub.s32 %s11, 2
    %s18 = sadd.s32 %s11, 1
    %s19 = ssub.s32 %s11, %s18
    %p20 = scmp.eq.s32.totalorder %s19, 0
    %s22 = sadd.s32 %s21, 1
    %s23 = scalar_select %p20, %s21, %s22
    %p26 = pneg %p20
    %p27 = scmp.eq.s32.totalorder %s11, 1
    %p28 = por %p26, %p27
    %p29 = scmp.ne.s32.totalorder %s21, %s24
    %p30 = scmp.eq.s32.totalorder %s11, 0
    %p31 = por %p29, %p30
    %p32 = scmp.ne.s32.totalorder %s21, %s24
    %p33 = scmp.eq.s32.totalorder %s16, 1
    %p34 = por %p32, %p33
    %p35 = scmp.ne.s32.totalorder %s24, %s25
    %p36 = scmp.eq.s32.totalorder %s16, 0
    %p37 = por %p35, %p36
    %p38 = scmp.ne.s32.totalorder %s24, %s25
    %p39 = scmp.eq.s32.totalorder %s17, 1
    %p40 = por %p38, %p39
    %p42 = scmp.ne.s32.totalorder %s25, %s41
    %p43 = scmp.eq.s32.totalorder %s17, 0
    %p44 = por %p42, %p43
    %s46 = sadd.s32 %s45, 1
    %p49 = scmp.eq.s32.totalorder %s11, 1
    %p50 = scmp.ne.s32.totalorder %s45, %s47
    %p51 = scmp.eq.s32.totalorder %s11, 0
    %p52 = por %p50, %p51
    %p53 = scmp.ne.s32.totalorder %s45, %s47
    %p54 = scmp.eq.s32.totalorder %s16, 1
    %p55 = por %p53, %p54
    %p56 = scmp.ne.s32.totalorder %s47, %s48
    %p57 = scmp.eq.s32.totalorder %s16, 0
    %p58 = por %p56, %p57
    %p59 = scmp.ne.s32.totalorder %s47, %s48
    %p60 = scmp.eq.s32.totalorder %s17, 1
    %p61 = por %p59, %p60
    %p63 = scmp.ne.s32.totalorder %s48, %s62
    %p64 = scmp.eq.s32.totalorder %s17, 0
    %p65 = por %p63, %p64
    %s67 = sadd.s32 %s66, 1
    %p70 = scmp.eq.s32.totalorder %s11, 1
    %p71 = scmp.ne.s32.totalorder %s66, %s68
    %p72 = scmp.eq.s32.totalorder %s11, 0
    %p73 = por %p71, %p72
    %p74 = scmp.ne.s32.totalorder %s66, %s68
    %p75 = scmp.eq.s32.totalorder %s16, 1
    %p76 = por %p74, %p75
    %p77 = scmp.ne.s32.totalorder %s68, %s69
    %p78 = scmp.eq.s32.totalorder %s16, 0
    %p79 = por %p77, %p78
    %p80 = scmp.ne.s32.totalorder %s68, %s69
    %p81 = scmp.eq.s32.totalorder %s17, 1
    %p82 = por %p80, %p81
    %p84 = scmp.ne.s32.totalorder %s69, %s83
    %p85 = scmp.eq.s32.totalorder %s17, 0
    %p86 = por %p84, %p85
    %s87 = ssub.s32 %s11, %s18
    %p88 = scmp.eq.s32.totalorder %s87, 0
    %s90 = sadd.s32 %s89, 1
    %s91 = scalar_select %p88, %s89, %s90
    %p94 = pneg %p88
    %p95 = scmp.eq.s32.totalorder %s11, 1
    %p96 = por %p94, %p95
    %p97 = scmp.ne.s32.totalorder %s89, %s92
    %p98 = scmp.eq.s32.totalorder %s11, 0
    %p99 = por %p97, %p98
    %p100 = scmp.ne.s32.totalorder %s89, %s92
    %p101 = scmp.eq.s32.totalorder %s16, 1
    %p102 = por %p100, %p101
    %p103 = scmp.ne.s32.totalorder %s92, %s93
    %p104 = scmp.eq.s32.totalorder %s16, 0
    %p105 = por %p103, %p104
    %p106 = scmp.ne.s32.totalorder %s92, %s93
    %p107 = scmp.eq.s32.totalorder %s17, 1
    %p108 = por %p106, %p107
    %p110 = scmp.ne.s32.totalorder %s93, %s109
    %p111 = scmp.eq.s32.totalorder %s17, 0
    %p112 = por %p110, %p111
    %s113 = ssub.s32 %s11, %s18
    %p114 = scmp.eq.s32.totalorder %s113, 0
    %s116 = sadd.s32 %s115, 1
    %s117 = scalar_select %p114, %s115, %s116
    %p120 = pneg %p114
    %p121 = scmp.eq.s32.totalorder %s11, 1
    %p122 = por %p120, %p121
    %p123 = scmp.ne.s32.totalorder %s115, %s118
    %p124 = scmp.eq.s32.totalorder %s11, 0
    %p125 = por %p123, %p124
    %p126 = scmp.ne.s32.totalorder %s115, %s118
    %p127 = scmp.eq.s32.totalorder %s16, 1
    %p128 = por %p126, %p127
    %p129 = scmp.ne.s32.totalorder %s118, %s119
    %p130 = scmp.eq.s32.totalorder %s16, 0
    %p131 = por %p129, %p130
    %p132 = scmp.ne.s32.totalorder %s118, %s119
    %p133 = scmp.eq.s32.totalorder %s17, 1
    %p134 = por %p132, %p133
    %p136 = scmp.ne.s32.totalorder %s119, %s135
    %p137 = scmp.eq.s32.totalorder %s17, 0
    %p138 = por %p136, %p137
    %p139 = scmp.le.s32.totalorder 1, %s11
    %p140 = scmp.lt.s32.totalorder %s11, 3
    %p141 = pnand %p139, %p140
    %p142 = pneg %p141
    // Predicated region
    $region9: #{resnet_block.3} parent=5 // pred_check
      _
    $region10: #{resnet_block.3} parent=5 // pred_check_branch
      %144 = sbr.rel (%p141) target = $region12
    $region11: #{resnet_block.3} parent=5 // pred_region
      %s145 = ssub.s32 %s11, 1
      // Predicated region
      $region13: #{resnet_block.3} parent=11 // pred_check
        %p146 = pneg %p58
      $region14: #{resnet_block.3} parent=11 // pred_check_branch
        %148 = sbr.rel (%p146) target = $region16
      $region15: #{resnet_block.3} parent=11 // pred_region
        _
      $region16: #{resnet_block.3} parent=11 // pred_fallthru
        _
      // Predicated region
      $region17: #{resnet_block.3} parent=11 // pred_check
        %p149 = pneg %p79
      $region18: #{resnet_block.3} parent=11 // pred_check_branch
        %151 = sbr.rel (%p149) target = $region20
      $region19: #{resnet_block.3} parent=11 // pred_region
        _
      $region20: #{resnet_block.3} parent=11 // pred_fallthru
        _
    $region12: #{resnet_block.3} parent=5 // pred_fallthru
      _
    %p152 = scmp.lt.s32.totalorder %s11, 2
    // Predicated region
    $region21: #{resnet_block.3} parent=5 // pred_check
      %p153 = pneg %p152
    $region22: #{resnet_block.3} parent=5 // pred_check_branch
      %155 = sbr.rel (%p153) target = $region24
    $region23: #{resnet_block.3} parent=5 // pred_region
      // Predicated region
      $region25: #{resnet_block.3} parent=23 // pred_check
        %p156 = pneg %p31
      $region26: #{resnet_block.3} parent=23 // pred_check_branch
        %158 = sbr.rel (%p156) target = $region28
      $region27: #{resnet_block.3} parent=23 // pred_region
        %p159 = scmp.lt.s32.totalorder %s11, 1
        %s160 = scalar_select %p159, %s11, 1
        %s161 = smul.addr %s160, 54
        %s162 = smul.addr %s161, 4
        %s163 = scalar_lea.vmem %s0, %s162
      $region28: #{resnet_block.3} parent=23 // pred_fallthru
        _
    $region24: #{resnet_block.3} parent=5 // pred_fallthru
      _
    %p164 = scmp.le.s32.totalorder 1, %s11
    %p165 = scmp.lt.s32.totalorder %s11, 3
    %p166 = pnand %p164, %p165
    %p167 = pneg %p166
    // Predicated region
    $region29: #{resnet_block.3} parent=5 // pred_check
      _
    $region30: #{resnet_block.3} parent=5 // pred_check_branch
      %169 = sbr.rel (%p166) target = $region32
    $region31: #{resnet_block.3} parent=5 // pred_region
      %s170 = ssub.s32 %s11, 1
      %p171 = scmp.lt.s32.totalorder %s16, 1
      %s172 = scalar_select %p171, %s16, 1
      %s173 = smul.addr %s172, 54
      %s174 = smul.addr %s173, 4
      %s175 = scalar_lea.vmem %s0, %s174
      %p176 = pneg %p37
      %p177 = pneg %p34
      %p178 = pneg %p58
      %p179 = pneg %p55
      %p180 = pneg %p79
      %p181 = pneg %p76
      %p182 = pneg %p105
      %p183 = pneg %p102
      %p184 = scmp.lt.s32.totalorder %s16, 1
      %s185 = scalar_select %p184, %s16, 1
      %s186 = smul.addr %s185, 32
      %s187 = smul.addr %s186, 8
      %s188 = scalar_lea.vmem %s3, %s187
      %p189 = pneg %p131
      %p190 = pneg %p128
      %p191 = scmp.lt.s32.totalorder %s16, 1
      %s192 = scalar_select %p191, %s16, 1
      %s193 = smul.addr %s192, 2
      %s194 = scalar_lea.vmem %s4, %s193
      %p195 = scmp.lt.s32.totalorder %s16, 1
      %s196 = scalar_select %p195, %s16, 1
      %s197 = smul.addr %s196, 54
      %s198 = smul.addr %s197, 4
      %s199 = scalar_lea.vmem %s0, %s198
      %p200 = scmp.lt.s32.totalorder %s16, 1
      %s201 = scalar_select %p200, %s16, 1
      %s202 = smul.addr %s201, 32
      %s203 = smul.addr %s202, 8
      %s204 = scalar_lea.vmem %s3, %s203
      %p205 = scmp.lt.s32.totalorder %s16, 1
      %s206 = scalar_select %p205, %s16, 1
      %s207 = smul.addr %s206, 2
      %s208 = scalar_lea.vmem %s4, %s207
      %v209 = vld [vmem:[%s199] sm:$0xf]
      %v210 = vld [vmem:[%s199 + $0x4] sm:$0xf]
      %v211 = vld [vmem:[%s199 + $0xc] sm:$0xf]
      %v212 = vld [vmem:[%s199 + $0x10] sm:$0xf]
      %v213 = vld [vmem:[%s199 + $0x18] sm:$0xf]
      %v214 = vld [vmem:[%s199 + $0x1c] sm:$0xf]
      %v215 = vld [vmem:[%s199 + $0x24] sm:$0xf]
      %v216 = vld [vmem:[%s199 + $0x28] sm:$0xf]
      %v217 = vld [vmem:[%s199 + $0x30] sm:$0xf]
      %v218 = vld [vmem:[%s199 + $0x34] sm:$0xf]
      %v219 = vld [vmem:[%s199 + $0x3c] sm:$0xf]
      %v220 = vld [vmem:[%s199 + $0x40] sm:$0xf]
      %v221 = vld [vmem:[%s199 + $0x48] sm:$0xf]
      %v222 = vld [vmem:[%s199 + $0x4c] sm:$0xf]
      %v223 = vld [vmem:[%s199 + $0x54] sm:$0xf]
      %v224 = vld [vmem:[%s199 + $0x58] sm:$0xf]
      %v225 = vld [vmem:[%s199 + $0x60] sm:$0xf]
      %v226 = vld [vmem:[%s199 + $0x64] sm:$0xf]
      %v227 = vld [vmem:[%s199 + $0x6c] sm:$0xf]
      %v228 = vld [vmem:[%s199 + $0x70] sm:$0xf]
      %v229 = vld [vmem:[%s199 + $0x78] sm:$0xf]
      %v230 = vld [vmem:[%s199 + $0x7c] sm:$0xf]
      %v231 = vld [vmem:[%s199 + $0x84] sm:$0xf]
      %v232 = vld [vmem:[%s199 + $0x88] sm:$0xf]
      %v233 = vld [vmem:[%s199 + $0x90] sm:$0xf]
      %v234 = vld [vmem:[%s199 + $0x94] sm:$0xf]
      %v235 = vld [vmem:[%s199 + $0x9c] sm:$0xf]
      %v236 = vld [vmem:[%s199 + $0xa0] sm:$0xf]
      %v237 = vld [vmem:[%s199 + $0xa8] sm:$0xf]
      %v238 = vld [vmem:[%s199 + $0xac] sm:$0xf]
      %v239 = vld [vmem:[%s199 + $0xb4] sm:$0xf]
      %v240 = vld [vmem:[%s199 + $0xb8] sm:$0xf]
      %v241 = vld [vmem:[%s1] sm:$0xf]
      %v242 = vld [vmem:[%s1 + $0x4] sm:$0xf]
      %v243 = vld [vmem:[%s1 + $0x8] sm:$0xf]
      %v244 = vld [vmem:[%s1 + $0xc] sm:$0xf]
      %v245 = vld [vmem:[%s1 + $0x10] sm:$0xf]
      %v246 = vld [vmem:[%s1 + $0x14] sm:$0xf]
      %v247 = vld [vmem:[%s1 + $0x18] sm:$0xf]
      %v248 = vld [vmem:[%s1 + $0x1c] sm:$0xf]
      %v249 = vld [vmem:[%s1 + $0x20] sm:$0xf]
      %v250 = vld [vmem:[%s1 + $0x24] sm:$0xf]
      %v251 = vld [vmem:[%s1 + $0x28] sm:$0xf]
      %v252 = vld [vmem:[%s1 + $0x2c] sm:$0xf]
      %v253 = vld [vmem:[%s1 + $0x30] sm:$0xf]
      %v254 = vld [vmem:[%s1 + $0x34] sm:$0xf]
      %v255 = vld [vmem:[%s1 + $0x38] sm:$0xf]
      %v256 = vld [vmem:[%s1 + $0x3c] sm:$0xf]
      %v257 = vld [vmem:[%s199 + $0x8] sm:$0x1]
      %v258 = vld [vmem:[%s199 + $0x14] sm:$0x1]
      %v259 = vld [vmem:[%s199 + $0x20] sm:$0x1]
      %v260 = vld [vmem:[%s199 + $0x2c] sm:$0x1]
      %v261 = vld [vmem:[%s199 + $0x38] sm:$0x1]
      %v262 = vld [vmem:[%s199 + $0x44] sm:$0x1]
      %v263 = vld [vmem:[%s199 + $0x50] sm:$0x1]
      %v264 = vld [vmem:[%s199 + $0x5c] sm:$0x1]
      %v265 = vld [vmem:[%s199 + $0x68] sm:$0x1]
      %v266 = vld [vmem:[%s199 + $0x74] sm:$0x1]
      %v267 = vld [vmem:[%s199 + $0x80] sm:$0x1]
      %v268 = vld [vmem:[%s199 + $0x8c] sm:$0x1]
      %v269 = vld [vmem:[%s199 + $0x98] sm:$0x1]
      %v270 = vld [vmem:[%s199 + $0xa4] sm:$0x1]
      %v271 = vld [vmem:[%s199 + $0xb0] sm:$0x1]
      %v272 = vld [vmem:[%s199 + $0xbc] sm:$0x1]
      %vm273 = vsmask.f32 3328
      %vm274 = vsmask.f32 7440
      %vm275 = vmor %vm273, %vm274
      %v277 = vshrl.u32 %v209, 16
      %v279 = vrot.slane %v277, 4
      %v280 = vshll.u32 %v209, 16
      %v282 = vrot.slane %v280, 5
      %v283 = vor.u32 %v279, %v282
      %v284 = vrot.slane %v283, 4
      %v286 = vshll.u32 %v210, 16
      %v288 = vrot.slane %v286, 5
      %v289 = vsel %vm275, %v284, %v288
      %v290 = vshrl.u32 %v210, 16
      %v292 = vrot.slane %v290, 4
      %v293 = vor.u32 %v292, %v288
      %v294 = vrot.slane %v293, 4
      %v296 = vshll.u32 %v257, 16
      %v298 = vrot.slane %v296, 5
      %v299 = vsel %vm275, %v294, %v298
      %v301 = vshrl.u32 %v211, 16
      %v303 = vrot.slane %v301, 4
      %v304 = vshll.u32 %v211, 16
      %v306 = vrot.slane %v304, 5
      %v307 = vor.u32 %v303, %v306
      %v308 = vrot.slane %v307, 4
      %v310 = vshll.u32 %v212, 16
      %v312 = vrot.slane %v310, 5
      %v313 = vsel %vm275, %v308, %v312
      %v314 = vshrl.u32 %v212, 16
      %v316 = vrot.slane %v314, 4
      %v317 = vor.u32 %v316, %v312
      %v318 = vrot.slane %v317, 4
      %v320 = vshll.u32 %v258, 16
      %v322 = vrot.slane %v320, 5
      %v323 = vsel %vm275, %v318, %v322
      %v325 = vshrl.u32 %v213, 16
      %v327 = vrot.slane %v325, 4
      %v328 = vshll.u32 %v213, 16
      %v330 = vrot.slane %v328, 5
      %v331 = vor.u32 %v327, %v330
      %v332 = vrot.slane %v331, 4
      %v334 = vshll.u32 %v214, 16
      %v336 = vrot.slane %v334, 5
      %v337 = vsel %vm275, %v332, %v336
      %v338 = vshrl.u32 %v214, 16
      %v340 = vrot.slane %v338, 4
      %v341 = vor.u32 %v340, %v336
      %v342 = vrot.slane %v341, 4
      %v344 = vshll.u32 %v259, 16
      %v346 = vrot.slane %v344, 5
      %v347 = vsel %vm275, %v342, %v346
      %v349 = vshrl.u32 %v215, 16
      %v351 = vrot.slane %v349, 4
      %v352 = vshll.u32 %v215, 16
      %v354 = vrot.slane %v352, 5
      %v355 = vor.u32 %v351, %v354
      %v356 = vrot.slane %v355, 4
      %v358 = vshll.u32 %v216, 16
      %v360 = vrot.slane %v358, 5
      %v361 = vsel %vm275, %v356, %v360
      %v362 = vshrl.u32 %v216, 16
      %v364 = vrot.slane %v362, 4
      %v365 = vor.u32 %v364, %v360
      %v366 = vrot.slane %v365, 4
      %v368 = vshll.u32 %v260, 16
      %v370 = vrot.slane %v368, 5
      %v371 = vsel %vm275, %v366, %v370
      %v373 = vshrl.u32 %v217, 16
      %v375 = vrot.slane %v373, 4
      %v376 = vshll.u32 %v217, 16
      %v378 = vrot.slane %v376, 5
      %v379 = vor.u32 %v375, %v378
      %v380 = vrot.slane %v379, 4
      %v382 = vshll.u32 %v218, 16
      %v384 = vrot.slane %v382, 5
      %v385 = vsel %vm275, %v380, %v384
      %v386 = vshrl.u32 %v218, 16
      %v388 = vrot.slane %v386, 4
      %v389 = vor.u32 %v388, %v384
      %v390 = vrot.slane %v389, 4
      %v392 = vshll.u32 %v261, 16
      %v394 = vrot.slane %v392, 5
      %v395 = vsel %vm275, %v390, %v394
      %v397 = vshrl.u32 %v219, 16
      %v399 = vrot.slane %v397, 4
      %v400 = vshll.u32 %v219, 16
      %v402 = vrot.slane %v400, 5
      %v403 = vor.u32 %v399, %v402
      %v404 = vrot.slane %v403, 4
      %v406 = vshll.u32 %v220, 16
      %v408 = vrot.slane %v406, 5
      %v409 = vsel %vm275, %v404, %v408
      %v410 = vshrl.u32 %v220, 16
      %v412 = vrot.slane %v410, 4
      %v413 = vor.u32 %v412, %v408
      %v414 = vrot.slane %v413, 4
      %v416 = vshll.u32 %v262, 16
      %v418 = vrot.slane %v416, 5
      %v419 = vsel %vm275, %v414, %v418
      %v421 = vshrl.u32 %v221, 16
      %v423 = vrot.slane %v421, 4
      %v424 = vshll.u32 %v221, 16
      %v426 = vrot.slane %v424, 5
      %v427 = vor.u32 %v423, %v426
      %v428 = vrot.slane %v427, 4
      %v430 = vshll.u32 %v222, 16
      %v432 = vrot.slane %v430, 5
      %v433 = vsel %vm275, %v428, %v432
      %v434 = vshrl.u32 %v222, 16
      %v436 = vrot.slane %v434, 4
      %v437 = vor.u32 %v436, %v432
      %v438 = vrot.slane %v437, 4
      %v440 = vshll.u32 %v263, 16
      %v442 = vrot.slane %v440, 5
      %v443 = vsel %vm275, %v438, %v442
      %v445 = vshrl.u32 %v223, 16
      %v447 = vrot.slane %v445, 4
      %v448 = vshll.u32 %v223, 16
      %v450 = vrot.slane %v448, 5
      %v451 = vor.u32 %v447, %v450
      %v452 = vrot.slane %v451, 4
      %v454 = vshll.u32 %v224, 16
      %v456 = vrot.slane %v454, 5
      %v457 = vsel %vm275, %v452, %v456
      %v458 = vshrl.u32 %v224, 16
      %v460 = vrot.slane %v458, 4
      %v461 = vor.u32 %v460, %v456
      %v462 = vrot.slane %v461, 4
      %v464 = vshll.u32 %v264, 16
      %v466 = vrot.slane %v464, 5
      %v467 = vsel %vm275, %v462, %v466
      %v469 = vshrl.u32 %v225, 16
      %v471 = vrot.slane %v469, 4
      %v472 = vshll.u32 %v225, 16
      %v474 = vrot.slane %v472, 5
      %v475 = vor.u32 %v471, %v474
      %v476 = vrot.slane %v475, 4
      %v478 = vshll.u32 %v226, 16
      %v480 = vrot.slane %v478, 5
      %v481 = vsel %vm275, %v476, %v480
      %v482 = vshrl.u32 %v226, 16
      %v484 = vrot.slane %v482, 4
      %v485 = vor.u32 %v484, %v480
      %v486 = vrot.slane %v485, 4
      %v488 = vshll.u32 %v265, 16
      %v490 = vrot.slane %v488, 5
      %v491 = vsel %vm275, %v486, %v490
      %v493 = vshrl.u32 %v227, 16
      %v495 = vrot.slane %v493, 4
      %v496 = vshll.u32 %v227, 16
      %v498 = vrot.slane %v496, 5
      %v499 = vor.u32 %v495, %v498
      %v500 = vrot.slane %v499, 4
      %v502 = vshll.u32 %v228, 16
      %v504 = vrot.slane %v502, 5
      %v505 = vsel %vm275, %v500, %v504
      %v506 = vshrl.u32 %v228, 16
      %v508 = vrot.slane %v506, 4
      %v509 = vor.u32 %v508, %v504
      %v510 = vrot.slane %v509, 4
      %v512 = vshll.u32 %v266, 16
      %v514 = vrot.slane %v512, 5
      %v515 = vsel %vm275, %v510, %v514
      %v517 = vshrl.u32 %v229, 16
      %v519 = vrot.slane %v517, 4
      %v520 = vshll.u32 %v229, 16
      %v522 = vrot.slane %v520, 5
      %v523 = vor.u32 %v519, %v522
      %v524 = vrot.slane %v523, 4
      %v526 = vshll.u32 %v230, 16
      %v528 = vrot.slane %v526, 5
      %v529 = vsel %vm275, %v524, %v528
      %v530 = vshrl.u32 %v230, 16
      %v532 = vrot.slane %v530, 4
      %v533 = vor.u32 %v532, %v528
      %v534 = vrot.slane %v533, 4
      %v536 = vshll.u32 %v267, 16
      %v538 = vrot.slane %v536, 5
      %v539 = vsel %vm275, %v534, %v538
      %v541 = vshrl.u32 %v231, 16
      %v543 = vrot.slane %v541, 4
      %v544 = vshll.u32 %v231, 16
      %v546 = vrot.slane %v544, 5
      %v547 = vor.u32 %v543, %v546
      %v548 = vrot.slane %v547, 4
      %v550 = vshll.u32 %v232, 16
      %v552 = vrot.slane %v550, 5
      %v553 = vsel %vm275, %v548, %v552
      %v554 = vshrl.u32 %v232, 16
      %v556 = vrot.slane %v554, 4
      %v557 = vor.u32 %v556, %v552
      %v558 = vrot.slane %v557, 4
      %v560 = vshll.u32 %v268, 16
      %v562 = vrot.slane %v560, 5
      %v563 = vsel %vm275, %v558, %v562
      %v565 = vshrl.u32 %v233, 16
      %v567 = vrot.slane %v565, 4
      %v568 = vshll.u32 %v233, 16
      %v570 = vrot.slane %v568, 5
      %v571 = vor.u32 %v567, %v570
      %v572 = vrot.slane %v571, 4
      %v574 = vshll.u32 %v234, 16
      %v576 = vrot.slane %v574, 5
      %v577 = vsel %vm275, %v572, %v576
      %v578 = vshrl.u32 %v234, 16
      %v580 = vrot.slane %v578, 4
      %v581 = vor.u32 %v580, %v576
      %v582 = vrot.slane %v581, 4
      %v584 = vshll.u32 %v269, 16
      %v586 = vrot.slane %v584, 5
      %v587 = vsel %vm275, %v582, %v586
      %v589 = vshrl.u32 %v235, 16
      %v591 = vrot.slane %v589, 4
      %v592 = vshll.u32 %v235, 16
      %v594 = vrot.slane %v592, 5
      %v595 = vor.u32 %v591, %v594
      %v596 = vrot.slane %v595, 4
      %v598 = vshll.u32 %v236, 16
      %v600 = vrot.slane %v598, 5
      %v601 = vsel %vm275, %v596, %v600
      %v602 = vshrl.u32 %v236, 16
      %v604 = vrot.slane %v602, 4
      %v605 = vor.u32 %v604, %v600
      %v606 = vrot.slane %v605, 4
      %v608 = vshll.u32 %v270, 16
      %v610 = vrot.slane %v608, 5
      %v611 = vsel %vm275, %v606, %v610
      %v613 = vshrl.u32 %v237, 16
      %v615 = vrot.slane %v613, 4
      %v616 = vshll.u32 %v237, 16
      %v618 = vrot.slane %v616, 5
      %v619 = vor.u32 %v615, %v618
      %v620 = vrot.slane %v619, 4
      %v622 = vshll.u32 %v238, 16
      %v624 = vrot.slane %v622, 5
      %v625 = vsel %vm275, %v620, %v624
      %v626 = vshrl.u32 %v238, 16
      %v628 = vrot.slane %v626, 4
      %v629 = vor.u32 %v628, %v624
      %v630 = vrot.slane %v629, 4
      %v632 = vshll.u32 %v271, 16
      %v634 = vrot.slane %v632, 5
      %v635 = vsel %vm275, %v630, %v634
      %v637 = vshrl.u32 %v239, 16
      %v639 = vrot.slane %v637, 4
      %v640 = vshll.u32 %v239, 16
      %v642 = vrot.slane %v640, 5
      %v643 = vor.u32 %v639, %v642
      %v644 = vrot.slane %v643, 4
      %v646 = vshll.u32 %v240, 16
      %v648 = vrot.slane %v646, 5
      %v649 = vsel %vm275, %v644, %v648
      %v650 = vshrl.u32 %v240, 16
      %v652 = vrot.slane %v650, 4
      %v653 = vor.u32 %v652, %v648
      %v654 = vrot.slane %v653, 4
      %v656 = vshll.u32 %v272, 16
      %v658 = vrot.slane %v656, 5
      %v659 = vsel %vm275, %v654, %v658
      %s660 = scalar_lea.vmem %s1, 64
      %v661 = vld [vmem:[%s660] sm:$0xf]
      %v662 = vld [vmem:[%s660 + $0x4] sm:$0xf]
      %v663 = vld [vmem:[%s660 + $0x8] sm:$0xf]
      %v664 = vld [vmem:[%s660 + $0xc] sm:$0xf]
      %v665 = vld [vmem:[%s660 + $0x10] sm:$0xf]
      %v666 = vld [vmem:[%s660 + $0x14] sm:$0xf]
      %v667 = vld [vmem:[%s660 + $0x18] sm:$0xf]
      %v668 = vld [vmem:[%s660 + $0x1c] sm:$0xf]
      %v669 = vld [vmem:[%s660 + $0x20] sm:$0xf]
      %v670 = vld [vmem:[%s660 + $0x24] sm:$0xf]
      %v671 = vld [vmem:[%s660 + $0x28] sm:$0xf]
      %v672 = vld [vmem:[%s660 + $0x2c] sm:$0xf]
      %v673 = vld [vmem:[%s660 + $0x30] sm:$0xf]
      %v674 = vld [vmem:[%s660 + $0x34] sm:$0xf]
      %v675 = vld [vmem:[%s660 + $0x38] sm:$0xf]
      %v676 = vld [vmem:[%s660 + $0x3c] sm:$0xf]
      %v677 = vunpack.c.l.b16 %v289
      %v678 = vunpack.c.l.b16 %v299
      %v679 = vunpack.c.l.b16 %v313
      %v680 = vunpack.c.l.b16 %v323
      %v681 = vunpack.c.l.b16 %v337
      %v682 = vunpack.c.l.b16 %v347
      %v683 = vunpack.c.l.b16 %v361
      %v684 = vunpack.c.l.b16 %v371
      %v685 = vunpack.c.l.b16 %v385
      %v686 = vunpack.c.l.b16 %v395
      %v687 = vunpack.c.l.b16 %v409
      %v688 = vunpack.c.l.b16 %v419
      %v689 = vunpack.c.l.b16 %v433
      %v690 = vunpack.c.l.b16 %v443
      %v691 = vunpack.c.l.b16 %v457
      %v692 = vunpack.c.l.b16 %v467
      %v693 = vunpack.c.l.b16 %v481
      %v694 = vunpack.c.l.b16 %v491
      %v695 = vunpack.c.l.b16 %v505
      %v696 = vunpack.c.l.b16 %v515
      %v697 = vunpack.c.l.b16 %v529
      %v698 = vunpack.c.l.b16 %v539
      %v699 = vunpack.c.l.b16 %v553
      %v700 = vunpack.c.l.b16 %v563
      %v701 = vunpack.c.l.b16 %v577
      %v702 = vunpack.c.l.b16 %v587
      %v703 = vunpack.c.l.b16 %v601
      %v704 = vunpack.c.l.b16 %v611
      %v705 = vunpack.c.l.b16 %v625
      %v706 = vunpack.c.l.b16 %v635
      %v707 = vunpack.c.l.b16 %v649
      %v708 = vunpack.c.l.b16 %v659
      %v709 = vpack.c.b16 %v678, %v677
      %v710 = vpack.c.b16 %v680, %v679
      %v711 = vpack.c.b16 %v682, %v681
      %v712 = vpack.c.b16 %v684, %v683
      %v713 = vpack.c.b16 %v686, %v685
      %v714 = vpack.c.b16 %v688, %v687
      %v715 = vpack.c.b16 %v690, %v689
      %v716 = vpack.c.b16 %v692, %v691
      %v717 = vpack.c.b16 %v694, %v693
      %v718 = vpack.c.b16 %v696, %v695
      %v719 = vpack.c.b16 %v698, %v697
      %v720 = vpack.c.b16 %v700, %v699
      %v721 = vpack.c.b16 %v702, %v701
      %v722 = vpack.c.b16 %v704, %v703
      %v723 = vpack.c.b16 %v706, %v705
      %v724 = vpack.c.b16 %v708, %v707
      %v757 = vunpack.c.l.b16 %v661
      %v758 = vunpack.c.l.b16 %v662
      %v759 = vunpack.c.l.b16 %v663
      %v760 = vunpack.c.l.b16 %v664
      %v761 = vunpack.c.l.b16 %v665
      %v762 = vunpack.c.l.b16 %v666
      %v763 = vunpack.c.l.b16 %v667
      %v764 = vunpack.c.l.b16 %v668
      %v765 = vunpack.c.l.b16 %v669
      %v766 = vunpack.c.l.b16 %v670
      %v767 = vunpack.c.l.b16 %v671
      %v768 = vunpack.c.l.b16 %v672
      %v769 = vunpack.c.l.b16 %v673
      %v770 = vunpack.c.l.b16 %v674
      %v771 = vunpack.c.l.b16 %v675
      %v772 = vunpack.c.l.b16 %v676
      %v773 = vpack.c.b16 %v758, %v757
      %v774 = vpack.c.b16 %v760, %v759
      %v775 = vpack.c.b16 %v762, %v761
      %v776 = vpack.c.b16 %v764, %v763
      %v777 = vpack.c.b16 %v766, %v765
      %v778 = vpack.c.b16 %v768, %v767
      %v779 = vpack.c.b16 %v770, %v769
      %v780 = vpack.c.b16 %v772, %v771
      %789 = vmatpush.bf16.msra.mxu0 %v780
      %790 = vmatpush.bf16.msra.mxu0 %v779
      %791 = vmatpush.bf16.msra.mxu0 %v778
      %792 = vmatpush.bf16.msra.mxu0 %v777
      %793 = vmatpush.bf16.msra.mxu0 %v776
      %794 = vmatpush.bf16.msra.mxu0 %v775
      %795 = vmatpush.bf16.msra.mxu0 %v774
      %796 = vmatpush.bf16.msra.mxu0 %v773
      %797 = vmatmul.bf16.gmra.mxu0 %v709
      %v798 = vpop.f32.mrf.mxu0
      %v799 = vadd.f32 0.0, %v798
      %v800 = vpop.f32.mrf.mxu0
      %v801 = vadd.f32 0.0, %v800
      %802 = vmatmul.bf16.gmra.mxu0 %v710
      %v803 = vpop.f32.mrf.mxu0
      %v804 = vadd.f32 0.0, %v803
      %v805 = vpop.f32.mrf.mxu0
      %v806 = vadd.f32 0.0, %v805
      %807 = vmatmul.bf16.gmra.mxu0 %v711
      %v808 = vpop.f32.mrf.mxu0
      %v809 = vadd.f32 0.0, %v808
      %v810 = vpop.f32.mrf.mxu0
      %v811 = vadd.f32 0.0, %v810
      %812 = vmatmul.bf16.gmra.mxu0 %v712
      %v813 = vpop.f32.mrf.mxu0
      %v814 = vadd.f32 0.0, %v813
      %v815 = vpop.f32.mrf.mxu0
      %v816 = vadd.f32 0.0, %v815
      %817 = vmatmul.bf16.gmra.mxu0 %v713
      %v818 = vpop.f32.mrf.mxu0
      %v819 = vadd.f32 0.0, %v818
      %v820 = vpop.f32.mrf.mxu0
      %v821 = vadd.f32 0.0, %v820
      %822 = vmatmul.bf16.gmra.mxu0 %v714
      %v823 = vpop.f32.mrf.mxu0
      %v824 = vadd.f32 0.0, %v823
      %v825 = vpop.f32.mrf.mxu0
      %v826 = vadd.f32 0.0, %v825
      %827 = vmatmul.bf16.gmra.mxu0 %v715
      %v828 = vpop.f32.mrf.mxu0
      %v829 = vadd.f32 0.0, %v828
      %v830 = vpop.f32.mrf.mxu0
      %v831 = vadd.f32 0.0, %v830
      %832 = vmatmul.bf16.gmra.mxu0 %v716
      %v833 = vpop.f32.mrf.mxu0
      %v834 = vadd.f32 0.0, %v833
      %v835 = vpop.f32.mrf.mxu0
      %v836 = vadd.f32 0.0, %v835
      %837 = vmatmul.bf16.gmra.mxu0 %v717
      %v838 = vpop.f32.mrf.mxu0
      %v839 = vadd.f32 0.0, %v838
      %v840 = vpop.f32.mrf.mxu0
      %v841 = vadd.f32 0.0, %v840
      %842 = vmatmul.bf16.gmra.mxu0 %v718
      %v843 = vpop.f32.mrf.mxu0
      %v844 = vadd.f32 0.0, %v843
      %v845 = vpop.f32.mrf.mxu0
      %v846 = vadd.f32 0.0, %v845
      %847 = vmatmul.bf16.gmra.mxu0 %v719
      %v848 = vpop.f32.mrf.mxu0
      %v849 = vadd.f32 0.0, %v848
      %v850 = vpop.f32.mrf.mxu0
      %v851 = vadd.f32 0.0, %v850
      %852 = vmatmul.bf16.gmra.mxu0 %v720
      %v853 = vpop.f32.mrf.mxu0
      %v854 = vadd.f32 0.0, %v853
      %v855 = vpop.f32.mrf.mxu0
      %v856 = vadd.f32 0.0, %v855
      %857 = vmatmul.bf16.gmra.mxu0 %v721
      %v858 = vpop.f32.mrf.mxu0
      %v859 = vadd.f32 0.0, %v858
      %v860 = vpop.f32.mrf.mxu0
      %v861 = vadd.f32 0.0, %v860
      %862 = vmatmul.bf16.gmra.mxu0 %v722
      %v863 = vpop.f32.mrf.mxu0
      %v864 = vadd.f32 0.0, %v863
      %v865 = vpop.f32.mrf.mxu0
      %v866 = vadd.f32 0.0, %v865
      %867 = vmatmul.bf16.gmra.mxu0 %v723
      %v868 = vpop.f32.mrf.mxu0
      %v869 = vadd.f32 0.0, %v868
      %v870 = vpop.f32.mrf.mxu0
      %v871 = vadd.f32 0.0, %v870
      %872 = vmatmul.bf16.gmra.mxu0 %v724
      %v873 = vpop.f32.mrf.mxu0
      %v874 = vadd.f32 0.0, %v873
      %v875 = vpop.f32.mrf.mxu0
      %v876 = vadd.f32 0.0, %v875
      %877 = vdwg.mxu0
      %v910 = vunpack.c.l.b16 %v209
      %v911 = vunpack.c.l.b16 %v210
      %v912 = vunpack.c.l.b16 %v211
      %v913 = vunpack.c.l.b16 %v212
      %v914 = vunpack.c.l.b16 %v213
      %v915 = vunpack.c.l.b16 %v214
      %v916 = vunpack.c.l.b16 %v215
      %v917 = vunpack.c.l.b16 %v216
      %v918 = vunpack.c.l.b16 %v217
      %v919 = vunpack.c.l.b16 %v218
      %v920 = vunpack.c.l.b16 %v219
      %v921 = vunpack.c.l.b16 %v220
      %v922 = vunpack.c.l.b16 %v221
      %v923 = vunpack.c.l.b16 %v222
      %v924 = vunpack.c.l.b16 %v223
      %v925 = vunpack.c.l.b16 %v224
      %v926 = vunpack.c.l.b16 %v225
      %v927 = vunpack.c.l.b16 %v226
      %v928 = vunpack.c.l.b16 %v227
      %v929 = vunpack.c.l.b16 %v228
      %v930 = vunpack.c.l.b16 %v229
      %v931 = vunpack.c.l.b16 %v230
      %v932 = vunpack.c.l.b16 %v231
      %v933 = vunpack.c.l.b16 %v232
      %v934 = vunpack.c.l.b16 %v233
      %v935 = vunpack.c.l.b16 %v234
      %v936 = vunpack.c.l.b16 %v235
      %v937 = vunpack.c.l.b16 %v236
      %v938 = vunpack.c.l.b16 %v237
      %v939 = vunpack.c.l.b16 %v238
      %v940 = vunpack.c.l.b16 %v239
      %v941 = vunpack.c.l.b16 %v240
      %v942 = vpack.c.b16 %v911, %v910
      %v943 = vpack.c.b16 %v913, %v912
      %v944 = vpack.c.b16 %v915, %v914
      %v945 = vpack.c.b16 %v917, %v916
      %v946 = vpack.c.b16 %v919, %v918
      %v947 = vpack.c.b16 %v921, %v920
      %v948 = vpack.c.b16 %v923, %v922
      %v949 = vpack.c.b16 %v925, %v924
      %v950 = vpack.c.b16 %v927, %v926
      %v951 = vpack.c.b16 %v929, %v928
      %v952 = vpack.c.b16 %v931, %v930
      %v953 = vpack.c.b16 %v933, %v932
      %v954 = vpack.c.b16 %v935, %v934
      %v955 = vpack.c.b16 %v937, %v936
      %v956 = vpack.c.b16 %v939, %v938
      %v957 = vpack.c.b16 %v941, %v940
      %v990 = vunpack.c.l.b16 %v241
      %v991 = vunpack.c.l.b16 %v242
      %v992 = vunpack.c.l.b16 %v243
      %v993 = vunpack.c.l.b16 %v244
      %v994 = vunpack.c.l.b16 %v245
      %v995 = vunpack.c.l.b16 %v246
      %v996 = vunpack.c.l.b16 %v247
      %v997 = vunpack.c.l.b16 %v248
      %v998 = vunpack.c.l.b16 %v249
      %v999 = vunpack.c.l.b16 %v250
      %v1000 = vunpack.c.l.b16 %v251
      %v1001 = vunpack.c.l.b16 %v252
      %v1002 = vunpack.c.l.b16 %v253
      %v1003 = vunpack.c.l.b16 %v254
      %v1004 = vunpack.c.l.b16 %v255
      %v1005 = vunpack.c.l.b16 %v256
      %v1006 = vpack.c.b16 %v991, %v990
      %v1007 = vpack.c.b16 %v993, %v992
      %v1008 = vpack.c.b16 %v995, %v994
      %v1009 = vpack.c.b16 %v997, %v996
      %v1010 = vpack.c.b16 %v999, %v998
      %v1011 = vpack.c.b16 %v1001, %v1000
      %v1012 = vpack.c.b16 %v1003, %v1002
      %v1013 = vpack.c.b16 %v1005, %v1004
      %1022 = vmatpush.bf16.msra.mxu0 %v1013
      %1023 = vmatpush.bf16.msra.mxu0 %v1012
      %1024 = vmatpush.bf16.msra.mxu0 %v1011
      %1025 = vmatpush.bf16.msra.mxu0 %v1010
      %1026 = vmatpush.bf16.msra.mxu0 %v1009
      %1027 = vmatpush.bf16.msra.mxu0 %v1008
      %1028 = vmatpush.bf16.msra.mxu0 %v1007
      %1029 = vmatpush.bf16.msra.mxu0 %v1006
      %1030 = vmatmul.bf16.gmra.mxu0 %v942
      %v1031 = vpop.f32.mrf.mxu0
      %v1032 = vadd.f32 %v799, %v1031
      %v1033 = vpop.f32.mrf.mxu0
      %v1034 = vadd.f32 %v801, %v1033
      %1035 = vmatmul.bf16.gmra.mxu0 %v943
      %v1036 = vpop.f32.mrf.mxu0
      %v1037 = vadd.f32 %v804, %v1036
      %v1038 = vpop.f32.mrf.mxu0
      %v1039 = vadd.f32 %v806, %v1038
      %1040 = vmatmul.bf16.gmra.mxu0 %v944
      %v1041 = vpop.f32.mrf.mxu0
      %v1042 = vadd.f32 %v809, %v1041
      %v1043 = vpop.f32.mrf.mxu0
      %v1044 = vadd.f32 %v811, %v1043
      %1045 = vmatmul.bf16.gmra.mxu0 %v945
      %v1046 = vpop.f32.mrf.mxu0
      %v1047 = vadd.f32 %v814, %v1046
      %v1048 = vpop.f32.mrf.mxu0
      %v1049 = vadd.f32 %v816, %v1048
      %1050 = vmatmul.bf16.gmra.mxu0 %v946
      %v1051 = vpop.f32.mrf.mxu0
      %v1052 = vadd.f32 %v819, %v1051
      %v1053 = vpop.f32.mrf.mxu0
      %v1054 = vadd.f32 %v821, %v1053
      %1055 = vmatmul.bf16.gmra.mxu0 %v947
      %v1056 = vpop.f32.mrf.mxu0
      %v1057 = vadd.f32 %v824, %v1056
      %v1058 = vpop.f32.mrf.mxu0
      %v1059 = vadd.f32 %v826, %v1058
      %1060 = vmatmul.bf16.gmra.mxu0 %v948
      %v1061 = vpop.f32.mrf.mxu0
      %v1062 = vadd.f32 %v829, %v1061
      %v1063 = vpop.f32.mrf.mxu0
      %v1064 = vadd.f32 %v831, %v1063
      %1065 = vmatmul.bf16.gmra.mxu0 %v949
      %v1066 = vpop.f32.mrf.mxu0
      %v1067 = vadd.f32 %v834, %v1066
      %v1068 = vpop.f32.mrf.mxu0
      %v1069 = vadd.f32 %v836, %v1068
      %1070 = vmatmul.bf16.gmra.mxu0 %v950
      %v1071 = vpop.f32.mrf.mxu0
      %v1072 = vadd.f32 %v839, %v1071
      %v1073 = vpop.f32.mrf.mxu0
      %v1074 = vadd.f32 %v841, %v1073
      %1075 = vmatmul.bf16.gmra.mxu0 %v951
      %v1076 = vpop.f32.mrf.mxu0
      %v1077 = vadd.f32 %v844, %v1076
      %v1078 = vpop.f32.mrf.mxu0
      %v1079 = vadd.f32 %v846, %v1078
      %1080 = vmatmul.bf16.gmra.mxu0 %v952
      %v1081 = vpop.f32.mrf.mxu0
      %v1082 = vadd.f32 %v849, %v1081
      %v1083 = vpop.f32.mrf.mxu0
      %v1084 = vadd.f32 %v851, %v1083
      %1085 = vmatmul.bf16.gmra.mxu0 %v953
      %v1086 = vpop.f32.mrf.mxu0
      %v1087 = vadd.f32 %v854, %v1086
      %v1088 = vpop.f32.mrf.mxu0
      %v1089 = vadd.f32 %v856, %v1088
      %1090 = vmatmul.bf16.gmra.mxu0 %v954
      %v1091 = vpop.f32.mrf.mxu0
      %v1092 = vadd.f32 %v859, %v1091
      %v1093 = vpop.f32.mrf.mxu0
      %v1094 = vadd.f32 %v861, %v1093
      %1095 = vmatmul.bf16.gmra.mxu0 %v955
      %v1096 = vpop.f32.mrf.mxu0
      %v1097 = vadd.f32 %v864, %v1096
      %v1098 = vpop.f32.mrf.mxu0
      %v1099 = vadd.f32 %v866, %v1098
      %1100 = vmatmul.bf16.gmra.mxu0 %v956
      %v1101 = vpop.f32.mrf.mxu0
      %v1102 = vadd.f32 %v869, %v1101
      %v1103 = vpop.f32.mrf.mxu0
      %v1104 = vadd.f32 %v871, %v1103
      %1105 = vmatmul.bf16.gmra.mxu0 %v957
      %v1106 = vpop.f32.mrf.mxu0
      %v1107 = vadd.f32 %v874, %v1106
      %v1108 = vpop.f32.mrf.mxu0
      %v1109 = vadd.f32 %v876, %v1108
      %1110 = vdwg.mxu0
      %v1111 = vld [vmem:[%s199] sm:$0xe]
      %v1112 = vld [vmem:[%s199 + $0xc] sm:$0xe]
      %v1113 = vld [vmem:[%s199 + $0x18] sm:$0xe]
      %v1114 = vld [vmem:[%s199 + $0x24] sm:$0xe]
      %v1115 = vld [vmem:[%s199 + $0x30] sm:$0xe]
      %v1116 = vld [vmem:[%s199 + $0x3c] sm:$0xe]
      %v1117 = vld [vmem:[%s199 + $0x48] sm:$0xe]
      %v1118 = vld [vmem:[%s199 + $0x54] sm:$0xe]
      %v1119 = vld [vmem:[%s199 + $0x60] sm:$0xe]
      %v1120 = vld [vmem:[%s199 + $0x6c] sm:$0xe]
      %v1121 = vld [vmem:[%s199 + $0x78] sm:$0xe]
      %v1122 = vld [vmem:[%s199 + $0x84] sm:$0xe]
      %v1123 = vld [vmem:[%s199 + $0x90] sm:$0xe]
      %v1124 = vld [vmem:[%s199 + $0x9c] sm:$0xe]
      %v1125 = vld [vmem:[%s199 + $0xa8] sm:$0xe]
      %v1126 = vld [vmem:[%s199 + $0xb4] sm:$0xe]
      %vm1159 = vcmask 1042432
      %vm1160 = vcmask 1046532
      %vm1161 = vmor %vm1159, %vm1160
      %v1162 = vrot.slane %v1111, 5
      %v1163 = vrot.slane %v1162, 4
      %v1164 = vrot.slane %v210, 5
      %v1165 = vsel %vm1161, %v1163, %v1164
      %v1166 = vrot.slane %v1164, 4
      %v1167 = vrot.slane %v257, 5
      %v1168 = vsel %vm1161, %v1166, %v1167
      %v1169 = vrot.slane %v1112, 5
      %v1170 = vrot.slane %v1169, 4
      %v1171 = vrot.slane %v212, 5
      %v1172 = vsel %vm1161, %v1170, %v1171
      %v1173 = vrot.slane %v1171, 4
      %v1174 = vrot.slane %v258, 5
      %v1175 = vsel %vm1161, %v1173, %v1174
      %v1176 = vrot.slane %v1113, 5
      %v1177 = vrot.slane %v1176, 4
      %v1178 = vrot.slane %v214, 5
      %v1179 = vsel %vm1161, %v1177, %v1178
      %v1180 = vrot.slane %v1178, 4
      %v1181 = vrot.slane %v259, 5
      %v1182 = vsel %vm1161, %v1180, %v1181
      %v1183 = vrot.slane %v1114, 5
      %v1184 = vrot.slane %v1183, 4
      %v1185 = vrot.slane %v216, 5
      %v1186 = vsel %vm1161, %v1184, %v1185
      %v1187 = vrot.slane %v1185, 4
      %v1188 = vrot.slane %v260, 5
      %v1189 = vsel %vm1161, %v1187, %v1188
      %v1190 = vrot.slane %v1115, 5
      %v1191 = vrot.slane %v1190, 4
      %v1192 = vrot.slane %v218, 5
      %v1193 = vsel %vm1161, %v1191, %v1192
      %v1194 = vrot.slane %v1192, 4
      %v1195 = vrot.slane %v261, 5
      %v1196 = vsel %vm1161, %v1194, %v1195
      %v1197 = vrot.slane %v1116, 5
      %v1198 = vrot.slane %v1197, 4
      %v1199 = vrot.slane %v220, 5
      %v1200 = vsel %vm1161, %v1198, %v1199
      %v1201 = vrot.slane %v1199, 4
      %v1202 = vrot.slane %v262, 5
      %v1203 = vsel %vm1161, %v1201, %v1202
      %v1204 = vrot.slane %v1117, 5
      %v1205 = vrot.slane %v1204, 4
      %v1206 = vrot.slane %v222, 5
      %v1207 = vsel %vm1161, %v1205, %v1206
      %v1208 = vrot.slane %v1206, 4
      %v1209 = vrot.slane %v263, 5
      %v1210 = vsel %vm1161, %v1208, %v1209
      %v1211 = vrot.slane %v1118, 5
      %v1212 = vrot.slane %v1211, 4
      %v1213 = vrot.slane %v224, 5
      %v1214 = vsel %vm1161, %v1212, %v1213
      %v1215 = vrot.slane %v1213, 4
      %v1216 = vrot.slane %v264, 5
      %v1217 = vsel %vm1161, %v1215, %v1216
      %v1218 = vrot.slane %v1119, 5
      %v1219 = vrot.slane %v1218, 4
      %v1220 = vrot.slane %v226, 5
      %v1221 = vsel %vm1161, %v1219, %v1220
      %v1222 = vrot.slane %v1220, 4
      %v1223 = vrot.slane %v265, 5
      %v1224 = vsel %vm1161, %v1222, %v1223
      %v1225 = vrot.slane %v1120, 5
      %v1226 = vrot.slane %v1225, 4
      %v1227 = vrot.slane %v228, 5
      %v1228 = vsel %vm1161, %v1226, %v1227
      %v1229 = vrot.slane %v1227, 4
      %v1230 = vrot.slane %v266, 5
      %v1231 = vsel %vm1161, %v1229, %v1230
      %v1232 = vrot.slane %v1121, 5
      %v1233 = vrot.slane %v1232, 4
      %v1234 = vrot.slane %v230, 5
      %v1235 = vsel %vm1161, %v1233, %v1234
      %v1236 = vrot.slane %v1234, 4
      %v1237 = vrot.slane %v267, 5
      %v1238 = vsel %vm1161, %v1236, %v1237
      %v1239 = vrot.slane %v1122, 5
      %v1240 = vrot.slane %v1239, 4
      %v1241 = vrot.slane %v232, 5
      %v1242 = vsel %vm1161, %v1240, %v1241
      %v1243 = vrot.slane %v1241, 4
      %v1244 = vrot.slane %v268, 5
      %v1245 = vsel %vm1161, %v1243, %v1244
      %v1246 = vrot.slane %v1123, 5
      %v1247 = vrot.slane %v1246, 4
      %v1248 = vrot.slane %v234, 5
      %v1249 = vsel %vm1161, %v1247, %v1248
      %v1250 = vrot.slane %v1248, 4
      %v1251 = vrot.slane %v269, 5
      %v1252 = vsel %vm1161, %v1250, %v1251
      %v1253 = vrot.slane %v1124, 5
      %v1254 = vrot.slane %v1253, 4
      %v1255 = vrot.slane %v236, 5
      %v1256 = vsel %vm1161, %v1254, %v1255
      %v1257 = vrot.slane %v1255, 4
      %v1258 = vrot.slane %v270, 5
      %v1259 = vsel %vm1161, %v1257, %v1258
      %v1260 = vrot.slane %v1125, 5
      %v1261 = vrot.slane %v1260, 4
      %v1262 = vrot.slane %v238, 5
      %v1263 = vsel %vm1161, %v1261, %v1262
      %v1264 = vrot.slane %v1262, 4
      %v1265 = vrot.slane %v271, 5
      %v1266 = vsel %vm1161, %v1264, %v1265
      %v1267 = vrot.slane %v1126, 5
      %v1268 = vrot.slane %v1267, 4
      %v1269 = vrot.slane %v240, 5
      %v1270 = vsel %vm1161, %v1268, %v1269
      %v1271 = vrot.slane %v1269, 4
      %v1272 = vrot.slane %v272, 5
      %v1273 = vsel %vm1161, %v1271, %v1272
      %s1274 = scalar_lea.vmem %s1, 128
      %v1275 = vld [vmem:[%s1274] sm:$0xf]
      %v1276 = vld [vmem:[%s1274 + $0x4] sm:$0xf]
      %v1277 = vld [vmem:[%s1274 + $0x8] sm:$0xf]
      %v1278 = vld [vmem:[%s1274 + $0xc] sm:$0xf]
      %v1279 = vld [vmem:[%s1274 + $0x10] sm:$0xf]
      %v1280 = vld [vmem:[%s1274 + $0x14] sm:$0xf]
      %v1281 = vld [vmem:[%s1274 + $0x18] sm:$0xf]
      %v1282 = vld [vmem:[%s1274 + $0x1c] sm:$0xf]
      %v1283 = vld [vmem:[%s1274 + $0x20] sm:$0xf]
      %v1284 = vld [vmem:[%s1274 + $0x24] sm:$0xf]
      %v1285 = vld [vmem:[%s1274 + $0x28] sm:$0xf]
      %v1286 = vld [vmem:[%s1274 + $0x2c] sm:$0xf]
      %v1287 = vld [vmem:[%s1274 + $0x30] sm:$0xf]
      %v1288 = vld [vmem:[%s1274 + $0x34] sm:$0xf]
      %v1289 = vld [vmem:[%s1274 + $0x38] sm:$0xf]
      %v1290 = vld [vmem:[%s1274 + $0x3c] sm:$0xf]
      %v1291 = vunpack.c.l.b16 %v1165
      %v1292 = vunpack.c.l.b16 %v1168
      %v1293 = vunpack.c.l.b16 %v1172
      %v1294 = vunpack.c.l.b16 %v1175
      %v1295 = vunpack.c.l.b16 %v1179
      %v1296 = vunpack.c.l.b16 %v1182
      %v1297 = vunpack.c.l.b16 %v1186
      %v1298 = vunpack.c.l.b16 %v1189
      %v1299 = vunpack.c.l.b16 %v1193
      %v1300 = vunpack.c.l.b16 %v1196
      %v1301 = vunpack.c.l.b16 %v1200
      %v1302 = vunpack.c.l.b16 %v1203
      %v1303 = vunpack.c.l.b16 %v1207
      %v1304 = vunpack.c.l.b16 %v1210
      %v1305 = vunpack.c.l.b16 %v1214
      %v1306 = vunpack.c.l.b16 %v1217
      %v1307 = vunpack.c.l.b16 %v1221
      %v1308 = vunpack.c.l.b16 %v1224
      %v1309 = vunpack.c.l.b16 %v1228
      %v1310 = vunpack.c.l.b16 %v1231
      %v1311 = vunpack.c.l.b16 %v1235
      %v1312 = vunpack.c.l.b16 %v1238
      %v1313 = vunpack.c.l.b16 %v1242
      %v1314 = vunpack.c.l.b16 %v1245
      %v1315 = vunpack.c.l.b16 %v1249
      %v1316 = vunpack.c.l.b16 %v1252
      %v1317 = vunpack.c.l.b16 %v1256
      %v1318 = vunpack.c.l.b16 %v1259
      %v1319 = vunpack.c.l.b16 %v1263
      %v1320 = vunpack.c.l.b16 %v1266
      %v1321 = vunpack.c.l.b16 %v1270
      %v1322 = vunpack.c.l.b16 %v1273
      %v1323 = vpack.c.b16 %v1292, %v1291
      %v1324 = vpack.c.b16 %v1294, %v1293
      %v1325 = vpack.c.b16 %v1296, %v1295
      %v1326 = vpack.c.b16 %v1298, %v1297
      %v1327 = vpack.c.b16 %v1300, %v1299
      %v1328 = vpack.c.b16 %v1302, %v1301
      %v1329 = vpack.c.b16 %v1304, %v1303
      %v1330 = vpack.c.b16 %v1306, %v1305
      %v1331 = vpack.c.b16 %v1308, %v1307
      %v1332 = vpack.c.b16 %v1310, %v1309
      %v1333 = vpack.c.b16 %v1312, %v1311
      %v1334 = vpack.c.b16 %v1314, %v1313
      %v1335 = vpack.c.b16 %v1316, %v1315
      %v1336 = vpack.c.b16 %v1318, %v1317
      %v1337 = vpack.c.b16 %v1320, %v1319
      %v1338 = vpack.c.b16 %v1322, %v1321
      %v1371 = vunpack.c.l.b16 %v1275
      %v1372 = vunpack.c.l.b16 %v1276
      %v1373 = vunpack.c.l.b16 %v1277
      %v1374 = vunpack.c.l.b16 %v1278
      %v1375 = vunpack.c.l.b16 %v1279
      %v1376 = vunpack.c.l.b16 %v1280
      %v1377 = vunpack.c.l.b16 %v1281
      %v1378 = vunpack.c.l.b16 %v1282
      %v1379 = vunpack.c.l.b16 %v1283
      %v1380 = vunpack.c.l.b16 %v1284
      %v1381 = vunpack.c.l.b16 %v1285
      %v1382 = vunpack.c.l.b16 %v1286
      %v1383 = vunpack.c.l.b16 %v1287
      %v1384 = vunpack.c.l.b16 %v1288
      %v1385 = vunpack.c.l.b16 %v1289
      %v1386 = vunpack.c.l.b16 %v1290
      %v1387 = vpack.c.b16 %v1372, %v1371
      %v1388 = vpack.c.b16 %v1374, %v1373
      %v1389 = vpack.c.b16 %v1376, %v1375
      %v1390 = vpack.c.b16 %v1378, %v1377
      %v1391 = vpack.c.b16 %v1380, %v1379
      %v1392 = vpack.c.b16 %v1382, %v1381
      %v1393 = vpack.c.b16 %v1384, %v1383
      %v1394 = vpack.c.b16 %v1386, %v1385
      %1403 = vmatpush.bf16.msra.mxu0 %v1394
      %1404 = vmatpush.bf16.msra.mxu0 %v1393
      %1405 = vmatpush.bf16.msra.mxu0 %v1392
      %1406 = vmatpush.bf16.msra.mxu0 %v1391
      %1407 = vmatpush.bf16.msra.mxu0 %v1390
      %1408 = vmatpush.bf16.msra.mxu0 %v1389
      %1409 = vmatpush.bf16.msra.mxu0 %v1388
      %1410 = vmatpush.bf16.msra.mxu0 %v1387
      %1411 = vmatmul.bf16.gmra.mxu0 %v1323
      %v1412 = vpop.f32.mrf.mxu0
      %v1413 = vadd.f32 0.0, %v1412
      %v1414 = vpop.f32.mrf.mxu0
      %v1415 = vadd.f32 0.0, %v1414
      %1416 = vmatmul.bf16.gmra.mxu0 %v1324
      %v1417 = vpop.f32.mrf.mxu0
      %v1418 = vadd.f32 0.0, %v1417
      %v1419 = vpop.f32.mrf.mxu0
      %v1420 = vadd.f32 0.0, %v1419
      %1421 = vmatmul.bf16.gmra.mxu0 %v1325
      %v1422 = vpop.f32.mrf.mxu0
      %v1423 = vadd.f32 0.0, %v1422
      %v1424 = vpop.f32.mrf.mxu0
      %v1425 = vadd.f32 0.0, %v1424
      %1426 = vmatmul.bf16.gmra.mxu0 %v1326
      %v1427 = vpop.f32.mrf.mxu0
      %v1428 = vadd.f32 0.0, %v1427
      %v1429 = vpop.f32.mrf.mxu0
      %v1430 = vadd.f32 0.0, %v1429
      %1431 = vmatmul.bf16.gmra.mxu0 %v1327
      %v1432 = vpop.f32.mrf.mxu0
      %v1433 = vadd.f32 0.0, %v1432
      %v1434 = vpop.f32.mrf.mxu0
      %v1435 = vadd.f32 0.0, %v1434
      %1436 = vmatmul.bf16.gmra.mxu0 %v1328
      %v1437 = vpop.f32.mrf.mxu0
      %v1438 = vadd.f32 0.0, %v1437
      %v1439 = vpop.f32.mrf.mxu0
      %v1440 = vadd.f32 0.0, %v1439
      %1441 = vmatmul.bf16.gmra.mxu0 %v1329
      %v1442 = vpop.f32.mrf.mxu0
      %v1443 = vadd.f32 0.0, %v1442
      %v1444 = vpop.f32.mrf.mxu0
      %v1445 = vadd.f32 0.0, %v1444
      %1446 = vmatmul.bf16.gmra.mxu0 %v1330
      %v1447 = vpop.f32.mrf.mxu0
      %v1448 = vadd.f32 0.0, %v1447
      %v1449 = vpop.f32.mrf.mxu0
      %v1450 = vadd.f32 0.0, %v1449
      %1451 = vmatmul.bf16.gmra.mxu0 %v1331
      %v1452 = vpop.f32.mrf.mxu0
      %v1453 = vadd.f32 0.0, %v1452
      %v1454 = vpop.f32.mrf.mxu0
      %v1455 = vadd.f32 0.0, %v1454
      %1456 = vmatmul.bf16.gmra.mxu0 %v1332
      %v1457 = vpop.f32.mrf.mxu0
      %v1458 = vadd.f32 0.0, %v1457
      %v1459 = vpop.f32.mrf.mxu0
      %v1460 = vadd.f32 0.0, %v1459
      %1461 = vmatmul.bf16.gmra.mxu0 %v1333
      %v1462 = vpop.f32.mrf.mxu0
      %v1463 = vadd.f32 0.0, %v1462
      %v1464 = vpop.f32.mrf.mxu0
      %v1465 = vadd.f32 0.0, %v1464
      %1466 = vmatmul.bf16.gmra.mxu0 %v1334
      %v1467 = vpop.f32.mrf.mxu0
      %v1468 = vadd.f32 0.0, %v1467
      %v1469 = vpop.f32.mrf.mxu0
      %v1470 = vadd.f32 0.0, %v1469
      %1471 = vmatmul.bf16.gmra.mxu0 %v1335
      %v1472 = vpop.f32.mrf.mxu0
      %v1473 = vadd.f32 0.0, %v1472
      %v1474 = vpop.f32.mrf.mxu0
      %v1475 = vadd.f32 0.0, %v1474
      %1476 = vmatmul.bf16.gmra.mxu0 %v1336
      %v1477 = vpop.f32.mrf.mxu0
      %v1478 = vadd.f32 0.0, %v1477
      %v1479 = vpop.f32.mrf.mxu0
      %v1480 = vadd.f32 0.0, %v1479
      %1481 = vmatmul.bf16.gmra.mxu0 %v1337
      %v1482 = vpop.f32.mrf.mxu0
      %v1483 = vadd.f32 0.0, %v1482
      %v1484 = vpop.f32.mrf.mxu0
      %v1485 = vadd.f32 0.0, %v1484
      %1486 = vmatmul.bf16.gmra.mxu0 %v1338
      %v1487 = vpop.f32.mrf.mxu0
      %v1488 = vadd.f32 0.0, %v1487
      %v1489 = vpop.f32.mrf.mxu0
      %v1490 = vadd.f32 0.0, %v1489
      %1491 = vdwg.mxu0
      %v1492 = vadd.f32 %v1032, %v1413
      %v1493 = vadd.f32 %v1034, %v1415
      %v1494 = vadd.f32 %v1037, %v1418
      %v1495 = vadd.f32 %v1039, %v1420
      %v1496 = vadd.f32 %v1042, %v1423
      %v1497 = vadd.f32 %v1044, %v1425
      %v1498 = vadd.f32 %v1047, %v1428
      %v1499 = vadd.f32 %v1049, %v1430
      %v1500 = vadd.f32 %v1052, %v1433
      %v1501 = vadd.f32 %v1054, %v1435
      %v1502 = vadd.f32 %v1057, %v1438
      %v1503 = vadd.f32 %v1059, %v1440
      %v1504 = vadd.f32 %v1062, %v1443
      %v1505 = vadd.f32 %v1064, %v1445
      %v1506 = vadd.f32 %v1067, %v1448
      %v1507 = vadd.f32 %v1069, %v1450
      %v1508 = vadd.f32 %v1072, %v1453
      %v1509 = vadd.f32 %v1074, %v1455
      %v1510 = vadd.f32 %v1077, %v1458
      %v1511 = vadd.f32 %v1079, %v1460
      %v1512 = vadd.f32 %v1082, %v1463
      %v1513 = vadd.f32 %v1084, %v1465
      %v1514 = vadd.f32 %v1087, %v1468
      %v1515 = vadd.f32 %v1089, %v1470
      %v1516 = vadd.f32 %v1092, %v1473
      %v1517 = vadd.f32 %v1094, %v1475
      %v1518 = vadd.f32 %v1097, %v1478
      %v1519 = vadd.f32 %v1099, %v1480
      %v1520 = vadd.f32 %v1102, %v1483
      %v1521 = vadd.f32 %v1104, %v1485
      %v1522 = vadd.f32 %v1107, %v1488
      %v1523 = vadd.f32 %v1109, %v1490
      %s1524 = scalar_lea.vmem %s199, 12
      %v1525 = vld [vmem:[%s1524] sm:$0xf]
      %v1526 = vld [vmem:[%s1524 + $0x4] sm:$0xf]
      %v1527 = vld [vmem:[%s1524 + $0xc] sm:$0xf]
      %v1528 = vld [vmem:[%s1524 + $0x10] sm:$0xf]
      %v1529 = vld [vmem:[%s1524 + $0x18] sm:$0xf]
      %v1530 = vld [vmem:[%s1524 + $0x1c] sm:$0xf]
      %v1531 = vld [vmem:[%s1524 + $0x24] sm:$0xf]
      %v1532 = vld [vmem:[%s1524 + $0x28] sm:$0xf]
      %v1533 = vld [vmem:[%s1524 + $0x30] sm:$0xf]
      %v1534 = vld [vmem:[%s1524 + $0x34] sm:$0xf]
      %v1535 = vld [vmem:[%s1524 + $0x3c] sm:$0xf]
      %v1536 = vld [vmem:[%s1524 + $0x40] sm:$0xf]
      %v1537 = vld [vmem:[%s1524 + $0x48] sm:$0xf]
      %v1538 = vld [vmem:[%s1524 + $0x4c] sm:$0xf]
      %v1539 = vld [vmem:[%s1524 + $0x54] sm:$0xf]
      %v1540 = vld [vmem:[%s1524 + $0x58] sm:$0xf]
      %v1541 = vld [vmem:[%s1524 + $0x60] sm:$0xf]
      %v1542 = vld [vmem:[%s1524 + $0x64] sm:$0xf]
      %v1543 = vld [vmem:[%s1524 + $0x6c] sm:$0xf]
      %v1544 = vld [vmem:[%s1524 + $0x70] sm:$0xf]
      %v1545 = vld [vmem:[%s1524 + $0x78] sm:$0xf]
      %v1546 = vld [vmem:[%s1524 + $0x7c] sm:$0xf]
      %v1547 = vld [vmem:[%s1524 + $0x84] sm:$0xf]
      %v1548 = vld [vmem:[%s1524 + $0x88] sm:$0xf]
      %v1549 = vld [vmem:[%s1524 + $0x90] sm:$0xf]
      %v1550 = vld [vmem:[%s1524 + $0x94] sm:$0xf]
      %v1551 = vld [vmem:[%s1524 + $0x9c] sm:$0xf]
      %v1552 = vld [vmem:[%s1524 + $0xa0] sm:$0xf]
      %v1553 = vld [vmem:[%s1524 + $0xa8] sm:$0xf]
      %v1554 = vld [vmem:[%s1524 + $0xac] sm:$0xf]
      %v1555 = vld [vmem:[%s1524 + $0xb4] sm:$0xf]
      %v1556 = vld [vmem:[%s1524 + $0xb8] sm:$0xf]
      %s1557 = scalar_lea.vmem %s1, 192
      %v1558 = vld [vmem:[%s1557] sm:$0xf]
      %v1559 = vld [vmem:[%s1557 + $0x4] sm:$0xf]
      %v1560 = vld [vmem:[%s1557 + $0x8] sm:$0xf]
      %v1561 = vld [vmem:[%s1557 + $0xc] sm:$0xf]
      %v1562 = vld [vmem:[%s1557 + $0x10] sm:$0xf]
      %v1563 = vld [vmem:[%s1557 + $0x14] sm:$0xf]
      %v1564 = vld [vmem:[%s1557 + $0x18] sm:$0xf]
      %v1565 = vld [vmem:[%s1557 + $0x1c] sm:$0xf]
      %v1566 = vld [vmem:[%s1557 + $0x20] sm:$0xf]
      %v1567 = vld [vmem:[%s1557 + $0x24] sm:$0xf]
      %v1568 = vld [vmem:[%s1557 + $0x28] sm:$0xf]
      %v1569 = vld [vmem:[%s1557 + $0x2c] sm:$0xf]
      %v1570 = vld [vmem:[%s1557 + $0x30] sm:$0xf]
      %v1571 = vld [vmem:[%s1557 + $0x34] sm:$0xf]
      %v1572 = vld [vmem:[%s1557 + $0x38] sm:$0xf]
      %v1573 = vld [vmem:[%s1557 + $0x3c] sm:$0xf]
      %v1606 = vunpack.c.l.b16 %v1525
      %v1607 = vunpack.c.l.b16 %v1526
      %v1608 = vunpack.c.l.b16 %v1527
      %v1609 = vunpack.c.l.b16 %v1528
      %v1610 = vunpack.c.l.b16 %v1529
      %v1611 = vunpack.c.l.b16 %v1530
      %v1612 = vunpack.c.l.b16 %v1531
      %v1613 = vunpack.c.l.b16 %v1532
      %v1614 = vunpack.c.l.b16 %v1533
      %v1615 = vunpack.c.l.b16 %v1534
      %v1616 = vunpack.c.l.b16 %v1535
      %v1617 = vunpack.c.l.b16 %v1536
      %v1618 = vunpack.c.l.b16 %v1537
      %v1619 = vunpack.c.l.b16 %v1538
      %v1620 = vunpack.c.l.b16 %v1539
      %v1621 = vunpack.c.l.b16 %v1540
      %v1622 = vunpack.c.l.b16 %v1541
      %v1623 = vunpack.c.l.b16 %v1542
      %v1624 = vunpack.c.l.b16 %v1543
      %v1625 = vunpack.c.l.b16 %v1544
      %v1626 = vunpack.c.l.b16 %v1545
      %v1627 = vunpack.c.l.b16 %v1546
      %v1628 = vunpack.c.l.b16 %v1547
      %v1629 = vunpack.c.l.b16 %v1548
      %v1630 = vunpack.c.l.b16 %v1549
      %v1631 = vunpack.c.l.b16 %v1550
      %v1632 = vunpack.c.l.b16 %v1551
      %v1633 = vunpack.c.l.b16 %v1552
      %v1634 = vunpack.c.l.b16 %v1553
      %v1635 = vunpack.c.l.b16 %v1554
      %v1636 = vunpack.c.l.b16 %v1555
      %v1637 = vunpack.c.l.b16 %v1556
      %v1638 = vpack.c.b16 %v1607, %v1606
      %v1639 = vpack.c.b16 %v1609, %v1608
      %v1640 = vpack.c.b16 %v1611, %v1610
      %v1641 = vpack.c.b16 %v1613, %v1612
      %v1642 = vpack.c.b16 %v1615, %v1614
      %v1643 = vpack.c.b16 %v1617, %v1616
      %v1644 = vpack.c.b16 %v1619, %v1618
      %v1645 = vpack.c.b16 %v1621, %v1620
      %v1646 = vpack.c.b16 %v1623, %v1622
      %v1647 = vpack.c.b16 %v1625, %v1624
      %v1648 = vpack.c.b16 %v1627, %v1626
      %v1649 = vpack.c.b16 %v1629, %v1628
      %v1650 = vpack.c.b16 %v1631, %v1630
      %v1651 = vpack.c.b16 %v1633, %v1632
      %v1652 = vpack.c.b16 %v1635, %v1634
      %v1653 = vpack.c.b16 %v1637, %v1636
      %v1686 = vunpack.c.l.b16 %v1558
      %v1687 = vunpack.c.l.b16 %v1559
      %v1688 = vunpack.c.l.b16 %v1560
      %v1689 = vunpack.c.l.b16 %v1561
      %v1690 = vunpack.c.l.b16 %v1562
      %v1691 = vunpack.c.l.b16 %v1563
      %v1692 = vunpack.c.l.b16 %v1564
      %v1693 = vunpack.c.l.b16 %v1565
      %v1694 = vunpack.c.l.b16 %v1566
      %v1695 = vunpack.c.l.b16 %v1567
      %v1696 = vunpack.c.l.b16 %v1568
      %v1697 = vunpack.c.l.b16 %v1569
      %v1698 = vunpack.c.l.b16 %v1570
      %v1699 = vunpack.c.l.b16 %v1571
      %v1700 = vunpack.c.l.b16 %v1572
      %v1701 = vunpack.c.l.b16 %v1573
      %v1702 = vpack.c.b16 %v1687, %v1686
      %v1703 = vpack.c.b16 %v1689, %v1688
      %v1704 = vpack.c.b16 %v1691, %v1690
      %v1705 = vpack.c.b16 %v1693, %v1692
      %v1706 = vpack.c.b16 %v1695, %v1694
      %v1707 = vpack.c.b16 %v1697, %v1696
      %v1708 = vpack.c.b16 %v1699, %v1698
      %v1709 = vpack.c.b16 %v1701, %v1700
      %1718 = vmatpush.bf16.msra.mxu0 %v1709
      %1719 = vmatpush.bf16.msra.mxu0 %v1708
      %1720 = vmatpush.bf16.msra.mxu0 %v1707
      %1721 = vmatpush.bf16.msra.mxu0 %v1706
      %1722 = vmatpush.bf16.msra.mxu0 %v1705
      %1723 = vmatpush.bf16.msra.mxu0 %v1704
      %1724 = vmatpush.bf16.msra.mxu0 %v1703
      %1725 = vmatpush.bf16.msra.mxu0 %v1702
      %1726 = vmatmul.bf16.gmra.mxu0 %v1638
      %v1727 = vpop.f32.mrf.mxu0
      %v1728 = vadd.f32 0.0, %v1727
      %v1729 = vpop.f32.mrf.mxu0
      %v1730 = vadd.f32 0.0, %v1729
      %1731 = vmatmul.bf16.gmra.mxu0 %v1639
      %v1732 = vpop.f32.mrf.mxu0
      %v1733 = vadd.f32 0.0, %v1732
      %v1734 = vpop.f32.mrf.mxu0
      %v1735 = vadd.f32 0.0, %v1734
      %1736 = vmatmul.bf16.gmra.mxu0 %v1640
      %v1737 = vpop.f32.mrf.mxu0
      %v1738 = vadd.f32 0.0, %v1737
      %v1739 = vpop.f32.mrf.mxu0
      %v1740 = vadd.f32 0.0, %v1739
      %1741 = vmatmul.bf16.gmra.mxu0 %v1641
      %v1742 = vpop.f32.mrf.mxu0
      %v1743 = vadd.f32 0.0, %v1742
      %v1744 = vpop.f32.mrf.mxu0
      %v1745 = vadd.f32 0.0, %v1744
      %1746 = vmatmul.bf16.gmra.mxu0 %v1642
      %v1747 = vpop.f32.mrf.mxu0
      %v1748 = vadd.f32 0.0, %v1747
      %v1749 = vpop.f32.mrf.mxu0
      %v1750 = vadd.f32 0.0, %v1749
      %1751 = vmatmul.bf16.gmra.mxu0 %v1643
      %v1752 = vpop.f32.mrf.mxu0
      %v1753 = vadd.f32 0.0, %v1752
      %v1754 = vpop.f32.mrf.mxu0
      %v1755 = vadd.f32 0.0, %v1754
      %1756 = vmatmul.bf16.gmra.mxu0 %v1644
      %v1757 = vpop.f32.mrf.mxu0
      %v1758 = vadd.f32 0.0, %v1757
      %v1759 = vpop.f32.mrf.mxu0
      %v1760 = vadd.f32 0.0, %v1759
      %1761 = vmatmul.bf16.gmra.mxu0 %v1645
      %v1762 = vpop.f32.mrf.mxu0
      %v1763 = vadd.f32 0.0, %v1762
      %v1764 = vpop.f32.mrf.mxu0
      %v1765 = vadd.f32 0.0, %v1764
      %1766 = vmatmul.bf16.gmra.mxu0 %v1646
      %v1767 = vpop.f32.mrf.mxu0
      %v1768 = vadd.f32 0.0, %v1767
      %v1769 = vpop.f32.mrf.mxu0
      %v1770 = vadd.f32 0.0, %v1769
      %1771 = vmatmul.bf16.gmra.mxu0 %v1647
      %v1772 = vpop.f32.mrf.mxu0
      %v1773 = vadd.f32 0.0, %v1772
      %v1774 = vpop.f32.mrf.mxu0
      %v1775 = vadd.f32 0.0, %v1774
      %1776 = vmatmul.bf16.gmra.mxu0 %v1648
      %v1777 = vpop.f32.mrf.mxu0
      %v1778 = vadd.f32 0.0, %v1777
      %v1779 = vpop.f32.mrf.mxu0
      %v1780 = vadd.f32 0.0, %v1779
      %1781 = vmatmul.bf16.gmra.mxu0 %v1649
      %v1782 = vpop.f32.mrf.mxu0
      %v1783 = vadd.f32 0.0, %v1782
      %v1784 = vpop.f32.mrf.mxu0
      %v1785 = vadd.f32 0.0, %v1784
      %1786 = vmatmul.bf16.gmra.mxu0 %v1650
      %v1787 = vpop.f32.mrf.mxu0
      %v1788 = vadd.f32 0.0, %v1787
      %v1789 = vpop.f32.mrf.mxu0
      %v1790 = vadd.f32 0.0, %v1789
      %1791 = vmatmul.bf16.gmra.mxu0 %v1651
      %v1792 = vpop.f32.mrf.mxu0
      %v1793 = vadd.f32 0.0, %v1792
      %v1794 = vpop.f32.mrf.mxu0
      %v1795 = vadd.f32 0.0, %v1794
      %1796 = vmatmul.bf16.gmra.mxu0 %v1652
      %v1797 = vpop.f32.mrf.mxu0
      %v1798 = vadd.f32 0.0, %v1797
      %v1799 = vpop.f32.mrf.mxu0
      %v1800 = vadd.f32 0.0, %v1799
      %1801 = vmatmul.bf16.gmra.mxu0 %v1653
      %v1802 = vpop.f32.mrf.mxu0
      %v1803 = vadd.f32 0.0, %v1802
      %v1804 = vpop.f32.mrf.mxu0
      %v1805 = vadd.f32 0.0, %v1804
      %1806 = vdwg.mxu0
      %v1807 = vadd.f32 %v1492, %v1728
      %v1808 = vadd.f32 %v1493, %v1730
      %v1809 = vadd.f32 %v1494, %v1733
      %v1810 = vadd.f32 %v1495, %v1735
      %v1811 = vadd.f32 %v1496, %v1738
      %v1812 = vadd.f32 %v1497, %v1740
      %v1813 = vadd.f32 %v1498, %v1743
      %v1814 = vadd.f32 %v1499, %v1745
      %v1815 = vadd.f32 %v1500, %v1748
      %v1816 = vadd.f32 %v1501, %v1750
      %v1817 = vadd.f32 %v1502, %v1753
      %v1818 = vadd.f32 %v1503, %v1755
      %v1819 = vadd.f32 %v1504, %v1758
      %v1820 = vadd.f32 %v1505, %v1760
      %v1821 = vadd.f32 %v1506, %v1763
      %v1822 = vadd.f32 %v1507, %v1765
      %v1823 = vadd.f32 %v1508, %v1768
      %v1824 = vadd.f32 %v1509, %v1770
      %v1825 = vadd.f32 %v1510, %v1773
      %v1826 = vadd.f32 %v1511, %v1775
      %v1827 = vadd.f32 %v1512, %v1778
      %v1828 = vadd.f32 %v1513, %v1780
      %v1829 = vadd.f32 %v1514, %v1783
      %v1830 = vadd.f32 %v1515, %v1785
      %v1831 = vadd.f32 %v1516, %v1788
      %v1832 = vadd.f32 %v1517, %v1790
      %v1833 = vadd.f32 %v1518, %v1793
      %v1834 = vadd.f32 %v1519, %v1795
      %v1835 = vadd.f32 %v1520, %v1798
      %v1836 = vadd.f32 %v1521, %v1800
      %v1837 = vadd.f32 %v1522, %v1803
      %v1838 = vadd.f32 %v1523, %v1805
      %v1839 = vld [vmem:[%s1524] sm:$0xf]
      %v1840 = vld [vmem:[%s1524 + $0x4] sm:$0xf]
      %v1841 = vld [vmem:[%s1524 + $0x8] sm:$0x1]
      %v1842 = vld [vmem:[%s1524 + $0xc] sm:$0xf]
      %v1843 = vld [vmem:[%s1524 + $0x10] sm:$0xf]
      %v1844 = vld [vmem:[%s1524 + $0x14] sm:$0x1]
      %v1845 = vld [vmem:[%s1524 + $0x18] sm:$0xf]
      %v1846 = vld [vmem:[%s1524 + $0x1c] sm:$0xf]
      %v1847 = vld [vmem:[%s1524 + $0x20] sm:$0x1]
      %v1848 = vld [vmem:[%s1524 + $0x24] sm:$0xf]
      %v1849 = vld [vmem:[%s1524 + $0x28] sm:$0xf]
      %v1850 = vld [vmem:[%s1524 + $0x2c] sm:$0x1]
      %v1851 = vld [vmem:[%s1524 + $0x30] sm:$0xf]
      %v1852 = vld [vmem:[%s1524 + $0x34] sm:$0xf]
      %v1853 = vld [vmem:[%s1524 + $0x38] sm:$0x1]
      %v1854 = vld [vmem:[%s1524 + $0x3c] sm:$0xf]
      %v1855 = vld [vmem:[%s1524 + $0x40] sm:$0xf]
      %v1856 = vld [vmem:[%s1524 + $0x44] sm:$0x1]
      %v1857 = vld [vmem:[%s1524 + $0x48] sm:$0xf]
      %v1858 = vld [vmem:[%s1524 + $0x4c] sm:$0xf]
      %v1859 = vld [vmem:[%s1524 + $0x50] sm:$0x1]
      %v1860 = vld [vmem:[%s1524 + $0x54] sm:$0xf]
      %v1861 = vld [vmem:[%s1524 + $0x58] sm:$0xf]
      %v1862 = vld [vmem:[%s1524 + $0x5c] sm:$0x1]
      %v1863 = vld [vmem:[%s1524 + $0x60] sm:$0xf]
      %v1864 = vld [vmem:[%s1524 + $0x64] sm:$0xf]
      %v1865 = vld [vmem:[%s1524 + $0x68] sm:$0x1]
      %v1866 = vld [vmem:[%s1524 + $0x6c] sm:$0xf]
      %v1867 = vld [vmem:[%s1524 + $0x70] sm:$0xf]
      %v1868 = vld [vmem:[%s1524 + $0x74] sm:$0x1]
      %v1869 = vld [vmem:[%s1524 + $0x78] sm:$0xf]
      %v1870 = vld [vmem:[%s1524 + $0x7c] sm:$0xf]
      %v1871 = vld [vmem:[%s1524 + $0x80] sm:$0x1]
      %v1872 = vld [vmem:[%s1524 + $0x84] sm:$0xf]
      %v1873 = vld [vmem:[%s1524 + $0x88] sm:$0xf]
      %v1874 = vld [vmem:[%s1524 + $0x8c] sm:$0x1]
      %v1875 = vld [vmem:[%s1524 + $0x90] sm:$0xf]
      %v1876 = vld [vmem:[%s1524 + $0x94] sm:$0xf]
      %v1877 = vld [vmem:[%s1524 + $0x98] sm:$0x1]
      %v1878 = vld [vmem:[%s1524 + $0x9c] sm:$0xf]
      %v1879 = vld [vmem:[%s1524 + $0xa0] sm:$0xf]
      %v1880 = vld [vmem:[%s1524 + $0xa4] sm:$0x1]
      %v1881 = vld [vmem:[%s1524 + $0xa8] sm:$0xf]
      %v1882 = vld [vmem:[%s1524 + $0xac] sm:$0xf]
      %v1883 = vld [vmem:[%s1524 + $0xb0] sm:$0x1]
      %v1884 = vld [vmem:[%s1524 + $0xb4] sm:$0xf]
      %v1885 = vld [vmem:[%s1524 + $0xb8] sm:$0xf]
      %v1886 = vld [vmem:[%s1524 + $0xbc] sm:$0x1]
      %v1888 = vshrl.u32 %v1839, 16
      %v1890 = vrot.slane %v1888, 4
      %v1891 = vshll.u32 %v1839, 16
      %v1893 = vrot.slane %v1891, 5
      %v1894 = vor.u32 %v1890, %v1893
      %v1895 = vrot.slane %v1894, 4
      %v1897 = vshll.u32 %v1840, 16
      %v1899 = vrot.slane %v1897, 5
      %v1900 = vsel %vm275, %v1895, %v1899
      %v1901 = vshrl.u32 %v1840, 16
      %v1903 = vrot.slane %v1901, 4
      %v1904 = vor.u32 %v1903, %v1899
      %v1905 = vrot.slane %v1904, 4
      %v1907 = vshll.u32 %v1841, 16
      %v1909 = vrot.slane %v1907, 5
      %v1910 = vsel %vm275, %v1905, %v1909
      %v1912 = vshrl.u32 %v1842, 16
      %v1914 = vrot.slane %v1912, 4
      %v1915 = vshll.u32 %v1842, 16
      %v1917 = vrot.slane %v1915, 5
      %v1918 = vor.u32 %v1914, %v1917
      %v1919 = vrot.slane %v1918, 4
      %v1921 = vshll.u32 %v1843, 16
      %v1923 = vrot.slane %v1921, 5
      %v1924 = vsel %vm275, %v1919, %v1923
      %v1925 = vshrl.u32 %v1843, 16
      %v1927 = vrot.slane %v1925, 4
      %v1928 = vor.u32 %v1927, %v1923
      %v1929 = vrot.slane %v1928, 4
      %v1931 = vshll.u32 %v1844, 16
      %v1933 = vrot.slane %v1931, 5
      %v1934 = vsel %vm275, %v1929, %v1933
      %v1936 = vshrl.u32 %v1845, 16
      %v1938 = vrot.slane %v1936, 4
      %v1939 = vshll.u32 %v1845, 16
      %v1941 = vrot.slane %v1939, 5
      %v1942 = vor.u32 %v1938, %v1941
      %v1943 = vrot.slane %v1942, 4
      %v1945 = vshll.u32 %v1846, 16
      %v1947 = vrot.slane %v1945, 5
      %v1948 = vsel %vm275, %v1943, %v1947
      %v1949 = vshrl.u32 %v1846, 16
      %v1951 = vrot.slane %v1949, 4
      %v1952 = vor.u32 %v1951, %v1947
      %v1953 = vrot.slane %v1952, 4
      %v1955 = vshll.u32 %v1847, 16
      %v1957 = vrot.slane %v1955, 5
      %v1958 = vsel %vm275, %v1953, %v1957
      %v1960 = vshrl.u32 %v1848, 16
      %v1962 = vrot.slane %v1960, 4
      %v1963 = vshll.u32 %v1848, 16
      %v1965 = vrot.slane %v1963, 5
      %v1966 = vor.u32 %v1962, %v1965
      %v1967 = vrot.slane %v1966, 4
      %v1969 = vshll.u32 %v1849, 16
      %v1971 = vrot.slane %v1969, 5
      %v1972 = vsel %vm275, %v1967, %v1971
      %v1973 = vshrl.u32 %v1849, 16
      %v1975 = vrot.slane %v1973, 4
      %v1976 = vor.u32 %v1975, %v1971
      %v1977 = vrot.slane %v1976, 4
      %v1979 = vshll.u32 %v1850, 16
      %v1981 = vrot.slane %v1979, 5
      %v1982 = vsel %vm275, %v1977, %v1981
      %v1984 = vshrl.u32 %v1851, 16
      %v1986 = vrot.slane %v1984, 4
      %v1987 = vshll.u32 %v1851, 16
      %v1989 = vrot.slane %v1987, 5
      %v1990 = vor.u32 %v1986, %v1989
      %v1991 = vrot.slane %v1990, 4
      %v1993 = vshll.u32 %v1852, 16
      %v1995 = vrot.slane %v1993, 5
      %v1996 = vsel %vm275, %v1991, %v1995
      %v1997 = vshrl.u32 %v1852, 16
      %v1999 = vrot.slane %v1997, 4
      %v2000 = vor.u32 %v1999, %v1995
      %v2001 = vrot.slane %v2000, 4
      %v2003 = vshll.u32 %v1853, 16
      %v2005 = vrot.slane %v2003, 5
      %v2006 = vsel %vm275, %v2001, %v2005
      %v2008 = vshrl.u32 %v1854, 16
      %v2010 = vrot.slane %v2008, 4
      %v2011 = vshll.u32 %v1854, 16
      %v2013 = vrot.slane %v2011, 5
      %v2014 = vor.u32 %v2010, %v2013
      %v2015 = vrot.slane %v2014, 4
      %v2017 = vshll.u32 %v1855, 16
      %v2019 = vrot.slane %v2017, 5
      %v2020 = vsel %vm275, %v2015, %v2019
      %v2021 = vshrl.u32 %v1855, 16
      %v2023 = vrot.slane %v2021, 4
      %v2024 = vor.u32 %v2023, %v2019
      %v2025 = vrot.slane %v2024, 4
      %v2027 = vshll.u32 %v1856, 16
      %v2029 = vrot.slane %v2027, 5
      %v2030 = vsel %vm275, %v2025, %v2029
      %v2032 = vshrl.u32 %v1857, 16
      %v2034 = vrot.slane %v2032, 4
      %v2035 = vshll.u32 %v1857, 16
      %v2037 = vrot.slane %v2035, 5
      %v2038 = vor.u32 %v2034, %v2037
      %v2039 = vrot.slane %v2038, 4
      %v2041 = vshll.u32 %v1858, 16
      %v2043 = vrot.slane %v2041, 5
      %v2044 = vsel %vm275, %v2039, %v2043
      %v2045 = vshrl.u32 %v1858, 16
      %v2047 = vrot.slane %v2045, 4
      %v2048 = vor.u32 %v2047, %v2043
      %v2049 = vrot.slane %v2048, 4
      %v2051 = vshll.u32 %v1859, 16
      %v2053 = vrot.slane %v2051, 5
      %v2054 = vsel %vm275, %v2049, %v2053
      %v2056 = vshrl.u32 %v1860, 16
      %v2058 = vrot.slane %v2056, 4
      %v2059 = vshll.u32 %v1860, 16
      %v2061 = vrot.slane %v2059, 5
      %v2062 = vor.u32 %v2058, %v2061
      %v2063 = vrot.slane %v2062, 4
      %v2065 = vshll.u32 %v1861, 16
      %v2067 = vrot.slane %v2065, 5
      %v2068 = vsel %vm275, %v2063, %v2067
      %v2069 = vshrl.u32 %v1861, 16
      %v2071 = vrot.slane %v2069, 4
      %v2072 = vor.u32 %v2071, %v2067
      %v2073 = vrot.slane %v2072, 4
      %v2075 = vshll.u32 %v1862, 16
      %v2077 = vrot.slane %v2075, 5
      %v2078 = vsel %vm275, %v2073, %v2077
      %v2080 = vshrl.u32 %v1863, 16
      %v2082 = vrot.slane %v2080, 4
      %v2083 = vshll.u32 %v1863, 16
      %v2085 = vrot.slane %v2083, 5
      %v2086 = vor.u32 %v2082, %v2085
      %v2087 = vrot.slane %v2086, 4
      %v2089 = vshll.u32 %v1864, 16
      %v2091 = vrot.slane %v2089, 5
      %v2092 = vsel %vm275, %v2087, %v2091
      %v2093 = vshrl.u32 %v1864, 16
      %v2095 = vrot.slane %v2093, 4
      %v2096 = vor.u32 %v2095, %v2091
      %v2097 = vrot.slane %v2096, 4
      %v2099 = vshll.u32 %v1865, 16
      %v2101 = vrot.slane %v2099, 5
      %v2102 = vsel %vm275, %v2097, %v2101
      %v2104 = vshrl.u32 %v1866, 16
      %v2106 = vrot.slane %v2104, 4
      %v2107 = vshll.u32 %v1866, 16
      %v2109 = vrot.slane %v2107, 5
      %v2110 = vor.u32 %v2106, %v2109
      %v2111 = vrot.slane %v2110, 4
      %v2113 = vshll.u32 %v1867, 16
      %v2115 = vrot.slane %v2113, 5
      %v2116 = vsel %vm275, %v2111, %v2115
      %v2117 = vshrl.u32 %v1867, 16
      %v2119 = vrot.slane %v2117, 4
      %v2120 = vor.u32 %v2119, %v2115
      %v2121 = vrot.slane %v2120, 4
      %v2123 = vshll.u32 %v1868, 16
      %v2125 = vrot.slane %v2123, 5
      %v2126 = vsel %vm275, %v2121, %v2125
      %v2128 = vshrl.u32 %v1869, 16
      %v2130 = vrot.slane %v2128, 4
      %v2131 = vshll.u32 %v1869, 16
      %v2133 = vrot.slane %v2131, 5
      %v2134 = vor.u32 %v2130, %v2133
      %v2135 = vrot.slane %v2134, 4
      %v2137 = vshll.u32 %v1870, 16
      %v2139 = vrot.slane %v2137, 5
      %v2140 = vsel %vm275, %v2135, %v2139
      %v2141 = vshrl.u32 %v1870, 16
      %v2143 = vrot.slane %v2141, 4
      %v2144 = vor.u32 %v2143, %v2139
      %v2145 = vrot.slane %v2144, 4
      %v2147 = vshll.u32 %v1871, 16
      %v2149 = vrot.slane %v2147, 5
      %v2150 = vsel %vm275, %v2145, %v2149
      %v2152 = vshrl.u32 %v1872, 16
      %v2154 = vrot.slane %v2152, 4
      %v2155 = vshll.u32 %v1872, 16
      %v2157 = vrot.slane %v2155, 5
      %v2158 = vor.u32 %v2154, %v2157
      %v2159 = vrot.slane %v2158, 4
      %v2161 = vshll.u32 %v1873, 16
      %v2163 = vrot.slane %v2161, 5
      %v2164 = vsel %vm275, %v2159, %v2163
      %v2165 = vshrl.u32 %v1873, 16
      %v2167 = vrot.slane %v2165, 4
      %v2168 = vor.u32 %v2167, %v2163
      %v2169 = vrot.slane %v2168, 4
      %v2171 = vshll.u32 %v1874, 16
      %v2173 = vrot.slane %v2171, 5
      %v2174 = vsel %vm275, %v2169, %v2173
      %v2176 = vshrl.u32 %v1875, 16
      %v2178 = vrot.slane %v2176, 4
      %v2179 = vshll.u32 %v1875, 16
      %v2181 = vrot.slane %v2179, 5
      %v2182 = vor.u32 %v2178, %v2181
      %v2183 = vrot.slane %v2182, 4
      %v2185 = vshll.u32 %v1876, 16
      %v2187 = vrot.slane %v2185, 5
      %v2188 = vsel %vm275, %v2183, %v2187
      %v2189 = vshrl.u32 %v1876, 16
      %v2191 = vrot.slane %v2189, 4
      %v2192 = vor.u32 %v2191, %v2187
      %v2193 = vrot.slane %v2192, 4
      %v2195 = vshll.u32 %v1877, 16
      %v2197 = vrot.slane %v2195, 5
      %v2198 = vsel %vm275, %v2193, %v2197
      %v2200 = vshrl.u32 %v1878, 16
      %v2202 = vrot.slane %v2200, 4
      %v2203 = vshll.u32 %v1878, 16
      %v2205 = vrot.slane %v2203, 5
      %v2206 = vor.u32 %v2202, %v2205
      %v2207 = vrot.slane %v2206, 4
      %v2209 = vshll.u32 %v1879, 16
      %v2211 = vrot.slane %v2209, 5
      %v2212 = vsel %vm275, %v2207, %v2211
      %v2213 = vshrl.u32 %v1879, 16
      %v2215 = vrot.slane %v2213, 4
      %v2216 = vor.u32 %v2215, %v2211
      %v2217 = vrot.slane %v2216, 4
      %v2219 = vshll.u32 %v1880, 16
      %v2221 = vrot.slane %v2219, 5
      %v2222 = vsel %vm275, %v2217, %v2221
      %v2224 = vshrl.u32 %v1881, 16
      %v2226 = vrot.slane %v2224, 4
      %v2227 = vshll.u32 %v1881, 16
      %v2229 = vrot.slane %v2227, 5
      %v2230 = vor.u32 %v2226, %v2229
      %v2231 = vrot.slane %v2230, 4
      %v2233 = vshll.u32 %v1882, 16
      %v2235 = vrot.slane %v2233, 5
      %v2236 = vsel %vm275, %v2231, %v2235
      %v2237 = vshrl.u32 %v1882, 16
      %v2239 = vrot.slane %v2237, 4
      %v2240 = vor.u32 %v2239, %v2235
      %v2241 = vrot.slane %v2240, 4
      %v2243 = vshll.u32 %v1883, 16
      %v2245 = vrot.slane %v2243, 5
      %v2246 = vsel %vm275, %v2241, %v2245
      %v2248 = vshrl.u32 %v1884, 16
      %v2250 = vrot.slane %v2248, 4
      %v2251 = vshll.u32 %v1884, 16
      %v2253 = vrot.slane %v2251, 5
      %v2254 = vor.u32 %v2250, %v2253
      %v2255 = vrot.slane %v2254, 4
      %v2257 = vshll.u32 %v1885, 16
      %v2259 = vrot.slane %v2257, 5
      %v2260 = vsel %vm275, %v2255, %v2259
      %v2261 = vshrl.u32 %v1885, 16
      %v2263 = vrot.slane %v2261, 4
      %v2264 = vor.u32 %v2263, %v2259
      %v2265 = vrot.slane %v2264, 4
      %v2267 = vshll.u32 %v1886, 16
      %v2269 = vrot.slane %v2267, 5
      %v2270 = vsel %vm275, %v2265, %v2269
      %s2271 = scalar_lea.vmem %s1, 256
      %v2272 = vld [vmem:[%s2271] sm:$0xf]
      %v2273 = vld [vmem:[%s2271 + $0x4] sm:$0xf]
      %v2274 = vld [vmem:[%s2271 + $0x8] sm:$0xf]
      %v2275 = vld [vmem:[%s2271 + $0xc] sm:$0xf]
      %v2276 = vld [vmem:[%s2271 + $0x10] sm:$0xf]
      %v2277 = vld [vmem:[%s2271 + $0x14] sm:$0xf]
      %v2278 = vld [vmem:[%s2271 + $0x18] sm:$0xf]
      %v2279 = vld [vmem:[%s2271 + $0x1c] sm:$0xf]
      %v2280 = vld [vmem:[%s2271 + $0x20] sm:$0xf]
      %v2281 = vld [vmem:[%s2271 + $0x24] sm:$0xf]
      %v2282 = vld [vmem:[%s2271 + $0x28] sm:$0xf]
      %v2283 = vld [vmem:[%s2271 + $0x2c] sm:$0xf]
      %v2284 = vld [vmem:[%s2271 + $0x30] sm:$0xf]
      %v2285 = vld [vmem:[%s2271 + $0x34] sm:$0xf]
      %v2286 = vld [vmem:[%s2271 + $0x38] sm:$0xf]
      %v2287 = vld [vmem:[%s2271 + $0x3c] sm:$0xf]
      %v2288 = vunpack.c.l.b16 %v1900
      %v2289 = vunpack.c.l.b16 %v1910
      %v2290 = vunpack.c.l.b16 %v1924
      %v2291 = vunpack.c.l.b16 %v1934
      %v2292 = vunpack.c.l.b16 %v1948
      %v2293 = vunpack.c.l.b16 %v1958
      %v2294 = vunpack.c.l.b16 %v1972
      %v2295 = vunpack.c.l.b16 %v1982
      %v2296 = vunpack.c.l.b16 %v1996
      %v2297 = vunpack.c.l.b16 %v2006
      %v2298 = vunpack.c.l.b16 %v2020
      %v2299 = vunpack.c.l.b16 %v2030
      %v2300 = vunpack.c.l.b16 %v2044
      %v2301 = vunpack.c.l.b16 %v2054
      %v2302 = vunpack.c.l.b16 %v2068
      %v2303 = vunpack.c.l.b16 %v2078
      %v2304 = vunpack.c.l.b16 %v2092
      %v2305 = vunpack.c.l.b16 %v2102
      %v2306 = vunpack.c.l.b16 %v2116
      %v2307 = vunpack.c.l.b16 %v2126
      %v2308 = vunpack.c.l.b16 %v2140
      %v2309 = vunpack.c.l.b16 %v2150
      %v2310 = vunpack.c.l.b16 %v2164
      %v2311 = vunpack.c.l.b16 %v2174
      %v2312 = vunpack.c.l.b16 %v2188
      %v2313 = vunpack.c.l.b16 %v2198
      %v2314 = vunpack.c.l.b16 %v2212
      %v2315 = vunpack.c.l.b16 %v2222
      %v2316 = vunpack.c.l.b16 %v2236
      %v2317 = vunpack.c.l.b16 %v2246
      %v2318 = vunpack.c.l.b16 %v2260
      %v2319 = vunpack.c.l.b16 %v2270
      %v2320 = vpack.c.b16 %v2289, %v2288
      %v2321 = vpack.c.b16 %v2291, %v2290
      %v2322 = vpack.c.b16 %v2293, %v2292
      %v2323 = vpack.c.b16 %v2295, %v2294
      %v2324 = vpack.c.b16 %v2297, %v2296
      %v2325 = vpack.c.b16 %v2299, %v2298
      %v2326 = vpack.c.b16 %v2301, %v2300
      %v2327 = vpack.c.b16 %v2303, %v2302
      %v2328 = vpack.c.b16 %v2305, %v2304
      %v2329 = vpack.c.b16 %v2307, %v2306
      %v2330 = vpack.c.b16 %v2309, %v2308
      %v2331 = vpack.c.b16 %v2311, %v2310
      %v2332 = vpack.c.b16 %v2313, %v2312
      %v2333 = vpack.c.b16 %v2315, %v2314
      %v2334 = vpack.c.b16 %v2317, %v2316
      %v2335 = vpack.c.b16 %v2319, %v2318
      %v2368 = vunpack.c.l.b16 %v2272
      %v2369 = vunpack.c.l.b16 %v2273
      %v2370 = vunpack.c.l.b16 %v2274
      %v2371 = vunpack.c.l.b16 %v2275
      %v2372 = vunpack.c.l.b16 %v2276
      %v2373 = vunpack.c.l.b16 %v2277
      %v2374 = vunpack.c.l.b16 %v2278
      %v2375 = vunpack.c.l.b16 %v2279
      %v2376 = vunpack.c.l.b16 %v2280
      %v2377 = vunpack.c.l.b16 %v2281
      %v2378 = vunpack.c.l.b16 %v2282
      %v2379 = vunpack.c.l.b16 %v2283
      %v2380 = vunpack.c.l.b16 %v2284
      %v2381 = vunpack.c.l.b16 %v2285
      %v2382 = vunpack.c.l.b16 %v2286
      %v2383 = vunpack.c.l.b16 %v2287
      %v2384 = vpack.c.b16 %v2369, %v2368
      %v2385 = vpack.c.b16 %v2371, %v2370
      %v2386 = vpack.c.b16 %v2373, %v2372
      %v2387 = vpack.c.b16 %v2375, %v2374
      %v2388 = vpack.c.b16 %v2377, %v2376
      %v2389 = vpack.c.b16 %v2379, %v2378
      %v2390 = vpack.c.b16 %v2381, %v2380
      %v2391 = vpack.c.b16 %v2383, %v2382
      %2400 = vmatpush.bf16.msra.mxu0 %v2391
      %2401 = vmatpush.bf16.msra.mxu0 %v2390
      %2402 = vmatpush.bf16.msra.mxu0 %v2389
      %2403 = vmatpush.bf16.msra.mxu0 %v2388
      %2404 = vmatpush.bf16.msra.mxu0 %v2387
      %2405 = vmatpush.bf16.msra.mxu0 %v2386
      %2406 = vmatpush.bf16.msra.mxu0 %v2385
      %2407 = vmatpush.bf16.msra.mxu0 %v2384
      %2408 = vmatmul.bf16.gmra.mxu0 %v2320
      %v2409 = vpop.f32.mrf.mxu0
      %v2410 = vadd.f32 0.0, %v2409
      %v2411 = vpop.f32.mrf.mxu0
      %v2412 = vadd.f32 0.0, %v2411
      %2413 = vmatmul.bf16.gmra.mxu0 %v2321
      %v2414 = vpop.f32.mrf.mxu0
      %v2415 = vadd.f32 0.0, %v2414
      %v2416 = vpop.f32.mrf.mxu0
      %v2417 = vadd.f32 0.0, %v2416
      %2418 = vmatmul.bf16.gmra.mxu0 %v2322
      %v2419 = vpop.f32.mrf.mxu0
      %v2420 = vadd.f32 0.0, %v2419
      %v2421 = vpop.f32.mrf.mxu0
      %v2422 = vadd.f32 0.0, %v2421
      %2423 = vmatmul.bf16.gmra.mxu0 %v2323
      %v2424 = vpop.f32.mrf.mxu0
      %v2425 = vadd.f32 0.0, %v2424
      %v2426 = vpop.f32.mrf.mxu0
      %v2427 = vadd.f32 0.0, %v2426
      %2428 = vmatmul.bf16.gmra.mxu0 %v2324
      %v2429 = vpop.f32.mrf.mxu0
      %v2430 = vadd.f32 0.0, %v2429
      %v2431 = vpop.f32.mrf.mxu0
      %v2432 = vadd.f32 0.0, %v2431
      %2433 = vmatmul.bf16.gmra.mxu0 %v2325
      %v2434 = vpop.f32.mrf.mxu0
      %v2435 = vadd.f32 0.0, %v2434
      %v2436 = vpop.f32.mrf.mxu0
      %v2437 = vadd.f32 0.0, %v2436
      %2438 = vmatmul.bf16.gmra.mxu0 %v2326
      %v2439 = vpop.f32.mrf.mxu0
      %v2440 = vadd.f32 0.0, %v2439
      %v2441 = vpop.f32.mrf.mxu0
      %v2442 = vadd.f32 0.0, %v2441
      %2443 = vmatmul.bf16.gmra.mxu0 %v2327
      %v2444 = vpop.f32.mrf.mxu0
      %v2445 = vadd.f32 0.0, %v2444
      %v2446 = vpop.f32.mrf.mxu0
      %v2447 = vadd.f32 0.0, %v2446
      %2448 = vmatmul.bf16.gmra.mxu0 %v2328
      %v2449 = vpop.f32.mrf.mxu0
      %v2450 = vadd.f32 0.0, %v2449
      %v2451 = vpop.f32.mrf.mxu0
      %v2452 = vadd.f32 0.0, %v2451
      %2453 = vmatmul.bf16.gmra.mxu0 %v2329
      %v2454 = vpop.f32.mrf.mxu0
      %v2455 = vadd.f32 0.0, %v2454
      %v2456 = vpop.f32.mrf.mxu0
      %v2457 = vadd.f32 0.0, %v2456
      %2458 = vmatmul.bf16.gmra.mxu0 %v2330
      %v2459 = vpop.f32.mrf.mxu0
      %v2460 = vadd.f32 0.0, %v2459
      %v2461 = vpop.f32.mrf.mxu0
      %v2462 = vadd.f32 0.0, %v2461
      %2463 = vmatmul.bf16.gmra.mxu0 %v2331
      %v2464 = vpop.f32.mrf.mxu0
      %v2465 = vadd.f32 0.0, %v2464
      %v2466 = vpop.f32.mrf.mxu0
      %v2467 = vadd.f32 0.0, %v2466
      %2468 = vmatmul.bf16.gmra.mxu0 %v2332
      %v2469 = vpop.f32.mrf.mxu0
      %v2470 = vadd.f32 0.0, %v2469
      %v2471 = vpop.f32.mrf.mxu0
      %v2472 = vadd.f32 0.0, %v2471
      %2473 = vmatmul.bf16.gmra.mxu0 %v2333
      %v2474 = vpop.f32.mrf.mxu0
      %v2475 = vadd.f32 0.0, %v2474
      %v2476 = vpop.f32.mrf.mxu0
      %v2477 = vadd.f32 0.0, %v2476
      %2478 = vmatmul.bf16.gmra.mxu0 %v2334
      %v2479 = vpop.f32.mrf.mxu0
      %v2480 = vadd.f32 0.0, %v2479
      %v2481 = vpop.f32.mrf.mxu0
      %v2482 = vadd.f32 0.0, %v2481
      %2483 = vmatmul.bf16.gmra.mxu0 %v2335
      %v2484 = vpop.f32.mrf.mxu0
      %v2485 = vadd.f32 0.0, %v2484
      %v2486 = vpop.f32.mrf.mxu0
      %v2487 = vadd.f32 0.0, %v2486
      %2488 = vdwg.mxu0
      %v2489 = vadd.f32 %v1807, %v2410
      %v2490 = vadd.f32 %v1808, %v2412
      %v2491 = vadd.f32 %v1809, %v2415
      %v2492 = vadd.f32 %v1810, %v2417
      %v2493 = vadd.f32 %v1811, %v2420
      %v2494 = vadd.f32 %v1812, %v2422
      %v2495 = vadd.f32 %v1813, %v2425
      %v2496 = vadd.f32 %v1814, %v2427
      %v2497 = vadd.f32 %v1815, %v2430
      %v2498 = vadd.f32 %v1816, %v2432
      %v2499 = vadd.f32 %v1817, %v2435
      %v2500 = vadd.f32 %v1818, %v2437
      %v2501 = vadd.f32 %v1819, %v2440
      %v2502 = vadd.f32 %v1820, %v2442
      %v2503 = vadd.f32 %v1821, %v2445
      %v2504 = vadd.f32 %v1822, %v2447
      %v2505 = vadd.f32 %v1823, %v2450
      %v2506 = vadd.f32 %v1824, %v2452
      %v2507 = vadd.f32 %v1825, %v2455
      %v2508 = vadd.f32 %v1826, %v2457
      %v2509 = vadd.f32 %v1827, %v2460
      %v2510 = vadd.f32 %v1828, %v2462
      %v2511 = vadd.f32 %v1829, %v2465
      %v2512 = vadd.f32 %v1830, %v2467
      %v2513 = vadd.f32 %v1831, %v2470
      %v2514 = vadd.f32 %v1832, %v2472
      %v2515 = vadd.f32 %v1833, %v2475
      %v2516 = vadd.f32 %v1834, %v2477
      %v2517 = vadd.f32 %v1835, %v2480
      %v2518 = vadd.f32 %v1836, %v2482
      %v2519 = vadd.f32 %v1837, %v2485
      %v2520 = vadd.f32 %v1838, %v2487
      %v2521 = vld [vmem:[%s1524] sm:$0xe]
      %v2522 = vld [vmem:[%s1524 + $0xc] sm:$0xe]
      %v2523 = vld [vmem:[%s1524 + $0x18] sm:$0xe]
      %v2524 = vld [vmem:[%s1524 + $0x24] sm:$0xe]
      %v2525 = vld [vmem:[%s1524 + $0x30] sm:$0xe]
      %v2526 = vld [vmem:[%s1524 + $0x3c] sm:$0xe]
      %v2527 = vld [vmem:[%s1524 + $0x48] sm:$0xe]
      %v2528 = vld [vmem:[%s1524 + $0x54] sm:$0xe]
      %v2529 = vld [vmem:[%s1524 + $0x60] sm:$0xe]
      %v2530 = vld [vmem:[%s1524 + $0x6c] sm:$0xe]
      %v2531 = vld [vmem:[%s1524 + $0x78] sm:$0xe]
      %v2532 = vld [vmem:[%s1524 + $0x84] sm:$0xe]
      %v2533 = vld [vmem:[%s1524 + $0x90] sm:$0xe]
      %v2534 = vld [vmem:[%s1524 + $0x9c] sm:$0xe]
      %v2535 = vld [vmem:[%s1524 + $0xa8] sm:$0xe]
      %v2536 = vld [vmem:[%s1524 + $0xb4] sm:$0xe]
      %v2585 = vrot.slane %v2521, 5
      %v2586 = vrot.slane %v2585, 4
      %v2587 = vrot.slane %v1840, 5
      %v2588 = vsel %vm1161, %v2586, %v2587
      %v2589 = vrot.slane %v2587, 4
      %v2590 = vrot.slane %v1841, 5
      %v2591 = vsel %vm1161, %v2589, %v2590
      %v2592 = vrot.slane %v2522, 5
      %v2593 = vrot.slane %v2592, 4
      %v2594 = vrot.slane %v1843, 5
      %v2595 = vsel %vm1161, %v2593, %v2594
      %v2596 = vrot.slane %v2594, 4
      %v2597 = vrot.slane %v1844, 5
      %v2598 = vsel %vm1161, %v2596, %v2597
      %v2599 = vrot.slane %v2523, 5
      %v2600 = vrot.slane %v2599, 4
      %v2601 = vrot.slane %v1846, 5
      %v2602 = vsel %vm1161, %v2600, %v2601
      %v2603 = vrot.slane %v2601, 4
      %v2604 = vrot.slane %v1847, 5
      %v2605 = vsel %vm1161, %v2603, %v2604
      %v2606 = vrot.slane %v2524, 5
      %v2607 = vrot.slane %v2606, 4
      %v2608 = vrot.slane %v1849, 5
      %v2609 = vsel %vm1161, %v2607, %v2608
      %v2610 = vrot.slane %v2608, 4
      %v2611 = vrot.slane %v1850, 5
      %v2612 = vsel %vm1161, %v2610, %v2611
      %v2613 = vrot.slane %v2525, 5
      %v2614 = vrot.slane %v2613, 4
      %v2615 = vrot.slane %v1852, 5
      %v2616 = vsel %vm1161, %v2614, %v2615
      %v2617 = vrot.slane %v2615, 4
      %v2618 = vrot.slane %v1853, 5
      %v2619 = vsel %vm1161, %v2617, %v2618
      %v2620 = vrot.slane %v2526, 5
      %v2621 = vrot.slane %v2620, 4
      %v2622 = vrot.slane %v1855, 5
      %v2623 = vsel %vm1161, %v2621, %v2622
      %v2624 = vrot.slane %v2622, 4
      %v2625 = vrot.slane %v1856, 5
      %v2626 = vsel %vm1161, %v2624, %v2625
      %v2627 = vrot.slane %v2527, 5
      %v2628 = vrot.slane %v2627, 4
      %v2629 = vrot.slane %v1858, 5
      %v2630 = vsel %vm1161, %v2628, %v2629
      %v2631 = vrot.slane %v2629, 4
      %v2632 = vrot.slane %v1859, 5
      %v2633 = vsel %vm1161, %v2631, %v2632
      %v2634 = vrot.slane %v2528, 5
      %v2635 = vrot.slane %v2634, 4
      %v2636 = vrot.slane %v1861, 5
      %v2637 = vsel %vm1161, %v2635, %v2636
      %v2638 = vrot.slane %v2636, 4
      %v2639 = vrot.slane %v1862, 5
      %v2640 = vsel %vm1161, %v2638, %v2639
      %v2641 = vrot.slane %v2529, 5
      %v2642 = vrot.slane %v2641, 4
      %v2643 = vrot.slane %v1864, 5
      %v2644 = vsel %vm1161, %v2642, %v2643
      %v2645 = vrot.slane %v2643, 4
      %v2646 = vrot.slane %v1865, 5
      %v2647 = vsel %vm1161, %v2645, %v2646
      %v2648 = vrot.slane %v2530, 5
      %v2649 = vrot.slane %v2648, 4
      %v2650 = vrot.slane %v1867, 5
      %v2651 = vsel %vm1161, %v2649, %v2650
      %v2652 = vrot.slane %v2650, 4
      %v2653 = vrot.slane %v1868, 5
      %v2654 = vsel %vm1161, %v2652, %v2653
      %v2655 = vrot.slane %v2531, 5
      %v2656 = vrot.slane %v2655, 4
      %v2657 = vrot.slane %v1870, 5
      %v2658 = vsel %vm1161, %v2656, %v2657
      %v2659 = vrot.slane %v2657, 4
      %v2660 = vrot.slane %v1871, 5
      %v2661 = vsel %vm1161, %v2659, %v2660
      %v2662 = vrot.slane %v2532, 5
      %v2663 = vrot.slane %v2662, 4
      %v2664 = vrot.slane %v1873, 5
      %v2665 = vsel %vm1161, %v2663, %v2664
      %v2666 = vrot.slane %v2664, 4
      %v2667 = vrot.slane %v1874, 5
      %v2668 = vsel %vm1161, %v2666, %v2667
      %v2669 = vrot.slane %v2533, 5
      %v2670 = vrot.slane %v2669, 4
      %v2671 = vrot.slane %v1876, 5
      %v2672 = vsel %vm1161, %v2670, %v2671
      %v2673 = vrot.slane %v2671, 4
      %v2674 = vrot.slane %v1877, 5
      %v2675 = vsel %vm1161, %v2673, %v2674
      %v2676 = vrot.slane %v2534, 5
      %v2677 = vrot.slane %v2676, 4
      %v2678 = vrot.slane %v1879, 5
      %v2679 = vsel %vm1161, %v2677, %v2678
      %v2680 = vrot.slane %v2678, 4
      %v2681 = vrot.slane %v1880, 5
      %v2682 = vsel %vm1161, %v2680, %v2681
      %v2683 = vrot.slane %v2535, 5
      %v2684 = vrot.slane %v2683, 4
      %v2685 = vrot.slane %v1882, 5
      %v2686 = vsel %vm1161, %v2684, %v2685
      %v2687 = vrot.slane %v2685, 4
      %v2688 = vrot.slane %v1883, 5
      %v2689 = vsel %vm1161, %v2687, %v2688
      %v2690 = vrot.slane %v2536, 5
      %v2691 = vrot.slane %v2690, 4
      %v2692 = vrot.slane %v1885, 5
      %v2693 = vsel %vm1161, %v2691, %v2692
      %v2694 = vrot.slane %v2692, 4
      %v2695 = vrot.slane %v1886, 5
      %v2696 = vsel %vm1161, %v2694, %v2695
      %s2697 = scalar_lea.vmem %s1, 320
      %v2698 = vld [vmem:[%s2697] sm:$0xf]
      %v2699 = vld [vmem:[%s2697 + $0x4] sm:$0xf]
      %v2700 = vld [vmem:[%s2697 + $0x8] sm:$0xf]
      %v2701 = vld [vmem:[%s2697 + $0xc] sm:$0xf]
      %v2702 = vld [vmem:[%s2697 + $0x10] sm:$0xf]
      %v2703 = vld [vmem:[%s2697 + $0x14] sm:$0xf]
      %v2704 = vld [vmem:[%s2697 + $0x18] sm:$0xf]
      %v2705 = vld [vmem:[%s2697 + $0x1c] sm:$0xf]
      %v2706 = vld [vmem:[%s2697 + $0x20] sm:$0xf]
      %v2707 = vld [vmem:[%s2697 + $0x24] sm:$0xf]
      %v2708 = vld [vmem:[%s2697 + $0x28] sm:$0xf]
      %v2709 = vld [vmem:[%s2697 + $0x2c] sm:$0xf]
      %v2710 = vld [vmem:[%s2697 + $0x30] sm:$0xf]
      %v2711 = vld [vmem:[%s2697 + $0x34] sm:$0xf]
      %v2712 = vld [vmem:[%s2697 + $0x38] sm:$0xf]
      %v2713 = vld [vmem:[%s2697 + $0x3c] sm:$0xf]
      %v2714 = vunpack.c.l.b16 %v2588
      %v2715 = vunpack.c.l.b16 %v2591
      %v2716 = vunpack.c.l.b16 %v2595
      %v2717 = vunpack.c.l.b16 %v2598
      %v2718 = vunpack.c.l.b16 %v2602
      %v2719 = vunpack.c.l.b16 %v2605
      %v2720 = vunpack.c.l.b16 %v2609
      %v2721 = vunpack.c.l.b16 %v2612
      %v2722 = vunpack.c.l.b16 %v2616
      %v2723 = vunpack.c.l.b16 %v2619
      %v2724 = vunpack.c.l.b16 %v2623
      %v2725 = vunpack.c.l.b16 %v2626
      %v2726 = vunpack.c.l.b16 %v2630
      %v2727 = vunpack.c.l.b16 %v2633
      %v2728 = vunpack.c.l.b16 %v2637
      %v2729 = vunpack.c.l.b16 %v2640
      %v2730 = vunpack.c.l.b16 %v2644
      %v2731 = vunpack.c.l.b16 %v2647
      %v2732 = vunpack.c.l.b16 %v2651
      %v2733 = vunpack.c.l.b16 %v2654
      %v2734 = vunpack.c.l.b16 %v2658
      %v2735 = vunpack.c.l.b16 %v2661
      %v2736 = vunpack.c.l.b16 %v2665
      %v2737 = vunpack.c.l.b16 %v2668
      %v2738 = vunpack.c.l.b16 %v2672
      %v2739 = vunpack.c.l.b16 %v2675
      %v2740 = vunpack.c.l.b16 %v2679
      %v2741 = vunpack.c.l.b16 %v2682
      %v2742 = vunpack.c.l.b16 %v2686
      %v2743 = vunpack.c.l.b16 %v2689
      %v2744 = vunpack.c.l.b16 %v2693
      %v2745 = vunpack.c.l.b16 %v2696
      %v2746 = vpack.c.b16 %v2715, %v2714
      %v2747 = vpack.c.b16 %v2717, %v2716
      %v2748 = vpack.c.b16 %v2719, %v2718
      %v2749 = vpack.c.b16 %v2721, %v2720
      %v2750 = vpack.c.b16 %v2723, %v2722
      %v2751 = vpack.c.b16 %v2725, %v2724
      %v2752 = vpack.c.b16 %v2727, %v2726
      %v2753 = vpack.c.b16 %v2729, %v2728
      %v2754 = vpack.c.b16 %v2731, %v2730
      %v2755 = vpack.c.b16 %v2733, %v2732
      %v2756 = vpack.c.b16 %v2735, %v2734
      %v2757 = vpack.c.b16 %v2737, %v2736
      %v2758 = vpack.c.b16 %v2739, %v2738
      %v2759 = vpack.c.b16 %v2741, %v2740
      %v2760 = vpack.c.b16 %v2743, %v2742
      %v2761 = vpack.c.b16 %v2745, %v2744
      %v2794 = vunpack.c.l.b16 %v2698
      %v2795 = vunpack.c.l.b16 %v2699
      %v2796 = vunpack.c.l.b16 %v2700
      %v2797 = vunpack.c.l.b16 %v2701
      %v2798 = vunpack.c.l.b16 %v2702
      %v2799 = vunpack.c.l.b16 %v2703
      %v2800 = vunpack.c.l.b16 %v2704
      %v2801 = vunpack.c.l.b16 %v2705
      %v2802 = vunpack.c.l.b16 %v2706
      %v2803 = vunpack.c.l.b16 %v2707
      %v2804 = vunpack.c.l.b16 %v2708
      %v2805 = vunpack.c.l.b16 %v2709
      %v2806 = vunpack.c.l.b16 %v2710
      %v2807 = vunpack.c.l.b16 %v2711
      %v2808 = vunpack.c.l.b16 %v2712
      %v2809 = vunpack.c.l.b16 %v2713
      %v2810 = vpack.c.b16 %v2795, %v2794
      %v2811 = vpack.c.b16 %v2797, %v2796
      %v2812 = vpack.c.b16 %v2799, %v2798
      %v2813 = vpack.c.b16 %v2801, %v2800
      %v2814 = vpack.c.b16 %v2803, %v2802
      %v2815 = vpack.c.b16 %v2805, %v2804
      %v2816 = vpack.c.b16 %v2807, %v2806
      %v2817 = vpack.c.b16 %v2809, %v2808
      %2826 = vmatpush.bf16.msra.mxu0 %v2817
      %2827 = vmatpush.bf16.msra.mxu0 %v2816
      %2828 = vmatpush.bf16.msra.mxu0 %v2815
      %2829 = vmatpush.bf16.msra.mxu0 %v2814
      %2830 = vmatpush.bf16.msra.mxu0 %v2813
      %2831 = vmatpush.bf16.msra.mxu0 %v2812
      %2832 = vmatpush.bf16.msra.mxu0 %v2811
      %2833 = vmatpush.bf16.msra.mxu0 %v2810
      %2834 = vmatmul.bf16.gmra.mxu0 %v2746
      %v2835 = vpop.f32.mrf.mxu0
      %v2836 = vadd.f32 0.0, %v2835
      %v2837 = vpop.f32.mrf.mxu0
      %v2838 = vadd.f32 0.0, %v2837
      %2839 = vmatmul.bf16.gmra.mxu0 %v2747
      %v2840 = vpop.f32.mrf.mxu0
      %v2841 = vadd.f32 0.0, %v2840
      %v2842 = vpop.f32.mrf.mxu0
      %v2843 = vadd.f32 0.0, %v2842
      %2844 = vmatmul.bf16.gmra.mxu0 %v2748
      %v2845 = vpop.f32.mrf.mxu0
      %v2846 = vadd.f32 0.0, %v2845
      %v2847 = vpop.f32.mrf.mxu0
      %v2848 = vadd.f32 0.0, %v2847
      %2849 = vmatmul.bf16.gmra.mxu0 %v2749
      %v2850 = vpop.f32.mrf.mxu0
      %v2851 = vadd.f32 0.0, %v2850
      %v2852 = vpop.f32.mrf.mxu0
      %v2853 = vadd.f32 0.0, %v2852
      %2854 = vmatmul.bf16.gmra.mxu0 %v2750
      %v2855 = vpop.f32.mrf.mxu0
      %v2856 = vadd.f32 0.0, %v2855
      %v2857 = vpop.f32.mrf.mxu0
      %v2858 = vadd.f32 0.0, %v2857
      %2859 = vmatmul.bf16.gmra.mxu0 %v2751
      %v2860 = vpop.f32.mrf.mxu0
      %v2861 = vadd.f32 0.0, %v2860
      %v2862 = vpop.f32.mrf.mxu0
      %v2863 = vadd.f32 0.0, %v2862
      %2864 = vmatmul.bf16.gmra.mxu0 %v2752
      %v2865 = vpop.f32.mrf.mxu0
      %v2866 = vadd.f32 0.0, %v2865
      %v2867 = vpop.f32.mrf.mxu0
      %v2868 = vadd.f32 0.0, %v2867
      %2869 = vmatmul.bf16.gmra.mxu0 %v2753
      %v2870 = vpop.f32.mrf.mxu0
      %v2871 = vadd.f32 0.0, %v2870
      %v2872 = vpop.f32.mrf.mxu0
      %v2873 = vadd.f32 0.0, %v2872
      %2874 = vmatmul.bf16.gmra.mxu0 %v2754
      %v2875 = vpop.f32.mrf.mxu0
      %v2876 = vadd.f32 0.0, %v2875
      %v2877 = vpop.f32.mrf.mxu0
      %v2878 = vadd.f32 0.0, %v2877
      %2879 = vmatmul.bf16.gmra.mxu0 %v2755
      %v2880 = vpop.f32.mrf.mxu0
      %v2881 = vadd.f32 0.0, %v2880
      %v2882 = vpop.f32.mrf.mxu0
      %v2883 = vadd.f32 0.0, %v2882
      %2884 = vmatmul.bf16.gmra.mxu0 %v2756
      %v2885 = vpop.f32.mrf.mxu0
      %v2886 = vadd.f32 0.0, %v2885
      %v2887 = vpop.f32.mrf.mxu0
      %v2888 = vadd.f32 0.0, %v2887
      %2889 = vmatmul.bf16.gmra.mxu0 %v2757
      %v2890 = vpop.f32.mrf.mxu0
      %v2891 = vadd.f32 0.0, %v2890
      %v2892 = vpop.f32.mrf.mxu0
      %v2893 = vadd.f32 0.0, %v2892
      %2894 = vmatmul.bf16.gmra.mxu0 %v2758
      %v2895 = vpop.f32.mrf.mxu0
      %v2896 = vadd.f32 0.0, %v2895
      %v2897 = vpop.f32.mrf.mxu0
      %v2898 = vadd.f32 0.0, %v2897
      %2899 = vmatmul.bf16.gmra.mxu0 %v2759
      %v2900 = vpop.f32.mrf.mxu0
      %v2901 = vadd.f32 0.0, %v2900
      %v2902 = vpop.f32.mrf.mxu0
      %v2903 = vadd.f32 0.0, %v2902
      %2904 = vmatmul.bf16.gmra.mxu0 %v2760
      %v2905 = vpop.f32.mrf.mxu0
      %v2906 = vadd.f32 0.0, %v2905
      %v2907 = vpop.f32.mrf.mxu0
      %v2908 = vadd.f32 0.0, %v2907
      %2909 = vmatmul.bf16.gmra.mxu0 %v2761
      %v2910 = vpop.f32.mrf.mxu0
      %v2911 = vadd.f32 0.0, %v2910
      %v2912 = vpop.f32.mrf.mxu0
      %v2913 = vadd.f32 0.0, %v2912
      %2914 = vdwg.mxu0
      %v2915 = vadd.f32 %v2489, %v2836
      %v2916 = vadd.f32 %v2490, %v2838
      %v2917 = vadd.f32 %v2491, %v2841
      %v2918 = vadd.f32 %v2492, %v2843
      %v2919 = vadd.f32 %v2493, %v2846
      %v2920 = vadd.f32 %v2494, %v2848
      %v2921 = vadd.f32 %v2495, %v2851
      %v2922 = vadd.f32 %v2496, %v2853
      %v2923 = vadd.f32 %v2497, %v2856
      %v2924 = vadd.f32 %v2498, %v2858
      %v2925 = vadd.f32 %v2499, %v2861
      %v2926 = vadd.f32 %v2500, %v2863
      %v2927 = vadd.f32 %v2501, %v2866
      %v2928 = vadd.f32 %v2502, %v2868
      %v2929 = vadd.f32 %v2503, %v2871
      %v2930 = vadd.f32 %v2504, %v2873
      %v2931 = vadd.f32 %v2505, %v2876
      %v2932 = vadd.f32 %v2506, %v2878
      %v2933 = vadd.f32 %v2507, %v2881
      %v2934 = vadd.f32 %v2508, %v2883
      %v2935 = vadd.f32 %v2509, %v2886
      %v2936 = vadd.f32 %v2510, %v2888
      %v2937 = vadd.f32 %v2511, %v2891
      %v2938 = vadd.f32 %v2512, %v2893
      %v2939 = vadd.f32 %v2513, %v2896
      %v2940 = vadd.f32 %v2514, %v2898
      %v2941 = vadd.f32 %v2515, %v2901
      %v2942 = vadd.f32 %v2516, %v2903
      %v2943 = vadd.f32 %v2517, %v2906
      %v2944 = vadd.f32 %v2518, %v2908
      %v2945 = vadd.f32 %v2519, %v2911
      %v2946 = vadd.f32 %v2520, %v2913
      %s2947 = scalar_lea.vmem %s199, 24
      %v2948 = vld [vmem:[%s2947] sm:$0xf]
      %v2949 = vld [vmem:[%s2947 + $0x4] sm:$0xf]
      %v2950 = vld [vmem:[%s2947 + $0xc] sm:$0xf]
      %v2951 = vld [vmem:[%s2947 + $0x10] sm:$0xf]
      %v2952 = vld [vmem:[%s2947 + $0x18] sm:$0xf]
      %v2953 = vld [vmem:[%s2947 + $0x1c] sm:$0xf]
      %v2954 = vld [vmem:[%s2947 + $0x24] sm:$0xf]
      %v2955 = vld [vmem:[%s2947 + $0x28] sm:$0xf]
      %v2956 = vld [vmem:[%s2947 + $0x30] sm:$0xf]
      %v2957 = vld [vmem:[%s2947 + $0x34] sm:$0xf]
      %v2958 = vld [vmem:[%s2947 + $0x3c] sm:$0xf]
      %v2959 = vld [vmem:[%s2947 + $0x40] sm:$0xf]
      %v2960 = vld [vmem:[%s2947 + $0x48] sm:$0xf]
      %v2961 = vld [vmem:[%s2947 + $0x4c] sm:$0xf]
      %v2962 = vld [vmem:[%s2947 + $0x54] sm:$0xf]
      %v2963 = vld [vmem:[%s2947 + $0x58] sm:$0xf]
      %v2964 = vld [vmem:[%s2947 + $0x60] sm:$0xf]
      %v2965 = vld [vmem:[%s2947 + $0x64] sm:$0xf]
      %v2966 = vld [vmem:[%s2947 + $0x6c] sm:$0xf]
      %v2967 = vld [vmem:[%s2947 + $0x70] sm:$0xf]
      %v2968 = vld [vmem:[%s2947 + $0x78] sm:$0xf]
      %v2969 = vld [vmem:[%s2947 + $0x7c] sm:$0xf]
      %v2970 = vld [vmem:[%s2947 + $0x84] sm:$0xf]
      %v2971 = vld [vmem:[%s2947 + $0x88] sm:$0xf]
      %v2972 = vld [vmem:[%s2947 + $0x90] sm:$0xf]
      %v2973 = vld [vmem:[%s2947 + $0x94] sm:$0xf]
      %v2974 = vld [vmem:[%s2947 + $0x9c] sm:$0xf]
      %v2975 = vld [vmem:[%s2947 + $0xa0] sm:$0xf]
      %v2976 = vld [vmem:[%s2947 + $0xa8] sm:$0xf]
      %v2977 = vld [vmem:[%s2947 + $0xac] sm:$0xf]
      %v2978 = vld [vmem:[%s2947 + $0xb4] sm:$0xf]
      %v2979 = vld [vmem:[%s2947 + $0xb8] sm:$0xf]
      %s2980 = scalar_lea.vmem %s1, 384
      %v2981 = vld [vmem:[%s2980] sm:$0xf]
      %v2982 = vld [vmem:[%s2980 + $0x4] sm:$0xf]
      %v2983 = vld [vmem:[%s2980 + $0x8] sm:$0xf]
      %v2984 = vld [vmem:[%s2980 + $0xc] sm:$0xf]
      %v2985 = vld [vmem:[%s2980 + $0x10] sm:$0xf]
      %v2986 = vld [vmem:[%s2980 + $0x14] sm:$0xf]
      %v2987 = vld [vmem:[%s2980 + $0x18] sm:$0xf]
      %v2988 = vld [vmem:[%s2980 + $0x1c] sm:$0xf]
      %v2989 = vld [vmem:[%s2980 + $0x20] sm:$0xf]
      %v2990 = vld [vmem:[%s2980 + $0x24] sm:$0xf]
      %v2991 = vld [vmem:[%s2980 + $0x28] sm:$0xf]
      %v2992 = vld [vmem:[%s2980 + $0x2c] sm:$0xf]
      %v2993 = vld [vmem:[%s2980 + $0x30] sm:$0xf]
      %v2994 = vld [vmem:[%s2980 + $0x34] sm:$0xf]
      %v2995 = vld [vmem:[%s2980 + $0x38] sm:$0xf]
      %v2996 = vld [vmem:[%s2980 + $0x3c] sm:$0xf]
      %v3029 = vunpack.c.l.b16 %v2948
      %v3030 = vunpack.c.l.b16 %v2949
      %v3031 = vunpack.c.l.b16 %v2950
      %v3032 = vunpack.c.l.b16 %v2951
      %v3033 = vunpack.c.l.b16 %v2952
      %v3034 = vunpack.c.l.b16 %v2953
      %v3035 = vunpack.c.l.b16 %v2954
      %v3036 = vunpack.c.l.b16 %v2955
      %v3037 = vunpack.c.l.b16 %v2956
      %v3038 = vunpack.c.l.b16 %v2957
      %v3039 = vunpack.c.l.b16 %v2958
      %v3040 = vunpack.c.l.b16 %v2959
      %v3041 = vunpack.c.l.b16 %v2960
      %v3042 = vunpack.c.l.b16 %v2961
      %v3043 = vunpack.c.l.b16 %v2962
      %v3044 = vunpack.c.l.b16 %v2963
      %v3045 = vunpack.c.l.b16 %v2964
      %v3046 = vunpack.c.l.b16 %v2965
      %v3047 = vunpack.c.l.b16 %v2966
      %v3048 = vunpack.c.l.b16 %v2967
      %v3049 = vunpack.c.l.b16 %v2968
      %v3050 = vunpack.c.l.b16 %v2969
      %v3051 = vunpack.c.l.b16 %v2970
      %v3052 = vunpack.c.l.b16 %v2971
      %v3053 = vunpack.c.l.b16 %v2972
      %v3054 = vunpack.c.l.b16 %v2973
      %v3055 = vunpack.c.l.b16 %v2974
      %v3056 = vunpack.c.l.b16 %v2975
      %v3057 = vunpack.c.l.b16 %v2976
      %v3058 = vunpack.c.l.b16 %v2977
      %v3059 = vunpack.c.l.b16 %v2978
      %v3060 = vunpack.c.l.b16 %v2979
      %v3061 = vpack.c.b16 %v3030, %v3029
      %v3062 = vpack.c.b16 %v3032, %v3031
      %v3063 = vpack.c.b16 %v3034, %v3033
      %v3064 = vpack.c.b16 %v3036, %v3035
      %v3065 = vpack.c.b16 %v3038, %v3037
      %v3066 = vpack.c.b16 %v3040, %v3039
      %v3067 = vpack.c.b16 %v3042, %v3041
      %v3068 = vpack.c.b16 %v3044, %v3043
      %v3069 = vpack.c.b16 %v3046, %v3045
      %v3070 = vpack.c.b16 %v3048, %v3047
      %v3071 = vpack.c.b16 %v3050, %v3049
      %v3072 = vpack.c.b16 %v3052, %v3051
      %v3073 = vpack.c.b16 %v3054, %v3053
      %v3074 = vpack.c.b16 %v3056, %v3055
      %v3075 = vpack.c.b16 %v3058, %v3057
      %v3076 = vpack.c.b16 %v3060, %v3059
      %v3109 = vunpack.c.l.b16 %v2981
      %v3110 = vunpack.c.l.b16 %v2982
      %v3111 = vunpack.c.l.b16 %v2983
      %v3112 = vunpack.c.l.b16 %v2984
      %v3113 = vunpack.c.l.b16 %v2985
      %v3114 = vunpack.c.l.b16 %v2986
      %v3115 = vunpack.c.l.b16 %v2987
      %v3116 = vunpack.c.l.b16 %v2988
      %v3117 = vunpack.c.l.b16 %v2989
      %v3118 = vunpack.c.l.b16 %v2990
      %v3119 = vunpack.c.l.b16 %v2991
      %v3120 = vunpack.c.l.b16 %v2992
      %v3121 = vunpack.c.l.b16 %v2993
      %v3122 = vunpack.c.l.b16 %v2994
      %v3123 = vunpack.c.l.b16 %v2995
      %v3124 = vunpack.c.l.b16 %v2996
      %v3125 = vpack.c.b16 %v3110, %v3109
      %v3126 = vpack.c.b16 %v3112, %v3111
      %v3127 = vpack.c.b16 %v3114, %v3113
      %v3128 = vpack.c.b16 %v3116, %v3115
      %v3129 = vpack.c.b16 %v3118, %v3117
      %v3130 = vpack.c.b16 %v3120, %v3119
      %v3131 = vpack.c.b16 %v3122, %v3121
      %v3132 = vpack.c.b16 %v3124, %v3123
      %3141 = vmatpush.bf16.msra.mxu0 %v3132
      %3142 = vmatpush.bf16.msra.mxu0 %v3131
      %3143 = vmatpush.bf16.msra.mxu0 %v3130
      %3144 = vmatpush.bf16.msra.mxu0 %v3129
      %3145 = vmatpush.bf16.msra.mxu0 %v3128
      %3146 = vmatpush.bf16.msra.mxu0 %v3127
      %3147 = vmatpush.bf16.msra.mxu0 %v3126
      %3148 = vmatpush.bf16.msra.mxu0 %v3125
      %3149 = vmatmul.bf16.gmra.mxu0 %v3061
      %v3150 = vpop.f32.mrf.mxu0
      %v3151 = vadd.f32 0.0, %v3150
      %v3152 = vpop.f32.mrf.mxu0
      %v3153 = vadd.f32 0.0, %v3152
      %3154 = vmatmul.bf16.gmra.mxu0 %v3062
      %v3155 = vpop.f32.mrf.mxu0
      %v3156 = vadd.f32 0.0, %v3155
      %v3157 = vpop.f32.mrf.mxu0
      %v3158 = vadd.f32 0.0, %v3157
      %3159 = vmatmul.bf16.gmra.mxu0 %v3063
      %v3160 = vpop.f32.mrf.mxu0
      %v3161 = vadd.f32 0.0, %v3160
      %v3162 = vpop.f32.mrf.mxu0
      %v3163 = vadd.f32 0.0, %v3162
      %3164 = vmatmul.bf16.gmra.mxu0 %v3064
      %v3165 = vpop.f32.mrf.mxu0
      %v3166 = vadd.f32 0.0, %v3165
      %v3167 = vpop.f32.mrf.mxu0
      %v3168 = vadd.f32 0.0, %v3167
      %3169 = vmatmul.bf16.gmra.mxu0 %v3065
      %v3170 = vpop.f32.mrf.mxu0
      %v3171 = vadd.f32 0.0, %v3170
      %v3172 = vpop.f32.mrf.mxu0
      %v3173 = vadd.f32 0.0, %v3172
      %3174 = vmatmul.bf16.gmra.mxu0 %v3066
      %v3175 = vpop.f32.mrf.mxu0
      %v3176 = vadd.f32 0.0, %v3175
      %v3177 = vpop.f32.mrf.mxu0
      %v3178 = vadd.f32 0.0, %v3177
      %3179 = vmatmul.bf16.gmra.mxu0 %v3067
      %v3180 = vpop.f32.mrf.mxu0
      %v3181 = vadd.f32 0.0, %v3180
      %v3182 = vpop.f32.mrf.mxu0
      %v3183 = vadd.f32 0.0, %v3182
      %3184 = vmatmul.bf16.gmra.mxu0 %v3068
      %v3185 = vpop.f32.mrf.mxu0
      %v3186 = vadd.f32 0.0, %v3185
      %v3187 = vpop.f32.mrf.mxu0
      %v3188 = vadd.f32 0.0, %v3187
      %3189 = vmatmul.bf16.gmra.mxu0 %v3069
      %v3190 = vpop.f32.mrf.mxu0
      %v3191 = vadd.f32 0.0, %v3190
      %v3192 = vpop.f32.mrf.mxu0
      %v3193 = vadd.f32 0.0, %v3192
      %3194 = vmatmul.bf16.gmra.mxu0 %v3070
      %v3195 = vpop.f32.mrf.mxu0
      %v3196 = vadd.f32 0.0, %v3195
      %v3197 = vpop.f32.mrf.mxu0
      %v3198 = vadd.f32 0.0, %v3197
      %3199 = vmatmul.bf16.gmra.mxu0 %v3071
      %v3200 = vpop.f32.mrf.mxu0
      %v3201 = vadd.f32 0.0, %v3200
      %v3202 = vpop.f32.mrf.mxu0
      %v3203 = vadd.f32 0.0, %v3202
      %3204 = vmatmul.bf16.gmra.mxu0 %v3072
      %v3205 = vpop.f32.mrf.mxu0
      %v3206 = vadd.f32 0.0, %v3205
      %v3207 = vpop.f32.mrf.mxu0
      %v3208 = vadd.f32 0.0, %v3207
      %3209 = vmatmul.bf16.gmra.mxu0 %v3073
      %v3210 = vpop.f32.mrf.mxu0
      %v3211 = vadd.f32 0.0, %v3210
      %v3212 = vpop.f32.mrf.mxu0
      %v3213 = vadd.f32 0.0, %v3212
      %3214 = vmatmul.bf16.gmra.mxu0 %v3074
      %v3215 = vpop.f32.mrf.mxu0
      %v3216 = vadd.f32 0.0, %v3215
      %v3217 = vpop.f32.mrf.mxu0
      %v3218 = vadd.f32 0.0, %v3217
      %3219 = vmatmul.bf16.gmra.mxu0 %v3075
      %v3220 = vpop.f32.mrf.mxu0
      %v3221 = vadd.f32 0.0, %v3220
      %v3222 = vpop.f32.mrf.mxu0
      %v3223 = vadd.f32 0.0, %v3222
      %3224 = vmatmul.bf16.gmra.mxu0 %v3076
      %v3225 = vpop.f32.mrf.mxu0
      %v3226 = vadd.f32 0.0, %v3225
      %v3227 = vpop.f32.mrf.mxu0
      %v3228 = vadd.f32 0.0, %v3227
      %3229 = vdwg.mxu0
      %v3230 = vadd.f32 %v2915, %v3151
      %v3231 = vadd.f32 %v2916, %v3153
      %v3232 = vadd.f32 %v2917, %v3156
      %v3233 = vadd.f32 %v2918, %v3158
      %v3234 = vadd.f32 %v2919, %v3161
      %v3235 = vadd.f32 %v2920, %v3163
      %v3236 = vadd.f32 %v2921, %v3166
      %v3237 = vadd.f32 %v2922, %v3168
      %v3238 = vadd.f32 %v2923, %v3171
      %v3239 = vadd.f32 %v2924, %v3173
      %v3240 = vadd.f32 %v2925, %v3176
      %v3241 = vadd.f32 %v2926, %v3178
      %v3242 = vadd.f32 %v2927, %v3181
      %v3243 = vadd.f32 %v2928, %v3183
      %v3244 = vadd.f32 %v2929, %v3186
      %v3245 = vadd.f32 %v2930, %v3188
      %v3246 = vadd.f32 %v2931, %v3191
      %v3247 = vadd.f32 %v2932, %v3193
      %v3248 = vadd.f32 %v2933, %v3196
      %v3249 = vadd.f32 %v2934, %v3198
      %v3250 = vadd.f32 %v2935, %v3201
      %v3251 = vadd.f32 %v2936, %v3203
      %v3252 = vadd.f32 %v2937, %v3206
      %v3253 = vadd.f32 %v2938, %v3208
      %v3254 = vadd.f32 %v2939, %v3211
      %v3255 = vadd.f32 %v2940, %v3213
      %v3256 = vadd.f32 %v2941, %v3216
      %v3257 = vadd.f32 %v2942, %v3218
      %v3258 = vadd.f32 %v2943, %v3221
      %v3259 = vadd.f32 %v2944, %v3223
      %v3260 = vadd.f32 %v2945, %v3226
      %v3261 = vadd.f32 %v2946, %v3228
      %v3262 = vld [vmem:[%s2947] sm:$0xf]
      %v3263 = vld [vmem:[%s2947 + $0x4] sm:$0xf]
      %v3264 = vld [vmem:[%s2947 + $0x8] sm:$0x1]
      %v3265 = vld [vmem:[%s2947 + $0xc] sm:$0xf]
      %v3266 = vld [vmem:[%s2947 + $0x10] sm:$0xf]
      %v3267 = vld [vmem:[%s2947 + $0x14] sm:$0x1]
      %v3268 = vld [vmem:[%s2947 + $0x18] sm:$0xf]
      %v3269 = vld [vmem:[%s2947 + $0x1c] sm:$0xf]
      %v3270 = vld [vmem:[%s2947 + $0x20] sm:$0x1]
      %v3271 = vld [vmem:[%s2947 + $0x24] sm:$0xf]
      %v3272 = vld [vmem:[%s2947 + $0x28] sm:$0xf]
      %v3273 = vld [vmem:[%s2947 + $0x2c] sm:$0x1]
      %v3274 = vld [vmem:[%s2947 + $0x30] sm:$0xf]
      %v3275 = vld [vmem:[%s2947 + $0x34] sm:$0xf]
      %v3276 = vld [vmem:[%s2947 + $0x38] sm:$0x1]
      %v3277 = vld [vmem:[%s2947 + $0x3c] sm:$0xf]
      %v3278 = vld [vmem:[%s2947 + $0x40] sm:$0xf]
      %v3279 = vld [vmem:[%s2947 + $0x44] sm:$0x1]
      %v3280 = vld [vmem:[%s2947 + $0x48] sm:$0xf]
      %v3281 = vld [vmem:[%s2947 + $0x4c] sm:$0xf]
      %v3282 = vld [vmem:[%s2947 + $0x50] sm:$0x1]
      %v3283 = vld [vmem:[%s2947 + $0x54] sm:$0xf]
      %v3284 = vld [vmem:[%s2947 + $0x58] sm:$0xf]
      %v3285 = vld [vmem:[%s2947 + $0x5c] sm:$0x1]
      %v3286 = vld [vmem:[%s2947 + $0x60] sm:$0xf]
      %v3287 = vld [vmem:[%s2947 + $0x64] sm:$0xf]
      %v3288 = vld [vmem:[%s2947 + $0x68] sm:$0x1]
      %v3289 = vld [vmem:[%s2947 + $0x6c] sm:$0xf]
      %v3290 = vld [vmem:[%s2947 + $0x70] sm:$0xf]
      %v3291 = vld [vmem:[%s2947 + $0x74] sm:$0x1]
      %v3292 = vld [vmem:[%s2947 + $0x78] sm:$0xf]
      %v3293 = vld [vmem:[%s2947 + $0x7c] sm:$0xf]
      %v3294 = vld [vmem:[%s2947 + $0x80] sm:$0x1]
      %v3295 = vld [vmem:[%s2947 + $0x84] sm:$0xf]
      %v3296 = vld [vmem:[%s2947 + $0x88] sm:$0xf]
      %v3297 = vld [vmem:[%s2947 + $0x8c] sm:$0x1]
      %v3298 = vld [vmem:[%s2947 + $0x90] sm:$0xf]
      %v3299 = vld [vmem:[%s2947 + $0x94] sm:$0xf]
      %v3300 = vld [vmem:[%s2947 + $0x98] sm:$0x1]
      %v3301 = vld [vmem:[%s2947 + $0x9c] sm:$0xf]
      %v3302 = vld [vmem:[%s2947 + $0xa0] sm:$0xf]
      %v3303 = vld [vmem:[%s2947 + $0xa4] sm:$0x1]
      %v3304 = vld [vmem:[%s2947 + $0xa8] sm:$0xf]
      %v3305 = vld [vmem:[%s2947 + $0xac] sm:$0xf]
      %v3306 = vld [vmem:[%s2947 + $0xb0] sm:$0x1]
      %v3307 = vld [vmem:[%s2947 + $0xb4] sm:$0xf]
      %v3308 = vld [vmem:[%s2947 + $0xb8] sm:$0xf]
      %v3309 = vld [vmem:[%s2947 + $0xbc] sm:$0x1]
      %v3311 = vshrl.u32 %v3262, 16
      %v3313 = vrot.slane %v3311, 4
      %v3314 = vshll.u32 %v3262, 16
      %v3316 = vrot.slane %v3314, 5
      %v3317 = vor.u32 %v3313, %v3316
      %v3318 = vrot.slane %v3317, 4
      %v3320 = vshll.u32 %v3263, 16
      %v3322 = vrot.slane %v3320, 5
      %v3323 = vsel %vm275, %v3318, %v3322
      %v3324 = vshrl.u32 %v3263, 16
      %v3326 = vrot.slane %v3324, 4
      %v3327 = vor.u32 %v3326, %v3322
      %v3328 = vrot.slane %v3327, 4
      %v3330 = vshll.u32 %v3264, 16
      %v3332 = vrot.slane %v3330, 5
      %v3333 = vsel %vm275, %v3328, %v3332
      %v3335 = vshrl.u32 %v3265, 16
      %v3337 = vrot.slane %v3335, 4
      %v3338 = vshll.u32 %v3265, 16
      %v3340 = vrot.slane %v3338, 5
      %v3341 = vor.u32 %v3337, %v3340
      %v3342 = vrot.slane %v3341, 4
      %v3344 = vshll.u32 %v3266, 16
      %v3346 = vrot.slane %v3344, 5
      %v3347 = vsel %vm275, %v3342, %v3346
      %v3348 = vshrl.u32 %v3266, 16
      %v3350 = vrot.slane %v3348, 4
      %v3351 = vor.u32 %v3350, %v3346
      %v3352 = vrot.slane %v3351, 4
      %v3354 = vshll.u32 %v3267, 16
      %v3356 = vrot.slane %v3354, 5
      %v3357 = vsel %vm275, %v3352, %v3356
      %v3359 = vshrl.u32 %v3268, 16
      %v3361 = vrot.slane %v3359, 4
      %v3362 = vshll.u32 %v3268, 16
      %v3364 = vrot.slane %v3362, 5
      %v3365 = vor.u32 %v3361, %v3364
      %v3366 = vrot.slane %v3365, 4
      %v3368 = vshll.u32 %v3269, 16
      %v3370 = vrot.slane %v3368, 5
      %v3371 = vsel %vm275, %v3366, %v3370
      %v3372 = vshrl.u32 %v3269, 16
      %v3374 = vrot.slane %v3372, 4
      %v3375 = vor.u32 %v3374, %v3370
      %v3376 = vrot.slane %v3375, 4
      %v3378 = vshll.u32 %v3270, 16
      %v3380 = vrot.slane %v3378, 5
      %v3381 = vsel %vm275, %v3376, %v3380
      %v3383 = vshrl.u32 %v3271, 16
      %v3385 = vrot.slane %v3383, 4
      %v3386 = vshll.u32 %v3271, 16
      %v3388 = vrot.slane %v3386, 5
      %v3389 = vor.u32 %v3385, %v3388
      %v3390 = vrot.slane %v3389, 4
      %v3392 = vshll.u32 %v3272, 16
      %v3394 = vrot.slane %v3392, 5
      %v3395 = vsel %vm275, %v3390, %v3394
      %v3396 = vshrl.u32 %v3272, 16
      %v3398 = vrot.slane %v3396, 4
      %v3399 = vor.u32 %v3398, %v3394
      %v3400 = vrot.slane %v3399, 4
      %v3402 = vshll.u32 %v3273, 16
      %v3404 = vrot.slane %v3402, 5
      %v3405 = vsel %vm275, %v3400, %v3404
      %v3407 = vshrl.u32 %v3274, 16
      %v3409 = vrot.slane %v3407, 4
      %v3410 = vshll.u32 %v3274, 16
      %v3412 = vrot.slane %v3410, 5
      %v3413 = vor.u32 %v3409, %v3412
      %v3414 = vrot.slane %v3413, 4
      %v3416 = vshll.u32 %v3275, 16
      %v3418 = vrot.slane %v3416, 5
      %v3419 = vsel %vm275, %v3414, %v3418
      %v3420 = vshrl.u32 %v3275, 16
      %v3422 = vrot.slane %v3420, 4
      %v3423 = vor.u32 %v3422, %v3418
      %v3424 = vrot.slane %v3423, 4
      %v3426 = vshll.u32 %v3276, 16
      %v3428 = vrot.slane %v3426, 5
      %v3429 = vsel %vm275, %v3424, %v3428
      %v3431 = vshrl.u32 %v3277, 16
      %v3433 = vrot.slane %v3431, 4
      %v3434 = vshll.u32 %v3277, 16
      %v3436 = vrot.slane %v3434, 5
      %v3437 = vor.u32 %v3433, %v3436
      %v3438 = vrot.slane %v3437, 4
      %v3440 = vshll.u32 %v3278, 16
      %v3442 = vrot.slane %v3440, 5
      %v3443 = vsel %vm275, %v3438, %v3442
      %v3444 = vshrl.u32 %v3278, 16
      %v3446 = vrot.slane %v3444, 4
      %v3447 = vor.u32 %v3446, %v3442
      %v3448 = vrot.slane %v3447, 4
      %v3450 = vshll.u32 %v3279, 16
      %v3452 = vrot.slane %v3450, 5
      %v3453 = vsel %vm275, %v3448, %v3452
      %v3455 = vshrl.u32 %v3280, 16
      %v3457 = vrot.slane %v3455, 4
      %v3458 = vshll.u32 %v3280, 16
      %v3460 = vrot.slane %v3458, 5
      %v3461 = vor.u32 %v3457, %v3460
      %v3462 = vrot.slane %v3461, 4
      %v3464 = vshll.u32 %v3281, 16
      %v3466 = vrot.slane %v3464, 5
      %v3467 = vsel %vm275, %v3462, %v3466
      %v3468 = vshrl.u32 %v3281, 16
      %v3470 = vrot.slane %v3468, 4
      %v3471 = vor.u32 %v3470, %v3466
      %v3472 = vrot.slane %v3471, 4
      %v3474 = vshll.u32 %v3282, 16
      %v3476 = vrot.slane %v3474, 5
      %v3477 = vsel %vm275, %v3472, %v3476
      %v3479 = vshrl.u32 %v3283, 16
      %v3481 = vrot.slane %v3479, 4
      %v3482 = vshll.u32 %v3283, 16
      %v3484 = vrot.slane %v3482, 5
      %v3485 = vor.u32 %v3481, %v3484
      %v3486 = vrot.slane %v3485, 4
      %v3488 = vshll.u32 %v3284, 16
      %v3490 = vrot.slane %v3488, 5
      %v3491 = vsel %vm275, %v3486, %v3490
      %v3492 = vshrl.u32 %v3284, 16
      %v3494 = vrot.slane %v3492, 4
      %v3495 = vor.u32 %v3494, %v3490
      %v3496 = vrot.slane %v3495, 4
      %v3498 = vshll.u32 %v3285, 16
      %v3500 = vrot.slane %v3498, 5
      %v3501 = vsel %vm275, %v3496, %v3500
      %v3503 = vshrl.u32 %v3286, 16
      %v3505 = vrot.slane %v3503, 4
      %v3506 = vshll.u32 %v3286, 16
      %v3508 = vrot.slane %v3506, 5
      %v3509 = vor.u32 %v3505, %v3508
      %v3510 = vrot.slane %v3509, 4
      %v3512 = vshll.u32 %v3287, 16
      %v3514 = vrot.slane %v3512, 5
      %v3515 = vsel %vm275, %v3510, %v3514
      %v3516 = vshrl.u32 %v3287, 16
      %v3518 = vrot.slane %v3516, 4
      %v3519 = vor.u32 %v3518, %v3514
      %v3520 = vrot.slane %v3519, 4
      %v3522 = vshll.u32 %v3288, 16
      %v3524 = vrot.slane %v3522, 5
      %v3525 = vsel %vm275, %v3520, %v3524
      %v3527 = vshrl.u32 %v3289, 16
      %v3529 = vrot.slane %v3527, 4
      %v3530 = vshll.u32 %v3289, 16
      %v3532 = vrot.slane %v3530, 5
      %v3533 = vor.u32 %v3529, %v3532
      %v3534 = vrot.slane %v3533, 4
      %v3536 = vshll.u32 %v3290, 16
      %v3538 = vrot.slane %v3536, 5
      %v3539 = vsel %vm275, %v3534, %v3538
      %v3540 = vshrl.u32 %v3290, 16
      %v3542 = vrot.slane %v3540, 4
      %v3543 = vor.u32 %v3542, %v3538
      %v3544 = vrot.slane %v3543, 4
      %v3546 = vshll.u32 %v3291, 16
      %v3548 = vrot.slane %v3546, 5
      %v3549 = vsel %vm275, %v3544, %v3548
      %v3551 = vshrl.u32 %v3292, 16
      %v3553 = vrot.slane %v3551, 4
      %v3554 = vshll.u32 %v3292, 16
      %v3556 = vrot.slane %v3554, 5
      %v3557 = vor.u32 %v3553, %v3556
      %v3558 = vrot.slane %v3557, 4
      %v3560 = vshll.u32 %v3293, 16
      %v3562 = vrot.slane %v3560, 5
      %v3563 = vsel %vm275, %v3558, %v3562
      %v3564 = vshrl.u32 %v3293, 16
      %v3566 = vrot.slane %v3564, 4
      %v3567 = vor.u32 %v3566, %v3562
      %v3568 = vrot.slane %v3567, 4
      %v3570 = vshll.u32 %v3294, 16
      %v3572 = vrot.slane %v3570, 5
      %v3573 = vsel %vm275, %v3568, %v3572
      %v3575 = vshrl.u32 %v3295, 16
      %v3577 = vrot.slane %v3575, 4
      %v3578 = vshll.u32 %v3295, 16
      %v3580 = vrot.slane %v3578, 5
      %v3581 = vor.u32 %v3577, %v3580
      %v3582 = vrot.slane %v3581, 4
      %v3584 = vshll.u32 %v3296, 16
      %v3586 = vrot.slane %v3584, 5
      %v3587 = vsel %vm275, %v3582, %v3586
      %v3588 = vshrl.u32 %v3296, 16
      %v3590 = vrot.slane %v3588, 4
      %v3591 = vor.u32 %v3590, %v3586
      %v3592 = vrot.slane %v3591, 4
      %v3594 = vshll.u32 %v3297, 16
      %v3596 = vrot.slane %v3594, 5
      %v3597 = vsel %vm275, %v3592, %v3596
      %v3599 = vshrl.u32 %v3298, 16
      %v3601 = vrot.slane %v3599, 4
      %v3602 = vshll.u32 %v3298, 16
      %v3604 = vrot.slane %v3602, 5
      %v3605 = vor.u32 %v3601, %v3604
      %v3606 = vrot.slane %v3605, 4
      %v3608 = vshll.u32 %v3299, 16
      %v3610 = vrot.slane %v3608, 5
      %v3611 = vsel %vm275, %v3606, %v3610
      %v3612 = vshrl.u32 %v3299, 16
      %v3614 = vrot.slane %v3612, 4
      %v3615 = vor.u32 %v3614, %v3610
      %v3616 = vrot.slane %v3615, 4
      %v3618 = vshll.u32 %v3300, 16
      %v3620 = vrot.slane %v3618, 5
      %v3621 = vsel %vm275, %v3616, %v3620
      %v3623 = vshrl.u32 %v3301, 16
      %v3625 = vrot.slane %v3623, 4
      %v3626 = vshll.u32 %v3301, 16
      %v3628 = vrot.slane %v3626, 5
      %v3629 = vor.u32 %v3625, %v3628
      %v3630 = vrot.slane %v3629, 4
      %v3632 = vshll.u32 %v3302, 16
      %v3634 = vrot.slane %v3632, 5
      %v3635 = vsel %vm275, %v3630, %v3634
      %v3636 = vshrl.u32 %v3302, 16
      %v3638 = vrot.slane %v3636, 4
      %v3639 = vor.u32 %v3638, %v3634
      %v3640 = vrot.slane %v3639, 4
      %v3642 = vshll.u32 %v3303, 16
      %v3644 = vrot.slane %v3642, 5
      %v3645 = vsel %vm275, %v3640, %v3644
      %v3647 = vshrl.u32 %v3304, 16
      %v3649 = vrot.slane %v3647, 4
      %v3650 = vshll.u32 %v3304, 16
      %v3652 = vrot.slane %v3650, 5
      %v3653 = vor.u32 %v3649, %v3652
      %v3654 = vrot.slane %v3653, 4
      %v3656 = vshll.u32 %v3305, 16
      %v3658 = vrot.slane %v3656, 5
      %v3659 = vsel %vm275, %v3654, %v3658
      %v3660 = vshrl.u32 %v3305, 16
      %v3662 = vrot.slane %v3660, 4
      %v3663 = vor.u32 %v3662, %v3658
      %v3664 = vrot.slane %v3663, 4
      %v3666 = vshll.u32 %v3306, 16
      %v3668 = vrot.slane %v3666, 5
      %v3669 = vsel %vm275, %v3664, %v3668
      %v3671 = vshrl.u32 %v3307, 16
      %v3673 = vrot.slane %v3671, 4
      %v3674 = vshll.u32 %v3307, 16
      %v3676 = vrot.slane %v3674, 5
      %v3677 = vor.u32 %v3673, %v3676
      %v3678 = vrot.slane %v3677, 4
      %v3680 = vshll.u32 %v3308, 16
      %v3682 = vrot.slane %v3680, 5
      %v3683 = vsel %vm275, %v3678, %v3682
      %v3684 = vshrl.u32 %v3308, 16
      %v3686 = vrot.slane %v3684, 4
      %v3687 = vor.u32 %v3686, %v3682
      %v3688 = vrot.slane %v3687, 4
      %v3690 = vshll.u32 %v3309, 16
      %v3692 = vrot.slane %v3690, 5
      %v3693 = vsel %vm275, %v3688, %v3692
      %s3694 = scalar_lea.vmem %s1, 448
      %v3695 = vld [vmem:[%s3694] sm:$0xf]
      %v3696 = vld [vmem:[%s3694 + $0x4] sm:$0xf]
      %v3697 = vld [vmem:[%s3694 + $0x8] sm:$0xf]
      %v3698 = vld [vmem:[%s3694 + $0xc] sm:$0xf]
      %v3699 = vld [vmem:[%s3694 + $0x10] sm:$0xf]
      %v3700 = vld [vmem:[%s3694 + $0x14] sm:$0xf]
      %v3701 = vld [vmem:[%s3694 + $0x18] sm:$0xf]
      %v3702 = vld [vmem:[%s3694 + $0x1c] sm:$0xf]
      %v3703 = vld [vmem:[%s3694 + $0x20] sm:$0xf]
      %v3704 = vld [vmem:[%s3694 + $0x24] sm:$0xf]
      %v3705 = vld [vmem:[%s3694 + $0x28] sm:$0xf]
      %v3706 = vld [vmem:[%s3694 + $0x2c] sm:$0xf]
      %v3707 = vld [vmem:[%s3694 + $0x30] sm:$0xf]
      %v3708 = vld [vmem:[%s3694 + $0x34] sm:$0xf]
      %v3709 = vld [vmem:[%s3694 + $0x38] sm:$0xf]
      %v3710 = vld [vmem:[%s3694 + $0x3c] sm:$0xf]
      %v3711 = vunpack.c.l.b16 %v3323
      %v3712 = vunpack.c.l.b16 %v3333
      %v3713 = vunpack.c.l.b16 %v3347
      %v3714 = vunpack.c.l.b16 %v3357
      %v3715 = vunpack.c.l.b16 %v3371
      %v3716 = vunpack.c.l.b16 %v3381
      %v3717 = vunpack.c.l.b16 %v3395
      %v3718 = vunpack.c.l.b16 %v3405
      %v3719 = vunpack.c.l.b16 %v3419
      %v3720 = vunpack.c.l.b16 %v3429
      %v3721 = vunpack.c.l.b16 %v3443
      %v3722 = vunpack.c.l.b16 %v3453
      %v3723 = vunpack.c.l.b16 %v3467
      %v3724 = vunpack.c.l.b16 %v3477
      %v3725 = vunpack.c.l.b16 %v3491
      %v3726 = vunpack.c.l.b16 %v3501
      %v3727 = vunpack.c.l.b16 %v3515
      %v3728 = vunpack.c.l.b16 %v3525
      %v3729 = vunpack.c.l.b16 %v3539
      %v3730 = vunpack.c.l.b16 %v3549
      %v3731 = vunpack.c.l.b16 %v3563
      %v3732 = vunpack.c.l.b16 %v3573
      %v3733 = vunpack.c.l.b16 %v3587
      %v3734 = vunpack.c.l.b16 %v3597
      %v3735 = vunpack.c.l.b16 %v3611
      %v3736 = vunpack.c.l.b16 %v3621
      %v3737 = vunpack.c.l.b16 %v3635
      %v3738 = vunpack.c.l.b16 %v3645
      %v3739 = vunpack.c.l.b16 %v3659
      %v3740 = vunpack.c.l.b16 %v3669
      %v3741 = vunpack.c.l.b16 %v3683
      %v3742 = vunpack.c.l.b16 %v3693
      %v3743 = vpack.c.b16 %v3712, %v3711
      %v3744 = vpack.c.b16 %v3714, %v3713
      %v3745 = vpack.c.b16 %v3716, %v3715
      %v3746 = vpack.c.b16 %v3718, %v3717
      %v3747 = vpack.c.b16 %v3720, %v3719
      %v3748 = vpack.c.b16 %v3722, %v3721
      %v3749 = vpack.c.b16 %v3724, %v3723
      %v3750 = vpack.c.b16 %v3726, %v3725
      %v3751 = vpack.c.b16 %v3728, %v3727
      %v3752 = vpack.c.b16 %v3730, %v3729
      %v3753 = vpack.c.b16 %v3732, %v3731
      %v3754 = vpack.c.b16 %v3734, %v3733
      %v3755 = vpack.c.b16 %v3736, %v3735
      %v3756 = vpack.c.b16 %v3738, %v3737
      %v3757 = vpack.c.b16 %v3740, %v3739
      %v3758 = vpack.c.b16 %v3742, %v3741
      %v3791 = vunpack.c.l.b16 %v3695
      %v3792 = vunpack.c.l.b16 %v3696
      %v3793 = vunpack.c.l.b16 %v3697
      %v3794 = vunpack.c.l.b16 %v3698
      %v3795 = vunpack.c.l.b16 %v3699
      %v3796 = vunpack.c.l.b16 %v3700
      %v3797 = vunpack.c.l.b16 %v3701
      %v3798 = vunpack.c.l.b16 %v3702
      %v3799 = vunpack.c.l.b16 %v3703
      %v3800 = vunpack.c.l.b16 %v3704
      %v3801 = vunpack.c.l.b16 %v3705
      %v3802 = vunpack.c.l.b16 %v3706
      %v3803 = vunpack.c.l.b16 %v3707
      %v3804 = vunpack.c.l.b16 %v3708
      %v3805 = vunpack.c.l.b16 %v3709
      %v3806 = vunpack.c.l.b16 %v3710
      %v3807 = vpack.c.b16 %v3792, %v3791
      %v3808 = vpack.c.b16 %v3794, %v3793
      %v3809 = vpack.c.b16 %v3796, %v3795
      %v3810 = vpack.c.b16 %v3798, %v3797
      %v3811 = vpack.c.b16 %v3800, %v3799
      %v3812 = vpack.c.b16 %v3802, %v3801
      %v3813 = vpack.c.b16 %v3804, %v3803
      %v3814 = vpack.c.b16 %v3806, %v3805
      %3823 = vmatpush.bf16.msra.mxu0 %v3814
      %3824 = vmatpush.bf16.msra.mxu0 %v3813
      %3825 = vmatpush.bf16.msra.mxu0 %v3812
      %3826 = vmatpush.bf16.msra.mxu0 %v3811
      %3827 = vmatpush.bf16.msra.mxu0 %v3810
      %3828 = vmatpush.bf16.msra.mxu0 %v3809
      %3829 = vmatpush.bf16.msra.mxu0 %v3808
      %3830 = vmatpush.bf16.msra.mxu0 %v3807
      %3831 = vmatmul.bf16.gmra.mxu0 %v3743
      %v3832 = vpop.f32.mrf.mxu0
      %v3833 = vadd.f32 0.0, %v3832
      %v3834 = vpop.f32.mrf.mxu0
      %v3835 = vadd.f32 0.0, %v3834
      %3836 = vmatmul.bf16.gmra.mxu0 %v3744
      %v3837 = vpop.f32.mrf.mxu0
      %v3838 = vadd.f32 0.0, %v3837
      %v3839 = vpop.f32.mrf.mxu0
      %v3840 = vadd.f32 0.0, %v3839
      %3841 = vmatmul.bf16.gmra.mxu0 %v3745
      %v3842 = vpop.f32.mrf.mxu0
      %v3843 = vadd.f32 0.0, %v3842
      %v3844 = vpop.f32.mrf.mxu0
      %v3845 = vadd.f32 0.0, %v3844
      %3846 = vmatmul.bf16.gmra.mxu0 %v3746
      %v3847 = vpop.f32.mrf.mxu0
      %v3848 = vadd.f32 0.0, %v3847
      %v3849 = vpop.f32.mrf.mxu0
      %v3850 = vadd.f32 0.0, %v3849
      %3851 = vmatmul.bf16.gmra.mxu0 %v3747
      %v3852 = vpop.f32.mrf.mxu0
      %v3853 = vadd.f32 0.0, %v3852
      %v3854 = vpop.f32.mrf.mxu0
      %v3855 = vadd.f32 0.0, %v3854
      %3856 = vmatmul.bf16.gmra.mxu0 %v3748
      %v3857 = vpop.f32.mrf.mxu0
      %v3858 = vadd.f32 0.0, %v3857
      %v3859 = vpop.f32.mrf.mxu0
      %v3860 = vadd.f32 0.0, %v3859
      %3861 = vmatmul.bf16.gmra.mxu0 %v3749
      %v3862 = vpop.f32.mrf.mxu0
      %v3863 = vadd.f32 0.0, %v3862
      %v3864 = vpop.f32.mrf.mxu0
      %v3865 = vadd.f32 0.0, %v3864
      %3866 = vmatmul.bf16.gmra.mxu0 %v3750
      %v3867 = vpop.f32.mrf.mxu0
      %v3868 = vadd.f32 0.0, %v3867
      %v3869 = vpop.f32.mrf.mxu0
      %v3870 = vadd.f32 0.0, %v3869
      %3871 = vmatmul.bf16.gmra.mxu0 %v3751
      %v3872 = vpop.f32.mrf.mxu0
      %v3873 = vadd.f32 0.0, %v3872
      %v3874 = vpop.f32.mrf.mxu0
      %v3875 = vadd.f32 0.0, %v3874
      %3876 = vmatmul.bf16.gmra.mxu0 %v3752
      %v3877 = vpop.f32.mrf.mxu0
      %v3878 = vadd.f32 0.0, %v3877
      %v3879 = vpop.f32.mrf.mxu0
      %v3880 = vadd.f32 0.0, %v3879
      %3881 = vmatmul.bf16.gmra.mxu0 %v3753
      %v3882 = vpop.f32.mrf.mxu0
      %v3883 = vadd.f32 0.0, %v3882
      %v3884 = vpop.f32.mrf.mxu0
      %v3885 = vadd.f32 0.0, %v3884
      %3886 = vmatmul.bf16.gmra.mxu0 %v3754
      %v3887 = vpop.f32.mrf.mxu0
      %v3888 = vadd.f32 0.0, %v3887
      %v3889 = vpop.f32.mrf.mxu0
      %v3890 = vadd.f32 0.0, %v3889
      %3891 = vmatmul.bf16.gmra.mxu0 %v3755
      %v3892 = vpop.f32.mrf.mxu0
      %v3893 = vadd.f32 0.0, %v3892
      %v3894 = vpop.f32.mrf.mxu0
      %v3895 = vadd.f32 0.0, %v3894
      %3896 = vmatmul.bf16.gmra.mxu0 %v3756
      %v3897 = vpop.f32.mrf.mxu0
      %v3898 = vadd.f32 0.0, %v3897
      %v3899 = vpop.f32.mrf.mxu0
      %v3900 = vadd.f32 0.0, %v3899
      %3901 = vmatmul.bf16.gmra.mxu0 %v3757
      %v3902 = vpop.f32.mrf.mxu0
      %v3903 = vadd.f32 0.0, %v3902
      %v3904 = vpop.f32.mrf.mxu0
      %v3905 = vadd.f32 0.0, %v3904
      %3906 = vmatmul.bf16.gmra.mxu0 %v3758
      %v3907 = vpop.f32.mrf.mxu0
      %v3908 = vadd.f32 0.0, %v3907
      %v3909 = vpop.f32.mrf.mxu0
      %v3910 = vadd.f32 0.0, %v3909
      %3911 = vdwg.mxu0
      %v3912 = vadd.f32 %v3230, %v3833
      %v3913 = vadd.f32 %v3231, %v3835
      %v3914 = vadd.f32 %v3232, %v3838
      %v3915 = vadd.f32 %v3233, %v3840
      %v3916 = vadd.f32 %v3234, %v3843
      %v3917 = vadd.f32 %v3235, %v3845
      %v3918 = vadd.f32 %v3236, %v3848
      %v3919 = vadd.f32 %v3237, %v3850
      %v3920 = vadd.f32 %v3238, %v3853
      %v3921 = vadd.f32 %v3239, %v3855
      %v3922 = vadd.f32 %v3240, %v3858
      %v3923 = vadd.f32 %v3241, %v3860
      %v3924 = vadd.f32 %v3242, %v3863
      %v3925 = vadd.f32 %v3243, %v3865
      %v3926 = vadd.f32 %v3244, %v3868
      %v3927 = vadd.f32 %v3245, %v3870
      %v3928 = vadd.f32 %v3246, %v3873
      %v3929 = vadd.f32 %v3247, %v3875
      %v3930 = vadd.f32 %v3248, %v3878
      %v3931 = vadd.f32 %v3249, %v3880
      %v3932 = vadd.f32 %v3250, %v3883
      %v3933 = vadd.f32 %v3251, %v3885
      %v3934 = vadd.f32 %v3252, %v3888
      %v3935 = vadd.f32 %v3253, %v3890
      %v3936 = vadd.f32 %v3254, %v3893
      %v3937 = vadd.f32 %v3255, %v3895
      %v3938 = vadd.f32 %v3256, %v3898
      %v3939 = vadd.f32 %v3257, %v3900
      %v3940 = vadd.f32 %v3258, %v3903
      %v3941 = vadd.f32 %v3259, %v3905
      %v3942 = vadd.f32 %v3260, %v3908
      %v3943 = vadd.f32 %v3261, %v3910
      %v3944 = vld [vmem:[%s2947] sm:$0xe]
      %v3945 = vld [vmem:[%s2947 + $0xc] sm:$0xe]
      %v3946 = vld [vmem:[%s2947 + $0x18] sm:$0xe]
      %v3947 = vld [vmem:[%s2947 + $0x24] sm:$0xe]
      %v3948 = vld [vmem:[%s2947 + $0x30] sm:$0xe]
      %v3949 = vld [vmem:[%s2947 + $0x3c] sm:$0xe]
      %v3950 = vld [vmem:[%s2947 + $0x48] sm:$0xe]
      %v3951 = vld [vmem:[%s2947 + $0x54] sm:$0xe]
      %v3952 = vld [vmem:[%s2947 + $0x60] sm:$0xe]
      %v3953 = vld [vmem:[%s2947 + $0x6c] sm:$0xe]
      %v3954 = vld [vmem:[%s2947 + $0x78] sm:$0xe]
      %v3955 = vld [vmem:[%s2947 + $0x84] sm:$0xe]
      %v3956 = vld [vmem:[%s2947 + $0x90] sm:$0xe]
      %v3957 = vld [vmem:[%s2947 + $0x9c] sm:$0xe]
      %v3958 = vld [vmem:[%s2947 + $0xa8] sm:$0xe]
      %v3959 = vld [vmem:[%s2947 + $0xb4] sm:$0xe]
      %v4008 = vrot.slane %v3944, 5
      %v4009 = vrot.slane %v4008, 4
      %v4010 = vrot.slane %v3263, 5
      %v4011 = vsel %vm1161, %v4009, %v4010
      %v4012 = vrot.slane %v4010, 4
      %v4013 = vrot.slane %v3264, 5
      %v4014 = vsel %vm1161, %v4012, %v4013
      %v4015 = vrot.slane %v3945, 5
      %v4016 = vrot.slane %v4015, 4
      %v4017 = vrot.slane %v3266, 5
      %v4018 = vsel %vm1161, %v4016, %v4017
      %v4019 = vrot.slane %v4017, 4
      %v4020 = vrot.slane %v3267, 5
      %v4021 = vsel %vm1161, %v4019, %v4020
      %v4022 = vrot.slane %v3946, 5
      %v4023 = vrot.slane %v4022, 4
      %v4024 = vrot.slane %v3269, 5
      %v4025 = vsel %vm1161, %v4023, %v4024
      %v4026 = vrot.slane %v4024, 4
      %v4027 = vrot.slane %v3270, 5
      %v4028 = vsel %vm1161, %v4026, %v4027
      %v4029 = vrot.slane %v3947, 5
      %v4030 = vrot.slane %v4029, 4
      %v4031 = vrot.slane %v3272, 5
      %v4032 = vsel %vm1161, %v4030, %v4031
      %v4033 = vrot.slane %v4031, 4
      %v4034 = vrot.slane %v3273, 5
      %v4035 = vsel %vm1161, %v4033, %v4034
      %v4036 = vrot.slane %v3948, 5
      %v4037 = vrot.slane %v4036, 4
      %v4038 = vrot.slane %v3275, 5
      %v4039 = vsel %vm1161, %v4037, %v4038
      %v4040 = vrot.slane %v4038, 4
      %v4041 = vrot.slane %v3276, 5
      %v4042 = vsel %vm1161, %v4040, %v4041
      %v4043 = vrot.slane %v3949, 5
      %v4044 = vrot.slane %v4043, 4
      %v4045 = vrot.slane %v3278, 5
      %v4046 = vsel %vm1161, %v4044, %v4045
      %v4047 = vrot.slane %v4045, 4
      %v4048 = vrot.slane %v3279, 5
      %v4049 = vsel %vm1161, %v4047, %v4048
      %v4050 = vrot.slane %v3950, 5
      %v4051 = vrot.slane %v4050, 4
      %v4052 = vrot.slane %v3281, 5
      %v4053 = vsel %vm1161, %v4051, %v4052
      %v4054 = vrot.slane %v4052, 4
      %v4055 = vrot.slane %v3282, 5
      %v4056 = vsel %vm1161, %v4054, %v4055
      %v4057 = vrot.slane %v3951, 5
      %v4058 = vrot.slane %v4057, 4
      %v4059 = vrot.slane %v3284, 5
      %v4060 = vsel %vm1161, %v4058, %v4059
      %v4061 = vrot.slane %v4059, 4
      %v4062 = vrot.slane %v3285, 5
      %v4063 = vsel %vm1161, %v4061, %v4062
      %v4064 = vrot.slane %v3952, 5
      %v4065 = vrot.slane %v4064, 4
      %v4066 = vrot.slane %v3287, 5
      %v4067 = vsel %vm1161, %v4065, %v4066
      %v4068 = vrot.slane %v4066, 4
      %v4069 = vrot.slane %v3288, 5
      %v4070 = vsel %vm1161, %v4068, %v4069
      %v4071 = vrot.slane %v3953, 5
      %v4072 = vrot.slane %v4071, 4
      %v4073 = vrot.slane %v3290, 5
      %v4074 = vsel %vm1161, %v4072, %v4073
      %v4075 = vrot.slane %v4073, 4
      %v4076 = vrot.slane %v3291, 5
      %v4077 = vsel %vm1161, %v4075, %v4076
      %v4078 = vrot.slane %v3954, 5
      %v4079 = vrot.slane %v4078, 4
      %v4080 = vrot.slane %v3293, 5
      %v4081 = vsel %vm1161, %v4079, %v4080
      %v4082 = vrot.slane %v4080, 4
      %v4083 = vrot.slane %v3294, 5
      %v4084 = vsel %vm1161, %v4082, %v4083
      %v4085 = vrot.slane %v3955, 5
      %v4086 = vrot.slane %v4085, 4
      %v4087 = vrot.slane %v3296, 5
      %v4088 = vsel %vm1161, %v4086, %v4087
      %v4089 = vrot.slane %v4087, 4
      %v4090 = vrot.slane %v3297, 5
      %v4091 = vsel %vm1161, %v4089, %v4090
      %v4092 = vrot.slane %v3956, 5
      %v4093 = vrot.slane %v4092, 4
      %v4094 = vrot.slane %v3299, 5
      %v4095 = vsel %vm1161, %v4093, %v4094
      %v4096 = vrot.slane %v4094, 4
      %v4097 = vrot.slane %v3300, 5
      %v4098 = vsel %vm1161, %v4096, %v4097
      %v4099 = vrot.slane %v3957, 5
      %v4100 = vrot.slane %v4099, 4
      %v4101 = vrot.slane %v3302, 5
      %v4102 = vsel %vm1161, %v4100, %v4101
      %v4103 = vrot.slane %v4101, 4
      %v4104 = vrot.slane %v3303, 5
      %v4105 = vsel %vm1161, %v4103, %v4104
      %v4106 = vrot.slane %v3958, 5
      %v4107 = vrot.slane %v4106, 4
      %v4108 = vrot.slane %v3305, 5
      %v4109 = vsel %vm1161, %v4107, %v4108
      %v4110 = vrot.slane %v4108, 4
      %v4111 = vrot.slane %v3306, 5
      %v4112 = vsel %vm1161, %v4110, %v4111
      %v4113 = vrot.slane %v3959, 5
      %v4114 = vrot.slane %v4113, 4
      %v4115 = vrot.slane %v3308, 5
      %v4116 = vsel %vm1161, %v4114, %v4115
      %v4117 = vrot.slane %v4115, 4
      %v4118 = vrot.slane %v3309, 5
      %v4119 = vsel %vm1161, %v4117, %v4118
      %s4120 = scalar_lea.vmem %s1, 512
      %v4121 = vld [vmem:[%s4120] sm:$0xf]
      %v4122 = vld [vmem:[%s4120 + $0x4] sm:$0xf]
      %v4123 = vld [vmem:[%s4120 + $0x8] sm:$0xf]
      %v4124 = vld [vmem:[%s4120 + $0xc] sm:$0xf]
      %v4125 = vld [vmem:[%s4120 + $0x10] sm:$0xf]
      %v4126 = vld [vmem:[%s4120 + $0x14] sm:$0xf]
      %v4127 = vld [vmem:[%s4120 + $0x18] sm:$0xf]
      %v4128 = vld [vmem:[%s4120 + $0x1c] sm:$0xf]
      %v4129 = vld [vmem:[%s4120 + $0x20] sm:$0xf]
      %v4130 = vld [vmem:[%s4120 + $0x24] sm:$0xf]
      %v4131 = vld [vmem:[%s4120 + $0x28] sm:$0xf]
      %v4132 = vld [vmem:[%s4120 + $0x2c] sm:$0xf]
      %v4133 = vld [vmem:[%s4120 + $0x30] sm:$0xf]
      %v4134 = vld [vmem:[%s4120 + $0x34] sm:$0xf]
      %v4135 = vld [vmem:[%s4120 + $0x38] sm:$0xf]
      %v4136 = vld [vmem:[%s4120 + $0x3c] sm:$0xf]
      %v4137 = vunpack.c.l.b16 %v4011
      %v4138 = vunpack.c.l.b16 %v4014
      %v4139 = vunpack.c.l.b16 %v4018
      %v4140 = vunpack.c.l.b16 %v4021
      %v4141 = vunpack.c.l.b16 %v4025
      %v4142 = vunpack.c.l.b16 %v4028
      %v4143 = vunpack.c.l.b16 %v4032
      %v4144 = vunpack.c.l.b16 %v4035
      %v4145 = vunpack.c.l.b16 %v4039
      %v4146 = vunpack.c.l.b16 %v4042
      %v4147 = vunpack.c.l.b16 %v4046
      %v4148 = vunpack.c.l.b16 %v4049
      %v4149 = vunpack.c.l.b16 %v4053
      %v4150 = vunpack.c.l.b16 %v4056
      %v4151 = vunpack.c.l.b16 %v4060
      %v4152 = vunpack.c.l.b16 %v4063
      %v4153 = vunpack.c.l.b16 %v4067
      %v4154 = vunpack.c.l.b16 %v4070
      %v4155 = vunpack.c.l.b16 %v4074
      %v4156 = vunpack.c.l.b16 %v4077
      %v4157 = vunpack.c.l.b16 %v4081
      %v4158 = vunpack.c.l.b16 %v4084
      %v4159 = vunpack.c.l.b16 %v4088
      %v4160 = vunpack.c.l.b16 %v4091
      %v4161 = vunpack.c.l.b16 %v4095
      %v4162 = vunpack.c.l.b16 %v4098
      %v4163 = vunpack.c.l.b16 %v4102
      %v4164 = vunpack.c.l.b16 %v4105
      %v4165 = vunpack.c.l.b16 %v4109
      %v4166 = vunpack.c.l.b16 %v4112
      %v4167 = vunpack.c.l.b16 %v4116
      %v4168 = vunpack.c.l.b16 %v4119
      %v4169 = vpack.c.b16 %v4138, %v4137
      %v4170 = vpack.c.b16 %v4140, %v4139
      %v4171 = vpack.c.b16 %v4142, %v4141
      %v4172 = vpack.c.b16 %v4144, %v4143
      %v4173 = vpack.c.b16 %v4146, %v4145
      %v4174 = vpack.c.b16 %v4148, %v4147
      %v4175 = vpack.c.b16 %v4150, %v4149
      %v4176 = vpack.c.b16 %v4152, %v4151
      %v4177 = vpack.c.b16 %v4154, %v4153
      %v4178 = vpack.c.b16 %v4156, %v4155
      %v4179 = vpack.c.b16 %v4158, %v4157
      %v4180 = vpack.c.b16 %v4160, %v4159
      %v4181 = vpack.c.b16 %v4162, %v4161
      %v4182 = vpack.c.b16 %v4164, %v4163
      %v4183 = vpack.c.b16 %v4166, %v4165
      %v4184 = vpack.c.b16 %v4168, %v4167
      %v4217 = vunpack.c.l.b16 %v4121
      %v4218 = vunpack.c.l.b16 %v4122
      %v4219 = vunpack.c.l.b16 %v4123
      %v4220 = vunpack.c.l.b16 %v4124
      %v4221 = vunpack.c.l.b16 %v4125
      %v4222 = vunpack.c.l.b16 %v4126
      %v4223 = vunpack.c.l.b16 %v4127
      %v4224 = vunpack.c.l.b16 %v4128
      %v4225 = vunpack.c.l.b16 %v4129
      %v4226 = vunpack.c.l.b16 %v4130
      %v4227 = vunpack.c.l.b16 %v4131
      %v4228 = vunpack.c.l.b16 %v4132
      %v4229 = vunpack.c.l.b16 %v4133
      %v4230 = vunpack.c.l.b16 %v4134
      %v4231 = vunpack.c.l.b16 %v4135
      %v4232 = vunpack.c.l.b16 %v4136
      %v4233 = vpack.c.b16 %v4218, %v4217
      %v4234 = vpack.c.b16 %v4220, %v4219
      %v4235 = vpack.c.b16 %v4222, %v4221
      %v4236 = vpack.c.b16 %v4224, %v4223
      %v4237 = vpack.c.b16 %v4226, %v4225
      %v4238 = vpack.c.b16 %v4228, %v4227
      %v4239 = vpack.c.b16 %v4230, %v4229
      %v4240 = vpack.c.b16 %v4232, %v4231
      %4249 = vmatpush.bf16.msra.mxu0 %v4240
      %4250 = vmatpush.bf16.msra.mxu0 %v4239
      %4251 = vmatpush.bf16.msra.mxu0 %v4238
      %4252 = vmatpush.bf16.msra.mxu0 %v4237
      %4253 = vmatpush.bf16.msra.mxu0 %v4236
      %4254 = vmatpush.bf16.msra.mxu0 %v4235
      %4255 = vmatpush.bf16.msra.mxu0 %v4234
      %4256 = vmatpush.bf16.msra.mxu0 %v4233
      %4257 = vmatmul.bf16.gmra.mxu0 %v4169
      %v4258 = vpop.f32.mrf.mxu0
      %v4259 = vadd.f32 0.0, %v4258
      %v4260 = vpop.f32.mrf.mxu0
      %v4261 = vadd.f32 0.0, %v4260
      %4262 = vmatmul.bf16.gmra.mxu0 %v4170
      %v4263 = vpop.f32.mrf.mxu0
      %v4264 = vadd.f32 0.0, %v4263
      %v4265 = vpop.f32.mrf.mxu0
      %v4266 = vadd.f32 0.0, %v4265
      %4267 = vmatmul.bf16.gmra.mxu0 %v4171
      %v4268 = vpop.f32.mrf.mxu0
      %v4269 = vadd.f32 0.0, %v4268
      %v4270 = vpop.f32.mrf.mxu0
      %v4271 = vadd.f32 0.0, %v4270
      %4272 = vmatmul.bf16.gmra.mxu0 %v4172
      %v4273 = vpop.f32.mrf.mxu0
      %v4274 = vadd.f32 0.0, %v4273
      %v4275 = vpop.f32.mrf.mxu0
      %v4276 = vadd.f32 0.0, %v4275
      %4277 = vmatmul.bf16.gmra.mxu0 %v4173
      %v4278 = vpop.f32.mrf.mxu0
      %v4279 = vadd.f32 0.0, %v4278
      %v4280 = vpop.f32.mrf.mxu0
      %v4281 = vadd.f32 0.0, %v4280
      %4282 = vmatmul.bf16.gmra.mxu0 %v4174
      %v4283 = vpop.f32.mrf.mxu0
      %v4284 = vadd.f32 0.0, %v4283
      %v4285 = vpop.f32.mrf.mxu0
      %v4286 = vadd.f32 0.0, %v4285
      %4287 = vmatmul.bf16.gmra.mxu0 %v4175
      %v4288 = vpop.f32.mrf.mxu0
      %v4289 = vadd.f32 0.0, %v4288
      %v4290 = vpop.f32.mrf.mxu0
      %v4291 = vadd.f32 0.0, %v4290
      %4292 = vmatmul.bf16.gmra.mxu0 %v4176
      %v4293 = vpop.f32.mrf.mxu0
      %v4294 = vadd.f32 0.0, %v4293
      %v4295 = vpop.f32.mrf.mxu0
      %v4296 = vadd.f32 0.0, %v4295
      %4297 = vmatmul.bf16.gmra.mxu0 %v4177
      %v4298 = vpop.f32.mrf.mxu0
      %v4299 = vadd.f32 0.0, %v4298
      %v4300 = vpop.f32.mrf.mxu0
      %v4301 = vadd.f32 0.0, %v4300
      %4302 = vmatmul.bf16.gmra.mxu0 %v4178
      %v4303 = vpop.f32.mrf.mxu0
      %v4304 = vadd.f32 0.0, %v4303
      %v4305 = vpop.f32.mrf.mxu0
      %v4306 = vadd.f32 0.0, %v4305
      %4307 = vmatmul.bf16.gmra.mxu0 %v4179
      %v4308 = vpop.f32.mrf.mxu0
      %v4309 = vadd.f32 0.0, %v4308
      %v4310 = vpop.f32.mrf.mxu0
      %v4311 = vadd.f32 0.0, %v4310
      %4312 = vmatmul.bf16.gmra.mxu0 %v4180
      %v4313 = vpop.f32.mrf.mxu0
      %v4314 = vadd.f32 0.0, %v4313
      %v4315 = vpop.f32.mrf.mxu0
      %v4316 = vadd.f32 0.0, %v4315
      %4317 = vmatmul.bf16.gmra.mxu0 %v4181
      %v4318 = vpop.f32.mrf.mxu0
      %v4319 = vadd.f32 0.0, %v4318
      %v4320 = vpop.f32.mrf.mxu0
      %v4321 = vadd.f32 0.0, %v4320
      %4322 = vmatmul.bf16.gmra.mxu0 %v4182
      %v4323 = vpop.f32.mrf.mxu0
      %v4324 = vadd.f32 0.0, %v4323
      %v4325 = vpop.f32.mrf.mxu0
      %v4326 = vadd.f32 0.0, %v4325
      %4327 = vmatmul.bf16.gmra.mxu0 %v4183
      %v4328 = vpop.f32.mrf.mxu0
      %v4329 = vadd.f32 0.0, %v4328
      %v4330 = vpop.f32.mrf.mxu0
      %v4331 = vadd.f32 0.0, %v4330
      %4332 = vmatmul.bf16.gmra.mxu0 %v4184
      %v4333 = vpop.f32.mrf.mxu0
      %v4334 = vadd.f32 0.0, %v4333
      %v4335 = vpop.f32.mrf.mxu0
      %v4336 = vadd.f32 0.0, %v4335
      %4337 = vdwg.mxu0
      %v4338 = vadd.f32 %v3912, %v4259
      %v4339 = vadd.f32 %v3913, %v4261
      %v4340 = vadd.f32 %v3914, %v4264
      %v4341 = vadd.f32 %v3915, %v4266
      %v4342 = vadd.f32 %v3916, %v4269
      %v4343 = vadd.f32 %v3917, %v4271
      %v4344 = vadd.f32 %v3918, %v4274
      %v4345 = vadd.f32 %v3919, %v4276
      %v4346 = vadd.f32 %v3920, %v4279
      %v4347 = vadd.f32 %v3921, %v4281
      %v4348 = vadd.f32 %v3922, %v4284
      %v4349 = vadd.f32 %v3923, %v4286
      %v4350 = vadd.f32 %v3924, %v4289
      %v4351 = vadd.f32 %v3925, %v4291
      %v4352 = vadd.f32 %v3926, %v4294
      %v4353 = vadd.f32 %v3927, %v4296
      %v4354 = vadd.f32 %v3928, %v4299
      %v4355 = vadd.f32 %v3929, %v4301
      %v4356 = vadd.f32 %v3930, %v4304
      %v4357 = vadd.f32 %v3931, %v4306
      %v4358 = vadd.f32 %v3932, %v4309
      %v4359 = vadd.f32 %v3933, %v4311
      %v4360 = vadd.f32 %v3934, %v4314
      %v4361 = vadd.f32 %v3935, %v4316
      %v4362 = vadd.f32 %v3936, %v4319
      %v4363 = vadd.f32 %v3937, %v4321
      %v4364 = vadd.f32 %v3938, %v4324
      %v4365 = vadd.f32 %v3939, %v4326
      %v4366 = vadd.f32 %v3940, %v4329
      %v4367 = vadd.f32 %v3941, %v4331
      %v4368 = vadd.f32 %v3942, %v4334
      %v4369 = vadd.f32 %v3943, %v4336
      %v4370 = vld [vmem:[%s2] sm:$0x1]
      %v4372 = vperm.slane %v4370, 0
      %v4374 = vadd.f32 %v4338, %v4372
      %v4375 = vadd.f32 %v4339, %v4372
      %v4376 = vadd.f32 %v4340, %v4372
      %v4377 = vadd.f32 %v4341, %v4372
      %v4378 = vadd.f32 %v4342, %v4372
      %v4379 = vadd.f32 %v4343, %v4372
      %v4380 = vadd.f32 %v4344, %v4372
      %v4381 = vadd.f32 %v4345, %v4372
      %v4382 = vadd.f32 %v4346, %v4372
      %v4383 = vadd.f32 %v4347, %v4372
      %v4384 = vadd.f32 %v4348, %v4372
      %v4385 = vadd.f32 %v4349, %v4372
      %v4386 = vadd.f32 %v4350, %v4372
      %v4387 = vadd.f32 %v4351, %v4372
      %v4388 = vadd.f32 %v4352, %v4372
      %v4389 = vadd.f32 %v4353, %v4372
      %v4390 = vadd.f32 %v4354, %v4372
      %v4391 = vadd.f32 %v4355, %v4372
      %v4392 = vadd.f32 %v4356, %v4372
      %v4393 = vadd.f32 %v4357, %v4372
      %v4394 = vadd.f32 %v4358, %v4372
      %v4395 = vadd.f32 %v4359, %v4372
      %v4396 = vadd.f32 %v4360, %v4372
      %v4397 = vadd.f32 %v4361, %v4372
      %v4398 = vadd.f32 %v4362, %v4372
      %v4399 = vadd.f32 %v4363, %v4372
      %v4400 = vadd.f32 %v4364, %v4372
      %v4401 = vadd.f32 %v4365, %v4372
      %v4402 = vadd.f32 %v4366, %v4372
      %v4403 = vadd.f32 %v4367, %v4372
      %v4404 = vadd.f32 %v4368, %v4372
      %v4405 = vadd.f32 %v4369, %v4372
      %v4406 = vadd.f32 %v4374, %v4375
      %v4407 = vadd.f32 %v4406, %v4376
      %v4408 = vadd.f32 %v4407, %v4377
      %v4409 = vadd.f32 %v4408, %v4378
      %v4410 = vadd.f32 %v4409, %v4379
      %v4411 = vadd.f32 %v4410, %v4380
      %v4412 = vadd.f32 %v4411, %v4381
      %v4413 = vadd.f32 %v4412, %v4382
      %v4414 = vadd.f32 %v4413, %v4383
      %v4415 = vadd.f32 %v4414, %v4384
      %v4416 = vadd.f32 %v4415, %v4385
      %v4417 = vadd.f32 %v4416, %v4386
      %v4418 = vadd.f32 %v4417, %v4387
      %v4419 = vadd.f32 %v4418, %v4388
      %v4420 = vadd.f32 %v4419, %v4389
      %v4421 = vadd.f32 %v4420, %v4390
      %v4422 = vadd.f32 %v4421, %v4391
      %v4423 = vadd.f32 %v4422, %v4392
      %v4424 = vadd.f32 %v4423, %v4393
      %v4425 = vadd.f32 %v4424, %v4394
      %v4426 = vadd.f32 %v4425, %v4395
      %v4427 = vadd.f32 %v4426, %v4396
      %v4428 = vadd.f32 %v4427, %v4397
      %v4429 = vadd.f32 %v4428, %v4398
      %v4430 = vadd.f32 %v4429, %v4399
      %v4431 = vadd.f32 %v4430, %v4400
      %v4432 = vadd.f32 %v4431, %v4401
      %v4433 = vadd.f32 %v4432, %v4402
      %v4434 = vadd.f32 %v4433, %v4403
      %v4435 = vadd.f32 %v4434, %v4404
      %v4436 = vadd.f32 %v4435, %v4405
      %v4437 = vrot.slane %v4436, 4
      %v4438 = vadd.f32 %v4436, %v4437
      %v4439 = vrot.slane %v4438, 2
      %v4440 = vadd.f32 %v4438, %v4439
      %v4441 = vrot.slane %v4440, 1
      %v4442 = vadd.f32 %v4440, %v4441
      %4443 = vst [vmem:[%s208] sm:$0x1] %v4442
      %v4444 = vmul.f32 %v4374, %v4374
      %v4445 = vmul.f32 %v4375, %v4375
      %v4446 = vmul.f32 %v4376, %v4376
      %v4447 = vmul.f32 %v4377, %v4377
      %v4448 = vmul.f32 %v4378, %v4378
      %v4449 = vmul.f32 %v4379, %v4379
      %v4450 = vmul.f32 %v4380, %v4380
      %v4451 = vmul.f32 %v4381, %v4381
      %v4452 = vmul.f32 %v4382, %v4382
      %v4453 = vmul.f32 %v4383, %v4383
      %v4454 = vmul.f32 %v4384, %v4384
      %v4455 = vmul.f32 %v4385, %v4385
      %v4456 = vmul.f32 %v4386, %v4386
      %v4457 = vmul.f32 %v4387, %v4387
      %v4458 = vmul.f32 %v4388, %v4388
      %v4459 = vmul.f32 %v4389, %v4389
      %v4460 = vmul.f32 %v4390, %v4390
      %v4461 = vmul.f32 %v4391, %v4391
      %v4462 = vmul.f32 %v4392, %v4392
      %v4463 = vmul.f32 %v4393, %v4393
      %v4464 = vmul.f32 %v4394, %v4394
      %v4465 = vmul.f32 %v4395, %v4395
      %v4466 = vmul.f32 %v4396, %v4396
      %v4467 = vmul.f32 %v4397, %v4397
      %v4468 = vmul.f32 %v4398, %v4398
      %v4469 = vmul.f32 %v4399, %v4399
      %v4470 = vmul.f32 %v4400, %v4400
      %v4471 = vmul.f32 %v4401, %v4401
      %v4472 = vmul.f32 %v4402, %v4402
      %v4473 = vmul.f32 %v4403, %v4403
      %v4474 = vmul.f32 %v4404, %v4404
      %v4475 = vmul.f32 %v4405, %v4405
      %v4476 = vadd.f32 %v4444, %v4445
      %v4477 = vadd.f32 %v4476, %v4446
      %v4478 = vadd.f32 %v4477, %v4447
      %v4479 = vadd.f32 %v4478, %v4448
      %v4480 = vadd.f32 %v4479, %v4449
      %v4481 = vadd.f32 %v4480, %v4450
      %v4482 = vadd.f32 %v4481, %v4451
      %v4483 = vadd.f32 %v4482, %v4452
      %v4484 = vadd.f32 %v4483, %v4453
      %v4485 = vadd.f32 %v4484, %v4454
      %v4486 = vadd.f32 %v4485, %v4455
      %v4487 = vadd.f32 %v4486, %v4456
      %v4488 = vadd.f32 %v4487, %v4457
      %v4489 = vadd.f32 %v4488, %v4458
      %v4490 = vadd.f32 %v4489, %v4459
      %v4491 = vadd.f32 %v4490, %v4460
      %v4492 = vadd.f32 %v4491, %v4461
      %v4493 = vadd.f32 %v4492, %v4462
      %v4494 = vadd.f32 %v4493, %v4463
      %v4495 = vadd.f32 %v4494, %v4464
      %v4496 = vadd.f32 %v4495, %v4465
      %v4497 = vadd.f32 %v4496, %v4466
      %v4498 = vadd.f32 %v4497, %v4467
      %v4499 = vadd.f32 %v4498, %v4468
      %v4500 = vadd.f32 %v4499, %v4469
      %v4501 = vadd.f32 %v4500, %v4470
      %v4502 = vadd.f32 %v4501, %v4471
      %v4503 = vadd.f32 %v4502, %v4472
      %v4504 = vadd.f32 %v4503, %v4473
      %v4505 = vadd.f32 %v4504, %v4474
      %v4506 = vadd.f32 %v4505, %v4475
      %v4507 = vrot.slane %v4506, 4
      %v4508 = vadd.f32 %v4506, %v4507
      %v4509 = vrot.slane %v4508, 2
      %v4510 = vadd.f32 %v4508, %v4509
      %v4511 = vrot.slane %v4510, 1
      %v4512 = vadd.f32 %v4510, %v4511
      %4513 = vst [vmem:[%s208 + $0x1] sm:$0x1] %v4512
      %4514 = vst [vmem:[%s204] sm:$0xff] %v4374
      %4515 = vst [vmem:[%s204 + $0x8] sm:$0xff] %v4375
      %4516 = vst [vmem:[%s204 + $0x10] sm:$0xff] %v4376
      %4517 = vst [vmem:[%s204 + $0x18] sm:$0xff] %v4377
      %4518 = vst [vmem:[%s204 + $0x20] sm:$0xff] %v4378
      %4519 = vst [vmem:[%s204 + $0x28] sm:$0xff] %v4379
      %4520 = vst [vmem:[%s204 + $0x30] sm:$0xff] %v4380
      %4521 = vst [vmem:[%s204 + $0x38] sm:$0xff] %v4381
      %4522 = vst [vmem:[%s204 + $0x40] sm:$0xff] %v4382
      %4523 = vst [vmem:[%s204 + $0x48] sm:$0xff] %v4383
      %4524 = vst [vmem:[%s204 + $0x50] sm:$0xff] %v4384
      %4525 = vst [vmem:[%s204 + $0x58] sm:$0xff] %v4385
      %4526 = vst [vmem:[%s204 + $0x60] sm:$0xff] %v4386
      %4527 = vst [vmem:[%s204 + $0x68] sm:$0xff] %v4387
      %4528 = vst [vmem:[%s204 + $0x70] sm:$0xff] %v4388
      %4529 = vst [vmem:[%s204 + $0x78] sm:$0xff] %v4389
      %4530 = vst [vmem:[%s204 + $0x80] sm:$0xff] %v4390
      %4531 = vst [vmem:[%s204 + $0x88] sm:$0xff] %v4391
      %4532 = vst [vmem:[%s204 + $0x90] sm:$0xff] %v4392
      %4533 = vst [vmem:[%s204 + $0x98] sm:$0xff] %v4393
      %4534 = vst [vmem:[%s204 + $0xa0] sm:$0xff] %v4394
      %4535 = vst [vmem:[%s204 + $0xa8] sm:$0xff] %v4395
      %4536 = vst [vmem:[%s204 + $0xb0] sm:$0xff] %v4396
      %4537 = vst [vmem:[%s204 + $0xb8] sm:$0xff] %v4397
      %4538 = vst [vmem:[%s204 + $0xc0] sm:$0xff] %v4398
      %4539 = vst [vmem:[%s204 + $0xc8] sm:$0xff] %v4399
      %4540 = vst [vmem:[%s204 + $0xd0] sm:$0xff] %v4400
      %4541 = vst [vmem:[%s204 + $0xd8] sm:$0xff] %v4401
      %4542 = vst [vmem:[%s204 + $0xe0] sm:$0xff] %v4402
      %4543 = vst [vmem:[%s204 + $0xe8] sm:$0xff] %v4403
      %4544 = vst [vmem:[%s204 + $0xf0] sm:$0xff] %v4404
      %4545 = vst [vmem:[%s204 + $0xf8] sm:$0xff] %v4405
      %p4546 = scmp.lt.s32.totalorder %s16, 1
      %s4547 = scalar_select %p4546, %s16, 1
      %s4548 = smul.addr %s4547, 32
      %s4549 = smul.addr %s4548, 8
      %s4550 = scalar_lea.vmem %s3, %s4549
      %p4551 = scmp.lt.s32.totalorder %s16, 1
      %s4552 = scalar_select %p4551, %s16, 1
      %s4553 = smul.addr %s4552, 2
      %s4554 = scalar_lea.vmem %s4, %s4553
      // Predicated region
      $region33: #{resnet_block.3} parent=31 // pred_check
        %p4555 = pneg %p102
      $region34: #{resnet_block.3} parent=31 // pred_check_branch
        %4557 = sbr.rel (%p4555) target = $region36
      $region35: #{resnet_block.3} parent=31 // pred_region
        _
      $region36: #{resnet_block.3} parent=31 // pred_fallthru
        _
      // Predicated region
      $region37: #{resnet_block.3} parent=31 // pred_check
        %p4558 = pneg %p128
      $region38: #{resnet_block.3} parent=31 // pred_check_branch
        %4560 = sbr.rel (%p4558) target = $region40
      $region39: #{resnet_block.3} parent=31 // pred_region
        _
      $region40: #{resnet_block.3} parent=31 // pred_fallthru
        _
    $region32: #{resnet_block.3} parent=5 // pred_fallthru
      _
    %p4561 = scmp.le.s32.totalorder 2, %s11
    // Predicated region
    $region41: #{resnet_block.3} parent=5 // pred_check
      %p4562 = pneg %p4561
    $region42: #{resnet_block.3} parent=5 // pred_check_branch
      %4564 = sbr.rel (%p4562) target = $region44
    $region43: #{resnet_block.3} parent=5 // pred_region
      %s4565 = ssub.s32 %s11, 2
      // Predicated region
      $region45: #{resnet_block.3} parent=43 // pred_check
        %p4566 = pneg %p108
      $region46: #{resnet_block.3} parent=43 // pred_check_branch
        %4568 = sbr.rel (%p4566) target = $region48
      $region47: #{resnet_block.3} parent=43 // pred_region
        %p4569 = scmp.lt.s32.totalorder %s17, 1
        %s4570 = scalar_select %p4569, %s17, 1
        %s4571 = smul.addr %s4570, 32
        %s4572 = smul.addr %s4571, 8
        %s4573 = scalar_lea.vmem %s3, %s4572
      $region48: #{resnet_block.3} parent=43 // pred_fallthru
        _
      // Predicated region
      $region49: #{resnet_block.3} parent=43 // pred_check
        %p4574 = pneg %p134
      $region50: #{resnet_block.3} parent=43 // pred_check_branch
        %4576 = sbr.rel (%p4574) target = $region52
      $region51: #{resnet_block.3} parent=43 // pred_region
        %p4577 = scmp.lt.s32.totalorder %s17, 1
        %s4578 = scalar_select %p4577, %s17, 1
        %s4579 = smul.addr %s4578, 2
        %s4580 = scalar_lea.vmem %s4, %s4579
      $region52: #{resnet_block.3} parent=43 // pred_fallthru
        _
    $region44: #{resnet_block.3} parent=5 // pred_fallthru
      _
  $region6: #{resnet_block.3} parent=0 // loop_footer
    %s15 = sadd.s32 1, %s11
  $region7: #{resnet_block.3} parent=0 // loop_footer_branch
    %10 = sbr.rel target = $region3
  $region8: #{resnet_block.3} parent=0 // loop_exit
    _

</llo_original>
